<compile_context>
chip_gen: v6e
topology: v6e:2x2x1
jax: 0.10.0
libtpu: 0.0.40
codegen_flags: <defaults>
</compile_context>

<pallas_src>
import math

import jax
import jax.numpy as jnp
from jax import lax
from jax.experimental import pallas as pl
from jax.experimental.pallas import tpu as pltpu


def _norm(x, alpha, bias, eps, d):
    # Matches the PyTorch Norm module exactly:
    #   unbiased std (divide by d-1), eps added to std (not variance).
    mean = jnp.mean(x, axis=-1, keepdims=True)
    xc = x - mean
    var = jnp.sum(xc * xc, axis=-1, keepdims=True) * (1.0 / (d - 1))
    inv = pl.reciprocal(jnp.sqrt(var) + eps, approx=False)  # one value per row: exact is free
    return alpha * xc * inv + bias


def _vmem_budget_bytes():
    try:
        cap = pltpu.get_tpu_info().vmem_capacity_bytes
    except Exception:
        cap = 64 * 1024 * 1024  # conservative default: v7x per-TensorCore VMEM
    return int(min(cap * 0.80, cap - (8 << 20)))


def decoder_layer(x, mask, params, *, heads, eps=1e-6):
    B, S, D = x.shape
    assert D % heads == 0
    DK = D // heads
    d_ff = params["w1"].shape[1]
    inv_sqrt_dk = 1.0 / math.sqrt(DK)

    bf16 = jnp.bfloat16
    f32 = jnp.float32

    # ---------------- VMEM-budget-aware Q-row tile selection ----------------
    vmem_limit = _vmem_budget_bytes()

    def _estimate_vmem(ts):
        bf, f = 2, 4
        fixed = (2 * S * D * f                       # full-seq x block (double-buffered)
                 + 2 * S * D * bf                    # K/V whole-sequence scratch
                 + (4 * D * D + 2 * D * d_ff) * bf   # matmul weights (single-buffered)
                 + (6 * D + d_ff) * f)               # biases + norm params
        per_tile = (2 * ts * S * bf                  # additive-bias mask block (double-buffered)
                    + 2 * ts * D * f                 # output block (double-buffered)
                    + ts * D * f                     # per-head context scratch
                    + 3 * ts * S * f                 # score / prob f32 temporaries
                    + ts * d_ff * f                  # FF hidden activation
                    + 4 * ts * D * f)                # misc f32 activations
        return fixed + per_tile

    TS = S
    if S > 128:
        chosen = None
        for cand in (1024, 512, 256, 128):           # biggest tile that fits the budget
            if S % cand == 0 and _estimate_vmem(cand) <= vmem_limit:
                chosen = cand
                break
        if chosen is None:                           # fall back to smallest aligned tile
            for cand in (128, 256, 512, 1024):
                if S % cand == 0:
                    chosen = cand
                    break
        if chosen is not None:
            TS = chosen
    n_qt = S // TS

    # ---------------- wrapper-side parameter re-layout (plain XLA ops) ----------------
    wq = (params["wq"] * inv_sqrt_dk).astype(bf16)   # fold 1/sqrt(d_k) into Q projection
    bq = (params["bq"] * inv_sqrt_dk).astype(f32)
    wk = params["wk"].astype(bf16); bk = params["bk"].astype(f32)
    wv = params["wv"].astype(bf16); bv = params["bv"].astype(f32)
    wo = params["wo"].astype(bf16); bo = params["bo"].astype(f32)
    w1 = params["w1"].astype(bf16); b1 = params["b1"].astype(f32)
    w2 = params["w2"].astype(bf16); b2 = params["b2"].astype(f32)
    a1 = params["a1"].astype(f32); g1 = params["g1"].astype(f32)
    a2 = params["a2"].astype(f32); g2 = params["g2"].astype(f32)

    # additive attention bias: 0 where visible, -1e9 where masked (bf16 halves mask DMA)
    mask_bias = jnp.where(mask == 0, -1e9, 0.0).astype(bf16)

    # ---------------- kernel ----------------
    def kernel(x_ref, mb_ref,
               a1_ref, g1_ref,
               wq_ref, bq_ref, wk_ref, bk_ref, wv_ref, bv_ref,
               wo_ref, bo_ref,
               a2_ref, g2_ref,
               w1_ref, b1_ref, w2_ref, b2_ref,
               out_ref,
               k_scr, v_scr, ctx_scr):
        qi = pl.program_id(1)

        # ---- K/V projection for the full sequence, once per batch element ----
        @pl.when(qi == 0)
        def _():
            xf = x_ref[0]                                                  # (S, D) f32
            x2f = _norm(xf, a1_ref[...], g1_ref[...], eps, D).astype(bf16)
            k_scr[...] = (jnp.dot(x2f, wk_ref[...],
                                  preferred_element_type=jnp.float32)
                          + bk_ref[...]).astype(bf16)                      # (S, D) lane-dense
            v_scr[...] = (jnp.dot(x2f, wv_ref[...],
                                  preferred_element_type=jnp.float32)
                          + bv_ref[...]).astype(bf16)

        # ---- Q-row tile of the input ----
        if n_qt == 1:
            xt = x_ref[0]                                                  # (TS, D)
        else:
            row0 = pl.multiple_of(qi * TS, TS)
            xt = x_ref[0, pl.ds(row0, TS), :]                              # (TS, D)
        bias_t = mb_ref[0].astype(jnp.float32)                             # (TS, S)

        # ---- norm_1 + fused Q projection (scale already folded into wq/bq) ----
        x2t = _norm(xt, a1_ref[...], g1_ref[...], eps, D).astype(bf16)
        q_full = jnp.dot(x2t, wq_ref[...],
                         preferred_element_type=jnp.float32) + bq_ref[...] # (TS, D) f32

        # ---- per-head attention (scores / softmax f32, matmuls bf16 MXU) ----
        for h in range(heads):                                             # static unroll
            off = h * DK
            qh = q_full[:, off:off + DK].astype(bf16)                      # (TS, DK)
            # scores = qh @ kh^T without materializing a transpose (NT dot_general)
            s = lax.dot_general(
                qh, k_scr[:, off:off + DK],
                dimension_numbers=(((1,), (1,)), ((), ())),
                preferred_element_type=jnp.float32)                        # (TS, S)
            s = s + bias_t                                                 # additive mask
            s = s - jnp.max(s, axis=-1, keepdims=True)
            p = jnp.exp(s)
            p = p * pl.reciprocal(jnp.sum(p, axis=-1, keepdims=True), approx=True)
            ctx = jnp.dot(p.astype(bf16), v_scr[:, off:off + DK],
                          preferred_element_type=jnp.float32)              # (TS, DK)
            ctx_scr[:, off:off + DK] = ctx                                 # gather heads

        # ---- fused output projection: one (TS, D) @ (D, D) matmul ----
        attn = jnp.dot(ctx_scr[...].astype(bf16), wo_ref[...],
                       preferred_element_type=jnp.float32) + bo_ref[...]

        # residual 1 (dropout_1 identity in eval mode)
        xr = xt + attn

        # ---- norm_2 + feed-forward ----
        x2 = _norm(xr, a2_ref[...], g2_ref[...], eps, D).astype(bf16)
        h1 = jnp.dot(x2, w1_ref[...],
                     preferred_element_type=jnp.float32) + b1_ref[...]
        h1 = jnp.maximum(h1, 0.0)
        ff = jnp.dot(h1.astype(bf16), w2_ref[...],
                     preferred_element_type=jnp.float32) + b2_ref[...]

        # residual 2 (dropout_2 identity in eval mode)
        out_ref[0] = xr + ff

    # ---------------- specs / pallas_call ----------------
    def _const_spec(arr, single_buffer):
        zeros = (0,) * arr.ndim
        if single_buffer:
            # grid-invariant block: double-buffering only wastes VMEM
            return pl.BlockSpec(arr.shape, lambda b, q: zeros,
                                pipeline_mode=pl.Buffered(1))
        return pl.BlockSpec(arr.shape, lambda b, q: zeros)

    def _call(single_buffer_weights):
        cs = lambda a: _const_spec(a, single_buffer_weights)
        in_specs = [
            pl.BlockSpec((1, S, D), lambda b, q: (b, 0, 0)),    # x: full sequence per batch
            pl.BlockSpec((1, TS, S), lambda b, q: (b, q, 0)),   # additive mask bias, Q-row tiled
            cs(a1), cs(g1),                                     # norm_1
            cs(wq), cs(bq),                                     # q_linear (scaled)
            cs(wk), cs(bk),                                     # k_linear
            cs(wv), cs(bv),                                     # v_linear
            cs(wo), cs(bo),                                     # output projection
            cs(a2), cs(g2),                                     # norm_2
            cs(w1), cs(b1),                                     # ff linear_1
            cs(w2), cs(b2),                                     # ff linear_2
        ]
        out_spec = pl.BlockSpec((1, TS, D), lambda b, q: (b, q, 0))
        return pl.pallas_call(
            kernel,
            out_shape=jax.ShapeDtypeStruct((B, S, D), jnp.float32),
            grid_spec=pltpu.PrefetchScalarGridSpec(
                num_scalar_prefetch=0,
                grid=(B, n_qt),
                in_specs=in_specs,
                out_specs=out_spec,
                scratch_shapes=[
                    pltpu.VMEM((S, D), jnp.bfloat16),   # K, full sequence, lane-dense
                    pltpu.VMEM((S, D), jnp.bfloat16),   # V, full sequence, lane-dense
                    pltpu.VMEM((TS, D), jnp.float32),   # per-head contexts gathered for out-proj
                ]),
            compiler_params=pltpu.CompilerParams(
                dimension_semantics=("parallel", "arbitrary"),
                vmem_limit_bytes=vmem_limit),
        )(x.astype(f32), mask_bias,
          a1, g1, wq, bq, wk, bk, wv, bv, wo, bo, a2, g2, w1, b1, w2, b2)

    if hasattr(pl, "Buffered"):
        try:
            return _call(True)
        except Exception:
            pass  # fall back to default (double-buffered) weight blocks
    return _call(False)


# ---------------- pure-JAX reference (for verification only) ----------------
def reference(x, mask, params, *, heads, eps=1e-6):
    B, S, D = x.shape
    DK = D // heads

    def norm(z, a, g):
        mean = z.mean(-1, keepdims=True)
        zc = z - mean
        var = (zc ** 2).sum(-1, keepdims=True) / (D - 1)
        return a * zc / (jnp.sqrt(var) + eps) + g

    x2 = norm(x, params["a1"], params["g1"])
    q = x2 @ params["wq"] + params["bq"]
    k = x2 @ params["wk"] + params["bk"]
    v = x2 @ params["wv"] + params["bv"]
    q = q.reshape(B, S, heads, DK).transpose(0, 2, 1, 3)
    k = k.reshape(B, S, heads, DK).transpose(0, 2, 1, 3)
    v = v.reshape(B, S, heads, DK).transpose(0, 2, 1, 3)
    scores = jnp.einsum("bhqd,bhkd->bhqk", q, k) / math.sqrt(DK)
    scores = jnp.where(mask[:, None, :, :] == 0, -1e9, scores)
    scores = jax.nn.softmax(scores, axis=-1)
    attn = jnp.einsum("bhqk,bhkd->bhqd", scores, v)
    attn = attn.transpose(0, 2, 1, 3).reshape(B, S, D)
    attn = attn @ params["wo"] + params["bo"]
    x = x + attn
    x2 = norm(x, params["a2"], params["g2"])
    h1 = jnp.maximum(x2 @ params["w1"] + params["b1"], 0.0)
    ff = h1 @ params["w2"] + params["b2"]
    return x + ff


def init_params(key, d_model, d_ff):
    def linear(k, fan_in, fan_out):
        kw, kb = jax.random.split(k)
        bound = 1.0 / math.sqrt(fan_in)
        w = jax.random.uniform(kw, (fan_in, fan_out), jnp.float32, -bound, bound)
        b = jax.random.uniform(kb, (1, fan_out), jnp.float32, -bound, bound)
        return w, b

    ks = jax.random.split(key, 6)
    wq, bq = linear(ks[0], d_model, d_model)
    wk, bk = linear(ks[1], d_model, d_model)
    wv, bv = linear(ks[2], d_model, d_model)
    wo, bo = linear(ks[3], d_model, d_model)
    w1, b1 = linear(ks[4], d_model, d_ff)
    w2, b2 = linear(ks[5], d_ff, d_model)
    return dict(
        a1=jnp.ones((1, d_model), jnp.float32), g1=jnp.zeros((1, d_model), jnp.float32),
        a2=jnp.ones((1, d_model), jnp.float32), g2=jnp.zeros((1, d_model), jnp.float32),
        wq=wq, bq=bq, wk=wk, bk=bk, wv=wv, bv=bv, wo=wo, bo=bo,
        w1=w1, b1=b1, w2=w2, b2=b2,
    )


if __name__ == "__main__":
    B, S, D, HEADS = 2, 8, 32, 4
    D_FF = 2048  # FeedForward default d_ff

    key = jax.random.PRNGKey(0)
    kx, kp = jax.random.split(key)
    x = jax.random.normal(kx, (B, S, D), dtype=jnp.float32)
    # causal target mask, broadcast per batch (data-driven input, as in the module)
    trg_mask = jnp.broadcast_to(
        jnp.tril(jnp.ones((S, S), jnp.float32)), (B, S, S))
    params = init_params(kp, D, D_FF)

    out = decoder_layer(x, trg_mask, params, heads=HEADS)
    out = jax.block_until_ready(out)

    ref = reference(x, trg_mask, params, heads=HEADS)
    assert out.shape == (B, S, D)
    max_err = float(jnp.max(jnp.abs(out - ref)))
    # Tolerance accounts for bf16 MXU matmuls (f32 accumulation) vs. the pure-f32 reference.
    assert jnp.allclose(out, ref, rtol=2e-2, atol=2e-2), f"mismatch vs reference (max abs err {max_err})"

    print("KERNEL_OK")
</pallas_src>

<mosaic_0001>
module attributes {stable_mosaic.version = 11 : i64} {
  func.func @kernel(%arg0: i32, %arg1: i32, %arg2: memref<1x8x32xf32, #tpu.memory_space<vmem>>, %arg3: memref<1x8x8xbf16, #tpu.memory_space<vmem>>, %arg4: memref<1x32xf32, #tpu.memory_space<vmem>>, %arg5: memref<1x32xf32, #tpu.memory_space<vmem>>, %arg6: memref<32x32xbf16, #tpu.memory_space<vmem>>, %arg7: memref<1x32xf32, #tpu.memory_space<vmem>>, %arg8: memref<32x32xbf16, #tpu.memory_space<vmem>>, %arg9: memref<1x32xf32, #tpu.memory_space<vmem>>, %arg10: memref<32x32xbf16, #tpu.memory_space<vmem>>, %arg11: memref<1x32xf32, #tpu.memory_space<vmem>>, %arg12: memref<32x32xbf16, #tpu.memory_space<vmem>>, %arg13: memref<1x32xf32, #tpu.memory_space<vmem>>, %arg14: memref<1x32xf32, #tpu.memory_space<vmem>>, %arg15: memref<1x32xf32, #tpu.memory_space<vmem>>, %arg16: memref<32x2048xbf16, #tpu.memory_space<vmem>>, %arg17: memref<1x2048xf32, #tpu.memory_space<vmem>>, %arg18: memref<2048x32xbf16, #tpu.memory_space<vmem>>, %arg19: memref<1x32xf32, #tpu.memory_space<vmem>>, %arg20: memref<1x8x32xf32, #tpu.memory_space<vmem>>, %arg21: memref<8x32xbf16, #tpu.memory_space<vmem>>, %arg22: memref<8x32xbf16, #tpu.memory_space<vmem>>, %arg23: memref<8x32xf32, #tpu.memory_space<vmem>>) attributes {dimension_semantics = [#tpu.dimension_semantics<parallel>, #tpu.dimension_semantics<arbitrary>], iteration_bounds = array<i64: 2, 1>, scalar_prefetch = 0 : i64, scratch_operands = 3 : i64, tpu.core_type = #tpu.core_type<tc>, window_params = [{transform_indices = @transform_0, window_bounds = array<i64: 1, 8, 32>}, {transform_indices = @transform_1, window_bounds = array<i64: 1, 8, 8>}, {pipeline_mode = #tpu.pipeline_mode<synchronous>, transform_indices = @transform_2, window_bounds = array<i64: 1, 32>}, {pipeline_mode = #tpu.pipeline_mode<synchronous>, transform_indices = @transform_3, window_bounds = array<i64: 1, 32>}, {pipeline_mode = #tpu.pipeline_mode<synchronous>, transform_indices = @transform_4, window_bounds = array<i64: 32, 32>}, {pipeline_mode = #tpu.pipeline_mode<synchronous>, transform_indices = @transform_5, window_bounds = array<i64: 1, 32>}, {pipeline_mode = #tpu.pipeline_mode<synchronous>, transform_indices = @transform_6, window_bounds = array<i64: 32, 32>}, {pipeline_mode = #tpu.pipeline_mode<synchronous>, transform_indices = @transform_7, window_bounds = array<i64: 1, 32>}, {pipeline_mode = #tpu.pipeline_mode<synchronous>, transform_indices = @transform_8, window_bounds = array<i64: 32, 32>}, {pipeline_mode = #tpu.pipeline_mode<synchronous>, transform_indices = @transform_9, window_bounds = array<i64: 1, 32>}, {pipeline_mode = #tpu.pipeline_mode<synchronous>, transform_indices = @transform_10, window_bounds = array<i64: 32, 32>}, {pipeline_mode = #tpu.pipeline_mode<synchronous>, transform_indices = @transform_11, window_bounds = array<i64: 1, 32>}, {pipeline_mode = #tpu.pipeline_mode<synchronous>, transform_indices = @transform_12, window_bounds = array<i64: 1, 32>}, {pipeline_mode = #tpu.pipeline_mode<synchronous>, transform_indices = @transform_13, window_bounds = array<i64: 1, 32>}, {pipeline_mode = #tpu.pipeline_mode<synchronous>, transform_indices = @transform_14, window_bounds = array<i64: 32, 2048>}, {pipeline_mode = #tpu.pipeline_mode<synchronous>, transform_indices = @transform_15, window_bounds = array<i64: 1, 2048>}, {pipeline_mode = #tpu.pipeline_mode<synchronous>, transform_indices = @transform_16, window_bounds = array<i64: 2048, 32>}, {pipeline_mode = #tpu.pipeline_mode<synchronous>, transform_indices = @transform_17, window_bounds = array<i64: 1, 32>}, {transform_indices = @transform_18, window_bounds = array<i64: 1, 8, 32>}]} {
    %c0_i32 = arith.constant 0 : i32
    %0 = arith.cmpi eq, %arg1, %c0_i32 : i32
    %1 = arith.extui %0 : i1 to i32
    %c0_i32_0 = arith.constant 0 : i32
    %2 = arith.cmpi ne, %1, %c0_i32_0 : i32
    scf.if %2 {
      %c0_86 = arith.constant 0 : index
      %c0_87 = arith.constant 0 : index
      %c0_88 = arith.constant 0 : index
      %162 = vector.load %arg2[%c0_86, %c0_87, %c0_88] : memref<1x8x32xf32, #tpu.memory_space<vmem>>, vector<1x8x32xf32>
      %163 = vector.shape_cast %162 : vector<1x8x32xf32> to vector<8x32xf32>
      %c0_89 = arith.constant 0 : index
      %c0_90 = arith.constant 0 : index
      %164 = vector.load %arg4[%c0_89, %c0_90] : memref<1x32xf32, #tpu.memory_space<vmem>>, vector<1x32xf32>
      %c0_91 = arith.constant 0 : index
      %c0_92 = arith.constant 0 : index
      %165 = vector.load %arg5[%c0_91, %c0_92] : memref<1x32xf32, #tpu.memory_space<vmem>>, vector<1x32xf32>
      %cst_93 = arith.constant dense<0.000000e+00> : vector<8xf32>
      %166 = vector.multi_reduction <add>, %163, %cst_93 [1] : vector<8x32xf32> to vector<8xf32>
      %167 = vector.shape_cast %166 : vector<8xf32> to vector<8x1xf32>
      %cst_94 = arith.constant 3.200000e+01 : f32
      %168 = vector.broadcast %cst_94 : f32 to vector<8x1xf32>
      %169 = arith.divf %167, %168 : vector<8x1xf32>
      %170 = vector.broadcast %169 : vector<8x1xf32> to vector<8x32xf32>
      %171 = arith.subf %163, %170 : vector<8x32xf32>
      %172 = arith.mulf %171, %171 : vector<8x32xf32>
      %cst_95 = arith.constant dense<0.000000e+00> : vector<8xf32>
      %173 = vector.multi_reduction <add>, %172, %cst_95 [1] : vector<8x32xf32> to vector<8xf32>
      %174 = vector.shape_cast %173 : vector<8xf32> to vector<8x1xf32>
      %cst_96 = arith.constant 0.0322580636 : f32
      %175 = vector.broadcast %cst_96 : f32 to vector<8x1xf32>
      %176 = arith.mulf %174, %175 : vector<8x1xf32>
      %177 = math.sqrt %176 : vector<8x1xf32>
      %cst_97 = arith.constant 9.99999997E-7 : f32
      %178 = vector.broadcast %cst_97 : f32 to vector<8x1xf32>
      %179 = arith.addf %177, %178 : vector<8x1xf32>
      %180 = tpu.reciprocal %179 : vector<8x1xf32> -> vector<8x1xf32>
      %181 = vector.broadcast %164 : vector<1x32xf32> to vector<8x32xf32>
      %182 = arith.mulf %181, %171 : vector<8x32xf32>
      %183 = vector.broadcast %180 : vector<8x1xf32> to vector<8x32xf32>
      %184 = arith.mulf %182, %183 : vector<8x32xf32>
      %185 = vector.broadcast %165 : vector<1x32xf32> to vector<8x32xf32>
      %186 = arith.addf %184, %185 : vector<8x32xf32>
      %187 = arith.truncf %186 : vector<8x32xf32> to vector<8x32xbf16>
      %c0_98 = arith.constant 0 : index
      %c0_99 = arith.constant 0 : index
      %188 = vector.load %arg8[%c0_98, %c0_99] : memref<32x32xbf16, #tpu.memory_space<vmem>>, vector<32x32xbf16>
      %cst_100 = arith.constant dense<0.000000e+00> : vector<8x32xf32>
      %189 = tpu.matmul %187, %188, %cst_100 {dimension_numbers = #tpu.dot_dimension_numbers<[1], [0], [0], [1], [0, 0, 1, 1], [], []>} : vector<8x32xbf16>, vector<32x32xbf16>, vector<8x32xf32> -> vector<8x32xf32>
      %c0_101 = arith.constant 0 : index
      %c0_102 = arith.constant 0 : index
      %190 = vector.load %arg9[%c0_101, %c0_102] : memref<1x32xf32, #tpu.memory_space<vmem>>, vector<1x32xf32>
      %191 = vector.broadcast %190 : vector<1x32xf32> to vector<8x32xf32>
      %192 = arith.addf %189, %191 : vector<8x32xf32>
      %193 = arith.truncf %192 : vector<8x32xf32> to vector<8x32xbf16>
      %c0_103 = arith.constant 0 : index
      %c0_104 = arith.constant 0 : index
      %194 = vector.load %arg21[%c0_103, %c0_104] : memref<8x32xbf16, #tpu.memory_space<vmem>>, vector<8x32xbf16>
      tpu.vector_store %arg21[%c0_103, %c0_104], %193 {strides = array<i32>} : memref<8x32xbf16, #tpu.memory_space<vmem>>, vector<8x32xbf16>,
      %c0_105 = arith.constant 0 : index
      %c0_106 = arith.constant 0 : index
      %195 = vector.load %arg10[%c0_105, %c0_106] : memref<32x32xbf16, #tpu.memory_space<vmem>>, vector<32x32xbf16>
      %cst_107 = arith.constant dense<0.000000e+00> : vector<8x32xf32>
      %196 = tpu.matmul %187, %195, %cst_107 {dimension_numbers = #tpu.dot_dimension_numbers<[1], [0], [0], [1], [0, 0, 1, 1], [], []>} : vector<8x32xbf16>, vector<32x32xbf16>, vector<8x32xf32> -> vector<8x32xf32>
      %c0_108 = arith.constant 0 : index
      %c0_109 = arith.constant 0 : index
      %197 = vector.load %arg11[%c0_108, %c0_109] : memref<1x32xf32, #tpu.memory_space<vmem>>, vector<1x32xf32>
      %198 = vector.broadcast %197 : vector<1x32xf32> to vector<8x32xf32>
      %199 = arith.addf %196, %198 : vector<8x32xf32>
      %200 = arith.truncf %199 : vector<8x32xf32> to vector<8x32xbf16>
      %c0_110 = arith.constant 0 : index
      %c0_111 = arith.constant 0 : index
      %201 = vector.load %arg22[%c0_110, %c0_111] : memref<8x32xbf16, #tpu.memory_space<vmem>>, vector<8x32xbf16>
      tpu.vector_store %arg22[%c0_110, %c0_111], %200 {strides = array<i32>} : memref<8x32xbf16, #tpu.memory_space<vmem>>, vector<8x32xbf16>,
    } else {
    }
    %c0 = arith.constant 0 : index
    %c0_1 = arith.constant 0 : index
    %c0_2 = arith.constant 0 : index
    %3 = vector.load %arg2[%c0, %c0_1, %c0_2] : memref<1x8x32xf32, #tpu.memory_space<vmem>>, vector<1x8x32xf32>
    %4 = vector.shape_cast %3 : vector<1x8x32xf32> to vector<8x32xf32>
    %c0_3 = arith.constant 0 : index
    %c0_4 = arith.constant 0 : index
    %c0_5 = arith.constant 0 : index
    %5 = vector.load %arg3[%c0_3, %c0_4, %c0_5] : memref<1x8x8xbf16, #tpu.memory_space<vmem>>, vector<1x8x8xbf16>
    %6 = vector.shape_cast %5 : vector<1x8x8xbf16> to vector<8x8xbf16>
    %7 = arith.extf %6 : vector<8x8xbf16> to vector<8x8xf32>
    %c0_6 = arith.constant 0 : index
    %c0_7 = arith.constant 0 : index
    %8 = vector.load %arg4[%c0_6, %c0_7] : memref<1x32xf32, #tpu.memory_space<vmem>>, vector<1x32xf32>
    %c0_8 = arith.constant 0 : index
    %c0_9 = arith.constant 0 : index
    %9 = vector.load %arg5[%c0_8, %c0_9] : memref<1x32xf32, #tpu.memory_space<vmem>>, vector<1x32xf32>
    %cst = arith.constant dense<0.000000e+00> : vector<8xf32>
    %10 = vector.multi_reduction <add>, %4, %cst [1] : vector<8x32xf32> to vector<8xf32>
    %11 = vector.shape_cast %10 : vector<8xf32> to vector<8x1xf32>
    %cst_10 = arith.constant 3.200000e+01 : f32
    %12 = vector.broadcast %cst_10 : f32 to vector<8x1xf32>
    %13 = arith.divf %11, %12 : vector<8x1xf32>
    %14 = vector.broadcast %13 : vector<8x1xf32> to vector<8x32xf32>
    %15 = arith.subf %4, %14 : vector<8x32xf32>
    %16 = arith.mulf %15, %15 : vector<8x32xf32>
    %cst_11 = arith.constant dense<0.000000e+00> : vector<8xf32>
    %17 = vector.multi_reduction <add>, %16, %cst_11 [1] : vector<8x32xf32> to vector<8xf32>
    %18 = vector.shape_cast %17 : vector<8xf32> to vector<8x1xf32>
    %cst_12 = arith.constant 0.0322580636 : f32
    %19 = vector.broadcast %cst_12 : f32 to vector<8x1xf32>
    %20 = arith.mulf %18, %19 : vector<8x1xf32>
    %21 = math.sqrt %20 : vector<8x1xf32>
    %cst_13 = arith.constant 9.99999997E-7 : f32
    %22 = vector.broadcast %cst_13 : f32 to vector<8x1xf32>
    %23 = arith.addf %21, %22 : vector<8x1xf32>
    %24 = tpu.reciprocal %23 : vector<8x1xf32> -> vector<8x1xf32>
    %25 = vector.broadcast %8 : vector<1x32xf32> to vector<8x32xf32>
    %26 = arith.mulf %25, %15 : vector<8x32xf32>
    %27 = vector.broadcast %24 : vector<8x1xf32> to vector<8x32xf32>
    %28 = arith.mulf %26, %27 : vector<8x32xf32>
    %29 = vector.broadcast %9 : vector<1x32xf32> to vector<8x32xf32>
    %30 = arith.addf %28, %29 : vector<8x32xf32>
    %31 = arith.truncf %30 : vector<8x32xf32> to vector<8x32xbf16>
    %c0_14 = arith.constant 0 : index
    %c0_15 = arith.constant 0 : index
    %32 = vector.load %arg6[%c0_14, %c0_15] : memref<32x32xbf16, #tpu.memory_space<vmem>>, vector<32x32xbf16>
    %cst_16 = arith.constant dense<0.000000e+00> : vector<8x32xf32>
    %33 = tpu.matmul %31, %32, %cst_16 {dimension_numbers = #tpu.dot_dimension_numbers<[1], [0], [0], [1], [0, 0, 1, 1], [], []>} : vector<8x32xbf16>, vector<32x32xbf16>, vector<8x32xf32> -> vector<8x32xf32>
    %c0_17 = arith.constant 0 : index
    %c0_18 = arith.constant 0 : index
    %34 = vector.load %arg7[%c0_17, %c0_18] : memref<1x32xf32, #tpu.memory_space<vmem>>, vector<1x32xf32>
    %35 = vector.broadcast %34 : vector<1x32xf32> to vector<8x32xf32>
    %36 = arith.addf %33, %35 : vector<8x32xf32>
    %37 = vector.extract_strided_slice %36 {offsets = [0, 0], sizes = [8, 8], strides = [1, 1]} : vector<8x32xf32> to vector<8x8xf32>
    %38 = arith.truncf %37 : vector<8x8xf32> to vector<8x8xbf16>
    %c0_19 = arith.constant 0 : index
    %c0_20 = arith.constant 0 : index
    %39 = vector.load %arg21[%c0_19, %c0_20] : memref<8x32xbf16, #tpu.memory_space<vmem>>, vector<8x8xbf16>
    %cst_21 = arith.constant dense<0.000000e+00> : vector<8x8xf32>
    %40 = tpu.matmul %38, %39, %cst_21 {dimension_numbers = #tpu.dot_dimension_numbers<[1], [1], [0], [0], [0, 0, 1, 0], [], []>} : vector<8x8xbf16>, vector<8x8xbf16>, vector<8x8xf32> -> vector<8x8xf32>
    %41 = arith.addf %40, %7 : vector<8x8xf32>
    %cst_22 = arith.constant dense<0xFF800000> : vector<8xf32>
    %42 = vector.multi_reduction <maximumf>, %41, %cst_22 [1] : vector<8x8xf32> to vector<8xf32>
    %43 = vector.shape_cast %42 : vector<8xf32> to vector<8x1xf32>
    %44 = vector.broadcast %43 : vector<8x1xf32> to vector<8x8xf32>
    %45 = arith.subf %41, %44 : vector<8x8xf32>
    %46 = math.exp %45 : vector<8x8xf32>
    %cst_23 = arith.constant dense<0.000000e+00> : vector<8xf32>
    %47 = vector.multi_reduction <add>, %46, %cst_23 [1] : vector<8x8xf32> to vector<8xf32>
    %48 = vector.shape_cast %47 : vector<8xf32> to vector<8x1xf32>
    %49 = tpu.reciprocal %48 {approx = true} : vector<8x1xf32> -> vector<8x1xf32>
    %50 = vector.broadcast %49 : vector<8x1xf32> to vector<8x8xf32>
    %51 = arith.mulf %46, %50 : vector<8x8xf32>
    %52 = arith.truncf %51 : vector<8x8xf32> to vector<8x8xbf16>
    %c0_24 = arith.constant 0 : index
    %c0_25 = arith.constant 0 : index
    %53 = vector.load %arg22[%c0_24, %c0_25] : memref<8x32xbf16, #tpu.memory_space<vmem>>, vector<8x8xbf16>
    %cst_26 = arith.constant dense<0.000000e+00> : vector<8x8xf32>
    %54 = tpu.matmul %52, %53, %cst_26 {dimension_numbers = #tpu.dot_dimension_numbers<[1], [0], [0], [1], [0, 0, 1, 1], [], []>} : vector<8x8xbf16>, vector<8x8xbf16>, vector<8x8xf32> -> vector<8x8xf32>
    %c0_27 = arith.constant 0 : index
    %c0_28 = arith.constant 0 : index
    %55 = vector.load %arg23[%c0_27, %c0_28] : memref<8x32xf32, #tpu.memory_space<vmem>>, vector<8x8xf32>
    tpu.vector_store %arg23[%c0_27, %c0_28], %54 {strides = array<i32>} : memref<8x32xf32, #tpu.memory_space<vmem>>, vector<8x8xf32>,
    %56 = vector.extract_strided_slice %36 {offsets = [0, 8], sizes = [8, 8], strides = [1, 1]} : vector<8x32xf32> to vector<8x8xf32>
    %57 = arith.truncf %56 : vector<8x8xf32> to vector<8x8xbf16>
    %c0_29 = arith.constant 0 : index
    %c8 = arith.constant 8 : index
    %58 = vector.load %arg21[%c0_29, %c8] : memref<8x32xbf16, #tpu.memory_space<vmem>>, vector<8x8xbf16>
    %cst_30 = arith.constant dense<0.000000e+00> : vector<8x8xf32>
    %59 = tpu.matmul %57, %58, %cst_30 {dimension_numbers = #tpu.dot_dimension_numbers<[1], [1], [0], [0], [0, 0, 1, 0], [], []>} : vector<8x8xbf16>, vector<8x8xbf16>, vector<8x8xf32> -> vector<8x8xf32>
    %60 = arith.addf %59, %7 : vector<8x8xf32>
    %cst_31 = arith.constant dense<0xFF800000> : vector<8xf32>
    %61 = vector.multi_reduction <maximumf>, %60, %cst_31 [1] : vector<8x8xf32> to vector<8xf32>
    %62 = vector.shape_cast %61 : vector<8xf32> to vector<8x1xf32>
    %63 = vector.broadcast %62 : vector<8x1xf32> to vector<8x8xf32>
    %64 = arith.subf %60, %63 : vector<8x8xf32>
    %65 = math.exp %64 : vector<8x8xf32>
    %cst_32 = arith.constant dense<0.000000e+00> : vector<8xf32>
    %66 = vector.multi_reduction <add>, %65, %cst_32 [1] : vector<8x8xf32> to vector<8xf32>
    %67 = vector.shape_cast %66 : vector<8xf32> to vector<8x1xf32>
    %68 = tpu.reciprocal %67 {approx = true} : vector<8x1xf32> -> vector<8x1xf32>
    %69 = vector.broadcast %68 : vector<8x1xf32> to vector<8x8xf32>
    %70 = arith.mulf %65, %69 : vector<8x8xf32>
    %71 = arith.truncf %70 : vector<8x8xf32> to vector<8x8xbf16>
    %c0_33 = arith.constant 0 : index
    %c8_34 = arith.constant 8 : index
    %72 = vector.load %arg22[%c0_33, %c8_34] : memref<8x32xbf16, #tpu.memory_space<vmem>>, vector<8x8xbf16>
    %cst_35 = arith.constant dense<0.000000e+00> : vector<8x8xf32>
    %73 = tpu.matmul %71, %72, %cst_35 {dimension_numbers = #tpu.dot_dimension_numbers<[1], [0], [0], [1], [0, 0, 1, 1], [], []>} : vector<8x8xbf16>, vector<8x8xbf16>, vector<8x8xf32> -> vector<8x8xf32>
    %c0_36 = arith.constant 0 : index
    %c8_37 = arith.constant 8 : index
    %74 = vector.load %arg23[%c0_36, %c8_37] : memref<8x32xf32, #tpu.memory_space<vmem>>, vector<8x8xf32>
    tpu.vector_store %arg23[%c0_36, %c8_37], %73 {strides = array<i32>} : memref<8x32xf32, #tpu.memory_space<vmem>>, vector<8x8xf32>,
    %75 = vector.extract_strided_slice %36 {offsets = [0, 16], sizes = [8, 8], strides = [1, 1]} : vector<8x32xf32> to vector<8x8xf32>
    %76 = arith.truncf %75 : vector<8x8xf32> to vector<8x8xbf16>
    %c0_38 = arith.constant 0 : index
    %c16 = arith.constant 16 : index
    %77 = vector.load %arg21[%c0_38, %c16] : memref<8x32xbf16, #tpu.memory_space<vmem>>, vector<8x8xbf16>
    %cst_39 = arith.constant dense<0.000000e+00> : vector<8x8xf32>
    %78 = tpu.matmul %76, %77, %cst_39 {dimension_numbers = #tpu.dot_dimension_numbers<[1], [1], [0], [0], [0, 0, 1, 0], [], []>} : vector<8x8xbf16>, vector<8x8xbf16>, vector<8x8xf32> -> vector<8x8xf32>
    %79 = arith.addf %78, %7 : vector<8x8xf32>
    %cst_40 = arith.constant dense<0xFF800000> : vector<8xf32>
    %80 = vector.multi_reduction <maximumf>, %79, %cst_40 [1] : vector<8x8xf32> to vector<8xf32>
    %81 = vector.shape_cast %80 : vector<8xf32> to vector<8x1xf32>
    %82 = vector.broadcast %81 : vector<8x1xf32> to vector<8x8xf32>
    %83 = arith.subf %79, %82 : vector<8x8xf32>
    %84 = math.exp %83 : vector<8x8xf32>
    %cst_41 = arith.constant dense<0.000000e+00> : vector<8xf32>
    %85 = vector.multi_reduction <add>, %84, %cst_41 [1] : vector<8x8xf32> to vector<8xf32>
    %86 = vector.shape_cast %85 : vector<8xf32> to vector<8x1xf32>
    %87 = tpu.reciprocal %86 {approx = true} : vector<8x1xf32> -> vector<8x1xf32>
    %88 = vector.broadcast %87 : vector<8x1xf32> to vector<8x8xf32>
    %89 = arith.mulf %84, %88 : vector<8x8xf32>
    %90 = arith.truncf %89 : vector<8x8xf32> to vector<8x8xbf16>
    %c0_42 = arith.constant 0 : index
    %c16_43 = arith.constant 16 : index
    %91 = vector.load %arg22[%c0_42, %c16_43] : memref<8x32xbf16, #tpu.memory_space<vmem>>, vector<8x8xbf16>
    %cst_44 = arith.constant dense<0.000000e+00> : vector<8x8xf32>
    %92 = tpu.matmul %90, %91, %cst_44 {dimension_numbers = #tpu.dot_dimension_numbers<[1], [0], [0], [1], [0, 0, 1, 1], [], []>} : vector<8x8xbf16>, vector<8x8xbf16>, vector<8x8xf32> -> vector<8x8xf32>
    %c0_45 = arith.constant 0 : index
    %c16_46 = arith.constant 16 : index
    %93 = vector.load %arg23[%c0_45, %c16_46] : memref<8x32xf32, #tpu.memory_space<vmem>>, vector<8x8xf32>
    tpu.vector_store %arg23[%c0_45, %c16_46], %92 {strides = array<i32>} : memref<8x32xf32, #tpu.memory_space<vmem>>, vector<8x8xf32>,
    %94 = vector.extract_strided_slice %36 {offsets = [0, 24], sizes = [8, 8], strides = [1, 1]} : vector<8x32xf32> to vector<8x8xf32>
    %95 = arith.truncf %94 : vector<8x8xf32> to vector<8x8xbf16>
    %c0_47 = arith.constant 0 : index
    %c24 = arith.constant 24 : index
    %96 = vector.load %arg21[%c0_47, %c24] : memref<8x32xbf16, #tpu.memory_space<vmem>>, vector<8x8xbf16>
    %cst_48 = arith.constant dense<0.000000e+00> : vector<8x8xf32>
    %97 = tpu.matmul %95, %96, %cst_48 {dimension_numbers = #tpu.dot_dimension_numbers<[1], [1], [0], [0], [0, 0, 1, 0], [], []>} : vector<8x8xbf16>, vector<8x8xbf16>, vector<8x8xf32> -> vector<8x8xf32>
    %98 = arith.addf %97, %7 : vector<8x8xf32>
    %cst_49 = arith.constant dense<0xFF800000> : vector<8xf32>
    %99 = vector.multi_reduction <maximumf>, %98, %cst_49 [1] : vector<8x8xf32> to vector<8xf32>
    %100 = vector.shape_cast %99 : vector<8xf32> to vector<8x1xf32>
    %101 = vector.broadcast %100 : vector<8x1xf32> to vector<8x8xf32>
    %102 = arith.subf %98, %101 : vector<8x8xf32>
    %103 = math.exp %102 : vector<8x8xf32>
    %cst_50 = arith.constant dense<0.000000e+00> : vector<8xf32>
    %104 = vector.multi_reduction <add>, %103, %cst_50 [1] : vector<8x8xf32> to vector<8xf32>
    %105 = vector.shape_cast %104 : vector<8xf32> to vector<8x1xf32>
    %106 = tpu.reciprocal %105 {approx = true} : vector<8x1xf32> -> vector<8x1xf32>
    %107 = vector.broadcast %106 : vector<8x1xf32> to vector<8x8xf32>
    %108 = arith.mulf %103, %107 : vector<8x8xf32>
    %109 = arith.truncf %108 : vector<8x8xf32> to vector<8x8xbf16>
    %c0_51 = arith.constant 0 : index
    %c24_52 = arith.constant 24 : index
    %110 = vector.load %arg22[%c0_51, %c24_52] : memref<8x32xbf16, #tpu.memory_space<vmem>>, vector<8x8xbf16>
    %cst_53 = arith.constant dense<0.000000e+00> : vector<8x8xf32>
    %111 = tpu.matmul %109, %110, %cst_53 {dimension_numbers = #tpu.dot_dimension_numbers<[1], [0], [0], [1], [0, 0, 1, 1], [], []>} : vector<8x8xbf16>, vector<8x8xbf16>, vector<8x8xf32> -> vector<8x8xf32>
    %c0_54 = arith.constant 0 : index
    %c24_55 = arith.constant 24 : index
    %112 = vector.load %arg23[%c0_54, %c24_55] : memref<8x32xf32, #tpu.memory_space<vmem>>, vector<8x8xf32>
    tpu.vector_store %arg23[%c0_54, %c24_55], %111 {strides = array<i32>} : memref<8x32xf32, #tpu.memory_space<vmem>>, vector<8x8xf32>,
    %c0_56 = arith.constant 0 : index
    %c0_57 = arith.constant 0 : index
    %113 = vector.load %arg23[%c0_56, %c0_57] : memref<8x32xf32, #tpu.memory_space<vmem>>, vector<8x32xf32>
    %114 = arith.truncf %113 : vector<8x32xf32> to vector<8x32xbf16>
    %c0_58 = arith.constant 0 : index
    %c0_59 = arith.constant 0 : index
    %115 = vector.load %arg12[%c0_58, %c0_59] : memref<32x32xbf16, #tpu.memory_space<vmem>>, vector<32x32xbf16>
    %cst_60 = arith.constant dense<0.000000e+00> : vector<8x32xf32>
    %116 = tpu.matmul %114, %115, %cst_60 {dimension_numbers = #tpu.dot_dimension_numbers<[1], [0], [0], [1], [0, 0, 1, 1], [], []>} : vector<8x32xbf16>, vector<32x32xbf16>, vector<8x32xf32> -> vector<8x32xf32>
    %c0_61 = arith.constant 0 : index
    %c0_62 = arith.constant 0 : index
    %117 = vector.load %arg13[%c0_61, %c0_62] : memref<1x32xf32, #tpu.memory_space<vmem>>, vector<1x32xf32>
    %118 = vector.broadcast %117 : vector<1x32xf32> to vector<8x32xf32>
    %119 = arith.addf %116, %118 : vector<8x32xf32>
    %120 = arith.addf %4, %119 : vector<8x32xf32>
    %c0_63 = arith.constant 0 : index
    %c0_64 = arith.constant 0 : index
    %121 = vector.load %arg14[%c0_63, %c0_64] : memref<1x32xf32, #tpu.memory_space<vmem>>, vector<1x32xf32>
    %c0_65 = arith.constant 0 : index
    %c0_66 = arith.constant 0 : index
    %122 = vector.load %arg15[%c0_65, %c0_66] : memref<1x32xf32, #tpu.memory_space<vmem>>, vector<1x32xf32>
    %cst_67 = arith.constant dense<0.000000e+00> : vector<8xf32>
    %123 = vector.multi_reduction <add>, %120, %cst_67 [1] : vector<8x32xf32> to vector<8xf32>
    %124 = vector.shape_cast %123 : vector<8xf32> to vector<8x1xf32>
    %cst_68 = arith.constant 3.200000e+01 : f32
    %125 = vector.broadcast %cst_68 : f32 to vector<8x1xf32>
    %126 = arith.divf %124, %125 : vector<8x1xf32>
    %127 = vector.broadcast %126 : vector<8x1xf32> to vector<8x32xf32>
    %128 = arith.subf %120, %127 : vector<8x32xf32>
    %129 = arith.mulf %128, %128 : vector<8x32xf32>
    %cst_69 = arith.constant dense<0.000000e+00> : vector<8xf32>
    %130 = vector.multi_reduction <add>, %129, %cst_69 [1] : vector<8x32xf32> to vector<8xf32>
    %131 = vector.shape_cast %130 : vector<8xf32> to vector<8x1xf32>
    %cst_70 = arith.constant 0.0322580636 : f32
    %132 = vector.broadcast %cst_70 : f32 to vector<8x1xf32>
    %133 = arith.mulf %131, %132 : vector<8x1xf32>
    %134 = math.sqrt %133 : vector<8x1xf32>
    %cst_71 = arith.constant 9.99999997E-7 : f32
    %135 = vector.broadcast %cst_71 : f32 to vector<8x1xf32>
    %136 = arith.addf %134, %135 : vector<8x1xf32>
    %137 = tpu.reciprocal %136 : vector<8x1xf32> -> vector<8x1xf32>
    %138 = vector.broadcast %121 : vector<1x32xf32> to vector<8x32xf32>
    %139 = arith.mulf %138, %128 : vector<8x32xf32>
    %140 = vector.broadcast %137 : vector<8x1xf32> to vector<8x32xf32>
    %141 = arith.mulf %139, %140 : vector<8x32xf32>
    %142 = vector.broadcast %122 : vector<1x32xf32> to vector<8x32xf32>
    %143 = arith.addf %141, %142 : vector<8x32xf32>
    %144 = arith.truncf %143 : vector<8x32xf32> to vector<8x32xbf16>
    %c0_72 = arith.constant 0 : index
    %c0_73 = arith.constant 0 : index
    %145 = vector.load %arg16[%c0_72, %c0_73] : memref<32x2048xbf16, #tpu.memory_space<vmem>>, vector<32x2048xbf16>
    %cst_74 = arith.constant dense<0.000000e+00> : vector<8x2048xf32>
    %146 = tpu.matmul %144, %145, %cst_74 {dimension_numbers = #tpu.dot_dimension_numbers<[1], [0], [0], [1], [0, 0, 1, 1], [], []>} : vector<8x32xbf16>, vector<32x2048xbf16>, vector<8x2048xf32> -> vector<8x2048xf32>
    %c0_75 = arith.constant 0 : index
    %c0_76 = arith.constant 0 : index
    %147 = vector.load %arg17[%c0_75, %c0_76] : memref<1x2048xf32, #tpu.memory_space<vmem>>, vector<1x2048xf32>
    %148 = vector.broadcast %147 : vector<1x2048xf32> to vector<8x2048xf32>
    %149 = arith.addf %146, %148 : vector<8x2048xf32>
    %cst_77 = arith.constant 0.000000e+00 : f32
    %150 = vector.broadcast %cst_77 : f32 to vector<8x2048xf32>
    %151 = arith.maximumf %149, %150 : vector<8x2048xf32>
    %152 = arith.truncf %151 : vector<8x2048xf32> to vector<8x2048xbf16>
    %c0_78 = arith.constant 0 : index
    %c0_79 = arith.constant 0 : index
    %153 = vector.load %arg18[%c0_78, %c0_79] : memref<2048x32xbf16, #tpu.memory_space<vmem>>, vector<2048x32xbf16>
    %cst_80 = arith.constant dense<0.000000e+00> : vector<8x32xf32>
    %154 = tpu.matmul %152, %153, %cst_80 {dimension_numbers = #tpu.dot_dimension_numbers<[1], [0], [0], [1], [0, 0, 1, 1], [], []>} : vector<8x2048xbf16>, vector<2048x32xbf16>, vector<8x32xf32> -> vector<8x32xf32>
    %c0_81 = arith.constant 0 : index
    %c0_82 = arith.constant 0 : index
    %155 = vector.load %arg19[%c0_81, %c0_82] : memref<1x32xf32, #tpu.memory_space<vmem>>, vector<1x32xf32>
    %156 = vector.broadcast %155 : vector<1x32xf32> to vector<8x32xf32>
    %157 = arith.addf %154, %156 : vector<8x32xf32>
    %158 = arith.addf %120, %157 : vector<8x32xf32>
    %c0_83 = arith.constant 0 : index
    %c0_84 = arith.constant 0 : index
    %c0_85 = arith.constant 0 : index
    %159 = vector.load %arg20[%c0_83, %c0_84, %c0_85] : memref<1x8x32xf32, #tpu.memory_space<vmem>>, vector<1x8x32xf32>
    %160 = vector.shape_cast %159 : vector<1x8x32xf32> to vector<8x32xf32>
    %161 = vector.shape_cast %158 : vector<8x32xf32> to vector<1x8x32xf32>
    tpu.vector_store %arg20[%c0_83, %c0_84, %c0_85], %161 {strides = array<i32>} : memref<1x8x32xf32, #tpu.memory_space<vmem>>, vector<1x8x32xf32>,
    return
  }
  func.func @transform_0(%arg0: i32, %arg1: i32) -> (i32, i32, i32) {
    %c0_i32 = arith.constant 0 : i32
    %c0_i32_0 = arith.constant 0 : i32
    %c0_i32_1 = arith.constant 0 : i32
    return %arg0, %c0_i32, %c0_i32_0 : i32, i32, i32
  }
  func.func @transform_1(%arg0: i32, %arg1: i32) -> (i32, i32, i32) {
    %c0_i32 = arith.constant 0 : i32
    %c0_i32_0 = arith.constant 0 : i32
    return %arg0, %arg1, %c0_i32 : i32, i32, i32
  }
  func.func @transform_2(%arg0: i32, %arg1: i32) -> (i32, i32) {
    %c0_i32 = arith.constant 0 : i32
    %c0_i32_0 = arith.constant 0 : i32
    %c0_i32_1 = arith.constant 0 : i32
    return %c0_i32, %c0_i32_0 : i32, i32
  }
  func.func @transform_3(%arg0: i32, %arg1: i32) -> (i32, i32) {
    %c0_i32 = arith.constant 0 : i32
    %c0_i32_0 = arith.constant 0 : i32
    %c0_i32_1 = arith.constant 0 : i32
    return %c0_i32, %c0_i32_0 : i32, i32
  }
  func.func @transform_4(%arg0: i32, %arg1: i32) -> (i32, i32) {
    %c0_i32 = arith.constant 0 : i32
    %c0_i32_0 = arith.constant 0 : i32
    %c0_i32_1 = arith.constant 0 : i32
    return %c0_i32, %c0_i32_0 : i32, i32
  }
  func.func @transform_5(%arg0: i32, %arg1: i32) -> (i32, i32) {
    %c0_i32 = arith.constant 0 : i32
    %c0_i32_0 = arith.constant 0 : i32
    %c0_i32_1 = arith.constant 0 : i32
    return %c0_i32, %c0_i32_0 : i32, i32
  }
  func.func @transform_6(%arg0: i32, %arg1: i32) -> (i32, i32) {
    %c0_i32 = arith.constant 0 : i32
    %c0_i32_0 = arith.constant 0 : i32
    %c0_i32_1 = arith.constant 0 : i32
    return %c0_i32, %c0_i32_0 : i32, i32
  }
  func.func @transform_7(%arg0: i32, %arg1: i32) -> (i32, i32) {
    %c0_i32 = arith.constant 0 : i32
    %c0_i32_0 = arith.constant 0 : i32
    %c0_i32_1 = arith.constant 0 : i32
    return %c0_i32, %c0_i32_0 : i32, i32
  }
  func.func @transform_8(%arg0: i32, %arg1: i32) -> (i32, i32) {
    %c0_i32 = arith.constant 0 : i32
    %c0_i32_0 = arith.constant 0 : i32
    %c0_i32_1 = arith.constant 0 : i32
    return %c0_i32, %c0_i32_0 : i32, i32
  }
  func.func @transform_9(%arg0: i32, %arg1: i32) -> (i32, i32) {
    %c0_i32 = arith.constant 0 : i32
    %c0_i32_0 = arith.constant 0 : i32
    %c0_i32_1 = arith.constant 0 : i32
    return %c0_i32, %c0_i32_0 : i32, i32
  }
  func.func @transform_10(%arg0: i32, %arg1: i32) -> (i32, i32) {
    %c0_i32 = arith.constant 0 : i32
    %c0_i32_0 = arith.constant 0 : i32
    %c0_i32_1 = arith.constant 0 : i32
    return %c0_i32, %c0_i32_0 : i32, i32
  }
  func.func @transform_11(%arg0: i32, %arg1: i32) -> (i32, i32) {
    %c0_i32 = arith.constant 0 : i32
    %c0_i32_0 = arith.constant 0 : i32
    %c0_i32_1 = arith.constant 0 : i32
    return %c0_i32, %c0_i32_0 : i32, i32
  }
  func.func @transform_12(%arg0: i32, %arg1: i32) -> (i32, i32) {
    %c0_i32 = arith.constant 0 : i32
    %c0_i32_0 = arith.constant 0 : i32
    %c0_i32_1 = arith.constant 0 : i32
    return %c0_i32, %c0_i32_0 : i32, i32
  }
  func.func @transform_13(%arg0: i32, %arg1: i32) -> (i32, i32) {
    %c0_i32 = arith.constant 0 : i32
    %c0_i32_0 = arith.constant 0 : i32
    %c0_i32_1 = arith.constant 0 : i32
    return %c0_i32, %c0_i32_0 : i32, i32
  }
  func.func @transform_14(%arg0: i32, %arg1: i32) -> (i32, i32) {
    %c0_i32 = arith.constant 0 : i32
    %c0_i32_0 = arith.constant 0 : i32
    %c0_i32_1 = arith.constant 0 : i32
    return %c0_i32, %c0_i32_0 : i32, i32
  }
  func.func @transform_15(%arg0: i32, %arg1: i32) -> (i32, i32) {
    %c0_i32 = arith.constant 0 : i32
    %c0_i32_0 = arith.constant 0 : i32
    %c0_i32_1 = arith.constant 0 : i32
    return %c0_i32, %c0_i32_0 : i32, i32
  }
  func.func @transform_16(%arg0: i32, %arg1: i32) -> (i32, i32) {
    %c0_i32 = arith.constant 0 : i32
    %c0_i32_0 = arith.constant 0 : i32
    %c0_i32_1 = arith.constant 0 : i32
    return %c0_i32, %c0_i32_0 : i32, i32
  }
  func.func @transform_17(%arg0: i32, %arg1: i32) -> (i32, i32) {
    %c0_i32 = arith.constant 0 : i32
    %c0_i32_0 = arith.constant 0 : i32
    %c0_i32_1 = arith.constant 0 : i32
    return %c0_i32, %c0_i32_0 : i32, i32
  }
  func.func @transform_18(%arg0: i32, %arg1: i32) -> (i32, i32, i32) {
    %c0_i32 = arith.constant 0 : i32
    %c0_i32_0 = arith.constant 0 : i32
    return %arg0, %arg1, %c0_i32 : i32, i32, i32
  }
}

module attributes {stable_mosaic.version = 11 : i64} {
  func.func @kernel(%arg0: i32, %arg1: i32, %arg2: memref<1x8x32xf32, #tpu.memory_space<vmem>>, %arg3: memref<1x8x8xbf16, #tpu.memory_space<vmem>>, %arg4: memref<1x32xf32, #tpu.memory_space<vmem>>, %arg5: memref<1x32xf32, #tpu.memory_space<vmem>>, %arg6: memref<32x32xbf16, #tpu.memory_space<vmem>>, %arg7: memref<1x32xf32, #tpu.memory_space<vmem>>, %arg8: memref<32x32xbf16, #tpu.memory_space<vmem>>, %arg9: memref<1x32xf32, #tpu.memory_space<vmem>>, %arg10: memref<32x32xbf16, #tpu.memory_space<vmem>>, %arg11: memref<1x32xf32, #tpu.memory_space<vmem>>, %arg12: memref<32x32xbf16, #tpu.memory_space<vmem>>, %arg13: memref<1x32xf32, #tpu.memory_space<vmem>>, %arg14: memref<1x32xf32, #tpu.memory_space<vmem>>, %arg15: memref<1x32xf32, #tpu.memory_space<vmem>>, %arg16: memref<32x2048xbf16, #tpu.memory_space<vmem>>, %arg17: memref<1x2048xf32, #tpu.memory_space<vmem>>, %arg18: memref<2048x32xbf16, #tpu.memory_space<vmem>>, %arg19: memref<1x32xf32, #tpu.memory_space<vmem>>, %arg20: memref<1x8x32xf32, #tpu.memory_space<vmem>>, %arg21: memref<8x32xbf16, #tpu.memory_space<vmem>>, %arg22: memref<8x32xbf16, #tpu.memory_space<vmem>>, %arg23: memref<8x32xf32, #tpu.memory_space<vmem>>) attributes {dimension_semantics = [#tpu.dimension_semantics<parallel>, #tpu.dimension_semantics<arbitrary>], iteration_bounds = array<i64: 2, 1>, scalar_prefetch = 0 : i64, scratch_operands = 3 : i64, tpu.core_type = #tpu.core_type<tc>, window_params = [{transform_indices = @transform_0, window_bounds = array<i64: 1, 8, 32>}, {transform_indices = @transform_1, window_bounds = array<i64: 1, 8, 8>}, {pipeline_mode = #tpu.pipeline_mode<synchronous>, transform_indices = @transform_2, window_bounds = array<i64: 1, 32>}, {pipeline_mode = #tpu.pipeline_mode<synchronous>, transform_indices = @transform_3, window_bounds = array<i64: 1, 32>}, {pipeline_mode = #tpu.pipeline_mode<synchronous>, transform_indices = @transform_4, window_bounds = array<i64: 32, 32>}, {pipeline_mode = #tpu.pipeline_mode<synchronous>, transform_indices = @transform_5, window_bounds = array<i64: 1, 32>}, {pipeline_mode = #tpu.pipeline_mode<synchronous>, transform_indices = @transform_6, window_bounds = array<i64: 32, 32>}, {pipeline_mode = #tpu.pipeline_mode<synchronous>, transform_indices = @transform_7, window_bounds = array<i64: 1, 32>}, {pipeline_mode = #tpu.pipeline_mode<synchronous>, transform_indices = @transform_8, window_bounds = array<i64: 32, 32>}, {pipeline_mode = #tpu.pipeline_mode<synchronous>, transform_indices = @transform_9, window_bounds = array<i64: 1, 32>}, {pipeline_mode = #tpu.pipeline_mode<synchronous>, transform_indices = @transform_10, window_bounds = array<i64: 32, 32>}, {pipeline_mode = #tpu.pipeline_mode<synchronous>, transform_indices = @transform_11, window_bounds = array<i64: 1, 32>}, {pipeline_mode = #tpu.pipeline_mode<synchronous>, transform_indices = @transform_12, window_bounds = array<i64: 1, 32>}, {pipeline_mode = #tpu.pipeline_mode<synchronous>, transform_indices = @transform_13, window_bounds = array<i64: 1, 32>}, {pipeline_mode = #tpu.pipeline_mode<synchronous>, transform_indices = @transform_14, window_bounds = array<i64: 32, 2048>}, {pipeline_mode = #tpu.pipeline_mode<synchronous>, transform_indices = @transform_15, window_bounds = array<i64: 1, 2048>}, {pipeline_mode = #tpu.pipeline_mode<synchronous>, transform_indices = @transform_16, window_bounds = array<i64: 2048, 32>}, {pipeline_mode = #tpu.pipeline_mode<synchronous>, transform_indices = @transform_17, window_bounds = array<i64: 1, 32>}, {transform_indices = @transform_18, window_bounds = array<i64: 1, 8, 32>}]} {
    %c0_i32 = arith.constant 0 : i32
    %0 = arith.cmpi eq, %arg1, %c0_i32 : i32
    %1 = arith.extui %0 : i1 to i32
    %c0_i32_0 = arith.constant 0 : i32
    %2 = arith.cmpi ne, %1, %c0_i32_0 : i32
    scf.if %2 {
      %c0_86 = arith.constant 0 : index
      %c0_87 = arith.constant 0 : index
      %c0_88 = arith.constant 0 : index
      %162 = vector.load %arg2[%c0_86, %c0_87, %c0_88] : memref<1x8x32xf32, #tpu.memory_space<vmem>>, vector<1x8x32xf32>
      %163 = vector.shape_cast %162 : vector<1x8x32xf32> to vector<8x32xf32>
      %c0_89 = arith.constant 0 : index
      %c0_90 = arith.constant 0 : index
      %164 = vector.load %arg4[%c0_89, %c0_90] : memref<1x32xf32, #tpu.memory_space<vmem>>, vector<1x32xf32>
      %c0_91 = arith.constant 0 : index
      %c0_92 = arith.constant 0 : index
      %165 = vector.load %arg5[%c0_91, %c0_92] : memref<1x32xf32, #tpu.memory_space<vmem>>, vector<1x32xf32>
      %cst_93 = arith.constant dense<0.000000e+00> : vector<8xf32>
      %166 = vector.multi_reduction <add>, %163, %cst_93 [1] : vector<8x32xf32> to vector<8xf32>
      %167 = vector.shape_cast %166 : vector<8xf32> to vector<8x1xf32>
      %cst_94 = arith.constant 3.200000e+01 : f32
      %168 = vector.broadcast %cst_94 : f32 to vector<8x1xf32>
      %169 = arith.divf %167, %168 : vector<8x1xf32>
      %170 = vector.broadcast %169 : vector<8x1xf32> to vector<8x32xf32>
      %171 = arith.subf %163, %170 : vector<8x32xf32>
      %172 = arith.mulf %171, %171 : vector<8x32xf32>
      %cst_95 = arith.constant dense<0.000000e+00> : vector<8xf32>
      %173 = vector.multi_reduction <add>, %172, %cst_95 [1] : vector<8x32xf32> to vector<8xf32>
      %174 = vector.shape_cast %173 : vector<8xf32> to vector<8x1xf32>
      %cst_96 = arith.constant 0.0322580636 : f32
      %175 = vector.broadcast %cst_96 : f32 to vector<8x1xf32>
      %176 = arith.mulf %174, %175 : vector<8x1xf32>
      %177 = math.sqrt %176 : vector<8x1xf32>
      %cst_97 = arith.constant 9.99999997E-7 : f32
      %178 = vector.broadcast %cst_97 : f32 to vector<8x1xf32>
      %179 = arith.addf %177, %178 : vector<8x1xf32>
      %180 = tpu.reciprocal %179 : vector<8x1xf32> -> vector<8x1xf32>
      %181 = vector.broadcast %164 : vector<1x32xf32> to vector<8x32xf32>
      %182 = arith.mulf %181, %171 : vector<8x32xf32>
      %183 = vector.broadcast %180 : vector<8x1xf32> to vector<8x32xf32>
      %184 = arith.mulf %182, %183 : vector<8x32xf32>
      %185 = vector.broadcast %165 : vector<1x32xf32> to vector<8x32xf32>
      %186 = arith.addf %184, %185 : vector<8x32xf32>
      %187 = arith.truncf %186 : vector<8x32xf32> to vector<8x32xbf16>
      %c0_98 = arith.constant 0 : index
      %c0_99 = arith.constant 0 : index
      %188 = vector.load %arg8[%c0_98, %c0_99] : memref<32x32xbf16, #tpu.memory_space<vmem>>, vector<32x32xbf16>
      %cst_100 = arith.constant dense<0.000000e+00> : vector<8x32xf32>
      %189 = tpu.matmul %187, %188, %cst_100 {dimension_numbers = #tpu.dot_dimension_numbers<[1], [0], [0], [1], [0, 0, 1, 1], [], []>} : vector<8x32xbf16>, vector<32x32xbf16>, vector<8x32xf32> -> vector<8x32xf32>
      %c0_101 = arith.constant 0 : index
      %c0_102 = arith.constant 0 : index
      %190 = vector.load %arg9[%c0_101, %c0_102] : memref<1x32xf32, #tpu.memory_space<vmem>>, vector<1x32xf32>
      %191 = vector.broadcast %190 : vector<1x32xf32> to vector<8x32xf32>
      %192 = arith.addf %189, %191 : vector<8x32xf32>
      %193 = arith.truncf %192 : vector<8x32xf32> to vector<8x32xbf16>
      %c0_103 = arith.constant 0 : index
      %c0_104 = arith.constant 0 : index
      %194 = vector.load %arg21[%c0_103, %c0_104] : memref<8x32xbf16, #tpu.memory_space<vmem>>, vector<8x32xbf16>
      tpu.vector_store %arg21[%c0_103, %c0_104], %193 {strides = array<i32>} : memref<8x32xbf16, #tpu.memory_space<vmem>>, vector<8x32xbf16>,
      %c0_105 = arith.constant 0 : index
      %c0_106 = arith.constant 0 : index
      %195 = vector.load %arg10[%c0_105, %c0_106] : memref<32x32xbf16, #tpu.memory_space<vmem>>, vector<32x32xbf16>
      %cst_107 = arith.constant dense<0.000000e+00> : vector<8x32xf32>
      %196 = tpu.matmul %187, %195, %cst_107 {dimension_numbers = #tpu.dot_dimension_numbers<[1], [0], [0], [1], [0, 0, 1, 1], [], []>} : vector<8x32xbf16>, vector<32x32xbf16>, vector<8x32xf32> -> vector<8x32xf32>
      %c0_108 = arith.constant 0 : index
      %c0_109 = arith.constant 0 : index
      %197 = vector.load %arg11[%c0_108, %c0_109] : memref<1x32xf32, #tpu.memory_space<vmem>>, vector<1x32xf32>
      %198 = vector.broadcast %197 : vector<1x32xf32> to vector<8x32xf32>
      %199 = arith.addf %196, %198 : vector<8x32xf32>
      %200 = arith.truncf %199 : vector<8x32xf32> to vector<8x32xbf16>
      %c0_110 = arith.constant 0 : index
      %c0_111 = arith.constant 0 : index
      %201 = vector.load %arg22[%c0_110, %c0_111] : memref<8x32xbf16, #tpu.memory_space<vmem>>, vector<8x32xbf16>
      tpu.vector_store %arg22[%c0_110, %c0_111], %200 {strides = array<i32>} : memref<8x32xbf16, #tpu.memory_space<vmem>>, vector<8x32xbf16>,
    } else {
    }
    %c0 = arith.constant 0 : index
    %c0_1 = arith.constant 0 : index
    %c0_2 = arith.constant 0 : index
    %3 = vector.load %arg2[%c0, %c0_1, %c0_2] : memref<1x8x32xf32, #tpu.memory_space<vmem>>, vector<1x8x32xf32>
    %4 = vector.shape_cast %3 : vector<1x8x32xf32> to vector<8x32xf32>
    %c0_3 = arith.constant 0 : index
    %c0_4 = arith.constant 0 : index
    %c0_5 = arith.constant 0 : index
    %5 = vector.load %arg3[%c0_3, %c0_4, %c0_5] : memref<1x8x8xbf16, #tpu.memory_space<vmem>>, vector<1x8x8xbf16>
    %6 = vector.shape_cast %5 : vector<1x8x8xbf16> to vector<8x8xbf16>
    %7 = arith.extf %6 : vector<8x8xbf16> to vector<8x8xf32>
    %c0_6 = arith.constant 0 : index
    %c0_7 = arith.constant 0 : index
    %8 = vector.load %arg4[%c0_6, %c0_7] : memref<1x32xf32, #tpu.memory_space<vmem>>, vector<1x32xf32>
    %c0_8 = arith.constant 0 : index
    %c0_9 = arith.constant 0 : index
    %9 = vector.load %arg5[%c0_8, %c0_9] : memref<1x32xf32, #tpu.memory_space<vmem>>, vector<1x32xf32>
    %cst = arith.constant dense<0.000000e+00> : vector<8xf32>
    %10 = vector.multi_reduction <add>, %4, %cst [1] : vector<8x32xf32> to vector<8xf32>
    %11 = vector.shape_cast %10 : vector<8xf32> to vector<8x1xf32>
    %cst_10 = arith.constant 3.200000e+01 : f32
    %12 = vector.broadcast %cst_10 : f32 to vector<8x1xf32>
    %13 = arith.divf %11, %12 : vector<8x1xf32>
    %14 = vector.broadcast %13 : vector<8x1xf32> to vector<8x32xf32>
    %15 = arith.subf %4, %14 : vector<8x32xf32>
    %16 = arith.mulf %15, %15 : vector<8x32xf32>
    %cst_11 = arith.constant dense<0.000000e+00> : vector<8xf32>
    %17 = vector.multi_reduction <add>, %16, %cst_11 [1] : vector<8x32xf32> to vector<8xf32>
    %18 = vector.shape_cast %17 : vector<8xf32> to vector<8x1xf32>
    %cst_12 = arith.constant 0.0322580636 : f32
    %19 = vector.broadcast %cst_12 : f32 to vector<8x1xf32>
    %20 = arith.mulf %18, %19 : vector<8x1xf32>
    %21 = math.sqrt %20 : vector<8x1xf32>
    %cst_13 = arith.constant 9.99999997E-7 : f32
    %22 = vector.broadcast %cst_13 : f32 to vector<8x1xf32>
    %23 = arith.addf %21, %22 : vector<8x1xf32>
    %24 = tpu.reciprocal %23 : vector<8x1xf32> -> vector<8x1xf32>
    %25 = vector.broadcast %8 : vector<1x32xf32> to vector<8x32xf32>
    %26 = arith.mulf %25, %15 : vector<8x32xf32>
    %27 = vector.broadcast %24 : vector<8x1xf32> to vector<8x32xf32>
    %28 = arith.mulf %26, %27 : vector<8x32xf32>
    %29 = vector.broadcast %9 : vector<1x32xf32> to vector<8x32xf32>
    %30 = arith.addf %28, %29 : vector<8x32xf32>
    %31 = arith.truncf %30 : vector<8x32xf32> to vector<8x32xbf16>
    %c0_14 = arith.constant 0 : index
    %c0_15 = arith.constant 0 : index
    %32 = vector.load %arg6[%c0_14, %c0_15] : memref<32x32xbf16, #tpu.memory_space<vmem>>, vector<32x32xbf16>
    %cst_16 = arith.constant dense<0.000000e+00> : vector<8x32xf32>
    %33 = tpu.matmul %31, %32, %cst_16 {dimension_numbers = #tpu.dot_dimension_numbers<[1], [0], [0], [1], [0, 0, 1, 1], [], []>} : vector<8x32xbf16>, vector<32x32xbf16>, vector<8x32xf32> -> vector<8x32xf32>
    %c0_17 = arith.constant 0 : index
    %c0_18 = arith.constant 0 : index
    %34 = vector.load %arg7[%c0_17, %c0_18] : memref<1x32xf32, #tpu.memory_space<vmem>>, vector<1x32xf32>
    %35 = vector.broadcast %34 : vector<1x32xf32> to vector<8x32xf32>
    %36 = arith.addf %33, %35 : vector<8x32xf32>
    %37 = vector.extract_strided_slice %36 {offsets = [0, 0], sizes = [8, 8], strides = [1, 1]} : vector<8x32xf32> to vector<8x8xf32>
    %38 = arith.truncf %37 : vector<8x8xf32> to vector<8x8xbf16>
    %c0_19 = arith.constant 0 : index
    %c0_20 = arith.constant 0 : index
    %39 = vector.load %arg21[%c0_19, %c0_20] : memref<8x32xbf16, #tpu.memory_space<vmem>>, vector<8x8xbf16>
    %cst_21 = arith.constant dense<0.000000e+00> : vector<8x8xf32>
    %40 = tpu.matmul %38, %39, %cst_21 {dimension_numbers = #tpu.dot_dimension_numbers<[1], [1], [0], [0], [0, 0, 1, 0], [], []>} : vector<8x8xbf16>, vector<8x8xbf16>, vector<8x8xf32> -> vector<8x8xf32>
    %41 = arith.addf %40, %7 : vector<8x8xf32>
    %cst_22 = arith.constant dense<0xFF800000> : vector<8xf32>
    %42 = vector.multi_reduction <maximumf>, %41, %cst_22 [1] : vector<8x8xf32> to vector<8xf32>
    %43 = vector.shape_cast %42 : vector<8xf32> to vector<8x1xf32>
    %44 = vector.broadcast %43 : vector<8x1xf32> to vector<8x8xf32>
    %45 = arith.subf %41, %44 : vector<8x8xf32>
    %46 = math.exp %45 : vector<8x8xf32>
    %cst_23 = arith.constant dense<0.000000e+00> : vector<8xf32>
    %47 = vector.multi_reduction <add>, %46, %cst_23 [1] : vector<8x8xf32> to vector<8xf32>
    %48 = vector.shape_cast %47 : vector<8xf32> to vector<8x1xf32>
    %49 = tpu.reciprocal %48 {approx = true} : vector<8x1xf32> -> vector<8x1xf32>
    %50 = vector.broadcast %49 : vector<8x1xf32> to vector<8x8xf32>
    %51 = arith.mulf %46, %50 : vector<8x8xf32>
    %52 = arith.truncf %51 : vector<8x8xf32> to vector<8x8xbf16>
    %c0_24 = arith.constant 0 : index
    %c0_25 = arith.constant 0 : index
    %53 = vector.load %arg22[%c0_24, %c0_25] : memref<8x32xbf16, #tpu.memory_space<vmem>>, vector<8x8xbf16>
    %cst_26 = arith.constant dense<0.000000e+00> : vector<8x8xf32>
    %54 = tpu.matmul %52, %53, %cst_26 {dimension_numbers = #tpu.dot_dimension_numbers<[1], [0], [0], [1], [0, 0, 1, 1], [], []>} : vector<8x8xbf16>, vector<8x8xbf16>, vector<8x8xf32> -> vector<8x8xf32>
    %c0_27 = arith.constant 0 : index
    %c0_28 = arith.constant 0 : index
    %55 = vector.load %arg23[%c0_27, %c0_28] : memref<8x32xf32, #tpu.memory_space<vmem>>, vector<8x8xf32>
    tpu.vector_store %arg23[%c0_27, %c0_28], %54 {strides = array<i32>} : memref<8x32xf32, #tpu.memory_space<vmem>>, vector<8x8xf32>,
    %56 = vector.extract_strided_slice %36 {offsets = [0, 8], sizes = [8, 8], strides = [1, 1]} : vector<8x32xf32> to vector<8x8xf32>
    %57 = arith.truncf %56 : vector<8x8xf32> to vector<8x8xbf16>
    %c0_29 = arith.constant 0 : index
    %c8 = arith.constant 8 : index
    %58 = vector.load %arg21[%c0_29, %c8] : memref<8x32xbf16, #tpu.memory_space<vmem>>, vector<8x8xbf16>
    %cst_30 = arith.constant dense<0.000000e+00> : vector<8x8xf32>
    %59 = tpu.matmul %57, %58, %cst_30 {dimension_numbers = #tpu.dot_dimension_numbers<[1], [1], [0], [0], [0, 0, 1, 0], [], []>} : vector<8x8xbf16>, vector<8x8xbf16>, vector<8x8xf32> -> vector<8x8xf32>
    %60 = arith.addf %59, %7 : vector<8x8xf32>
    %cst_31 = arith.constant dense<0xFF800000> : vector<8xf32>
    %61 = vector.multi_reduction <maximumf>, %60, %cst_31 [1] : vector<8x8xf32> to vector<8xf32>
    %62 = vector.shape_cast %61 : vector<8xf32> to vector<8x1xf32>
    %63 = vector.broadcast %62 : vector<8x1xf32> to vector<8x8xf32>
    %64 = arith.subf %60, %63 : vector<8x8xf32>
    %65 = math.exp %64 : vector<8x8xf32>
    %cst_32 = arith.constant dense<0.000000e+00> : vector<8xf32>
    %66 = vector.multi_reduction <add>, %65, %cst_32 [1] : vector<8x8xf32> to vector<8xf32>
    %67 = vector.shape_cast %66 : vector<8xf32> to vector<8x1xf32>
    %68 = tpu.reciprocal %67 {approx = true} : vector<8x1xf32> -> vector<8x1xf32>
    %69 = vector.broadcast %68 : vector<8x1xf32> to vector<8x8xf32>
    %70 = arith.mulf %65, %69 : vector<8x8xf32>
    %71 = arith.truncf %70 : vector<8x8xf32> to vector<8x8xbf16>
    %c0_33 = arith.constant 0 : index
    %c8_34 = arith.constant 8 : index
    %72 = vector.load %arg22[%c0_33, %c8_34] : memref<8x32xbf16, #tpu.memory_space<vmem>>, vector<8x8xbf16>
    %cst_35 = arith.constant dense<0.000000e+00> : vector<8x8xf32>
    %73 = tpu.matmul %71, %72, %cst_35 {dimension_numbers = #tpu.dot_dimension_numbers<[1], [0], [0], [1], [0, 0, 1, 1], [], []>} : vector<8x8xbf16>, vector<8x8xbf16>, vector<8x8xf32> -> vector<8x8xf32>
    %c0_36 = arith.constant 0 : index
    %c8_37 = arith.constant 8 : index
    %74 = vector.load %arg23[%c0_36, %c8_37] : memref<8x32xf32, #tpu.memory_space<vmem>>, vector<8x8xf32>
    tpu.vector_store %arg23[%c0_36, %c8_37], %73 {strides = array<i32>} : memref<8x32xf32, #tpu.memory_space<vmem>>, vector<8x8xf32>,
    %75 = vector.extract_strided_slice %36 {offsets = [0, 16], sizes = [8, 8], strides = [1, 1]} : vector<8x32xf32> to vector<8x8xf32>
    %76 = arith.truncf %75 : vector<8x8xf32> to vector<8x8xbf16>
    %c0_38 = arith.constant 0 : index
    %c16 = arith.constant 16 : index
    %77 = vector.load %arg21[%c0_38, %c16] : memref<8x32xbf16, #tpu.memory_space<vmem>>, vector<8x8xbf16>
    %cst_39 = arith.constant dense<0.000000e+00> : vector<8x8xf32>
    %78 = tpu.matmul %76, %77, %cst_39 {dimension_numbers = #tpu.dot_dimension_numbers<[1], [1], [0], [0], [0, 0, 1, 0], [], []>} : vector<8x8xbf16>, vector<8x8xbf16>, vector<8x8xf32> -> vector<8x8xf32>
    %79 = arith.addf %78, %7 : vector<8x8xf32>
    %cst_40 = arith.constant dense<0xFF800000> : vector<8xf32>
    %80 = vector.multi_reduction <maximumf>, %79, %cst_40 [1] : vector<8x8xf32> to vector<8xf32>
    %81 = vector.shape_cast %80 : vector<8xf32> to vector<8x1xf32>
    %82 = vector.broadcast %81 : vector<8x1xf32> to vector<8x8xf32>
    %83 = arith.subf %79, %82 : vector<8x8xf32>
    %84 = math.exp %83 : vector<8x8xf32>
    %cst_41 = arith.constant dense<0.000000e+00> : vector<8xf32>
    %85 = vector.multi_reduction <add>, %84, %cst_41 [1] : vector<8x8xf32> to vector<8xf32>
    %86 = vector.shape_cast %85 : vector<8xf32> to vector<8x1xf32>
    %87 = tpu.reciprocal %86 {approx = true} : vector<8x1xf32> -> vector<8x1xf32>
    %88 = vector.broadcast %87 : vector<8x1xf32> to vector<8x8xf32>
    %89 = arith.mulf %84, %88 : vector<8x8xf32>
    %90 = arith.truncf %89 : vector<8x8xf32> to vector<8x8xbf16>
    %c0_42 = arith.constant 0 : index
    %c16_43 = arith.constant 16 : index
    %91 = vector.load %arg22[%c0_42, %c16_43] : memref<8x32xbf16, #tpu.memory_space<vmem>>, vector<8x8xbf16>
    %cst_44 = arith.constant dense<0.000000e+00> : vector<8x8xf32>
    %92 = tpu.matmul %90, %91, %cst_44 {dimension_numbers = #tpu.dot_dimension_numbers<[1], [0], [0], [1], [0, 0, 1, 1], [], []>} : vector<8x8xbf16>, vector<8x8xbf16>, vector<8x8xf32> -> vector<8x8xf32>
    %c0_45 = arith.constant 0 : index
    %c16_46 = arith.constant 16 : index
    %93 = vector.load %arg23[%c0_45, %c16_46] : memref<8x32xf32, #tpu.memory_space<vmem>>, vector<8x8xf32>
    tpu.vector_store %arg23[%c0_45, %c16_46], %92 {strides = array<i32>} : memref<8x32xf32, #tpu.memory_space<vmem>>, vector<8x8xf32>,
    %94 = vector.extract_strided_slice %36 {offsets = [0, 24], sizes = [8, 8], strides = [1, 1]} : vector<8x32xf32> to vector<8x8xf32>
    %95 = arith.truncf %94 : vector<8x8xf32> to vector<8x8xbf16>
    %c0_47 = arith.constant 0 : index
    %c24 = arith.constant 24 : index
    %96 = vector.load %arg21[%c0_47, %c24] : memref<8x32xbf16, #tpu.memory_space<vmem>>, vector<8x8xbf16>
    %cst_48 = arith.constant dense<0.000000e+00> : vector<8x8xf32>
    %97 = tpu.matmul %95, %96, %cst_48 {dimension_numbers = #tpu.dot_dimension_numbers<[1], [1], [0], [0], [0, 0, 1, 0], [], []>} : vector<8x8xbf16>, vector<8x8xbf16>, vector<8x8xf32> -> vector<8x8xf32>
    %98 = arith.addf %97, %7 : vector<8x8xf32>
    %cst_49 = arith.constant dense<0xFF800000> : vector<8xf32>
    %99 = vector.multi_reduction <maximumf>, %98, %cst_49 [1] : vector<8x8xf32> to vector<8xf32>
    %100 = vector.shape_cast %99 : vector<8xf32> to vector<8x1xf32>
    %101 = vector.broadcast %100 : vector<8x1xf32> to vector<8x8xf32>
    %102 = arith.subf %98, %101 : vector<8x8xf32>
    %103 = math.exp %102 : vector<8x8xf32>
    %cst_50 = arith.constant dense<0.000000e+00> : vector<8xf32>
    %104 = vector.multi_reduction <add>, %103, %cst_50 [1] : vector<8x8xf32> to vector<8xf32>
    %105 = vector.shape_cast %104 : vector<8xf32> to vector<8x1xf32>
    %106 = tpu.reciprocal %105 {approx = true} : vector<8x1xf32> -> vector<8x1xf32>
    %107 = vector.broadcast %106 : vector<8x1xf32> to vector<8x8xf32>
    %108 = arith.mulf %103, %107 : vector<8x8xf32>
    %109 = arith.truncf %108 : vector<8x8xf32> to vector<8x8xbf16>
    %c0_51 = arith.constant 0 : index
    %c24_52 = arith.constant 24 : index
    %110 = vector.load %arg22[%c0_51, %c24_52] : memref<8x32xbf16, #tpu.memory_space<vmem>>, vector<8x8xbf16>
    %cst_53 = arith.constant dense<0.000000e+00> : vector<8x8xf32>
    %111 = tpu.matmul %109, %110, %cst_53 {dimension_numbers = #tpu.dot_dimension_numbers<[1], [0], [0], [1], [0, 0, 1, 1], [], []>} : vector<8x8xbf16>, vector<8x8xbf16>, vector<8x8xf32> -> vector<8x8xf32>
    %c0_54 = arith.constant 0 : index
    %c24_55 = arith.constant 24 : index
    %112 = vector.load %arg23[%c0_54, %c24_55] : memref<8x32xf32, #tpu.memory_space<vmem>>, vector<8x8xf32>
    tpu.vector_store %arg23[%c0_54, %c24_55], %111 {strides = array<i32>} : memref<8x32xf32, #tpu.memory_space<vmem>>, vector<8x8xf32>,
    %c0_56 = arith.constant 0 : index
    %c0_57 = arith.constant 0 : index
    %113 = vector.load %arg23[%c0_56, %c0_57] : memref<8x32xf32, #tpu.memory_space<vmem>>, vector<8x32xf32>
    %114 = arith.truncf %113 : vector<8x32xf32> to vector<8x32xbf16>
    %c0_58 = arith.constant 0 : index
    %c0_59 = arith.constant 0 : index
    %115 = vector.load %arg12[%c0_58, %c0_59] : memref<32x32xbf16, #tpu.memory_space<vmem>>, vector<32x32xbf16>
    %cst_60 = arith.constant dense<0.000000e+00> : vector<8x32xf32>
    %116 = tpu.matmul %114, %115, %cst_60 {dimension_numbers = #tpu.dot_dimension_numbers<[1], [0], [0], [1], [0, 0, 1, 1], [], []>} : vector<8x32xbf16>, vector<32x32xbf16>, vector<8x32xf32> -> vector<8x32xf32>
    %c0_61 = arith.constant 0 : index
    %c0_62 = arith.constant 0 : index
    %117 = vector.load %arg13[%c0_61, %c0_62] : memref<1x32xf32, #tpu.memory_space<vmem>>, vector<1x32xf32>
    %118 = vector.broadcast %117 : vector<1x32xf32> to vector<8x32xf32>
    %119 = arith.addf %116, %118 : vector<8x32xf32>
    %120 = arith.addf %4, %119 : vector<8x32xf32>
    %c0_63 = arith.constant 0 : index
    %c0_64 = arith.constant 0 : index
    %121 = vector.load %arg14[%c0_63, %c0_64] : memref<1x32xf32, #tpu.memory_space<vmem>>, vector<1x32xf32>
    %c0_65 = arith.constant 0 : index
    %c0_66 = arith.constant 0 : index
    %122 = vector.load %arg15[%c0_65, %c0_66] : memref<1x32xf32, #tpu.memory_space<vmem>>, vector<1x32xf32>
    %cst_67 = arith.constant dense<0.000000e+00> : vector<8xf32>
    %123 = vector.multi_reduction <add>, %120, %cst_67 [1] : vector<8x32xf32> to vector<8xf32>
    %124 = vector.shape_cast %123 : vector<8xf32> to vector<8x1xf32>
    %cst_68 = arith.constant 3.200000e+01 : f32
    %125 = vector.broadcast %cst_68 : f32 to vector<8x1xf32>
    %126 = arith.divf %124, %125 : vector<8x1xf32>
    %127 = vector.broadcast %126 : vector<8x1xf32> to vector<8x32xf32>
    %128 = arith.subf %120, %127 : vector<8x32xf32>
    %129 = arith.mulf %128, %128 : vector<8x32xf32>
    %cst_69 = arith.constant dense<0.000000e+00> : vector<8xf32>
    %130 = vector.multi_reduction <add>, %129, %cst_69 [1] : vector<8x32xf32> to vector<8xf32>
    %131 = vector.shape_cast %130 : vector<8xf32> to vector<8x1xf32>
    %cst_70 = arith.constant 0.0322580636 : f32
    %132 = vector.broadcast %cst_70 : f32 to vector<8x1xf32>
    %133 = arith.mulf %131, %132 : vector<8x1xf32>
    %134 = math.sqrt %133 : vector<8x1xf32>
    %cst_71 = arith.constant 9.99999997E-7 : f32
    %135 = vector.broadcast %cst_71 : f32 to vector<8x1xf32>
    %136 = arith.addf %134, %135 : vector<8x1xf32>
    %137 = tpu.reciprocal %136 : vector<8x1xf32> -> vector<8x1xf32>
    %138 = vector.broadcast %121 : vector<1x32xf32> to vector<8x32xf32>
    %139 = arith.mulf %138, %128 : vector<8x32xf32>
    %140 = vector.broadcast %137 : vector<8x1xf32> to vector<8x32xf32>
    %141 = arith.mulf %139, %140 : vector<8x32xf32>
    %142 = vector.broadcast %122 : vector<1x32xf32> to vector<8x32xf32>
    %143 = arith.addf %141, %142 : vector<8x32xf32>
    %144 = arith.truncf %143 : vector<8x32xf32> to vector<8x32xbf16>
    %c0_72 = arith.constant 0 : index
    %c0_73 = arith.constant 0 : index
    %145 = vector.load %arg16[%c0_72, %c0_73] : memref<32x2048xbf16, #tpu.memory_space<vmem>>, vector<32x2048xbf16>
    %cst_74 = arith.constant dense<0.000000e+00> : vector<8x2048xf32>
    %146 = tpu.matmul %144, %145, %cst_74 {dimension_numbers = #tpu.dot_dimension_numbers<[1], [0], [0], [1], [0, 0, 1, 1], [], []>} : vector<8x32xbf16>, vector<32x2048xbf16>, vector<8x2048xf32> -> vector<8x2048xf32>
    %c0_75 = arith.constant 0 : index
    %c0_76 = arith.constant 0 : index
    %147 = vector.load %arg17[%c0_75, %c0_76] : memref<1x2048xf32, #tpu.memory_space<vmem>>, vector<1x2048xf32>
    %148 = vector.broadcast %147 : vector<1x2048xf32> to vector<8x2048xf32>
    %149 = arith.addf %146, %148 : vector<8x2048xf32>
    %cst_77 = arith.constant 0.000000e+00 : f32
    %150 = vector.broadcast %cst_77 : f32 to vector<8x2048xf32>
    %151 = arith.maximumf %149, %150 : vector<8x2048xf32>
    %152 = arith.truncf %151 : vector<8x2048xf32> to vector<8x2048xbf16>
    %c0_78 = arith.constant 0 : index
    %c0_79 = arith.constant 0 : index
    %153 = vector.load %arg18[%c0_78, %c0_79] : memref<2048x32xbf16, #tpu.memory_space<vmem>>, vector<2048x32xbf16>
    %cst_80 = arith.constant dense<0.000000e+00> : vector<8x32xf32>
    %154 = tpu.matmul %152, %153, %cst_80 {dimension_numbers = #tpu.dot_dimension_numbers<[1], [0], [0], [1], [0, 0, 1, 1], [], []>} : vector<8x2048xbf16>, vector<2048x32xbf16>, vector<8x32xf32> -> vector<8x32xf32>
    %c0_81 = arith.constant 0 : index
    %c0_82 = arith.constant 0 : index
    %155 = vector.load %arg19[%c0_81, %c0_82] : memref<1x32xf32, #tpu.memory_space<vmem>>, vector<1x32xf32>
    %156 = vector.broadcast %155 : vector<1x32xf32> to vector<8x32xf32>
    %157 = arith.addf %154, %156 : vector<8x32xf32>
    %158 = arith.addf %120, %157 : vector<8x32xf32>
    %c0_83 = arith.constant 0 : index
    %c0_84 = arith.constant 0 : index
    %c0_85 = arith.constant 0 : index
    %159 = vector.load %arg20[%c0_83, %c0_84, %c0_85] : memref<1x8x32xf32, #tpu.memory_space<vmem>>, vector<1x8x32xf32>
    %160 = vector.shape_cast %159 : vector<1x8x32xf32> to vector<8x32xf32>
    %161 = vector.shape_cast %158 : vector<8x32xf32> to vector<1x8x32xf32>
    tpu.vector_store %arg20[%c0_83, %c0_84, %c0_85], %161 {strides = array<i32>} : memref<1x8x32xf32, #tpu.memory_space<vmem>>, vector<1x8x32xf32>,
    return
  }
  func.func @transform_0(%arg0: i32, %arg1: i32) -> (i32, i32, i32) {
    %c0_i32 = arith.constant 0 : i32
    %c0_i32_0 = arith.constant 0 : i32
    %c0_i32_1 = arith.constant 0 : i32
    return %arg0, %c0_i32, %c0_i32_0 : i32, i32, i32
  }
  func.func @transform_1(%arg0: i32, %arg1: i32) -> (i32, i32, i32) {
    %c0_i32 = arith.constant 0 : i32
    %c0_i32_0 = arith.constant 0 : i32
    return %arg0, %arg1, %c0_i32 : i32, i32, i32
  }
  func.func @transform_2(%arg0: i32, %arg1: i32) -> (i32, i32) {
    %c0_i32 = arith.constant 0 : i32
    %c0_i32_0 = arith.constant 0 : i32
    %c0_i32_1 = arith.constant 0 : i32
    return %c0_i32, %c0_i32_0 : i32, i32
  }
  func.func @transform_3(%arg0: i32, %arg1: i32) -> (i32, i32) {
    %c0_i32 = arith.constant 0 : i32
    %c0_i32_0 = arith.constant 0 : i32
    %c0_i32_1 = arith.constant 0 : i32
    return %c0_i32, %c0_i32_0 : i32, i32
  }
  func.func @transform_4(%arg0: i32, %arg1: i32) -> (i32, i32) {
    %c0_i32 = arith.constant 0 : i32
    %c0_i32_0 = arith.constant 0 : i32
    %c0_i32_1 = arith.constant 0 : i32
    return %c0_i32, %c0_i32_0 : i32, i32
  }
  func.func @transform_5(%arg0: i32, %arg1: i32) -> (i32, i32) {
    %c0_i32 = arith.constant 0 : i32
    %c0_i32_0 = arith.constant 0 : i32
    %c0_i32_1 = arith.constant 0 : i32
    return %c0_i32, %c0_i32_0 : i32, i32
  }
  func.func @transform_6(%arg0: i32, %arg1: i32) -> (i32, i32) {
    %c0_i32 = arith.constant 0 : i32
    %c0_i32_0 = arith.constant 0 : i32
    %c0_i32_1 = arith.constant 0 : i32
    return %c0_i32, %c0_i32_0 : i32, i32
  }
  func.func @transform_7(%arg0: i32, %arg1: i32) -> (i32, i32) {
    %c0_i32 = arith.constant 0 : i32
    %c0_i32_0 = arith.constant 0 : i32
    %c0_i32_1 = arith.constant 0 : i32
    return %c0_i32, %c0_i32_0 : i32, i32
  }
  func.func @transform_8(%arg0: i32, %arg1: i32) -> (i32, i32) {
    %c0_i32 = arith.constant 0 : i32
    %c0_i32_0 = arith.constant 0 : i32
    %c0_i32_1 = arith.constant 0 : i32
    return %c0_i32, %c0_i32_0 : i32, i32
  }
  func.func @transform_9(%arg0: i32, %arg1: i32) -> (i32, i32) {
    %c0_i32 = arith.constant 0 : i32
    %c0_i32_0 = arith.constant 0 : i32
    %c0_i32_1 = arith.constant 0 : i32
    return %c0_i32, %c0_i32_0 : i32, i32
  }
  func.func @transform_10(%arg0: i32, %arg1: i32) -> (i32, i32) {
    %c0_i32 = arith.constant 0 : i32
    %c0_i32_0 = arith.constant 0 : i32
    %c0_i32_1 = arith.constant 0 : i32
    return %c0_i32, %c0_i32_0 : i32, i32
  }
  func.func @transform_11(%arg0: i32, %arg1: i32) -> (i32, i32) {
    %c0_i32 = arith.constant 0 : i32
    %c0_i32_0 = arith.constant 0 : i32
    %c0_i32_1 = arith.constant 0 : i32
    return %c0_i32, %c0_i32_0 : i32, i32
  }
  func.func @transform_12(%arg0: i32, %arg1: i32) -> (i32, i32) {
    %c0_i32 = arith.constant 0 : i32
    %c0_i32_0 = arith.constant 0 : i32
    %c0_i32_1 = arith.constant 0 : i32
    return %c0_i32, %c0_i32_0 : i32, i32
  }
  func.func @transform_13(%arg0: i32, %arg1: i32) -> (i32, i32) {
    %c0_i32 = arith.constant 0 : i32
    %c0_i32_0 = arith.constant 0 : i32
    %c0_i32_1 = arith.constant 0 : i32
    return %c0_i32, %c0_i32_0 : i32, i32
  }
  func.func @transform_14(%arg0: i32, %arg1: i32) -> (i32, i32) {
    %c0_i32 = arith.constant 0 : i32
    %c0_i32_0 = arith.constant 0 : i32
    %c0_i32_1 = arith.constant 0 : i32
    return %c0_i32, %c0_i32_0 : i32, i32
  }
  func.func @transform_15(%arg0: i32, %arg1: i32) -> (i32, i32) {
    %c0_i32 = arith.constant 0 : i32
    %c0_i32_0 = arith.constant 0 : i32
    %c0_i32_1 = arith.constant 0 : i32
    return %c0_i32, %c0_i32_0 : i32, i32
  }
  func.func @transform_16(%arg0: i32, %arg1: i32) -> (i32, i32) {
    %c0_i32 = arith.constant 0 : i32
    %c0_i32_0 = arith.constant 0 : i32
    %c0_i32_1 = arith.constant 0 : i32
    return %c0_i32, %c0_i32_0 : i32, i32
  }
  func.func @transform_17(%arg0: i32, %arg1: i32) -> (i32, i32) {
    %c0_i32 = arith.constant 0 : i32
    %c0_i32_0 = arith.constant 0 : i32
    %c0_i32_1 = arith.constant 0 : i32
    return %c0_i32, %c0_i32_0 : i32, i32
  }
  func.func @transform_18(%arg0: i32, %arg1: i32) -> (i32, i32, i32) {
    %c0_i32 = arith.constant 0 : i32
    %c0_i32_0 = arith.constant 0 : i32
    return %arg0, %arg1, %c0_i32 : i32, i32, i32
  }
}

</mosaic_0001>

<llo_original>
// kernel: tpu_custom_call.1
$region0: #{tpu_custom_call.1}
  #allocation0 [shape = 'u32[]', space=smem, size = 0x4, offset = 0x4, fixed_abs, tag = 'smem constant byte address 0x4 - core index']
  #allocation1 [shape = 'u32[144,128]{1,0:T(1,128)}', space=vmem, size = 0x12000, scoped, tag = 'internal scratch']
  #allocation2 [shape = 'bf16[8,32]{1,0:T(8,128)(2,1)}', space=vmem, size = 0x800, scoped, tag = 'scratch operand']
  #allocation3 [shape = 'bf16[8,32]{1,0:T(8,128)(2,1)}', space=vmem, size = 0x800, scoped, tag = 'scratch operand']
  #allocation4 [shape = 'f32[8,32]{1,0:T(8,128)}', space=vmem, size = 0x1000, scoped, tag = 'scratch operand']
  %s0 = inlined_call_operand.vmem [shape: f32[2,8,32], index: 0, kind: input, shape index: {}]
  %s1 = inlined_call_operand.vmem [shape: bf16[2,8,8], index: 1, kind: input, shape index: {}]
  %s2 = inlined_call_operand.vmem [shape: f32[1,32], index: 2, kind: input, shape index: {}]
  %s3 = inlined_call_operand.vmem [shape: f32[1,32], index: 3, kind: input, shape index: {}]
  %s4 = inlined_call_operand.vmem [shape: bf16[32,32], index: 4, kind: input, shape index: {}]
  %s5 = inlined_call_operand.vmem [shape: f32[1,32], index: 5, kind: input, shape index: {}]
  %s6 = inlined_call_operand.vmem [shape: bf16[32,32], index: 6, kind: input, shape index: {}]
  %s7 = inlined_call_operand.vmem [shape: f32[1,32], index: 7, kind: input, shape index: {}]
  %s8 = inlined_call_operand.vmem [shape: bf16[32,32], index: 8, kind: input, shape index: {}]
  %s9 = inlined_call_operand.vmem [shape: f32[1,32], index: 9, kind: input, shape index: {}]
  %s10 = inlined_call_operand.vmem [shape: bf16[32,32], index: 10, kind: input, shape index: {}]
  %s11 = inlined_call_operand.vmem [shape: f32[1,32], index: 11, kind: input, shape index: {}]
  %s12 = inlined_call_operand.vmem [shape: f32[1,32], index: 12, kind: input, shape index: {}]
  %s13 = inlined_call_operand.vmem [shape: f32[1,32], index: 13, kind: input, shape index: {}]
  %s14 = inlined_call_operand.vmem [shape: bf16[32,2048], index: 14, kind: input, shape index: {}]
  %s15 = inlined_call_operand.vmem [shape: f32[1,2048], index: 15, kind: input, shape index: {}]
  %s16 = inlined_call_operand.vmem [shape: bf16[2048,32], index: 16, kind: input, shape index: {}]
  %s17 = inlined_call_operand.vmem [shape: f32[1,32], index: 17, kind: input, shape index: {}]
  %s18 = inlined_call_operand.hbm [shape: f32[2,8,32], index: 18, kind: output, shape index: {}]
  %s19 = sld [smem:[#allocation0]]
  $region109: #{tpu_custom_call.1} parent=0
    _
  %s21 = ssub.s32 1, %s19
  %s22 = scalar_select 0, %s21, %s19
  $region1: #{tpu_custom_call.1} parent=0
    #allocation5 [shape = 'u8[8192]{0}', space=vmem, size = 0x2000, scoped, tag = 'output window, operand 0']
    #allocation6 [shape = 's32[2]{0}', space=sflag, size = 0x8, scoped, tag = 'scoped memory for tpu_custom_call.1']
    %23 = vsyncpa [#allocation6], 0
    %s24 = scalar_lea.sflag [#allocation6], 1
    %25 = vsyncpa %s24, 0
    loop: start=0, step=1, limit=4
    $region2: #{tpu_custom_call.1} parent=1 // loop_pre_header
      _
    $region3: #{tpu_custom_call.1} parent=1 // loop_header
      %s27 = sphi 0, %s31
      %p28 = scmp.ge.s32.totalorder %s27, 4
      %s34 = sphi 0, %s46
      %s35 = sphi 0, %s42
      %s36 = sphi 0, %s34
      %s37 = sphi 0, %s35
      %s38 = sphi 0, %s36
      %s39 = sphi 0, %s37
      %s49 = sphi 0, %s51
      %s52 = sphi 0, %s49
      %s53 = sphi 0, %s52
      %s69 = sphi 0, %s53
      %s77 = sphi 0, %s79
      %s80 = sphi 0, %s77
      %s81 = sphi 0, %s80
      %s97 = sphi 0, %s81
      %s101 = sphi 0, %s101
      %s103 = sphi 0, %s101
      %s104 = sphi 0, %s103
      %s118 = sphi 0, %s104
      %s122 = sphi 0, %s122
      %s124 = sphi 0, %s122
      %s125 = sphi 0, %s124
      %s139 = sphi 0, %s125
      %s143 = sphi 0, %s143
      %s145 = sphi 0, %s143
      %s146 = sphi 0, %s145
      %s160 = sphi 0, %s146
      %s164 = sphi 0, %s164
      %s166 = sphi 0, %s164
      %s167 = sphi 0, %s166
      %s181 = sphi 0, %s167
      %s185 = sphi 0, %s185
      %s187 = sphi 0, %s185
      %s188 = sphi 0, %s187
      %s202 = sphi 0, %s188
      %s206 = sphi 0, %s206
      %s208 = sphi 0, %s206
      %s209 = sphi 0, %s208
      %s223 = sphi 0, %s209
      %s227 = sphi 0, %s227
      %s229 = sphi 0, %s227
      %s230 = sphi 0, %s229
      %s244 = sphi 0, %s230
      %s248 = sphi 0, %s248
      %s250 = sphi 0, %s248
      %s251 = sphi 0, %s250
      %s265 = sphi 0, %s251
      %s269 = sphi 0, %s269
      %s271 = sphi 0, %s269
      %s272 = sphi 0, %s271
      %s286 = sphi 0, %s272
      %s290 = sphi 0, %s290
      %s292 = sphi 0, %s290
      %s293 = sphi 0, %s292
      %s307 = sphi 0, %s293
      %s311 = sphi 0, %s311
      %s313 = sphi 0, %s311
      %s314 = sphi 0, %s313
      %s328 = sphi 0, %s314
      %s332 = sphi 0, %s332
      %s334 = sphi 0, %s332
      %s335 = sphi 0, %s334
      %s349 = sphi 0, %s335
      %s353 = sphi 0, %s353
      %s355 = sphi 0, %s353
      %s356 = sphi 0, %s355
      %s370 = sphi 0, %s356
      %s374 = sphi 0, %s374
      %s376 = sphi 0, %s374
      %s377 = sphi 0, %s376
      %s391 = sphi 0, %s377
      %s395 = sphi 0, %s395
      %s397 = sphi 0, %s395
      %s398 = sphi 0, %s397
      %s412 = sphi 0, %s398
      %s416 = sphi 0, %s416
      %s418 = sphi 0, %s416
      %s419 = sphi 0, %s418
      %s433 = sphi 0, %s419
      %s441 = sphi 0, %s443
      %s444 = sphi 0, %s441
      %s445 = sphi 0, %s444
      %s461 = sphi 0, %s445
    $region4: #{tpu_custom_call.1} parent=1 // loop_header_branch
      %30 = sbr.rel (%p28) target = $region8
    $region5: #{tpu_custom_call.1} parent=1 // loop_body
      %s32 = ssub.s32 %s27, 1
      %s33 = ssub.s32 %s27, 2
      %s40 = sadd.s32 1, %s35
      %p41 = scmp.ge.s32.totalorder %s40, 1
      %s42 = scalar_select %p41, 0, %s40
      %s43 = sadd.s32 1, %s34
      %s44 = scalar_select %p41, %s43, %s34
      %p45 = scmp.ge.s32.totalorder %s44, 2
      %s46 = scalar_select %p45, 0, %s44
      %s47 = ssub.s32 %s34, %s46
      %p48 = scmp.eq.s32.totalorder %s47, 0
      %s50 = sadd.s32 %s49, 1
      %s51 = scalar_select %p48, %s49, %s50
      %p54 = pneg %p48
      %p55 = scmp.eq.s32.totalorder %s27, 1
      %p56 = por %p54, %p55
      %p57 = scmp.ne.s32.totalorder %s49, %s52
      %p58 = scmp.eq.s32.totalorder %s27, 0
      %p59 = por %p57, %p58
      %p60 = scmp.ne.s32.totalorder %s49, %s52
      %p61 = scmp.eq.s32.totalorder %s32, 1
      %p62 = por %p60, %p61
      %p63 = scmp.ne.s32.totalorder %s52, %s53
      %p64 = scmp.eq.s32.totalorder %s32, 0
      %p65 = por %p63, %p64
      %p66 = scmp.ne.s32.totalorder %s52, %s53
      %p67 = scmp.eq.s32.totalorder %s33, 1
      %p68 = por %p66, %p67
      %p70 = scmp.ne.s32.totalorder %s53, %s69
      %p71 = scmp.eq.s32.totalorder %s33, 0
      %p72 = por %p70, %p71
      %s73 = ssub.s32 %s34, %s46
      %s74 = ssub.s32 %s35, %s42
      %s75 = sor.u32 %s73, %s74
      %p76 = scmp.eq.s32.totalorder %s75, 0
      %s78 = sadd.s32 %s77, 1
      %s79 = scalar_select %p76, %s77, %s78
      %p82 = pneg %p76
      %p83 = scmp.eq.s32.totalorder %s27, 1
      %p84 = por %p82, %p83
      %p85 = scmp.ne.s32.totalorder %s77, %s80
      %p86 = scmp.eq.s32.totalorder %s27, 0
      %p87 = por %p85, %p86
      %p88 = scmp.ne.s32.totalorder %s77, %s80
      %p89 = scmp.eq.s32.totalorder %s32, 1
      %p90 = por %p88, %p89
      %p91 = scmp.ne.s32.totalorder %s80, %s81
      %p92 = scmp.eq.s32.totalorder %s32, 0
      %p93 = por %p91, %p92
      %p94 = scmp.ne.s32.totalorder %s80, %s81
      %p95 = scmp.eq.s32.totalorder %s33, 1
      %p96 = por %p94, %p95
      %p98 = scmp.ne.s32.totalorder %s81, %s97
      %p99 = scmp.eq.s32.totalorder %s33, 0
      %p100 = por %p98, %p99
      %s102 = sadd.s32 %s101, 1
      %p105 = scmp.eq.s32.totalorder %s27, 1
      %p106 = scmp.ne.s32.totalorder %s101, %s103
      %p107 = scmp.eq.s32.totalorder %s27, 0
      %p108 = por %p106, %p107
      %p109 = scmp.ne.s32.totalorder %s101, %s103
      %p110 = scmp.eq.s32.totalorder %s32, 1
      %p111 = por %p109, %p110
      %p112 = scmp.ne.s32.totalorder %s103, %s104
      %p113 = scmp.eq.s32.totalorder %s32, 0
      %p114 = por %p112, %p113
      %p115 = scmp.ne.s32.totalorder %s103, %s104
      %p116 = scmp.eq.s32.totalorder %s33, 1
      %p117 = por %p115, %p116
      %p119 = scmp.ne.s32.totalorder %s104, %s118
      %p120 = scmp.eq.s32.totalorder %s33, 0
      %p121 = por %p119, %p120
      %s123 = sadd.s32 %s122, 1
      %p126 = scmp.eq.s32.totalorder %s27, 1
      %p127 = scmp.ne.s32.totalorder %s122, %s124
      %p128 = scmp.eq.s32.totalorder %s27, 0
      %p129 = por %p127, %p128
      %p130 = scmp.ne.s32.totalorder %s122, %s124
      %p131 = scmp.eq.s32.totalorder %s32, 1
      %p132 = por %p130, %p131
      %p133 = scmp.ne.s32.totalorder %s124, %s125
      %p134 = scmp.eq.s32.totalorder %s32, 0
      %p135 = por %p133, %p134
      %p136 = scmp.ne.s32.totalorder %s124, %s125
      %p137 = scmp.eq.s32.totalorder %s33, 1
      %p138 = por %p136, %p137
      %p140 = scmp.ne.s32.totalorder %s125, %s139
      %p141 = scmp.eq.s32.totalorder %s33, 0
      %p142 = por %p140, %p141
      %s144 = sadd.s32 %s143, 1
      %p147 = scmp.eq.s32.totalorder %s27, 1
      %p148 = scmp.ne.s32.totalorder %s143, %s145
      %p149 = scmp.eq.s32.totalorder %s27, 0
      %p150 = por %p148, %p149
      %p151 = scmp.ne.s32.totalorder %s143, %s145
      %p152 = scmp.eq.s32.totalorder %s32, 1
      %p153 = por %p151, %p152
      %p154 = scmp.ne.s32.totalorder %s145, %s146
      %p155 = scmp.eq.s32.totalorder %s32, 0
      %p156 = por %p154, %p155
      %p157 = scmp.ne.s32.totalorder %s145, %s146
      %p158 = scmp.eq.s32.totalorder %s33, 1
      %p159 = por %p157, %p158
      %p161 = scmp.ne.s32.totalorder %s146, %s160
      %p162 = scmp.eq.s32.totalorder %s33, 0
      %p163 = por %p161, %p162
      %s165 = sadd.s32 %s164, 1
      %p168 = scmp.eq.s32.totalorder %s27, 1
      %p169 = scmp.ne.s32.totalorder %s164, %s166
      %p170 = scmp.eq.s32.totalorder %s27, 0
      %p171 = por %p169, %p170
      %p172 = scmp.ne.s32.totalorder %s164, %s166
      %p173 = scmp.eq.s32.totalorder %s32, 1
      %p174 = por %p172, %p173
      %p175 = scmp.ne.s32.totalorder %s166, %s167
      %p176 = scmp.eq.s32.totalorder %s32, 0
      %p177 = por %p175, %p176
      %p178 = scmp.ne.s32.totalorder %s166, %s167
      %p179 = scmp.eq.s32.totalorder %s33, 1
      %p180 = por %p178, %p179
      %p182 = scmp.ne.s32.totalorder %s167, %s181
      %p183 = scmp.eq.s32.totalorder %s33, 0
      %p184 = por %p182, %p183
      %s186 = sadd.s32 %s185, 1
      %p189 = scmp.eq.s32.totalorder %s27, 1
      %p190 = scmp.ne.s32.totalorder %s185, %s187
      %p191 = scmp.eq.s32.totalorder %s27, 0
      %p192 = por %p190, %p191
      %p193 = scmp.ne.s32.totalorder %s185, %s187
      %p194 = scmp.eq.s32.totalorder %s32, 1
      %p195 = por %p193, %p194
      %p196 = scmp.ne.s32.totalorder %s187, %s188
      %p197 = scmp.eq.s32.totalorder %s32, 0
      %p198 = por %p196, %p197
      %p199 = scmp.ne.s32.totalorder %s187, %s188
      %p200 = scmp.eq.s32.totalorder %s33, 1
      %p201 = por %p199, %p200
      %p203 = scmp.ne.s32.totalorder %s188, %s202
      %p204 = scmp.eq.s32.totalorder %s33, 0
      %p205 = por %p203, %p204
      %s207 = sadd.s32 %s206, 1
      %p210 = scmp.eq.s32.totalorder %s27, 1
      %p211 = scmp.ne.s32.totalorder %s206, %s208
      %p212 = scmp.eq.s32.totalorder %s27, 0
      %p213 = por %p211, %p212
      %p214 = scmp.ne.s32.totalorder %s206, %s208
      %p215 = scmp.eq.s32.totalorder %s32, 1
      %p216 = por %p214, %p215
      %p217 = scmp.ne.s32.totalorder %s208, %s209
      %p218 = scmp.eq.s32.totalorder %s32, 0
      %p219 = por %p217, %p218
      %p220 = scmp.ne.s32.totalorder %s208, %s209
      %p221 = scmp.eq.s32.totalorder %s33, 1
      %p222 = por %p220, %p221
      %p224 = scmp.ne.s32.totalorder %s209, %s223
      %p225 = scmp.eq.s32.totalorder %s33, 0
      %p226 = por %p224, %p225
      %s228 = sadd.s32 %s227, 1
      %p231 = scmp.eq.s32.totalorder %s27, 1
      %p232 = scmp.ne.s32.totalorder %s227, %s229
      %p233 = scmp.eq.s32.totalorder %s27, 0
      %p234 = por %p232, %p233
      %p235 = scmp.ne.s32.totalorder %s227, %s229
      %p236 = scmp.eq.s32.totalorder %s32, 1
      %p237 = por %p235, %p236
      %p238 = scmp.ne.s32.totalorder %s229, %s230
      %p239 = scmp.eq.s32.totalorder %s32, 0
      %p240 = por %p238, %p239
      %p241 = scmp.ne.s32.totalorder %s229, %s230
      %p242 = scmp.eq.s32.totalorder %s33, 1
      %p243 = por %p241, %p242
      %p245 = scmp.ne.s32.totalorder %s230, %s244
      %p246 = scmp.eq.s32.totalorder %s33, 0
      %p247 = por %p245, %p246
      %s249 = sadd.s32 %s248, 1
      %p252 = scmp.eq.s32.totalorder %s27, 1
      %p253 = scmp.ne.s32.totalorder %s248, %s250
      %p254 = scmp.eq.s32.totalorder %s27, 0
      %p255 = por %p253, %p254
      %p256 = scmp.ne.s32.totalorder %s248, %s250
      %p257 = scmp.eq.s32.totalorder %s32, 1
      %p258 = por %p256, %p257
      %p259 = scmp.ne.s32.totalorder %s250, %s251
      %p260 = scmp.eq.s32.totalorder %s32, 0
      %p261 = por %p259, %p260
      %p262 = scmp.ne.s32.totalorder %s250, %s251
      %p263 = scmp.eq.s32.totalorder %s33, 1
      %p264 = por %p262, %p263
      %p266 = scmp.ne.s32.totalorder %s251, %s265
      %p267 = scmp.eq.s32.totalorder %s33, 0
      %p268 = por %p266, %p267
      %s270 = sadd.s32 %s269, 1
      %p273 = scmp.eq.s32.totalorder %s27, 1
      %p274 = scmp.ne.s32.totalorder %s269, %s271
      %p275 = scmp.eq.s32.totalorder %s27, 0
      %p276 = por %p274, %p275
      %p277 = scmp.ne.s32.totalorder %s269, %s271
      %p278 = scmp.eq.s32.totalorder %s32, 1
      %p279 = por %p277, %p278
      %p280 = scmp.ne.s32.totalorder %s271, %s272
      %p281 = scmp.eq.s32.totalorder %s32, 0
      %p282 = por %p280, %p281
      %p283 = scmp.ne.s32.totalorder %s271, %s272
      %p284 = scmp.eq.s32.totalorder %s33, 1
      %p285 = por %p283, %p284
      %p287 = scmp.ne.s32.totalorder %s272, %s286
      %p288 = scmp.eq.s32.totalorder %s33, 0
      %p289 = por %p287, %p288
      %s291 = sadd.s32 %s290, 1
      %p294 = scmp.eq.s32.totalorder %s27, 1
      %p295 = scmp.ne.s32.totalorder %s290, %s292
      %p296 = scmp.eq.s32.totalorder %s27, 0
      %p297 = por %p295, %p296
      %p298 = scmp.ne.s32.totalorder %s290, %s292
      %p299 = scmp.eq.s32.totalorder %s32, 1
      %p300 = por %p298, %p299
      %p301 = scmp.ne.s32.totalorder %s292, %s293
      %p302 = scmp.eq.s32.totalorder %s32, 0
      %p303 = por %p301, %p302
      %p304 = scmp.ne.s32.totalorder %s292, %s293
      %p305 = scmp.eq.s32.totalorder %s33, 1
      %p306 = por %p304, %p305
      %p308 = scmp.ne.s32.totalorder %s293, %s307
      %p309 = scmp.eq.s32.totalorder %s33, 0
      %p310 = por %p308, %p309
      %s312 = sadd.s32 %s311, 1
      %p315 = scmp.eq.s32.totalorder %s27, 1
      %p316 = scmp.ne.s32.totalorder %s311, %s313
      %p317 = scmp.eq.s32.totalorder %s27, 0
      %p318 = por %p316, %p317
      %p319 = scmp.ne.s32.totalorder %s311, %s313
      %p320 = scmp.eq.s32.totalorder %s32, 1
      %p321 = por %p319, %p320
      %p322 = scmp.ne.s32.totalorder %s313, %s314
      %p323 = scmp.eq.s32.totalorder %s32, 0
      %p324 = por %p322, %p323
      %p325 = scmp.ne.s32.totalorder %s313, %s314
      %p326 = scmp.eq.s32.totalorder %s33, 1
      %p327 = por %p325, %p326
      %p329 = scmp.ne.s32.totalorder %s314, %s328
      %p330 = scmp.eq.s32.totalorder %s33, 0
      %p331 = por %p329, %p330
      %s333 = sadd.s32 %s332, 1
      %p336 = scmp.eq.s32.totalorder %s27, 1
      %p337 = scmp.ne.s32.totalorder %s332, %s334
      %p338 = scmp.eq.s32.totalorder %s27, 0
      %p339 = por %p337, %p338
      %p340 = scmp.ne.s32.totalorder %s332, %s334
      %p341 = scmp.eq.s32.totalorder %s32, 1
      %p342 = por %p340, %p341
      %p343 = scmp.ne.s32.totalorder %s334, %s335
      %p344 = scmp.eq.s32.totalorder %s32, 0
      %p345 = por %p343, %p344
      %p346 = scmp.ne.s32.totalorder %s334, %s335
      %p347 = scmp.eq.s32.totalorder %s33, 1
      %p348 = por %p346, %p347
      %p350 = scmp.ne.s32.totalorder %s335, %s349
      %p351 = scmp.eq.s32.totalorder %s33, 0
      %p352 = por %p350, %p351
      %s354 = sadd.s32 %s353, 1
      %p357 = scmp.eq.s32.totalorder %s27, 1
      %p358 = scmp.ne.s32.totalorder %s353, %s355
      %p359 = scmp.eq.s32.totalorder %s27, 0
      %p360 = por %p358, %p359
      %p361 = scmp.ne.s32.totalorder %s353, %s355
      %p362 = scmp.eq.s32.totalorder %s32, 1
      %p363 = por %p361, %p362
      %p364 = scmp.ne.s32.totalorder %s355, %s356
      %p365 = scmp.eq.s32.totalorder %s32, 0
      %p366 = por %p364, %p365
      %p367 = scmp.ne.s32.totalorder %s355, %s356
      %p368 = scmp.eq.s32.totalorder %s33, 1
      %p369 = por %p367, %p368
      %p371 = scmp.ne.s32.totalorder %s356, %s370
      %p372 = scmp.eq.s32.totalorder %s33, 0
      %p373 = por %p371, %p372
      %s375 = sadd.s32 %s374, 1
      %p378 = scmp.eq.s32.totalorder %s27, 1
      %p379 = scmp.ne.s32.totalorder %s374, %s376
      %p380 = scmp.eq.s32.totalorder %s27, 0
      %p381 = por %p379, %p380
      %p382 = scmp.ne.s32.totalorder %s374, %s376
      %p383 = scmp.eq.s32.totalorder %s32, 1
      %p384 = por %p382, %p383
      %p385 = scmp.ne.s32.totalorder %s376, %s377
      %p386 = scmp.eq.s32.totalorder %s32, 0
      %p387 = por %p385, %p386
      %p388 = scmp.ne.s32.totalorder %s376, %s377
      %p389 = scmp.eq.s32.totalorder %s33, 1
      %p390 = por %p388, %p389
      %p392 = scmp.ne.s32.totalorder %s377, %s391
      %p393 = scmp.eq.s32.totalorder %s33, 0
      %p394 = por %p392, %p393
      %s396 = sadd.s32 %s395, 1
      %p399 = scmp.eq.s32.totalorder %s27, 1
      %p400 = scmp.ne.s32.totalorder %s395, %s397
      %p401 = scmp.eq.s32.totalorder %s27, 0
      %p402 = por %p400, %p401
      %p403 = scmp.ne.s32.totalorder %s395, %s397
      %p404 = scmp.eq.s32.totalorder %s32, 1
      %p405 = por %p403, %p404
      %p406 = scmp.ne.s32.totalorder %s397, %s398
      %p407 = scmp.eq.s32.totalorder %s32, 0
      %p408 = por %p406, %p407
      %p409 = scmp.ne.s32.totalorder %s397, %s398
      %p410 = scmp.eq.s32.totalorder %s33, 1
      %p411 = por %p409, %p410
      %p413 = scmp.ne.s32.totalorder %s398, %s412
      %p414 = scmp.eq.s32.totalorder %s33, 0
      %p415 = por %p413, %p414
      %s417 = sadd.s32 %s416, 1
      %p420 = scmp.eq.s32.totalorder %s27, 1
      %p421 = scmp.ne.s32.totalorder %s416, %s418
      %p422 = scmp.eq.s32.totalorder %s27, 0
      %p423 = por %p421, %p422
      %p424 = scmp.ne.s32.totalorder %s416, %s418
      %p425 = scmp.eq.s32.totalorder %s32, 1
      %p426 = por %p424, %p425
      %p427 = scmp.ne.s32.totalorder %s418, %s419
      %p428 = scmp.eq.s32.totalorder %s32, 0
      %p429 = por %p427, %p428
      %p430 = scmp.ne.s32.totalorder %s418, %s419
      %p431 = scmp.eq.s32.totalorder %s33, 1
      %p432 = por %p430, %p431
      %p434 = scmp.ne.s32.totalorder %s419, %s433
      %p435 = scmp.eq.s32.totalorder %s33, 0
      %p436 = por %p434, %p435
      %s437 = ssub.s32 %s34, %s46
      %s438 = ssub.s32 %s35, %s42
      %s439 = sor.u32 %s437, %s438
      %p440 = scmp.eq.s32.totalorder %s439, 0
      %s442 = sadd.s32 %s441, 1
      %s443 = scalar_select %p440, %s441, %s442
      %p446 = pneg %p440
      %p447 = scmp.eq.s32.totalorder %s27, 1
      %p448 = por %p446, %p447
      %p449 = scmp.ne.s32.totalorder %s441, %s444
      %p450 = scmp.eq.s32.totalorder %s27, 0
      %p451 = por %p449, %p450
      %p452 = scmp.ne.s32.totalorder %s441, %s444
      %p453 = scmp.eq.s32.totalorder %s32, 1
      %p454 = por %p452, %p453
      %p455 = scmp.ne.s32.totalorder %s444, %s445
      %p456 = scmp.eq.s32.totalorder %s32, 0
      %p457 = por %p455, %p456
      %p458 = scmp.ne.s32.totalorder %s444, %s445
      %p459 = scmp.eq.s32.totalorder %s33, 1
      %p460 = por %p458, %p459
      %p462 = scmp.ne.s32.totalorder %s445, %s461
      %p463 = scmp.eq.s32.totalorder %s33, 0
      %p464 = por %p462, %p463
      %p465 = scmp.le.s32.totalorder 1, %s27
      %p466 = scmp.lt.s32.totalorder %s27, 3
      %p467 = pnand %p465, %p466
      %p468 = pneg %p467
      // Predicated region
      $region9: #{tpu_custom_call.1} parent=5 // pred_check
        _
      $region10: #{tpu_custom_call.1} parent=5 // pred_check_branch
        %470 = sbr.rel (%p467) target = $region12
      $region11: #{tpu_custom_call.1} parent=5 // pred_region
        %s471 = ssub.s32 %s27, 1
        // Predicated region
        $region13: #{tpu_custom_call.1} parent=11 // pred_check
          %p472 = pneg %p114
        $region14: #{tpu_custom_call.1} parent=11 // pred_check_branch
          %474 = sbr.rel (%p472) target = $region16
        $region15: #{tpu_custom_call.1} parent=11 // pred_region
          _
        $region16: #{tpu_custom_call.1} parent=11 // pred_fallthru
          _
        // Predicated region
        $region17: #{tpu_custom_call.1} parent=11 // pred_check
          %p475 = pneg %p135
        $region18: #{tpu_custom_call.1} parent=11 // pred_check_branch
          %477 = sbr.rel (%p475) target = $region20
        $region19: #{tpu_custom_call.1} parent=11 // pred_region
          _
        $region20: #{tpu_custom_call.1} parent=11 // pred_fallthru
          _
        // Predicated region
        $region21: #{tpu_custom_call.1} parent=11 // pred_check
          %p478 = pneg %p156
        $region22: #{tpu_custom_call.1} parent=11 // pred_check_branch
          %480 = sbr.rel (%p478) target = $region24
        $region23: #{tpu_custom_call.1} parent=11 // pred_region
          _
        $region24: #{tpu_custom_call.1} parent=11 // pred_fallthru
          _
        // Predicated region
        $region25: #{tpu_custom_call.1} parent=11 // pred_check
          %p481 = pneg %p177
        $region26: #{tpu_custom_call.1} parent=11 // pred_check_branch
          %483 = sbr.rel (%p481) target = $region28
        $region27: #{tpu_custom_call.1} parent=11 // pred_region
          _
        $region28: #{tpu_custom_call.1} parent=11 // pred_fallthru
          _
        // Predicated region
        $region29: #{tpu_custom_call.1} parent=11 // pred_check
          %p484 = pneg %p198
        $region30: #{tpu_custom_call.1} parent=11 // pred_check_branch
          %486 = sbr.rel (%p484) target = $region32
        $region31: #{tpu_custom_call.1} parent=11 // pred_region
          _
        $region32: #{tpu_custom_call.1} parent=11 // pred_fallthru
          _
        // Predicated region
        $region33: #{tpu_custom_call.1} parent=11 // pred_check
          %p487 = pneg %p219
        $region34: #{tpu_custom_call.1} parent=11 // pred_check_branch
          %489 = sbr.rel (%p487) target = $region36
        $region35: #{tpu_custom_call.1} parent=11 // pred_region
          _
        $region36: #{tpu_custom_call.1} parent=11 // pred_fallthru
          _
        // Predicated region
        $region37: #{tpu_custom_call.1} parent=11 // pred_check
          %p490 = pneg %p240
        $region38: #{tpu_custom_call.1} parent=11 // pred_check_branch
          %492 = sbr.rel (%p490) target = $region40
        $region39: #{tpu_custom_call.1} parent=11 // pred_region
          _
        $region40: #{tpu_custom_call.1} parent=11 // pred_fallthru
          _
        // Predicated region
        $region41: #{tpu_custom_call.1} parent=11 // pred_check
          %p493 = pneg %p261
        $region42: #{tpu_custom_call.1} parent=11 // pred_check_branch
          %495 = sbr.rel (%p493) target = $region44
        $region43: #{tpu_custom_call.1} parent=11 // pred_region
          _
        $region44: #{tpu_custom_call.1} parent=11 // pred_fallthru
          _
        // Predicated region
        $region45: #{tpu_custom_call.1} parent=11 // pred_check
          %p496 = pneg %p282
        $region46: #{tpu_custom_call.1} parent=11 // pred_check_branch
          %498 = sbr.rel (%p496) target = $region48
        $region47: #{tpu_custom_call.1} parent=11 // pred_region
          _
        $region48: #{tpu_custom_call.1} parent=11 // pred_fallthru
          _
        // Predicated region
        $region49: #{tpu_custom_call.1} parent=11 // pred_check
          %p499 = pneg %p303
        $region50: #{tpu_custom_call.1} parent=11 // pred_check_branch
          %501 = sbr.rel (%p499) target = $region52
        $region51: #{tpu_custom_call.1} parent=11 // pred_region
          _
        $region52: #{tpu_custom_call.1} parent=11 // pred_fallthru
          _
        // Predicated region
        $region53: #{tpu_custom_call.1} parent=11 // pred_check
          %p502 = pneg %p324
        $region54: #{tpu_custom_call.1} parent=11 // pred_check_branch
          %504 = sbr.rel (%p502) target = $region56
        $region55: #{tpu_custom_call.1} parent=11 // pred_region
          _
        $region56: #{tpu_custom_call.1} parent=11 // pred_fallthru
          _
        // Predicated region
        $region57: #{tpu_custom_call.1} parent=11 // pred_check
          %p505 = pneg %p345
        $region58: #{tpu_custom_call.1} parent=11 // pred_check_branch
          %507 = sbr.rel (%p505) target = $region60
        $region59: #{tpu_custom_call.1} parent=11 // pred_region
          _
        $region60: #{tpu_custom_call.1} parent=11 // pred_fallthru
          _
        // Predicated region
        $region61: #{tpu_custom_call.1} parent=11 // pred_check
          %p508 = pneg %p366
        $region62: #{tpu_custom_call.1} parent=11 // pred_check_branch
          %510 = sbr.rel (%p508) target = $region64
        $region63: #{tpu_custom_call.1} parent=11 // pred_region
          _
        $region64: #{tpu_custom_call.1} parent=11 // pred_fallthru
          _
        // Predicated region
        $region65: #{tpu_custom_call.1} parent=11 // pred_check
          %p511 = pneg %p387
        $region66: #{tpu_custom_call.1} parent=11 // pred_check_branch
          %513 = sbr.rel (%p511) target = $region68
        $region67: #{tpu_custom_call.1} parent=11 // pred_region
          _
        $region68: #{tpu_custom_call.1} parent=11 // pred_fallthru
          _
        // Predicated region
        $region69: #{tpu_custom_call.1} parent=11 // pred_check
          %p514 = pneg %p408
        $region70: #{tpu_custom_call.1} parent=11 // pred_check_branch
          %516 = sbr.rel (%p514) target = $region72
        $region71: #{tpu_custom_call.1} parent=11 // pred_region
          _
        $region72: #{tpu_custom_call.1} parent=11 // pred_fallthru
          _
        // Predicated region
        $region73: #{tpu_custom_call.1} parent=11 // pred_check
          %p517 = pneg %p429
        $region74: #{tpu_custom_call.1} parent=11 // pred_check_branch
          %519 = sbr.rel (%p517) target = $region76
        $region75: #{tpu_custom_call.1} parent=11 // pred_region
          _
        $region76: #{tpu_custom_call.1} parent=11 // pred_fallthru
          _
      $region12: #{tpu_custom_call.1} parent=5 // pred_fallthru
        _
      %p520 = scmp.lt.s32.totalorder %s27, 2
      // Predicated region
      $region77: #{tpu_custom_call.1} parent=5 // pred_check
        %p521 = pneg %p520
      $region78: #{tpu_custom_call.1} parent=5 // pred_check_branch
        %523 = sbr.rel (%p521) target = $region80
      $region79: #{tpu_custom_call.1} parent=5 // pred_region
        // Predicated region
        $region81: #{tpu_custom_call.1} parent=79 // pred_check
          %p524 = pneg %p59
        $region82: #{tpu_custom_call.1} parent=79 // pred_check_branch
          %526 = sbr.rel (%p524) target = $region84
        $region83: #{tpu_custom_call.1} parent=79 // pred_region
          %p527 = scmp.lt.s32.totalorder %s34, 1
          %s528 = scalar_select %p527, %s34, 1
          %s529 = smul.addr %s528, 8
          %s530 = scalar_lea.vmem %s0, %s529
        $region84: #{tpu_custom_call.1} parent=79 // pred_fallthru
          _
        // Predicated region
        $region85: #{tpu_custom_call.1} parent=79 // pred_check
          %p531 = pneg %p87
        $region86: #{tpu_custom_call.1} parent=79 // pred_check_branch
          %533 = sbr.rel (%p531) target = $region88
        $region87: #{tpu_custom_call.1} parent=79 // pred_region
          %p534 = scmp.lt.s32.totalorder %s34, 1
          %s535 = scalar_select %p534, %s34, 1
          %p536 = scmp.lt.s32.totalorder %s35, 0
          %s537 = scalar_select %p536, %s35, 0
          %s538 = sadd.s32 %s537, %s535
          %s539 = smul.addr %s538, 4
          %s540 = scalar_lea.vmem %s1, %s539
        $region88: #{tpu_custom_call.1} parent=79 // pred_fallthru
          _
      $region80: #{tpu_custom_call.1} parent=5 // pred_fallthru
        _
      %p541 = scmp.le.s32.totalorder 1, %s27
      %p542 = scmp.lt.s32.totalorder %s27, 3
      %p543 = pnand %p541, %p542
      %p544 = pneg %p543
      // Predicated region
      $region89: #{tpu_custom_call.1} parent=5 // pred_check
        _
      $region90: #{tpu_custom_call.1} parent=5 // pred_check_branch
        %546 = sbr.rel (%p543) target = $region92
      $region91: #{tpu_custom_call.1} parent=5 // pred_region
        %s547 = ssub.s32 %s27, 1
        %p548 = scmp.lt.s32.totalorder %s36, 1
        %s549 = scalar_select %p548, %s36, 1
        %s550 = smul.addr %s549, 8
        %s551 = scalar_lea.vmem %s0, %s550
        %p552 = pneg %p65
        %p553 = pneg %p62
        %p554 = scmp.lt.s32.totalorder %s36, 1
        %s555 = scalar_select %p554, %s36, 1
        %p556 = scmp.lt.s32.totalorder %s37, 0
        %s557 = scalar_select %p556, %s37, 0
        %s558 = sadd.s32 %s557, %s555
        %s559 = smul.addr %s558, 4
        %s560 = scalar_lea.vmem %s1, %s559
        %p561 = pneg %p93
        %p562 = pneg %p90
        %p563 = pneg %p114
        %p564 = pneg %p111
        %p565 = pneg %p135
        %p566 = pneg %p132
        %p567 = pneg %p156
        %p568 = pneg %p153
        %p569 = pneg %p177
        %p570 = pneg %p174
        %p571 = pneg %p198
        %p572 = pneg %p195
        %p573 = pneg %p219
        %p574 = pneg %p216
        %p575 = pneg %p240
        %p576 = pneg %p237
        %p577 = pneg %p261
        %p578 = pneg %p258
        %p579 = pneg %p282
        %p580 = pneg %p279
        %p581 = pneg %p303
        %p582 = pneg %p300
        %p583 = pneg %p324
        %p584 = pneg %p321
        %p585 = pneg %p345
        %p586 = pneg %p342
        %p587 = pneg %p366
        %p588 = pneg %p363
        %p589 = pneg %p387
        %p590 = pneg %p384
        %p591 = pneg %p408
        %p592 = pneg %p405
        %p593 = pneg %p429
        %p594 = pneg %p426
        %p595 = pneg %p457
        %p596 = pneg %p454
        %s597 = sand.u32 %s444, 1
        %s598 = scalar_lea.sflag [#allocation6], %s597
        %s599 = sand.u32 %s444, 1
        %s600 = smul.addr %s599, 8
        %s601 = scalar_lea.vmem [#allocation5], %s600
        %p602 = scmp.lt.s32.totalorder %s36, 1
        %s603 = scalar_select %p602, %s36, 1
        %s604 = smul.addr %s603, 8
        %s605 = scalar_lea.vmem %s0, %s604
        %p606 = scmp.lt.s32.totalorder %s36, 1
        %s607 = scalar_select %p606, %s36, 1
        %p608 = scmp.lt.s32.totalorder %s37, 0
        %s609 = scalar_select %p608, %s37, 0
        %s610 = sadd.s32 %s609, %s607
        %s611 = smul.addr %s610, 4
        %s612 = scalar_lea.vmem %s1, %s611
        %p614 = scmp.eq.s32.totalorder %s37, 0
        // Predicated region
        $region93: #{tpu_custom_call.1} parent=91 // pred_check
          %p615 = pneg %p614
        $region94: #{tpu_custom_call.1} parent=91 // pred_check_branch
          %617 = sbr.rel (%p615) target = $region96
        $region95: #{tpu_custom_call.1} parent=91 // pred_region
          %v618 = vld [vmem:[%s605] sm:$0xff]
          %v619 = vld [vmem:[%s2] sm:$0x1]
          %v620 = vld [vmem:[%s3] sm:$0x1]
          %vm621 = vcmask 261120
          %v622 = vsel %vm621, %v618, 0.0
          %623 = vadd.xlane.f32.xlu0 %v622
          %v624 = vpop.xlane.xlu0 %623
          %v625 = vrcp.pop 32.0
          %v626 = vmul.f32 %v624, %v625
          %v627 = vsub.f32 %v618, %v626
          %v628 = vmul.f32 %v627, %v627
          %v629 = vsel %vm621, %v628, 0.0
          %630 = vadd.xlane.f32.xlu0 %v629
          %v631 = vpop.xlane.xlu0 %630
          %v632 = vmul.f32 %v631, 0.032258064
          %v633 = vrsqrt.pop %v632
          %v634 = vmul.f32 %v632, %v633
          %vm635 = vcmp.eq.f32.partialorder %v632, inf
          %v636 = vsel %vm635, %v632, %v634
          %vm637 = vcmp.eq.f32.partialorder %v632, 0.0
          %v638 = vand.u32 %v632, 2147483648
          %v639 = vsel %vm637, %v638, %v636
          %v640 = vadd.f32 %v639, 1e-06
          %v641 = vrcp.pop %v640
          %v643 = vlaneseq
          %v644 = vshrl.u32 %v643, 7
          %v645 = vsub.s32 0, %v644
          %v646 = vrot.slane %v619, %v645
          %v648 = vmul.f32 %v646, %v627
          %v649 = vmul.f32 %v648, %v641
          %v651 = vlaneseq
          %v652 = vshrl.u32 %v651, 7
          %v653 = vsub.s32 0, %v652
          %v654 = vrot.slane %v620, %v653
          %v656 = vadd.f32 %v649, %v654
          %v657 = vpack.c.bf16 %v656, %v656
          %v658 = vld [vmem:[%s6] sm:$0xf]
          %v659 = vld [vmem:[%s6 + $0x4] sm:$0xf]
          %v660 = vld [vmem:[%s6 + $0x8] sm:$0xf]
          %v661 = vld [vmem:[%s6 + $0xc] sm:$0xf]
          %v662 = vld [vmem:[%s7] sm:$0x1]
          %v664 = vlaneseq
          %v665 = vshrl.u32 %v664, 7
          %v666 = vsub.s32 0, %v665
          %v667 = vrot.slane %v662, %v666
          %v673 = vunpack.c.l.b16 %v658
          %v674 = vunpack.c.l.b16 %v659
          %v675 = vunpack.c.l.b16 %v660
          %v676 = vunpack.c.l.b16 %v661
          %v677 = vpack.c.b16 %v674, %v673
          %v678 = vpack.c.b16 %v676, %v675
          %v682 = vsel %vm621, %v657, 0
          %684 = vmatprep.subr.bf16.mxu0 0
          %685 = vmatpush1.bf16.msra.mxu0 0
          %686 = vmatprep.subr.bf16.mxu0 0
          %687 = vmatpush1.bf16.msra.mxu0 0
          %688 = vmatprep.subr.bf16.mxu0 0
          %689 = vmatpush1.bf16.msra.mxu0 0
          %690 = vmatprep.subr.bf16.mxu0 0
          %691 = vmatpush1.bf16.msra.mxu0 0
          %692 = vmatprep.subr.bf16.mxu0 0
          %693 = vmatpush1.bf16.msra.mxu0 0
          %694 = vmatprep.subr.bf16.mxu0 0
          %695 = vmatpush1.bf16.msra.mxu0 0
          %696 = vmatprep.subr.bf16.mxu0 0
          %697 = vmatpush1.bf16.msra.mxu0 %v678
          %698 = vmatprep.subr.bf16.mxu0 0
          %699 = vmatpush1.bf16.msra.mxu0 %v677
          %700 = vmatprep.subr.bf16.mxu0 0
          %701 = vmatpush2.bf16.msra.mxu0 0
          %702 = vmatprep.subr.bf16.mxu0 0
          %703 = vmatpush2.bf16.msra.mxu0 0
          %704 = vmatprep.subr.bf16.mxu0 0
          %705 = vmatpush2.bf16.msra.mxu0 0
          %706 = vmatprep.subr.bf16.mxu0 0
          %707 = vmatpush2.bf16.msra.mxu0 0
          %708 = vmatprep.subr.bf16.mxu0 0
          %709 = vmatpush2.bf16.msra.mxu0 0
          %710 = vmatprep.subr.bf16.mxu0 0
          %711 = vmatpush2.bf16.msra.mxu0 0
          %712 = vmatprep.subr.bf16.mxu0 0
          %713 = vmatpush2.bf16.msra.mxu0 0
          %714 = vmatprep.subr.bf16.mxu0 0
          %715 = vmatpush2.bf16.msra.mxu0 0
          %716 = vmatprep.mubr.bf16.mxu0 0
          %717 = vmatmul.mubr.bf16.gmra.mxu0 %v682
          %v718 = vpop.f32.mrf.mxu0
          %v719 = vadd.f32 %v667, %v718
          %v720 = vpop.f32.mrf.mxu0
          %v721 = vpop.f32.mrf.mxu0
          %v722 = vpop.f32.mrf.mxu0
          %723 = vdwg.mxu0
          %v724 = vpack.c.bf16 %v719, %v719
          %vm725 = vcmask 257024
          %726 = vst.msk [vmem:[#allocation2] sm:$0xf] %vm725, %v724
          %v727 = vld [vmem:[%s8] sm:$0xf]
          %v728 = vld [vmem:[%s8 + $0x4] sm:$0xf]
          %v729 = vld [vmem:[%s8 + $0x8] sm:$0xf]
          %v730 = vld [vmem:[%s8 + $0xc] sm:$0xf]
          %v731 = vld [vmem:[%s9] sm:$0x1]
          %v733 = vlaneseq
          %v734 = vshrl.u32 %v733, 7
          %v735 = vsub.s32 0, %v734
          %v736 = vrot.slane %v731, %v735
          %v742 = vunpack.c.l.b16 %v727
          %v743 = vunpack.c.l.b16 %v728
          %v744 = vunpack.c.l.b16 %v729
          %v745 = vunpack.c.l.b16 %v730
          %v746 = vpack.c.b16 %v743, %v742
          %v747 = vpack.c.b16 %v745, %v744
          %750 = vmatprep.subr.bf16.mxu0 0
          %751 = vmatpush1.bf16.msra.mxu0 0
          %752 = vmatprep.subr.bf16.mxu0 0
          %753 = vmatpush1.bf16.msra.mxu0 0
          %754 = vmatprep.subr.bf16.mxu0 0
          %755 = vmatpush1.bf16.msra.mxu0 0
          %756 = vmatprep.subr.bf16.mxu0 0
          %757 = vmatpush1.bf16.msra.mxu0 0
          %758 = vmatprep.subr.bf16.mxu0 0
          %759 = vmatpush1.bf16.msra.mxu0 0
          %760 = vmatprep.subr.bf16.mxu0 0
          %761 = vmatpush1.bf16.msra.mxu0 0
          %762 = vmatprep.subr.bf16.mxu0 0
          %763 = vmatpush1.bf16.msra.mxu0 %v747
          %764 = vmatprep.subr.bf16.mxu0 0
          %765 = vmatpush1.bf16.msra.mxu0 %v746
          %766 = vmatprep.subr.bf16.mxu0 0
          %767 = vmatpush2.bf16.msra.mxu0 0
          %768 = vmatprep.subr.bf16.mxu0 0
          %769 = vmatpush2.bf16.msra.mxu0 0
          %770 = vmatprep.subr.bf16.mxu0 0
          %771 = vmatpush2.bf16.msra.mxu0 0
          %772 = vmatprep.subr.bf16.mxu0 0
          %773 = vmatpush2.bf16.msra.mxu0 0
          %774 = vmatprep.subr.bf16.mxu0 0
          %775 = vmatpush2.bf16.msra.mxu0 0
          %776 = vmatprep.subr.bf16.mxu0 0
          %777 = vmatpush2.bf16.msra.mxu0 0
          %778 = vmatprep.subr.bf16.mxu0 0
          %779 = vmatpush2.bf16.msra.mxu0 0
          %780 = vmatprep.subr.bf16.mxu0 0
          %781 = vmatpush2.bf16.msra.mxu0 0
          %782 = vmatprep.mubr.bf16.mxu0 0
          %783 = vmatmul.mubr.bf16.gmra.mxu0 %v682
          %v784 = vpop.f32.mrf.mxu0
          %v785 = vadd.f32 %v736, %v784
          %v786 = vpop.f32.mrf.mxu0
          %v787 = vpop.f32.mrf.mxu0
          %v788 = vpop.f32.mrf.mxu0
          %789 = vdwg.mxu0
          %v790 = vpack.c.bf16 %v785, %v785
          %791 = vst.msk [vmem:[#allocation3] sm:$0xf] %vm725, %v790
        $region96: #{tpu_custom_call.1} parent=91 // pred_fallthru
          _
        %v792 = vld [vmem:[%s605] sm:$0xff]
        %v793 = vld [vmem:[%s612] sm:$0xf]
        %v794 = vunpack.c.l.bf16 %v793
        %v795 = vld [vmem:[%s2] sm:$0x1]
        %v796 = vld [vmem:[%s3] sm:$0x1]
        %vm797 = vcmask 261120
        %v798 = vsel %vm797, %v792, 0.0
        %799 = vadd.xlane.f32.xlu0 %v798
        %v800 = vpop.xlane.xlu0 %799
        %v801 = vrcp.pop 32.0
        %v802 = vmul.f32 %v800, %v801
        %v803 = vsub.f32 %v792, %v802
        %v804 = vmul.f32 %v803, %v803
        %v805 = vsel %vm797, %v804, 0.0
        %806 = vadd.xlane.f32.xlu0 %v805
        %v807 = vpop.xlane.xlu0 %806
        %v808 = vmul.f32 %v807, 0.032258064
        %v809 = vrsqrt.pop %v808
        %v810 = vmul.f32 %v808, %v809
        %vm811 = vcmp.eq.f32.partialorder %v808, inf
        %v812 = vsel %vm811, %v808, %v810
        %vm813 = vcmp.eq.f32.partialorder %v808, 0.0
        %v814 = vand.u32 %v808, 2147483648
        %v815 = vsel %vm813, %v814, %v812
        %v816 = vadd.f32 %v815, 1e-06
        %v817 = vrcp.pop %v816
        %v819 = vlaneseq
        %v820 = vshrl.u32 %v819, 7
        %v821 = vsub.s32 0, %v820
        %v822 = vrot.slane %v795, %v821
        %v824 = vmul.f32 %v822, %v803
        %v825 = vmul.f32 %v824, %v817
        %v827 = vlaneseq
        %v828 = vshrl.u32 %v827, 7
        %v829 = vsub.s32 0, %v828
        %v830 = vrot.slane %v796, %v829
        %v832 = vadd.f32 %v825, %v830
        %v833 = vpack.c.bf16 %v832, %v832
        %v834 = vld [vmem:[%s4] sm:$0xf]
        %v835 = vld [vmem:[%s4 + $0x4] sm:$0xf]
        %v836 = vld [vmem:[%s4 + $0x8] sm:$0xf]
        %v837 = vld [vmem:[%s4 + $0xc] sm:$0xf]
        %v838 = vld [vmem:[%s5] sm:$0x1]
        %v840 = vlaneseq
        %v841 = vshrl.u32 %v840, 7
        %v842 = vsub.s32 0, %v841
        %v843 = vrot.slane %v838, %v842
        %v849 = vunpack.c.l.b16 %v834
        %v850 = vunpack.c.l.b16 %v835
        %v851 = vunpack.c.l.b16 %v836
        %v852 = vunpack.c.l.b16 %v837
        %v853 = vpack.c.b16 %v850, %v849
        %v854 = vpack.c.b16 %v852, %v851
        %v858 = vsel %vm797, %v833, 0
        %860 = vmatprep.subr.bf16.mxu0 0
        %861 = vmatpush1.bf16.msra.mxu0 0
        %862 = vmatprep.subr.bf16.mxu0 0
        %863 = vmatpush1.bf16.msra.mxu0 0
        %864 = vmatprep.subr.bf16.mxu0 0
        %865 = vmatpush1.bf16.msra.mxu0 0
        %866 = vmatprep.subr.bf16.mxu0 0
        %867 = vmatpush1.bf16.msra.mxu0 0
        %868 = vmatprep.subr.bf16.mxu0 0
        %869 = vmatpush1.bf16.msra.mxu0 0
        %870 = vmatprep.subr.bf16.mxu0 0
        %871 = vmatpush1.bf16.msra.mxu0 0
        %872 = vmatprep.subr.bf16.mxu0 0
        %873 = vmatpush1.bf16.msra.mxu0 %v854
        %874 = vmatprep.subr.bf16.mxu0 0
        %875 = vmatpush1.bf16.msra.mxu0 %v853
        %876 = vmatprep.subr.bf16.mxu0 0
        %877 = vmatpush2.bf16.msra.mxu0 0
        %878 = vmatprep.subr.bf16.mxu0 0
        %879 = vmatpush2.bf16.msra.mxu0 0
        %880 = vmatprep.subr.bf16.mxu0 0
        %881 = vmatpush2.bf16.msra.mxu0 0
        %882 = vmatprep.subr.bf16.mxu0 0
        %883 = vmatpush2.bf16.msra.mxu0 0
        %884 = vmatprep.subr.bf16.mxu0 0
        %885 = vmatpush2.bf16.msra.mxu0 0
        %886 = vmatprep.subr.bf16.mxu0 0
        %887 = vmatpush2.bf16.msra.mxu0 0
        %888 = vmatprep.subr.bf16.mxu0 0
        %889 = vmatpush2.bf16.msra.mxu0 0
        %890 = vmatprep.subr.bf16.mxu0 0
        %891 = vmatpush2.bf16.msra.mxu0 0
        %892 = vmatprep.mubr.bf16.mxu0 0
        %893 = vmatmul.mubr.bf16.gmra.mxu0 %v858
        %v894 = vpop.f32.mrf.mxu0
        %v895 = vadd.f32 %v843, %v894
        %v896 = vpop.f32.mrf.mxu0
        %v897 = vpop.f32.mrf.mxu0
        %v898 = vpop.f32.mrf.mxu0
        %899 = vdwg.mxu0
        %v900 = vpack.c.bf16 %v895, %v895
        %v901 = vld [vmem:[#allocation2] sm:$0xf]
        %vm902 = vcmask 64512
        %v904 = vsel %vm902, %v900, 0
        %v907 = vsel %vm902, %v901, 0
        %909 = vmatprep.subr.bf16.mxu0 0
        %910 = vmatpush1.bf16.xpose.msra.mxu0 0
        %911 = vmatprep.subr.bf16.mxu0 0
        %912 = vmatpush1.bf16.xpose.msra.mxu0 0
        %913 = vmatprep.subr.bf16.mxu0 0
        %914 = vmatpush1.bf16.xpose.msra.mxu0 0
        %915 = vmatprep.subr.bf16.mxu0 0
        %916 = vmatpush1.bf16.xpose.msra.mxu0 0
        %917 = vmatprep.subr.bf16.mxu0 0
        %918 = vmatpush1.bf16.xpose.msra.mxu0 0
        %919 = vmatprep.subr.bf16.mxu0 0
        %920 = vmatpush1.bf16.xpose.msra.mxu0 0
        %921 = vmatprep.subr.bf16.mxu0 0
        %922 = vmatpush1.bf16.xpose.msra.mxu0 0
        %923 = vmatprep.subr.bf16.mxu0 0
        %924 = vmatpush1.bf16.xpose.msra.mxu0 %v907
        %925 = vmatprep.subr.bf16.mxu0 0
        %926 = vmatpush2.bf16.xpose.msra.mxu0 0
        %927 = vmatprep.subr.bf16.mxu0 0
        %928 = vmatpush2.bf16.xpose.msra.mxu0 0
        %929 = vmatprep.subr.bf16.mxu0 0
        %930 = vmatpush2.bf16.xpose.msra.mxu0 0
        %931 = vmatprep.subr.bf16.mxu0 0
        %932 = vmatpush2.bf16.xpose.msra.mxu0 0
        %933 = vmatprep.subr.bf16.mxu0 0
        %934 = vmatpush2.bf16.xpose.msra.mxu0 0
        %935 = vmatprep.subr.bf16.mxu0 0
        %936 = vmatpush2.bf16.xpose.msra.mxu0 0
        %937 = vmatprep.subr.bf16.mxu0 0
        %938 = vmatpush2.bf16.xpose.msra.mxu0 0
        %939 = vmatprep.subr.bf16.mxu0 0
        %940 = vmatpush2.bf16.xpose.msra.mxu0 0
        %941 = vmatprep.mubr.bf16.mxu0 0
        %942 = vmatmul.mubr.bf16.gmra.mxu0 %v904
        %v943 = vpop.f32.mrf.mxu0
        %v944 = vadd.f32 %v794, %v943
        %v945 = vpop.f32.mrf.mxu0
        %v946 = vpop.f32.mrf.mxu0
        %v947 = vpop.f32.mrf.mxu0
        %948 = vdwg.mxu0
        %v949 = vsel %vm902, %v944, -inf
        %950 = vmax.xlane.f32.xlu0 %v949
        %v951 = vpop.xlane.xlu0 %950
        %v952 = vsub.f32 %v944, %v951
        %v953 = vmul.f32 %v952, 1.442695
        %v954 = vpow.pop %v953
        %v955 = vsel %vm902, %v954, 0.0
        %956 = vadd.xlane.f32.xlu0 %v955
        %v957 = vpop.xlane.xlu0 %956
        %v958 = vrcp.pop %v957
        %v959 = vmul.f32 %v954, %v958
        %v960 = vpack.c.bf16 %v959, %v959
        %v961 = vld [vmem:[#allocation3] sm:$0xf]
        %v963 = vsel %vm902, %v960, 0
        %vm965 = vcmask 1043456
        %v967 = vsel %vm965, %v961, 0
        %969 = vmatprep.subr.bf16.mxu0 0
        %970 = vmatpush1.bf16.msra.mxu0 0
        %971 = vmatprep.subr.bf16.mxu0 0
        %972 = vmatpush1.bf16.msra.mxu0 0
        %973 = vmatprep.subr.bf16.mxu0 0
        %974 = vmatpush1.bf16.msra.mxu0 0
        %975 = vmatprep.subr.bf16.mxu0 0
        %976 = vmatpush1.bf16.msra.mxu0 0
        %977 = vmatprep.subr.bf16.mxu0 0
        %978 = vmatpush1.bf16.msra.mxu0 0
        %979 = vmatprep.subr.bf16.mxu0 0
        %980 = vmatpush1.bf16.msra.mxu0 0
        %981 = vmatprep.subr.bf16.mxu0 0
        %982 = vmatpush1.bf16.msra.mxu0 0
        %983 = vmatprep.subr.bf16.mxu0 0
        %984 = vmatpush1.bf16.msra.mxu0 %v967
        %985 = vmatprep.subr.bf16.mxu0 0
        %986 = vmatpush2.bf16.msra.mxu0 0
        %987 = vmatprep.subr.bf16.mxu0 0
        %988 = vmatpush2.bf16.msra.mxu0 0
        %989 = vmatprep.subr.bf16.mxu0 0
        %990 = vmatpush2.bf16.msra.mxu0 0
        %991 = vmatprep.subr.bf16.mxu0 0
        %992 = vmatpush2.bf16.msra.mxu0 0
        %993 = vmatprep.subr.bf16.mxu0 0
        %994 = vmatpush2.bf16.msra.mxu0 0
        %995 = vmatprep.subr.bf16.mxu0 0
        %996 = vmatpush2.bf16.msra.mxu0 0
        %997 = vmatprep.subr.bf16.mxu0 0
        %998 = vmatpush2.bf16.msra.mxu0 0
        %999 = vmatprep.subr.bf16.mxu0 0
        %1000 = vmatpush2.bf16.msra.mxu0 0
        %1001 = vmatprep.mubr.bf16.mxu0 0
        %1002 = vmatmul.mubr.bf16.gmra.mxu0 %v963
        %v1003 = vpop.f32.mrf.mxu0
        %v1004 = vadd.f32 0.0, %v1003
        %v1005 = vpop.f32.mrf.mxu0
        %v1006 = vpop.f32.mrf.mxu0
        %v1007 = vpop.f32.mrf.mxu0
        %1008 = vdwg.mxu0
        %1009 = vst.msk [vmem:[#allocation4] sm:$0xff] %vm902, %v1004
        %v1010 = vld [vmem:[#allocation2] sm:$0xf]
        %1012 = vrot.lane.b32.xlu0 %v900, 120
        %v1013 = vpop.permute.xlu0 %1012
        %v1015 = vunpack.c.l.b16 %v1010
        %v1016 = vpack.c.b16 %v1015, %v1015
        %1017 = vrot.lane.b32.xlu0 %v1016, 120
        %v1018 = vpop.permute.xlu0 %1017
        %v1020 = vsel %vm902, %v1013, 0
        %v1023 = vsel %vm902, %v1018, 0
        %1025 = vmatprep.subr.bf16.mxu0 0
        %1026 = vmatpush1.bf16.xpose.msra.mxu0 0
        %1027 = vmatprep.subr.bf16.mxu0 0
        %1028 = vmatpush1.bf16.xpose.msra.mxu0 0
        %1029 = vmatprep.subr.bf16.mxu0 0
        %1030 = vmatpush1.bf16.xpose.msra.mxu0 0
        %1031 = vmatprep.subr.bf16.mxu0 0
        %1032 = vmatpush1.bf16.xpose.msra.mxu0 0
        %1033 = vmatprep.subr.bf16.mxu0 0
        %1034 = vmatpush1.bf16.xpose.msra.mxu0 0
        %1035 = vmatprep.subr.bf16.mxu0 0
        %1036 = vmatpush1.bf16.xpose.msra.mxu0 0
        %1037 = vmatprep.subr.bf16.mxu0 0
        %1038 = vmatpush1.bf16.xpose.msra.mxu0 0
        %1039 = vmatprep.subr.bf16.mxu0 0
        %1040 = vmatpush1.bf16.xpose.msra.mxu0 %v1023
        %1041 = vmatprep.subr.bf16.mxu0 0
        %1042 = vmatpush2.bf16.xpose.msra.mxu0 0
        %1043 = vmatprep.subr.bf16.mxu0 0
        %1044 = vmatpush2.bf16.xpose.msra.mxu0 0
        %1045 = vmatprep.subr.bf16.mxu0 0
        %1046 = vmatpush2.bf16.xpose.msra.mxu0 0
        %1047 = vmatprep.subr.bf16.mxu0 0
        %1048 = vmatpush2.bf16.xpose.msra.mxu0 0
        %1049 = vmatprep.subr.bf16.mxu0 0
        %1050 = vmatpush2.bf16.xpose.msra.mxu0 0
        %1051 = vmatprep.subr.bf16.mxu0 0
        %1052 = vmatpush2.bf16.xpose.msra.mxu0 0
        %1053 = vmatprep.subr.bf16.mxu0 0
        %1054 = vmatpush2.bf16.xpose.msra.mxu0 0
        %1055 = vmatprep.subr.bf16.mxu0 0
        %1056 = vmatpush2.bf16.xpose.msra.mxu0 0
        %1057 = vmatprep.mubr.bf16.mxu0 0
        %1058 = vmatmul.mubr.bf16.gmra.mxu0 %v1020
        %v1059 = vpop.f32.mrf.mxu0
        %v1060 = vadd.f32 %v794, %v1059
        %v1061 = vpop.f32.mrf.mxu0
        %v1062 = vpop.f32.mrf.mxu0
        %v1063 = vpop.f32.mrf.mxu0
        %1064 = vdwg.mxu0
        %v1065 = vsel %vm902, %v1060, -inf
        %1066 = vmax.xlane.f32.xlu0 %v1065
        %v1067 = vpop.xlane.xlu0 %1066
        %v1068 = vsub.f32 %v1060, %v1067
        %v1069 = vmul.f32 %v1068, 1.442695
        %v1070 = vpow.pop %v1069
        %v1071 = vsel %vm902, %v1070, 0.0
        %1072 = vadd.xlane.f32.xlu0 %v1071
        %v1073 = vpop.xlane.xlu0 %1072
        %v1074 = vrcp.pop %v1073
        %v1075 = vmul.f32 %v1070, %v1074
        %v1076 = vpack.c.bf16 %v1075, %v1075
        %v1077 = vld [vmem:[#allocation3] sm:$0xf]
        %v1079 = vunpack.c.l.b16 %v1077
        %v1080 = vpack.c.b16 %v1079, %v1079
        %1081 = vrot.lane.b32.xlu0 %v1080, 120
        %v1082 = vpop.permute.xlu0 %1081
        %v1084 = vsel %vm902, %v1076, 0
        %v1087 = vsel %vm965, %v1082, 0
        %1089 = vmatprep.subr.bf16.mxu0 0
        %1090 = vmatpush1.bf16.msra.mxu0 0
        %1091 = vmatprep.subr.bf16.mxu0 0
        %1092 = vmatpush1.bf16.msra.mxu0 0
        %1093 = vmatprep.subr.bf16.mxu0 0
        %1094 = vmatpush1.bf16.msra.mxu0 0
        %1095 = vmatprep.subr.bf16.mxu0 0
        %1096 = vmatpush1.bf16.msra.mxu0 0
        %1097 = vmatprep.subr.bf16.mxu0 0
        %1098 = vmatpush1.bf16.msra.mxu0 0
        %1099 = vmatprep.subr.bf16.mxu0 0
        %1100 = vmatpush1.bf16.msra.mxu0 0
        %1101 = vmatprep.subr.bf16.mxu0 0
        %1102 = vmatpush1.bf16.msra.mxu0 0
        %1103 = vmatprep.subr.bf16.mxu0 0
        %1104 = vmatpush1.bf16.msra.mxu0 %v1087
        %1105 = vmatprep.subr.bf16.mxu0 0
        %1106 = vmatpush2.bf16.msra.mxu0 0
        %1107 = vmatprep.subr.bf16.mxu0 0
        %1108 = vmatpush2.bf16.msra.mxu0 0
        %1109 = vmatprep.subr.bf16.mxu0 0
        %1110 = vmatpush2.bf16.msra.mxu0 0
        %1111 = vmatprep.subr.bf16.mxu0 0
        %1112 = vmatpush2.bf16.msra.mxu0 0
        %1113 = vmatprep.subr.bf16.mxu0 0
        %1114 = vmatpush2.bf16.msra.mxu0 0
        %1115 = vmatprep.subr.bf16.mxu0 0
        %1116 = vmatpush2.bf16.msra.mxu0 0
        %1117 = vmatprep.subr.bf16.mxu0 0
        %1118 = vmatpush2.bf16.msra.mxu0 0
        %1119 = vmatprep.subr.bf16.mxu0 0
        %1120 = vmatpush2.bf16.msra.mxu0 0
        %1121 = vmatprep.mubr.bf16.mxu0 0
        %1122 = vmatmul.mubr.bf16.gmra.mxu0 %v1084
        %v1123 = vpop.f32.mrf.mxu0
        %v1124 = vadd.f32 0.0, %v1123
        %v1125 = vpop.f32.mrf.mxu0
        %v1126 = vpop.f32.mrf.mxu0
        %v1127 = vpop.f32.mrf.mxu0
        %1128 = vdwg.mxu0
        %1130 = vrot.lane.b32.xlu0 %v1124, 8
        %v1131 = vpop.permute.xlu0 %1130
        %vm1133 = vcmask 130112
        %1134 = vst.msk [vmem:[#allocation4] sm:$0xff] %vm1133, %v1131
        %v1135 = vld [vmem:[#allocation2] sm:$0xf]
        %1136 = vrot.lane.b32.xlu0 %v900, 112
        %v1137 = vpop.permute.xlu0 %1136
        %v1139 = vunpack.c.l.b16 %v1135
        %v1140 = vpack.c.b16 %v1139, %v1139
        %1141 = vrot.lane.b32.xlu0 %v1140, 112
        %v1142 = vpop.permute.xlu0 %1141
        %v1144 = vsel %vm902, %v1137, 0
        %v1147 = vsel %vm902, %v1142, 0
        %1149 = vmatprep.subr.bf16.mxu0 0
        %1150 = vmatpush1.bf16.xpose.msra.mxu0 0
        %1151 = vmatprep.subr.bf16.mxu0 0
        %1152 = vmatpush1.bf16.xpose.msra.mxu0 0
        %1153 = vmatprep.subr.bf16.mxu0 0
        %1154 = vmatpush1.bf16.xpose.msra.mxu0 0
        %1155 = vmatprep.subr.bf16.mxu0 0
        %1156 = vmatpush1.bf16.xpose.msra.mxu0 0
        %1157 = vmatprep.subr.bf16.mxu0 0
        %1158 = vmatpush1.bf16.xpose.msra.mxu0 0
        %1159 = vmatprep.subr.bf16.mxu0 0
        %1160 = vmatpush1.bf16.xpose.msra.mxu0 0
        %1161 = vmatprep.subr.bf16.mxu0 0
        %1162 = vmatpush1.bf16.xpose.msra.mxu0 0
        %1163 = vmatprep.subr.bf16.mxu0 0
        %1164 = vmatpush1.bf16.xpose.msra.mxu0 %v1147
        %1165 = vmatprep.subr.bf16.mxu0 0
        %1166 = vmatpush2.bf16.xpose.msra.mxu0 0
        %1167 = vmatprep.subr.bf16.mxu0 0
        %1168 = vmatpush2.bf16.xpose.msra.mxu0 0
        %1169 = vmatprep.subr.bf16.mxu0 0
        %1170 = vmatpush2.bf16.xpose.msra.mxu0 0
        %1171 = vmatprep.subr.bf16.mxu0 0
        %1172 = vmatpush2.bf16.xpose.msra.mxu0 0
        %1173 = vmatprep.subr.bf16.mxu0 0
        %1174 = vmatpush2.bf16.xpose.msra.mxu0 0
        %1175 = vmatprep.subr.bf16.mxu0 0
        %1176 = vmatpush2.bf16.xpose.msra.mxu0 0
        %1177 = vmatprep.subr.bf16.mxu0 0
        %1178 = vmatpush2.bf16.xpose.msra.mxu0 0
        %1179 = vmatprep.subr.bf16.mxu0 0
        %1180 = vmatpush2.bf16.xpose.msra.mxu0 0
        %1181 = vmatprep.mubr.bf16.mxu0 0
        %1182 = vmatmul.mubr.bf16.gmra.mxu0 %v1144
        %v1183 = vpop.f32.mrf.mxu0
        %v1184 = vadd.f32 %v794, %v1183
        %v1185 = vpop.f32.mrf.mxu0
        %v1186 = vpop.f32.mrf.mxu0
        %v1187 = vpop.f32.mrf.mxu0
        %1188 = vdwg.mxu0
        %v1189 = vsel %vm902, %v1184, -inf
        %1190 = vmax.xlane.f32.xlu0 %v1189
        %v1191 = vpop.xlane.xlu0 %1190
        %v1192 = vsub.f32 %v1184, %v1191
        %v1193 = vmul.f32 %v1192, 1.442695
        %v1194 = vpow.pop %v1193
        %v1195 = vsel %vm902, %v1194, 0.0
        %1196 = vadd.xlane.f32.xlu0 %v1195
        %v1197 = vpop.xlane.xlu0 %1196
        %v1198 = vrcp.pop %v1197
        %v1199 = vmul.f32 %v1194, %v1198
        %v1200 = vpack.c.bf16 %v1199, %v1199
        %v1201 = vld [vmem:[#allocation3] sm:$0xf]
        %v1203 = vunpack.c.l.b16 %v1201
        %v1204 = vpack.c.b16 %v1203, %v1203
        %1205 = vrot.lane.b32.xlu0 %v1204, 112
        %v1206 = vpop.permute.xlu0 %1205
        %v1208 = vsel %vm902, %v1200, 0
        %v1211 = vsel %vm965, %v1206, 0
        %1213 = vmatprep.subr.bf16.mxu0 0
        %1214 = vmatpush1.bf16.msra.mxu0 0
        %1215 = vmatprep.subr.bf16.mxu0 0
        %1216 = vmatpush1.bf16.msra.mxu0 0
        %1217 = vmatprep.subr.bf16.mxu0 0
        %1218 = vmatpush1.bf16.msra.mxu0 0
        %1219 = vmatprep.subr.bf16.mxu0 0
        %1220 = vmatpush1.bf16.msra.mxu0 0
        %1221 = vmatprep.subr.bf16.mxu0 0
        %1222 = vmatpush1.bf16.msra.mxu0 0
        %1223 = vmatprep.subr.bf16.mxu0 0
        %1224 = vmatpush1.bf16.msra.mxu0 0
        %1225 = vmatprep.subr.bf16.mxu0 0
        %1226 = vmatpush1.bf16.msra.mxu0 0
        %1227 = vmatprep.subr.bf16.mxu0 0
        %1228 = vmatpush1.bf16.msra.mxu0 %v1211
        %1229 = vmatprep.subr.bf16.mxu0 0
        %1230 = vmatpush2.bf16.msra.mxu0 0
        %1231 = vmatprep.subr.bf16.mxu0 0
        %1232 = vmatpush2.bf16.msra.mxu0 0
        %1233 = vmatprep.subr.bf16.mxu0 0
        %1234 = vmatpush2.bf16.msra.mxu0 0
        %1235 = vmatprep.subr.bf16.mxu0 0
        %1236 = vmatpush2.bf16.msra.mxu0 0
        %1237 = vmatprep.subr.bf16.mxu0 0
        %1238 = vmatpush2.bf16.msra.mxu0 0
        %1239 = vmatprep.subr.bf16.mxu0 0
        %1240 = vmatpush2.bf16.msra.mxu0 0
        %1241 = vmatprep.subr.bf16.mxu0 0
        %1242 = vmatpush2.bf16.msra.mxu0 0
        %1243 = vmatprep.subr.bf16.mxu0 0
        %1244 = vmatpush2.bf16.msra.mxu0 0
        %1245 = vmatprep.mubr.bf16.mxu0 0
        %1246 = vmatmul.mubr.bf16.gmra.mxu0 %v1208
        %v1247 = vpop.f32.mrf.mxu0
        %v1248 = vadd.f32 0.0, %v1247
        %v1249 = vpop.f32.mrf.mxu0
        %v1250 = vpop.f32.mrf.mxu0
        %v1251 = vpop.f32.mrf.mxu0
        %1252 = vdwg.mxu0
        %1254 = vrot.lane.b32.xlu0 %v1248, 16
        %v1255 = vpop.permute.xlu0 %1254
        %vm1257 = vcmask 195712
        %1258 = vst.msk [vmem:[#allocation4] sm:$0xff] %vm1257, %v1255
        %v1259 = vld [vmem:[#allocation2] sm:$0xf]
        %1260 = vrot.lane.b32.xlu0 %v900, 104
        %v1261 = vpop.permute.xlu0 %1260
        %v1263 = vunpack.c.l.b16 %v1259
        %v1264 = vpack.c.b16 %v1263, %v1263
        %1265 = vrot.lane.b32.xlu0 %v1264, 104
        %v1266 = vpop.permute.xlu0 %1265
        %v1268 = vsel %vm902, %v1261, 0
        %v1271 = vsel %vm902, %v1266, 0
        %1273 = vmatprep.subr.bf16.mxu0 0
        %1274 = vmatpush1.bf16.xpose.msra.mxu0 0
        %1275 = vmatprep.subr.bf16.mxu0 0
        %1276 = vmatpush1.bf16.xpose.msra.mxu0 0
        %1277 = vmatprep.subr.bf16.mxu0 0
        %1278 = vmatpush1.bf16.xpose.msra.mxu0 0
        %1279 = vmatprep.subr.bf16.mxu0 0
        %1280 = vmatpush1.bf16.xpose.msra.mxu0 0
        %1281 = vmatprep.subr.bf16.mxu0 0
        %1282 = vmatpush1.bf16.xpose.msra.mxu0 0
        %1283 = vmatprep.subr.bf16.mxu0 0
        %1284 = vmatpush1.bf16.xpose.msra.mxu0 0
        %1285 = vmatprep.subr.bf16.mxu0 0
        %1286 = vmatpush1.bf16.xpose.msra.mxu0 0
        %1287 = vmatprep.subr.bf16.mxu0 0
        %1288 = vmatpush1.bf16.xpose.msra.mxu0 %v1271
        %1289 = vmatprep.subr.bf16.mxu0 0
        %1290 = vmatpush2.bf16.xpose.msra.mxu0 0
        %1291 = vmatprep.subr.bf16.mxu0 0
        %1292 = vmatpush2.bf16.xpose.msra.mxu0 0
        %1293 = vmatprep.subr.bf16.mxu0 0
        %1294 = vmatpush2.bf16.xpose.msra.mxu0 0
        %1295 = vmatprep.subr.bf16.mxu0 0
        %1296 = vmatpush2.bf16.xpose.msra.mxu0 0
        %1297 = vmatprep.subr.bf16.mxu0 0
        %1298 = vmatpush2.bf16.xpose.msra.mxu0 0
        %1299 = vmatprep.subr.bf16.mxu0 0
        %1300 = vmatpush2.bf16.xpose.msra.mxu0 0
        %1301 = vmatprep.subr.bf16.mxu0 0
        %1302 = vmatpush2.bf16.xpose.msra.mxu0 0
        %1303 = vmatprep.subr.bf16.mxu0 0
        %1304 = vmatpush2.bf16.xpose.msra.mxu0 0
        %1305 = vmatprep.mubr.bf16.mxu0 0
        %1306 = vmatmul.mubr.bf16.gmra.mxu0 %v1268
        %v1307 = vpop.f32.mrf.mxu0
        %v1308 = vadd.f32 %v794, %v1307
        %v1309 = vpop.f32.mrf.mxu0
        %v1310 = vpop.f32.mrf.mxu0
        %v1311 = vpop.f32.mrf.mxu0
        %1312 = vdwg.mxu0
        %v1313 = vsel %vm902, %v1308, -inf
        %1314 = vmax.xlane.f32.xlu0 %v1313
        %v1315 = vpop.xlane.xlu0 %1314
        %v1316 = vsub.f32 %v1308, %v1315
        %v1317 = vmul.f32 %v1316, 1.442695
        %v1318 = vpow.pop %v1317
        %v1319 = vsel %vm902, %v1318, 0.0
        %1320 = vadd.xlane.f32.xlu0 %v1319
        %v1321 = vpop.xlane.xlu0 %1320
        %v1322 = vrcp.pop %v1321
        %v1323 = vmul.f32 %v1318, %v1322
        %v1324 = vpack.c.bf16 %v1323, %v1323
        %v1325 = vld [vmem:[#allocation3] sm:$0xf]
        %v1327 = vunpack.c.l.b16 %v1325
        %v1328 = vpack.c.b16 %v1327, %v1327
        %1329 = vrot.lane.b32.xlu0 %v1328, 104
        %v1330 = vpop.permute.xlu0 %1329
        %v1332 = vsel %vm902, %v1324, 0
        %v1335 = vsel %vm965, %v1330, 0
        %1337 = vmatprep.subr.bf16.mxu0 0
        %1338 = vmatpush1.bf16.msra.mxu0 0
        %1339 = vmatprep.subr.bf16.mxu0 0
        %1340 = vmatpush1.bf16.msra.mxu0 0
        %1341 = vmatprep.subr.bf16.mxu0 0
        %1342 = vmatpush1.bf16.msra.mxu0 0
        %1343 = vmatprep.subr.bf16.mxu0 0
        %1344 = vmatpush1.bf16.msra.mxu0 0
        %1345 = vmatprep.subr.bf16.mxu0 0
        %1346 = vmatpush1.bf16.msra.mxu0 0
        %1347 = vmatprep.subr.bf16.mxu0 0
        %1348 = vmatpush1.bf16.msra.mxu0 0
        %1349 = vmatprep.subr.bf16.mxu0 0
        %1350 = vmatpush1.bf16.msra.mxu0 0
        %1351 = vmatprep.subr.bf16.mxu0 0
        %1352 = vmatpush1.bf16.msra.mxu0 %v1335
        %1353 = vmatprep.subr.bf16.mxu0 0
        %1354 = vmatpush2.bf16.msra.mxu0 0
        %1355 = vmatprep.subr.bf16.mxu0 0
        %1356 = vmatpush2.bf16.msra.mxu0 0
        %1357 = vmatprep.subr.bf16.mxu0 0
        %1358 = vmatpush2.bf16.msra.mxu0 0
        %1359 = vmatprep.subr.bf16.mxu0 0
        %1360 = vmatpush2.bf16.msra.mxu0 0
        %1361 = vmatprep.subr.bf16.mxu0 0
        %1362 = vmatpush2.bf16.msra.mxu0 0
        %1363 = vmatprep.subr.bf16.mxu0 0
        %1364 = vmatpush2.bf16.msra.mxu0 0
        %1365 = vmatprep.subr.bf16.mxu0 0
        %1366 = vmatpush2.bf16.msra.mxu0 0
        %1367 = vmatprep.subr.bf16.mxu0 0
        %1368 = vmatpush2.bf16.msra.mxu0 0
        %1369 = vmatprep.mubr.bf16.mxu0 0
        %1370 = vmatmul.mubr.bf16.gmra.mxu0 %v1332
        %v1371 = vpop.f32.mrf.mxu0
        %v1372 = vadd.f32 0.0, %v1371
        %v1373 = vpop.f32.mrf.mxu0
        %v1374 = vpop.f32.mrf.mxu0
        %v1375 = vpop.f32.mrf.mxu0
        %1376 = vdwg.mxu0
        %1378 = vrot.lane.b32.xlu0 %v1372, 24
        %v1379 = vpop.permute.xlu0 %1378
        %vm1381 = vcmask 261312
        %1382 = vst.msk [vmem:[#allocation4] sm:$0xff] %vm1381, %v1379
        %v1383 = vld [vmem:[#allocation4] sm:$0xff]
        %v1384 = vpack.c.bf16 %v1383, %v1383
        %v1385 = vld [vmem:[%s10] sm:$0xf]
        %v1386 = vld [vmem:[%s10 + $0x4] sm:$0xf]
        %v1387 = vld [vmem:[%s10 + $0x8] sm:$0xf]
        %v1388 = vld [vmem:[%s10 + $0xc] sm:$0xf]
        %v1389 = vld [vmem:[%s11] sm:$0x1]
        %v1391 = vlaneseq
        %v1392 = vshrl.u32 %v1391, 7
        %v1393 = vsub.s32 0, %v1392
        %v1394 = vrot.slane %v1389, %v1393
        %v1400 = vunpack.c.l.b16 %v1385
        %v1401 = vunpack.c.l.b16 %v1386
        %v1402 = vunpack.c.l.b16 %v1387
        %v1403 = vunpack.c.l.b16 %v1388
        %v1404 = vpack.c.b16 %v1401, %v1400
        %v1405 = vpack.c.b16 %v1403, %v1402
        %v1409 = vsel %vm797, %v1384, 0
        %1411 = vmatprep.subr.bf16.mxu0 0
        %1412 = vmatpush1.bf16.msra.mxu0 0
        %1413 = vmatprep.subr.bf16.mxu0 0
        %1414 = vmatpush1.bf16.msra.mxu0 0
        %1415 = vmatprep.subr.bf16.mxu0 0
        %1416 = vmatpush1.bf16.msra.mxu0 0
        %1417 = vmatprep.subr.bf16.mxu0 0
        %1418 = vmatpush1.bf16.msra.mxu0 0
        %1419 = vmatprep.subr.bf16.mxu0 0
        %1420 = vmatpush1.bf16.msra.mxu0 0
        %1421 = vmatprep.subr.bf16.mxu0 0
        %1422 = vmatpush1.bf16.msra.mxu0 0
        %1423 = vmatprep.subr.bf16.mxu0 0
        %1424 = vmatpush1.bf16.msra.mxu0 %v1405
        %1425 = vmatprep.subr.bf16.mxu0 0
        %1426 = vmatpush1.bf16.msra.mxu0 %v1404
        %1427 = vmatprep.subr.bf16.mxu0 0
        %1428 = vmatpush2.bf16.msra.mxu0 0
        %1429 = vmatprep.subr.bf16.mxu0 0
        %1430 = vmatpush2.bf16.msra.mxu0 0
        %1431 = vmatprep.subr.bf16.mxu0 0
        %1432 = vmatpush2.bf16.msra.mxu0 0
        %1433 = vmatprep.subr.bf16.mxu0 0
        %1434 = vmatpush2.bf16.msra.mxu0 0
        %1435 = vmatprep.subr.bf16.mxu0 0
        %1436 = vmatpush2.bf16.msra.mxu0 0
        %1437 = vmatprep.subr.bf16.mxu0 0
        %1438 = vmatpush2.bf16.msra.mxu0 0
        %1439 = vmatprep.subr.bf16.mxu0 0
        %1440 = vmatpush2.bf16.msra.mxu0 0
        %1441 = vmatprep.subr.bf16.mxu0 0
        %1442 = vmatpush2.bf16.msra.mxu0 0
        %1443 = vmatprep.mubr.bf16.mxu0 0
        %1444 = vmatmul.mubr.bf16.gmra.mxu0 %v1409
        %v1445 = vpop.f32.mrf.mxu0
        %v1446 = vadd.f32 %v1394, %v1445
        %v1447 = vpop.f32.mrf.mxu0
        %v1448 = vpop.f32.mrf.mxu0
        %v1449 = vpop.f32.mrf.mxu0
        %1450 = vdwg.mxu0
        %v1451 = vadd.f32 %v792, %v1446
        %v1452 = vld [vmem:[%s12] sm:$0x1]
        %v1453 = vld [vmem:[%s13] sm:$0x1]
        %v1454 = vsel %vm797, %v1451, 0.0
        %1455 = vadd.xlane.f32.xlu0 %v1454
        %v1456 = vpop.xlane.xlu0 %1455
        %v1457 = vmul.f32 %v1456, %v801
        %v1458 = vsub.f32 %v1451, %v1457
        %v1459 = vmul.f32 %v1458, %v1458
        %v1460 = vsel %vm797, %v1459, 0.0
        %1461 = vadd.xlane.f32.xlu0 %v1460
        %v1462 = vpop.xlane.xlu0 %1461
        %v1463 = vmul.f32 %v1462, 0.032258064
        %v1464 = vrsqrt.pop %v1463
        %v1465 = vmul.f32 %v1463, %v1464
        %vm1466 = vcmp.eq.f32.partialorder %v1463, inf
        %v1467 = vsel %vm1466, %v1463, %v1465
        %vm1468 = vcmp.eq.f32.partialorder %v1463, 0.0
        %v1469 = vand.u32 %v1463, 2147483648
        %v1470 = vsel %vm1468, %v1469, %v1467
        %v1471 = vadd.f32 %v1470, 1e-06
        %v1472 = vrcp.pop %v1471
        %v1474 = vlaneseq
        %v1475 = vshrl.u32 %v1474, 7
        %v1476 = vsub.s32 0, %v1475
        %v1477 = vrot.slane %v1452, %v1476
        %v1479 = vmul.f32 %v1477, %v1458
        %v1480 = vmul.f32 %v1479, %v1472
        %v1482 = vlaneseq
        %v1483 = vshrl.u32 %v1482, 7
        %v1484 = vsub.s32 0, %v1483
        %v1485 = vrot.slane %v1453, %v1484
        %v1487 = vadd.f32 %v1480, %v1485
        %v1488 = vpack.c.bf16 %v1487, %v1487
        %v1489 = vld [vmem:[%s14] sm:$0xff]
        %v1490 = vld [vmem:[%s14 + $0x8] sm:$0xff]
        %v1491 = vld [vmem:[%s14 + $0x10] sm:$0xff]
        %v1492 = vld [vmem:[%s14 + $0x18] sm:$0xff]
        %v1493 = vld [vmem:[%s14 + $0x20] sm:$0xff]
        %v1494 = vld [vmem:[%s14 + $0x28] sm:$0xff]
        %v1495 = vld [vmem:[%s14 + $0x30] sm:$0xff]
        %v1496 = vld [vmem:[%s14 + $0x38] sm:$0xff]
        %v1497 = vld [vmem:[%s14 + $0x40] sm:$0xff]
        %v1498 = vld [vmem:[%s14 + $0x48] sm:$0xff]
        %v1499 = vld [vmem:[%s14 + $0x50] sm:$0xff]
        %v1500 = vld [vmem:[%s14 + $0x58] sm:$0xff]
        %v1501 = vld [vmem:[%s14 + $0x60] sm:$0xff]
        %v1502 = vld [vmem:[%s14 + $0x68] sm:$0xff]
        %v1503 = vld [vmem:[%s14 + $0x70] sm:$0xff]
        %v1504 = vld [vmem:[%s14 + $0x78] sm:$0xff]
        %v1505 = vld [vmem:[%s14 + $0x80] sm:$0xff]
        %v1506 = vld [vmem:[%s14 + $0x88] sm:$0xff]
        %v1507 = vld [vmem:[%s14 + $0x90] sm:$0xff]
        %v1508 = vld [vmem:[%s14 + $0x98] sm:$0xff]
        %v1509 = vld [vmem:[%s14 + $0xa0] sm:$0xff]
        %v1510 = vld [vmem:[%s14 + $0xa8] sm:$0xff]
        %v1511 = vld [vmem:[%s14 + $0xb0] sm:$0xff]
        %v1512 = vld [vmem:[%s14 + $0xb8] sm:$0xff]
        %v1513 = vld [vmem:[%s14 + $0xc0] sm:$0xff]
        %v1514 = vld [vmem:[%s14 + $0xc8] sm:$0xff]
        %v1515 = vld [vmem:[%s14 + $0xd0] sm:$0xff]
        %v1516 = vld [vmem:[%s14 + $0xd8] sm:$0xff]
        %v1517 = vld [vmem:[%s14 + $0xe0] sm:$0xff]
        %v1518 = vld [vmem:[%s14 + $0xe8] sm:$0xff]
        %v1519 = vld [vmem:[%s14 + $0xf0] sm:$0xff]
        %v1520 = vld [vmem:[%s14 + $0xf8] sm:$0xff]
        %v1521 = vld [vmem:[%s15] sm:$0xff]
        %v1522 = vld [vmem:[%s15 + $0x8] sm:$0xff]
        %v1525 = vlaneseq
        %v1526 = vshrl.u32 %v1525, 7
        %v1527 = vsub.s32 0, %v1526
        %v1528 = vrot.slane %v1521, %v1527
        %v1529 = vlaneseq
        %v1530 = vshrl.u32 %v1529, 7
        %v1531 = vsub.s32 1, %v1530
        %v1532 = vrot.slane %v1521, %v1531
        %v1533 = vlaneseq
        %v1534 = vshrl.u32 %v1533, 7
        %v1535 = vsub.s32 2, %v1534
        %v1536 = vrot.slane %v1521, %v1535
        %v1537 = vlaneseq
        %v1538 = vshrl.u32 %v1537, 7
        %v1539 = vsub.s32 3, %v1538
        %v1540 = vrot.slane %v1521, %v1539
        %v1541 = vlaneseq
        %v1542 = vshrl.u32 %v1541, 7
        %v1543 = vsub.s32 4, %v1542
        %v1544 = vrot.slane %v1521, %v1543
        %v1545 = vlaneseq
        %v1546 = vshrl.u32 %v1545, 7
        %v1547 = vsub.s32 5, %v1546
        %v1548 = vrot.slane %v1521, %v1547
        %v1549 = vlaneseq
        %v1550 = vshrl.u32 %v1549, 7
        %v1551 = vsub.s32 6, %v1550
        %v1552 = vrot.slane %v1521, %v1551
        %v1553 = vlaneseq
        %v1554 = vshrl.u32 %v1553, 7
        %v1555 = vsub.s32 7, %v1554
        %v1556 = vrot.slane %v1521, %v1555
        %v1557 = vlaneseq
        %v1558 = vshrl.u32 %v1557, 7
        %v1559 = vsub.s32 0, %v1558
        %v1560 = vrot.slane %v1522, %v1559
        %v1561 = vlaneseq
        %v1562 = vshrl.u32 %v1561, 7
        %v1563 = vsub.s32 1, %v1562
        %v1564 = vrot.slane %v1522, %v1563
        %v1565 = vlaneseq
        %v1566 = vshrl.u32 %v1565, 7
        %v1567 = vsub.s32 2, %v1566
        %v1568 = vrot.slane %v1522, %v1567
        %v1569 = vlaneseq
        %v1570 = vshrl.u32 %v1569, 7
        %v1571 = vsub.s32 3, %v1570
        %v1572 = vrot.slane %v1522, %v1571
        %v1573 = vlaneseq
        %v1574 = vshrl.u32 %v1573, 7
        %v1575 = vsub.s32 4, %v1574
        %v1576 = vrot.slane %v1522, %v1575
        %v1577 = vlaneseq
        %v1578 = vshrl.u32 %v1577, 7
        %v1579 = vsub.s32 5, %v1578
        %v1580 = vrot.slane %v1522, %v1579
        %v1581 = vlaneseq
        %v1582 = vshrl.u32 %v1581, 7
        %v1583 = vsub.s32 6, %v1582
        %v1584 = vrot.slane %v1522, %v1583
        %v1585 = vlaneseq
        %v1586 = vshrl.u32 %v1585, 7
        %v1587 = vsub.s32 7, %v1586
        %v1588 = vrot.slane %v1522, %v1587
        %v1637 = vunpack.c.l.b16 %v1489
        %v1638 = vunpack.c.h.b16 %v1489
        %v1639 = vunpack.c.l.b16 %v1490
        %v1640 = vunpack.c.h.b16 %v1490
        %v1641 = vunpack.c.l.b16 %v1491
        %v1642 = vunpack.c.h.b16 %v1491
        %v1643 = vunpack.c.l.b16 %v1492
        %v1644 = vunpack.c.h.b16 %v1492
        %v1645 = vunpack.c.l.b16 %v1493
        %v1646 = vunpack.c.h.b16 %v1493
        %v1647 = vunpack.c.l.b16 %v1494
        %v1648 = vunpack.c.h.b16 %v1494
        %v1649 = vunpack.c.l.b16 %v1495
        %v1650 = vunpack.c.h.b16 %v1495
        %v1651 = vunpack.c.l.b16 %v1496
        %v1652 = vunpack.c.h.b16 %v1496
        %v1653 = vunpack.c.l.b16 %v1497
        %v1654 = vunpack.c.h.b16 %v1497
        %v1655 = vunpack.c.l.b16 %v1498
        %v1656 = vunpack.c.h.b16 %v1498
        %v1657 = vunpack.c.l.b16 %v1499
        %v1658 = vunpack.c.h.b16 %v1499
        %v1659 = vunpack.c.l.b16 %v1500
        %v1660 = vunpack.c.h.b16 %v1500
        %v1661 = vunpack.c.l.b16 %v1501
        %v1662 = vunpack.c.h.b16 %v1501
        %v1663 = vunpack.c.l.b16 %v1502
        %v1664 = vunpack.c.h.b16 %v1502
        %v1665 = vunpack.c.l.b16 %v1503
        %v1666 = vunpack.c.h.b16 %v1503
        %v1667 = vunpack.c.l.b16 %v1504
        %v1668 = vunpack.c.h.b16 %v1504
        %v1669 = vunpack.c.l.b16 %v1505
        %v1670 = vunpack.c.h.b16 %v1505
        %v1671 = vunpack.c.l.b16 %v1506
        %v1672 = vunpack.c.h.b16 %v1506
        %v1673 = vunpack.c.l.b16 %v1507
        %v1674 = vunpack.c.h.b16 %v1507
        %v1675 = vunpack.c.l.b16 %v1508
        %v1676 = vunpack.c.h.b16 %v1508
        %v1677 = vunpack.c.l.b16 %v1509
        %v1678 = vunpack.c.h.b16 %v1509
        %v1679 = vunpack.c.l.b16 %v1510
        %v1680 = vunpack.c.h.b16 %v1510
        %v1681 = vunpack.c.l.b16 %v1511
        %v1682 = vunpack.c.h.b16 %v1511
        %v1683 = vunpack.c.l.b16 %v1512
        %v1684 = vunpack.c.h.b16 %v1512
        %v1685 = vunpack.c.l.b16 %v1513
        %v1686 = vunpack.c.h.b16 %v1513
        %v1687 = vunpack.c.l.b16 %v1514
        %v1688 = vunpack.c.h.b16 %v1514
        %v1689 = vunpack.c.l.b16 %v1515
        %v1690 = vunpack.c.h.b16 %v1515
        %v1691 = vunpack.c.l.b16 %v1516
        %v1692 = vunpack.c.h.b16 %v1516
        %v1693 = vunpack.c.l.b16 %v1517
        %v1694 = vunpack.c.h.b16 %v1517
        %v1695 = vunpack.c.l.b16 %v1518
        %v1696 = vunpack.c.h.b16 %v1518
        %v1697 = vunpack.c.l.b16 %v1519
        %v1698 = vunpack.c.h.b16 %v1519
        %v1699 = vunpack.c.l.b16 %v1520
        %v1700 = vunpack.c.h.b16 %v1520
        %v1701 = vpack.c.b16 %v1653, %v1637
        %v1702 = vpack.c.b16 %v1654, %v1638
        %v1703 = vpack.c.b16 %v1655, %v1639
        %v1704 = vpack.c.b16 %v1656, %v1640
        %v1705 = vpack.c.b16 %v1657, %v1641
        %v1706 = vpack.c.b16 %v1658, %v1642
        %v1707 = vpack.c.b16 %v1659, %v1643
        %v1708 = vpack.c.b16 %v1660, %v1644
        %v1709 = vpack.c.b16 %v1661, %v1645
        %v1710 = vpack.c.b16 %v1662, %v1646
        %v1711 = vpack.c.b16 %v1663, %v1647
        %v1712 = vpack.c.b16 %v1664, %v1648
        %v1713 = vpack.c.b16 %v1665, %v1649
        %v1714 = vpack.c.b16 %v1666, %v1650
        %v1715 = vpack.c.b16 %v1667, %v1651
        %v1716 = vpack.c.b16 %v1668, %v1652
        %v1717 = vpack.c.b16 %v1685, %v1669
        %v1718 = vpack.c.b16 %v1686, %v1670
        %v1719 = vpack.c.b16 %v1687, %v1671
        %v1720 = vpack.c.b16 %v1688, %v1672
        %v1721 = vpack.c.b16 %v1689, %v1673
        %v1722 = vpack.c.b16 %v1690, %v1674
        %v1723 = vpack.c.b16 %v1691, %v1675
        %v1724 = vpack.c.b16 %v1692, %v1676
        %v1725 = vpack.c.b16 %v1693, %v1677
        %v1726 = vpack.c.b16 %v1694, %v1678
        %v1727 = vpack.c.b16 %v1695, %v1679
        %v1728 = vpack.c.b16 %v1696, %v1680
        %v1729 = vpack.c.b16 %v1697, %v1681
        %v1730 = vpack.c.b16 %v1698, %v1682
        %v1731 = vpack.c.b16 %v1699, %v1683
        %v1732 = vpack.c.b16 %v1700, %v1684
        %v1766 = vsel %vm797, %v1488, 0
        %1768 = vmatprep.subr.bf16.mxu0 0
        %1769 = vmatpush1.bf16.msra.mxu0 0
        %1770 = vmatprep.subr.bf16.mxu0 0
        %1771 = vmatpush1.bf16.msra.mxu0 0
        %1772 = vmatprep.subr.bf16.mxu0 0
        %1773 = vmatpush1.bf16.msra.mxu0 0
        %1774 = vmatprep.subr.bf16.mxu0 0
        %1775 = vmatpush1.bf16.msra.mxu0 0
        %1776 = vmatprep.subr.bf16.mxu0 0
        %1777 = vmatpush1.bf16.msra.mxu0 0
        %1778 = vmatprep.subr.bf16.mxu0 0
        %1779 = vmatpush1.bf16.msra.mxu0 0
        %1780 = vmatprep.subr.bf16.mxu0 %v1718
        %1781 = vmatpush1.bf16.msra.mxu0 %v1717
        %1782 = vmatprep.subr.bf16.mxu0 %v1702
        %1783 = vmatpush1.bf16.msra.mxu0 %v1701
        %1784 = vmatprep.subr.bf16.mxu0 0
        %1785 = vmatpush2.bf16.msra.mxu0 0
        %1786 = vmatprep.subr.bf16.mxu0 0
        %1787 = vmatpush2.bf16.msra.mxu0 0
        %1788 = vmatprep.subr.bf16.mxu0 0
        %1789 = vmatpush2.bf16.msra.mxu0 0
        %1790 = vmatprep.subr.bf16.mxu0 0
        %1791 = vmatpush2.bf16.msra.mxu0 0
        %1792 = vmatprep.subr.bf16.mxu0 0
        %1793 = vmatpush2.bf16.msra.mxu0 0
        %1794 = vmatprep.subr.bf16.mxu0 0
        %1795 = vmatpush2.bf16.msra.mxu0 0
        %1796 = vmatprep.subr.bf16.mxu0 0
        %1797 = vmatpush2.bf16.msra.mxu0 0
        %1798 = vmatprep.subr.bf16.mxu0 0
        %1799 = vmatpush2.bf16.msra.mxu0 0
        %1800 = vmatprep.mubr.bf16.mxu0 0
        %1801 = vmatmul.mubr.bf16.gmra.mxu0 %v1766
        %v1802 = vpop.f32.mrf.mxu0
        %v1803 = vadd.f32 %v1528, %v1802
        %v1804 = vpop.f32.mrf.mxu0
        %v1805 = vadd.f32 %v1532, %v1804
        %v1806 = vpop.f32.mrf.mxu0
        %v1807 = vpop.f32.mrf.mxu0
        %1808 = vdwg.mxu0
        %1809 = vmatprep.subr.bf16.mxu0 0
        %1810 = vmatpush1.bf16.msra.mxu0 0
        %1811 = vmatprep.subr.bf16.mxu0 0
        %1812 = vmatpush1.bf16.msra.mxu0 0
        %1813 = vmatprep.subr.bf16.mxu0 0
        %1814 = vmatpush1.bf16.msra.mxu0 0
        %1815 = vmatprep.subr.bf16.mxu0 0
        %1816 = vmatpush1.bf16.msra.mxu0 0
        %1817 = vmatprep.subr.bf16.mxu0 0
        %1818 = vmatpush1.bf16.msra.mxu0 0
        %1819 = vmatprep.subr.bf16.mxu0 0
        %1820 = vmatpush1.bf16.msra.mxu0 0
        %1821 = vmatprep.subr.bf16.mxu0 %v1720
        %1822 = vmatpush1.bf16.msra.mxu0 %v1719
        %1823 = vmatprep.subr.bf16.mxu0 %v1704
        %1824 = vmatpush1.bf16.msra.mxu0 %v1703
        %1825 = vmatprep.subr.bf16.mxu0 0
        %1826 = vmatpush2.bf16.msra.mxu0 0
        %1827 = vmatprep.subr.bf16.mxu0 0
        %1828 = vmatpush2.bf16.msra.mxu0 0
        %1829 = vmatprep.subr.bf16.mxu0 0
        %1830 = vmatpush2.bf16.msra.mxu0 0
        %1831 = vmatprep.subr.bf16.mxu0 0
        %1832 = vmatpush2.bf16.msra.mxu0 0
        %1833 = vmatprep.subr.bf16.mxu0 0
        %1834 = vmatpush2.bf16.msra.mxu0 0
        %1835 = vmatprep.subr.bf16.mxu0 0
        %1836 = vmatpush2.bf16.msra.mxu0 0
        %1837 = vmatprep.subr.bf16.mxu0 0
        %1838 = vmatpush2.bf16.msra.mxu0 0
        %1839 = vmatprep.subr.bf16.mxu0 0
        %1840 = vmatpush2.bf16.msra.mxu0 0
        %1841 = vmatprep.mubr.bf16.mxu0 0
        %1842 = vmatmul.mubr.bf16.gmra.mxu0 %v1766
        %v1843 = vpop.f32.mrf.mxu0
        %v1844 = vadd.f32 %v1536, %v1843
        %v1845 = vpop.f32.mrf.mxu0
        %v1846 = vadd.f32 %v1540, %v1845
        %v1847 = vpop.f32.mrf.mxu0
        %v1848 = vpop.f32.mrf.mxu0
        %1849 = vdwg.mxu0
        %1850 = vmatprep.subr.bf16.mxu0 0
        %1851 = vmatpush1.bf16.msra.mxu0 0
        %1852 = vmatprep.subr.bf16.mxu0 0
        %1853 = vmatpush1.bf16.msra.mxu0 0
        %1854 = vmatprep.subr.bf16.mxu0 0
        %1855 = vmatpush1.bf16.msra.mxu0 0
        %1856 = vmatprep.subr.bf16.mxu0 0
        %1857 = vmatpush1.bf16.msra.mxu0 0
        %1858 = vmatprep.subr.bf16.mxu0 0
        %1859 = vmatpush1.bf16.msra.mxu0 0
        %1860 = vmatprep.subr.bf16.mxu0 0
        %1861 = vmatpush1.bf16.msra.mxu0 0
        %1862 = vmatprep.subr.bf16.mxu0 %v1722
        %1863 = vmatpush1.bf16.msra.mxu0 %v1721
        %1864 = vmatprep.subr.bf16.mxu0 %v1706
        %1865 = vmatpush1.bf16.msra.mxu0 %v1705
        %1866 = vmatprep.subr.bf16.mxu0 0
        %1867 = vmatpush2.bf16.msra.mxu0 0
        %1868 = vmatprep.subr.bf16.mxu0 0
        %1869 = vmatpush2.bf16.msra.mxu0 0
        %1870 = vmatprep.subr.bf16.mxu0 0
        %1871 = vmatpush2.bf16.msra.mxu0 0
        %1872 = vmatprep.subr.bf16.mxu0 0
        %1873 = vmatpush2.bf16.msra.mxu0 0
        %1874 = vmatprep.subr.bf16.mxu0 0
        %1875 = vmatpush2.bf16.msra.mxu0 0
        %1876 = vmatprep.subr.bf16.mxu0 0
        %1877 = vmatpush2.bf16.msra.mxu0 0
        %1878 = vmatprep.subr.bf16.mxu0 0
        %1879 = vmatpush2.bf16.msra.mxu0 0
        %1880 = vmatprep.subr.bf16.mxu0 0
        %1881 = vmatpush2.bf16.msra.mxu0 0
        %1882 = vmatprep.mubr.bf16.mxu0 0
        %1883 = vmatmul.mubr.bf16.gmra.mxu0 %v1766
        %v1884 = vpop.f32.mrf.mxu0
        %v1885 = vadd.f32 %v1544, %v1884
        %v1886 = vpop.f32.mrf.mxu0
        %v1887 = vadd.f32 %v1548, %v1886
        %v1888 = vpop.f32.mrf.mxu0
        %v1889 = vpop.f32.mrf.mxu0
        %1890 = vdwg.mxu0
        %1891 = vmatprep.subr.bf16.mxu0 0
        %1892 = vmatpush1.bf16.msra.mxu0 0
        %1893 = vmatprep.subr.bf16.mxu0 0
        %1894 = vmatpush1.bf16.msra.mxu0 0
        %1895 = vmatprep.subr.bf16.mxu0 0
        %1896 = vmatpush1.bf16.msra.mxu0 0
        %1897 = vmatprep.subr.bf16.mxu0 0
        %1898 = vmatpush1.bf16.msra.mxu0 0
        %1899 = vmatprep.subr.bf16.mxu0 0
        %1900 = vmatpush1.bf16.msra.mxu0 0
        %1901 = vmatprep.subr.bf16.mxu0 0
        %1902 = vmatpush1.bf16.msra.mxu0 0
        %1903 = vmatprep.subr.bf16.mxu0 %v1724
        %1904 = vmatpush1.bf16.msra.mxu0 %v1723
        %1905 = vmatprep.subr.bf16.mxu0 %v1708
        %1906 = vmatpush1.bf16.msra.mxu0 %v1707
        %1907 = vmatprep.subr.bf16.mxu0 0
        %1908 = vmatpush2.bf16.msra.mxu0 0
        %1909 = vmatprep.subr.bf16.mxu0 0
        %1910 = vmatpush2.bf16.msra.mxu0 0
        %1911 = vmatprep.subr.bf16.mxu0 0
        %1912 = vmatpush2.bf16.msra.mxu0 0
        %1913 = vmatprep.subr.bf16.mxu0 0
        %1914 = vmatpush2.bf16.msra.mxu0 0
        %1915 = vmatprep.subr.bf16.mxu0 0
        %1916 = vmatpush2.bf16.msra.mxu0 0
        %1917 = vmatprep.subr.bf16.mxu0 0
        %1918 = vmatpush2.bf16.msra.mxu0 0
        %1919 = vmatprep.subr.bf16.mxu0 0
        %1920 = vmatpush2.bf16.msra.mxu0 0
        %1921 = vmatprep.subr.bf16.mxu0 0
        %1922 = vmatpush2.bf16.msra.mxu0 0
        %1923 = vmatprep.mubr.bf16.mxu0 0
        %1924 = vmatmul.mubr.bf16.gmra.mxu0 %v1766
        %v1925 = vpop.f32.mrf.mxu0
        %v1926 = vadd.f32 %v1552, %v1925
        %v1927 = vpop.f32.mrf.mxu0
        %v1928 = vadd.f32 %v1556, %v1927
        %v1929 = vpop.f32.mrf.mxu0
        %v1930 = vpop.f32.mrf.mxu0
        %1931 = vdwg.mxu0
        %1932 = vmatprep.subr.bf16.mxu0 0
        %1933 = vmatpush1.bf16.msra.mxu0 0
        %1934 = vmatprep.subr.bf16.mxu0 0
        %1935 = vmatpush1.bf16.msra.mxu0 0
        %1936 = vmatprep.subr.bf16.mxu0 0
        %1937 = vmatpush1.bf16.msra.mxu0 0
        %1938 = vmatprep.subr.bf16.mxu0 0
        %1939 = vmatpush1.bf16.msra.mxu0 0
        %1940 = vmatprep.subr.bf16.mxu0 0
        %1941 = vmatpush1.bf16.msra.mxu0 0
        %1942 = vmatprep.subr.bf16.mxu0 0
        %1943 = vmatpush1.bf16.msra.mxu0 0
        %1944 = vmatprep.subr.bf16.mxu0 %v1726
        %1945 = vmatpush1.bf16.msra.mxu0 %v1725
        %1946 = vmatprep.subr.bf16.mxu0 %v1710
        %1947 = vmatpush1.bf16.msra.mxu0 %v1709
        %1948 = vmatprep.subr.bf16.mxu0 0
        %1949 = vmatpush2.bf16.msra.mxu0 0
        %1950 = vmatprep.subr.bf16.mxu0 0
        %1951 = vmatpush2.bf16.msra.mxu0 0
        %1952 = vmatprep.subr.bf16.mxu0 0
        %1953 = vmatpush2.bf16.msra.mxu0 0
        %1954 = vmatprep.subr.bf16.mxu0 0
        %1955 = vmatpush2.bf16.msra.mxu0 0
        %1956 = vmatprep.subr.bf16.mxu0 0
        %1957 = vmatpush2.bf16.msra.mxu0 0
        %1958 = vmatprep.subr.bf16.mxu0 0
        %1959 = vmatpush2.bf16.msra.mxu0 0
        %1960 = vmatprep.subr.bf16.mxu0 0
        %1961 = vmatpush2.bf16.msra.mxu0 0
        %1962 = vmatprep.subr.bf16.mxu0 0
        %1963 = vmatpush2.bf16.msra.mxu0 0
        %1964 = vmatprep.mubr.bf16.mxu0 0
        %1965 = vmatmul.mubr.bf16.gmra.mxu0 %v1766
        %v1966 = vpop.f32.mrf.mxu0
        %v1967 = vadd.f32 %v1560, %v1966
        %v1968 = vpop.f32.mrf.mxu0
        %v1969 = vadd.f32 %v1564, %v1968
        %v1970 = vpop.f32.mrf.mxu0
        %v1971 = vpop.f32.mrf.mxu0
        %1972 = vdwg.mxu0
        %1973 = vmatprep.subr.bf16.mxu0 0
        %1974 = vmatpush1.bf16.msra.mxu0 0
        %1975 = vmatprep.subr.bf16.mxu0 0
        %1976 = vmatpush1.bf16.msra.mxu0 0
        %1977 = vmatprep.subr.bf16.mxu0 0
        %1978 = vmatpush1.bf16.msra.mxu0 0
        %1979 = vmatprep.subr.bf16.mxu0 0
        %1980 = vmatpush1.bf16.msra.mxu0 0
        %1981 = vmatprep.subr.bf16.mxu0 0
        %1982 = vmatpush1.bf16.msra.mxu0 0
        %1983 = vmatprep.subr.bf16.mxu0 0
        %1984 = vmatpush1.bf16.msra.mxu0 0
        %1985 = vmatprep.subr.bf16.mxu0 %v1728
        %1986 = vmatpush1.bf16.msra.mxu0 %v1727
        %1987 = vmatprep.subr.bf16.mxu0 %v1712
        %1988 = vmatpush1.bf16.msra.mxu0 %v1711
        %1989 = vmatprep.subr.bf16.mxu0 0
        %1990 = vmatpush2.bf16.msra.mxu0 0
        %1991 = vmatprep.subr.bf16.mxu0 0
        %1992 = vmatpush2.bf16.msra.mxu0 0
        %1993 = vmatprep.subr.bf16.mxu0 0
        %1994 = vmatpush2.bf16.msra.mxu0 0
        %1995 = vmatprep.subr.bf16.mxu0 0
        %1996 = vmatpush2.bf16.msra.mxu0 0
        %1997 = vmatprep.subr.bf16.mxu0 0
        %1998 = vmatpush2.bf16.msra.mxu0 0
        %1999 = vmatprep.subr.bf16.mxu0 0
        %2000 = vmatpush2.bf16.msra.mxu0 0
        %2001 = vmatprep.subr.bf16.mxu0 0
        %2002 = vmatpush2.bf16.msra.mxu0 0
        %2003 = vmatprep.subr.bf16.mxu0 0
        %2004 = vmatpush2.bf16.msra.mxu0 0
        %2005 = vmatprep.mubr.bf16.mxu0 0
        %2006 = vmatmul.mubr.bf16.gmra.mxu0 %v1766
        %v2007 = vpop.f32.mrf.mxu0
        %v2008 = vadd.f32 %v1568, %v2007
        %v2009 = vpop.f32.mrf.mxu0
        %v2010 = vadd.f32 %v1572, %v2009
        %v2011 = vpop.f32.mrf.mxu0
        %v2012 = vpop.f32.mrf.mxu0
        %2013 = vdwg.mxu0
        %2014 = vmatprep.subr.bf16.mxu0 0
        %2015 = vmatpush1.bf16.msra.mxu0 0
        %2016 = vmatprep.subr.bf16.mxu0 0
        %2017 = vmatpush1.bf16.msra.mxu0 0
        %2018 = vmatprep.subr.bf16.mxu0 0
        %2019 = vmatpush1.bf16.msra.mxu0 0
        %2020 = vmatprep.subr.bf16.mxu0 0
        %2021 = vmatpush1.bf16.msra.mxu0 0
        %2022 = vmatprep.subr.bf16.mxu0 0
        %2023 = vmatpush1.bf16.msra.mxu0 0
        %2024 = vmatprep.subr.bf16.mxu0 0
        %2025 = vmatpush1.bf16.msra.mxu0 0
        %2026 = vmatprep.subr.bf16.mxu0 %v1730
        %2027 = vmatpush1.bf16.msra.mxu0 %v1729
        %2028 = vmatprep.subr.bf16.mxu0 %v1714
        %2029 = vmatpush1.bf16.msra.mxu0 %v1713
        %2030 = vmatprep.subr.bf16.mxu0 0
        %2031 = vmatpush2.bf16.msra.mxu0 0
        %2032 = vmatprep.subr.bf16.mxu0 0
        %2033 = vmatpush2.bf16.msra.mxu0 0
        %2034 = vmatprep.subr.bf16.mxu0 0
        %2035 = vmatpush2.bf16.msra.mxu0 0
        %2036 = vmatprep.subr.bf16.mxu0 0
        %2037 = vmatpush2.bf16.msra.mxu0 0
        %2038 = vmatprep.subr.bf16.mxu0 0
        %2039 = vmatpush2.bf16.msra.mxu0 0
        %2040 = vmatprep.subr.bf16.mxu0 0
        %2041 = vmatpush2.bf16.msra.mxu0 0
        %2042 = vmatprep.subr.bf16.mxu0 0
        %2043 = vmatpush2.bf16.msra.mxu0 0
        %2044 = vmatprep.subr.bf16.mxu0 0
        %2045 = vmatpush2.bf16.msra.mxu0 0
        %2046 = vmatprep.mubr.bf16.mxu0 0
        %2047 = vmatmul.mubr.bf16.gmra.mxu0 %v1766
        %v2048 = vpop.f32.mrf.mxu0
        %v2049 = vadd.f32 %v1576, %v2048
        %v2050 = vpop.f32.mrf.mxu0
        %v2051 = vadd.f32 %v1580, %v2050
        %v2052 = vpop.f32.mrf.mxu0
        %v2053 = vpop.f32.mrf.mxu0
        %2054 = vdwg.mxu0
        %2055 = vmatprep.subr.bf16.mxu0 0
        %2056 = vmatpush1.bf16.msra.mxu0 0
        %2057 = vmatprep.subr.bf16.mxu0 0
        %2058 = vmatpush1.bf16.msra.mxu0 0
        %2059 = vmatprep.subr.bf16.mxu0 0
        %2060 = vmatpush1.bf16.msra.mxu0 0
        %2061 = vmatprep.subr.bf16.mxu0 0
        %2062 = vmatpush1.bf16.msra.mxu0 0
        %2063 = vmatprep.subr.bf16.mxu0 0
        %2064 = vmatpush1.bf16.msra.mxu0 0
        %2065 = vmatprep.subr.bf16.mxu0 0
        %2066 = vmatpush1.bf16.msra.mxu0 0
        %2067 = vmatprep.subr.bf16.mxu0 %v1732
        %2068 = vmatpush1.bf16.msra.mxu0 %v1731
        %2069 = vmatprep.subr.bf16.mxu0 %v1716
        %2070 = vmatpush1.bf16.msra.mxu0 %v1715
        %2071 = vmatprep.subr.bf16.mxu0 0
        %2072 = vmatpush2.bf16.msra.mxu0 0
        %2073 = vmatprep.subr.bf16.mxu0 0
        %2074 = vmatpush2.bf16.msra.mxu0 0
        %2075 = vmatprep.subr.bf16.mxu0 0
        %2076 = vmatpush2.bf16.msra.mxu0 0
        %2077 = vmatprep.subr.bf16.mxu0 0
        %2078 = vmatpush2.bf16.msra.mxu0 0
        %2079 = vmatprep.subr.bf16.mxu0 0
        %2080 = vmatpush2.bf16.msra.mxu0 0
        %2081 = vmatprep.subr.bf16.mxu0 0
        %2082 = vmatpush2.bf16.msra.mxu0 0
        %2083 = vmatprep.subr.bf16.mxu0 0
        %2084 = vmatpush2.bf16.msra.mxu0 0
        %2085 = vmatprep.subr.bf16.mxu0 0
        %2086 = vmatpush2.bf16.msra.mxu0 0
        %2087 = vmatprep.mubr.bf16.mxu0 0
        %2088 = vmatmul.mubr.bf16.gmra.mxu0 %v1766
        %v2089 = vpop.f32.mrf.mxu0
        %v2090 = vadd.f32 %v1584, %v2089
        %v2091 = vpop.f32.mrf.mxu0
        %v2092 = vadd.f32 %v1588, %v2091
        %v2093 = vpop.f32.mrf.mxu0
        %v2094 = vpop.f32.mrf.mxu0
        %2095 = vdwg.mxu0
        %v2096 = vmax.f32 %v1803, 0.0
        %v2097 = vmax.f32 %v1805, 0.0
        %v2098 = vmax.f32 %v1844, 0.0
        %v2099 = vmax.f32 %v1846, 0.0
        %v2100 = vmax.f32 %v1885, 0.0
        %v2101 = vmax.f32 %v1887, 0.0
        %v2102 = vmax.f32 %v1926, 0.0
        %v2103 = vmax.f32 %v1928, 0.0
        %v2104 = vmax.f32 %v1967, 0.0
        %v2105 = vmax.f32 %v1969, 0.0
        %v2106 = vmax.f32 %v2008, 0.0
        %v2107 = vmax.f32 %v2010, 0.0
        %v2108 = vmax.f32 %v2049, 0.0
        %v2109 = vmax.f32 %v2051, 0.0
        %v2110 = vmax.f32 %v2090, 0.0
        %v2111 = vmax.f32 %v2092, 0.0
        %v2112 = vpack.c.bf16 %v2096, %v2096
        %v2113 = vpack.c.bf16 %v2097, %v2097
        %v2114 = vpack.c.bf16 %v2098, %v2098
        %v2115 = vpack.c.bf16 %v2099, %v2099
        %v2116 = vpack.c.bf16 %v2100, %v2100
        %v2117 = vpack.c.bf16 %v2101, %v2101
        %v2118 = vpack.c.bf16 %v2102, %v2102
        %v2119 = vpack.c.bf16 %v2103, %v2103
        %v2120 = vpack.c.bf16 %v2104, %v2104
        %v2121 = vpack.c.bf16 %v2105, %v2105
        %v2122 = vpack.c.bf16 %v2106, %v2106
        %v2123 = vpack.c.bf16 %v2107, %v2107
        %v2124 = vpack.c.bf16 %v2108, %v2108
        %v2125 = vpack.c.bf16 %v2109, %v2109
        %v2126 = vpack.c.bf16 %v2110, %v2110
        %v2127 = vpack.c.bf16 %v2111, %v2111
        %v2128 = vld [vmem:[%s16] sm:$0xf]
        %v2129 = vld [vmem:[%s16 + $0x4] sm:$0xf]
        %v2130 = vld [vmem:[%s16 + $0x8] sm:$0xf]
        %v2131 = vld [vmem:[%s16 + $0xc] sm:$0xf]
        %v2132 = vld [vmem:[%s16 + $0x10] sm:$0xf]
        %v2133 = vld [vmem:[%s16 + $0x14] sm:$0xf]
        %v2134 = vld [vmem:[%s16 + $0x18] sm:$0xf]
        %v2135 = vld [vmem:[%s16 + $0x1c] sm:$0xf]
        %v2136 = vld [vmem:[%s16 + $0x20] sm:$0xf]
        %v2137 = vld [vmem:[%s16 + $0x24] sm:$0xf]
        %v2138 = vld [vmem:[%s16 + $0x28] sm:$0xf]
        %v2139 = vld [vmem:[%s16 + $0x2c] sm:$0xf]
        %v2140 = vld [vmem:[%s16 + $0x30] sm:$0xf]
        %v2141 = vld [vmem:[%s16 + $0x34] sm:$0xf]
        %v2142 = vld [vmem:[%s16 + $0x38] sm:$0xf]
        %v2143 = vld [vmem:[%s16 + $0x3c] sm:$0xf]
        %v2144 = vld [vmem:[%s16 + $0x40] sm:$0xf]
        %v2145 = vld [vmem:[%s16 + $0x44] sm:$0xf]
        %v2146 = vld [vmem:[%s16 + $0x48] sm:$0xf]
        %v2147 = vld [vmem:[%s16 + $0x4c] sm:$0xf]
        %v2148 = vld [vmem:[%s16 + $0x50] sm:$0xf]
        %v2149 = vld [vmem:[%s16 + $0x54] sm:$0xf]
        %v2150 = vld [vmem:[%s16 + $0x58] sm:$0xf]
        %v2151 = vld [vmem:[%s16 + $0x5c] sm:$0xf]
        %v2152 = vld [vmem:[%s16 + $0x60] sm:$0xf]
        %v2153 = vld [vmem:[%s16 + $0x64] sm:$0xf]
        %v2154 = vld [vmem:[%s16 + $0x68] sm:$0xf]
        %v2155 = vld [vmem:[%s16 + $0x6c] sm:$0xf]
        %v2156 = vld [vmem:[%s16 + $0x70] sm:$0xf]
        %v2157 = vld [vmem:[%s16 + $0x74] sm:$0xf]
        %v2158 = vld [vmem:[%s16 + $0x78] sm:$0xf]
        %v2159 = vld [vmem:[%s16 + $0x7c] sm:$0xf]
        %v2160 = vld [vmem:[%s16 + $0x80] sm:$0xf]
        %v2161 = vld [vmem:[%s16 + $0x84] sm:$0xf]
        %v2162 = vld [vmem:[%s16 + $0x88] sm:$0xf]
        %v2163 = vld [vmem:[%s16 + $0x8c] sm:$0xf]
        %v2164 = vld [vmem:[%s16 + $0x90] sm:$0xf]
        %v2165 = vld [vmem:[%s16 + $0x94] sm:$0xf]
        %v2166 = vld [vmem:[%s16 + $0x98] sm:$0xf]
        %v2167 = vld [vmem:[%s16 + $0x9c] sm:$0xf]
        %v2168 = vld [vmem:[%s16 + $0xa0] sm:$0xf]
        %v2169 = vld [vmem:[%s16 + $0xa4] sm:$0xf]
        %v2170 = vld [vmem:[%s16 + $0xa8] sm:$0xf]
        %v2171 = vld [vmem:[%s16 + $0xac] sm:$0xf]
        %v2172 = vld [vmem:[%s16 + $0xb0] sm:$0xf]
        %v2173 = vld [vmem:[%s16 + $0xb4] sm:$0xf]
        %v2174 = vld [vmem:[%s16 + $0xb8] sm:$0xf]
        %v2175 = vld [vmem:[%s16 + $0xbc] sm:$0xf]
        %v2176 = vld [vmem:[%s16 + $0xc0] sm:$0xf]
        %v2177 = vld [vmem:[%s16 + $0xc4] sm:$0xf]
        %v2178 = vld [vmem:[%s16 + $0xc8] sm:$0xf]
        %v2179 = vld [vmem:[%s16 + $0xcc] sm:$0xf]
        %v2180 = vld [vmem:[%s16 + $0xd0] sm:$0xf]
        %v2181 = vld [vmem:[%s16 + $0xd4] sm:$0xf]
        %v2182 = vld [vmem:[%s16 + $0xd8] sm:$0xf]
        %v2183 = vld [vmem:[%s16 + $0xdc] sm:$0xf]
        %v2184 = vld [vmem:[%s16 + $0xe0] sm:$0xf]
        %v2185 = vld [vmem:[%s16 + $0xe4] sm:$0xf]
        %v2186 = vld [vmem:[%s16 + $0xe8] sm:$0xf]
        %v2187 = vld [vmem:[%s16 + $0xec] sm:$0xf]
        %v2188 = vld [vmem:[%s16 + $0xf0] sm:$0xf]
        %v2189 = vld [vmem:[%s16 + $0xf4] sm:$0xf]
        %v2190 = vld [vmem:[%s16 + $0xf8] sm:$0xf]
        %v2191 = vld [vmem:[%s16 + $0xfc] sm:$0xf]
        %v2192 = vld [vmem:[%s16 + $0x100] sm:$0xf]
        %v2193 = vld [vmem:[%s16 + $0x104] sm:$0xf]
        %v2194 = vld [vmem:[%s16 + $0x108] sm:$0xf]
        %v2195 = vld [vmem:[%s16 + $0x10c] sm:$0xf]
        %v2196 = vld [vmem:[%s16 + $0x110] sm:$0xf]
        %v2197 = vld [vmem:[%s16 + $0x114] sm:$0xf]
        %v2198 = vld [vmem:[%s16 + $0x118] sm:$0xf]
        %v2199 = vld [vmem:[%s16 + $0x11c] sm:$0xf]
        %v2200 = vld [vmem:[%s16 + $0x120] sm:$0xf]
        %v2201 = vld [vmem:[%s16 + $0x124] sm:$0xf]
        %v2202 = vld [vmem:[%s16 + $0x128] sm:$0xf]
        %v2203 = vld [vmem:[%s16 + $0x12c] sm:$0xf]
        %v2204 = vld [vmem:[%s16 + $0x130] sm:$0xf]
        %v2205 = vld [vmem:[%s16 + $0x134] sm:$0xf]
        %v2206 = vld [vmem:[%s16 + $0x138] sm:$0xf]
        %v2207 = vld [vmem:[%s16 + $0x13c] sm:$0xf]
        %v2208 = vld [vmem:[%s16 + $0x140] sm:$0xf]
        %v2209 = vld [vmem:[%s16 + $0x144] sm:$0xf]
        %v2210 = vld [vmem:[%s16 + $0x148] sm:$0xf]
        %v2211 = vld [vmem:[%s16 + $0x14c] sm:$0xf]
        %v2212 = vld [vmem:[%s16 + $0x150] sm:$0xf]
        %v2213 = vld [vmem:[%s16 + $0x154] sm:$0xf]
        %v2214 = vld [vmem:[%s16 + $0x158] sm:$0xf]
        %v2215 = vld [vmem:[%s16 + $0x15c] sm:$0xf]
        %v2216 = vld [vmem:[%s16 + $0x160] sm:$0xf]
        %v2217 = vld [vmem:[%s16 + $0x164] sm:$0xf]
        %v2218 = vld [vmem:[%s16 + $0x168] sm:$0xf]
        %v2219 = vld [vmem:[%s16 + $0x16c] sm:$0xf]
        %v2220 = vld [vmem:[%s16 + $0x170] sm:$0xf]
        %v2221 = vld [vmem:[%s16 + $0x174] sm:$0xf]
        %v2222 = vld [vmem:[%s16 + $0x178] sm:$0xf]
        %v2223 = vld [vmem:[%s16 + $0x17c] sm:$0xf]
        %v2224 = vld [vmem:[%s16 + $0x180] sm:$0xf]
        %v2225 = vld [vmem:[%s16 + $0x184] sm:$0xf]
        %v2226 = vld [vmem:[%s16 + $0x188] sm:$0xf]
        %v2227 = vld [vmem:[%s16 + $0x18c] sm:$0xf]
        %v2228 = vld [vmem:[%s16 + $0x190] sm:$0xf]
        %v2229 = vld [vmem:[%s16 + $0x194] sm:$0xf]
        %v2230 = vld [vmem:[%s16 + $0x198] sm:$0xf]
        %v2231 = vld [vmem:[%s16 + $0x19c] sm:$0xf]
        %v2232 = vld [vmem:[%s16 + $0x1a0] sm:$0xf]
        %v2233 = vld [vmem:[%s16 + $0x1a4] sm:$0xf]
        %v2234 = vld [vmem:[%s16 + $0x1a8] sm:$0xf]
        %v2235 = vld [vmem:[%s16 + $0x1ac] sm:$0xf]
        %v2236 = vld [vmem:[%s16 + $0x1b0] sm:$0xf]
        %v2237 = vld [vmem:[%s16 + $0x1b4] sm:$0xf]
        %v2238 = vld [vmem:[%s16 + $0x1b8] sm:$0xf]
        %v2239 = vld [vmem:[%s16 + $0x1bc] sm:$0xf]
        %v2240 = vld [vmem:[%s16 + $0x1c0] sm:$0xf]
        %v2241 = vld [vmem:[%s16 + $0x1c4] sm:$0xf]
        %v2242 = vld [vmem:[%s16 + $0x1c8] sm:$0xf]
        %v2243 = vld [vmem:[%s16 + $0x1cc] sm:$0xf]
        %v2244 = vld [vmem:[%s16 + $0x1d0] sm:$0xf]
        %v2245 = vld [vmem:[%s16 + $0x1d4] sm:$0xf]
        %v2246 = vld [vmem:[%s16 + $0x1d8] sm:$0xf]
        %v2247 = vld [vmem:[%s16 + $0x1dc] sm:$0xf]
        %v2248 = vld [vmem:[%s16 + $0x1e0] sm:$0xf]
        %v2249 = vld [vmem:[%s16 + $0x1e4] sm:$0xf]
        %v2250 = vld [vmem:[%s16 + $0x1e8] sm:$0xf]
        %v2251 = vld [vmem:[%s16 + $0x1ec] sm:$0xf]
        %v2252 = vld [vmem:[%s16 + $0x1f0] sm:$0xf]
        %v2253 = vld [vmem:[%s16 + $0x1f4] sm:$0xf]
        %v2254 = vld [vmem:[%s16 + $0x1f8] sm:$0xf]
        %v2255 = vld [vmem:[%s16 + $0x1fc] sm:$0xf]
        %v2256 = vld [vmem:[%s16 + $0x200] sm:$0xf]
        %v2257 = vld [vmem:[%s16 + $0x204] sm:$0xf]
        %v2258 = vld [vmem:[%s16 + $0x208] sm:$0xf]
        %v2259 = vld [vmem:[%s16 + $0x20c] sm:$0xf]
        %v2260 = vld [vmem:[%s16 + $0x210] sm:$0xf]
        %v2261 = vld [vmem:[%s16 + $0x214] sm:$0xf]
        %v2262 = vld [vmem:[%s16 + $0x218] sm:$0xf]
        %v2263 = vld [vmem:[%s16 + $0x21c] sm:$0xf]
        %v2264 = vld [vmem:[%s16 + $0x220] sm:$0xf]
        %v2265 = vld [vmem:[%s16 + $0x224] sm:$0xf]
        %v2266 = vld [vmem:[%s16 + $0x228] sm:$0xf]
        %v2267 = vld [vmem:[%s16 + $0x22c] sm:$0xf]
        %v2268 = vld [vmem:[%s16 + $0x230] sm:$0xf]
        %v2269 = vld [vmem:[%s16 + $0x234] sm:$0xf]
        %v2270 = vld [vmem:[%s16 + $0x238] sm:$0xf]
        %v2271 = vld [vmem:[%s16 + $0x23c] sm:$0xf]
        %v2272 = vld [vmem:[%s16 + $0x240] sm:$0xf]
        %v2273 = vld [vmem:[%s16 + $0x244] sm:$0xf]
        %v2274 = vld [vmem:[%s16 + $0x248] sm:$0xf]
        %v2275 = vld [vmem:[%s16 + $0x24c] sm:$0xf]
        %v2276 = vld [vmem:[%s16 + $0x250] sm:$0xf]
        %v2277 = vld [vmem:[%s16 + $0x254] sm:$0xf]
        %v2278 = vld [vmem:[%s16 + $0x258] sm:$0xf]
        %v2279 = vld [vmem:[%s16 + $0x25c] sm:$0xf]
        %v2280 = vld [vmem:[%s16 + $0x260] sm:$0xf]
        %v2281 = vld [vmem:[%s16 + $0x264] sm:$0xf]
        %v2282 = vld [vmem:[%s16 + $0x268] sm:$0xf]
        %v2283 = vld [vmem:[%s16 + $0x26c] sm:$0xf]
        %v2284 = vld [vmem:[%s16 + $0x270] sm:$0xf]
        %v2285 = vld [vmem:[%s16 + $0x274] sm:$0xf]
        %v2286 = vld [vmem:[%s16 + $0x278] sm:$0xf]
        %v2287 = vld [vmem:[%s16 + $0x27c] sm:$0xf]
        %v2288 = vld [vmem:[%s16 + $0x280] sm:$0xf]
        %v2289 = vld [vmem:[%s16 + $0x284] sm:$0xf]
        %v2290 = vld [vmem:[%s16 + $0x288] sm:$0xf]
        %v2291 = vld [vmem:[%s16 + $0x28c] sm:$0xf]
        %v2292 = vld [vmem:[%s16 + $0x290] sm:$0xf]
        %v2293 = vld [vmem:[%s16 + $0x294] sm:$0xf]
        %v2294 = vld [vmem:[%s16 + $0x298] sm:$0xf]
        %v2295 = vld [vmem:[%s16 + $0x29c] sm:$0xf]
        %v2296 = vld [vmem:[%s16 + $0x2a0] sm:$0xf]
        %v2297 = vld [vmem:[%s16 + $0x2a4] sm:$0xf]
        %v2298 = vld [vmem:[%s16 + $0x2a8] sm:$0xf]
        %v2299 = vld [vmem:[%s16 + $0x2ac] sm:$0xf]
        %v2300 = vld [vmem:[%s16 + $0x2b0] sm:$0xf]
        %v2301 = vld [vmem:[%s16 + $0x2b4] sm:$0xf]
        %v2302 = vld [vmem:[%s16 + $0x2b8] sm:$0xf]
        %v2303 = vld [vmem:[%s16 + $0x2bc] sm:$0xf]
        %v2304 = vld [vmem:[%s16 + $0x2c0] sm:$0xf]
        %v2305 = vld [vmem:[%s16 + $0x2c4] sm:$0xf]
        %v2306 = vld [vmem:[%s16 + $0x2c8] sm:$0xf]
        %v2307 = vld [vmem:[%s16 + $0x2cc] sm:$0xf]
        %v2308 = vld [vmem:[%s16 + $0x2d0] sm:$0xf]
        %v2309 = vld [vmem:[%s16 + $0x2d4] sm:$0xf]
        %v2310 = vld [vmem:[%s16 + $0x2d8] sm:$0xf]
        %v2311 = vld [vmem:[%s16 + $0x2dc] sm:$0xf]
        %v2312 = vld [vmem:[%s16 + $0x2e0] sm:$0xf]
        %v2313 = vld [vmem:[%s16 + $0x2e4] sm:$0xf]
        %v2314 = vld [vmem:[%s16 + $0x2e8] sm:$0xf]
        %v2315 = vld [vmem:[%s16 + $0x2ec] sm:$0xf]
        %v2316 = vld [vmem:[%s16 + $0x2f0] sm:$0xf]
        %v2317 = vld [vmem:[%s16 + $0x2f4] sm:$0xf]
        %v2318 = vld [vmem:[%s16 + $0x2f8] sm:$0xf]
        %v2319 = vld [vmem:[%s16 + $0x2fc] sm:$0xf]
        %v2320 = vld [vmem:[%s16 + $0x300] sm:$0xf]
        %v2321 = vld [vmem:[%s16 + $0x304] sm:$0xf]
        %v2322 = vld [vmem:[%s16 + $0x308] sm:$0xf]
        %v2323 = vld [vmem:[%s16 + $0x30c] sm:$0xf]
        %v2324 = vld [vmem:[%s16 + $0x310] sm:$0xf]
        %v2325 = vld [vmem:[%s16 + $0x314] sm:$0xf]
        %v2326 = vld [vmem:[%s16 + $0x318] sm:$0xf]
        %v2327 = vld [vmem:[%s16 + $0x31c] sm:$0xf]
        %v2328 = vld [vmem:[%s16 + $0x320] sm:$0xf]
        %v2329 = vld [vmem:[%s16 + $0x324] sm:$0xf]
        %v2330 = vld [vmem:[%s16 + $0x328] sm:$0xf]
        %v2331 = vld [vmem:[%s16 + $0x32c] sm:$0xf]
        %v2332 = vld [vmem:[%s16 + $0x330] sm:$0xf]
        %v2333 = vld [vmem:[%s16 + $0x334] sm:$0xf]
        %v2334 = vld [vmem:[%s16 + $0x338] sm:$0xf]
        %v2335 = vld [vmem:[%s16 + $0x33c] sm:$0xf]
        %v2336 = vld [vmem:[%s16 + $0x340] sm:$0xf]
        %v2337 = vld [vmem:[%s16 + $0x344] sm:$0xf]
        %v2338 = vld [vmem:[%s16 + $0x348] sm:$0xf]
        %v2339 = vld [vmem:[%s16 + $0x34c] sm:$0xf]
        %v2340 = vld [vmem:[%s16 + $0x350] sm:$0xf]
        %v2341 = vld [vmem:[%s16 + $0x354] sm:$0xf]
        %v2342 = vld [vmem:[%s16 + $0x358] sm:$0xf]
        %v2343 = vld [vmem:[%s16 + $0x35c] sm:$0xf]
        %v2344 = vld [vmem:[%s16 + $0x360] sm:$0xf]
        %v2345 = vld [vmem:[%s16 + $0x364] sm:$0xf]
        %v2346 = vld [vmem:[%s16 + $0x368] sm:$0xf]
        %v2347 = vld [vmem:[%s16 + $0x36c] sm:$0xf]
        %v2348 = vld [vmem:[%s16 + $0x370] sm:$0xf]
        %v2349 = vld [vmem:[%s16 + $0x374] sm:$0xf]
        %v2350 = vld [vmem:[%s16 + $0x378] sm:$0xf]
        %v2351 = vld [vmem:[%s16 + $0x37c] sm:$0xf]
        %v2352 = vld [vmem:[%s16 + $0x380] sm:$0xf]
        %v2353 = vld [vmem:[%s16 + $0x384] sm:$0xf]
        %v2354 = vld [vmem:[%s16 + $0x388] sm:$0xf]
        %v2355 = vld [vmem:[%s16 + $0x38c] sm:$0xf]
        %v2356 = vld [vmem:[%s16 + $0x390] sm:$0xf]
        %v2357 = vld [vmem:[%s16 + $0x394] sm:$0xf]
        %v2358 = vld [vmem:[%s16 + $0x398] sm:$0xf]
        %v2359 = vld [vmem:[%s16 + $0x39c] sm:$0xf]
        %v2360 = vld [vmem:[%s16 + $0x3a0] sm:$0xf]
        %v2361 = vld [vmem:[%s16 + $0x3a4] sm:$0xf]
        %v2362 = vld [vmem:[%s16 + $0x3a8] sm:$0xf]
        %v2363 = vld [vmem:[%s16 + $0x3ac] sm:$0xf]
        %v2364 = vld [vmem:[%s16 + $0x3b0] sm:$0xf]
        %v2365 = vld [vmem:[%s16 + $0x3b4] sm:$0xf]
        %v2366 = vld [vmem:[%s16 + $0x3b8] sm:$0xf]
        %v2367 = vld [vmem:[%s16 + $0x3bc] sm:$0xf]
        %v2368 = vld [vmem:[%s16 + $0x3c0] sm:$0xf]
        %v2369 = vld [vmem:[%s16 + $0x3c4] sm:$0xf]
        %v2370 = vld [vmem:[%s16 + $0x3c8] sm:$0xf]
        %v2371 = vld [vmem:[%s16 + $0x3cc] sm:$0xf]
        %v2372 = vld [vmem:[%s16 + $0x3d0] sm:$0xf]
        %v2373 = vld [vmem:[%s16 + $0x3d4] sm:$0xf]
        %v2374 = vld [vmem:[%s16 + $0x3d8] sm:$0xf]
        %v2375 = vld [vmem:[%s16 + $0x3dc] sm:$0xf]
        %v2376 = vld [vmem:[%s16 + $0x3e0] sm:$0xf]
        %v2377 = vld [vmem:[%s16 + $0x3e4] sm:$0xf]
        %v2378 = vld [vmem:[%s16 + $0x3e8] sm:$0xf]
        %v2379 = vld [vmem:[%s16 + $0x3ec] sm:$0xf]
        %v2380 = vld [vmem:[%s16 + $0x3f0] sm:$0xf]
        %v2381 = vld [vmem:[%s16 + $0x3f4] sm:$0xf]
        %v2382 = vld [vmem:[%s16 + $0x3f8] sm:$0xf]
        %v2383 = vld [vmem:[%s16 + $0x3fc] sm:$0xf]
        %v2384 = vld [vmem:[%s17] sm:$0x1]
        %v2386 = vlaneseq
        %v2387 = vshrl.u32 %v2386, 7
        %v2388 = vsub.s32 0, %v2387
        %v2389 = vrot.slane %v2384, %v2388
        %v2647 = vunpack.c.l.b16 %v2128
        %v2648 = vunpack.c.l.b16 %v2129
        %v2649 = vunpack.c.l.b16 %v2130
        %v2650 = vunpack.c.l.b16 %v2131
        %v2651 = vunpack.c.l.b16 %v2132
        %v2652 = vunpack.c.l.b16 %v2133
        %v2653 = vunpack.c.l.b16 %v2134
        %v2654 = vunpack.c.l.b16 %v2135
        %v2655 = vunpack.c.l.b16 %v2136
        %v2656 = vunpack.c.l.b16 %v2137
        %v2657 = vunpack.c.l.b16 %v2138
        %v2658 = vunpack.c.l.b16 %v2139
        %v2659 = vunpack.c.l.b16 %v2140
        %v2660 = vunpack.c.l.b16 %v2141
        %v2661 = vunpack.c.l.b16 %v2142
        %v2662 = vunpack.c.l.b16 %v2143
        %v2663 = vunpack.c.l.b16 %v2144
        %v2664 = vunpack.c.l.b16 %v2145
        %v2665 = vunpack.c.l.b16 %v2146
        %v2666 = vunpack.c.l.b16 %v2147
        %v2667 = vunpack.c.l.b16 %v2148
        %v2668 = vunpack.c.l.b16 %v2149
        %v2669 = vunpack.c.l.b16 %v2150
        %v2670 = vunpack.c.l.b16 %v2151
        %v2671 = vunpack.c.l.b16 %v2152
        %v2672 = vunpack.c.l.b16 %v2153
        %v2673 = vunpack.c.l.b16 %v2154
        %v2674 = vunpack.c.l.b16 %v2155
        %v2675 = vunpack.c.l.b16 %v2156
        %v2676 = vunpack.c.l.b16 %v2157
        %v2677 = vunpack.c.l.b16 %v2158
        %v2678 = vunpack.c.l.b16 %v2159
        %v2679 = vunpack.c.l.b16 %v2160
        %v2680 = vunpack.c.l.b16 %v2161
        %v2681 = vunpack.c.l.b16 %v2162
        %v2682 = vunpack.c.l.b16 %v2163
        %v2683 = vunpack.c.l.b16 %v2164
        %v2684 = vunpack.c.l.b16 %v2165
        %v2685 = vunpack.c.l.b16 %v2166
        %v2686 = vunpack.c.l.b16 %v2167
        %v2687 = vunpack.c.l.b16 %v2168
        %v2688 = vunpack.c.l.b16 %v2169
        %v2689 = vunpack.c.l.b16 %v2170
        %v2690 = vunpack.c.l.b16 %v2171
        %v2691 = vunpack.c.l.b16 %v2172
        %v2692 = vunpack.c.l.b16 %v2173
        %v2693 = vunpack.c.l.b16 %v2174
        %v2694 = vunpack.c.l.b16 %v2175
        %v2695 = vunpack.c.l.b16 %v2176
        %v2696 = vunpack.c.l.b16 %v2177
        %v2697 = vunpack.c.l.b16 %v2178
        %v2698 = vunpack.c.l.b16 %v2179
        %v2699 = vunpack.c.l.b16 %v2180
        %v2700 = vunpack.c.l.b16 %v2181
        %v2701 = vunpack.c.l.b16 %v2182
        %v2702 = vunpack.c.l.b16 %v2183
        %v2703 = vunpack.c.l.b16 %v2184
        %v2704 = vunpack.c.l.b16 %v2185
        %v2705 = vunpack.c.l.b16 %v2186
        %v2706 = vunpack.c.l.b16 %v2187
        %v2707 = vunpack.c.l.b16 %v2188
        %v2708 = vunpack.c.l.b16 %v2189
        %v2709 = vunpack.c.l.b16 %v2190
        %v2710 = vunpack.c.l.b16 %v2191
        %v2711 = vunpack.c.l.b16 %v2192
        %v2712 = vunpack.c.l.b16 %v2193
        %v2713 = vunpack.c.l.b16 %v2194
        %v2714 = vunpack.c.l.b16 %v2195
        %v2715 = vunpack.c.l.b16 %v2196
        %v2716 = vunpack.c.l.b16 %v2197
        %v2717 = vunpack.c.l.b16 %v2198
        %v2718 = vunpack.c.l.b16 %v2199
        %v2719 = vunpack.c.l.b16 %v2200
        %v2720 = vunpack.c.l.b16 %v2201
        %v2721 = vunpack.c.l.b16 %v2202
        %v2722 = vunpack.c.l.b16 %v2203
        %v2723 = vunpack.c.l.b16 %v2204
        %v2724 = vunpack.c.l.b16 %v2205
        %v2725 = vunpack.c.l.b16 %v2206
        %v2726 = vunpack.c.l.b16 %v2207
        %v2727 = vunpack.c.l.b16 %v2208
        %v2728 = vunpack.c.l.b16 %v2209
        %v2729 = vunpack.c.l.b16 %v2210
        %v2730 = vunpack.c.l.b16 %v2211
        %v2731 = vunpack.c.l.b16 %v2212
        %v2732 = vunpack.c.l.b16 %v2213
        %v2733 = vunpack.c.l.b16 %v2214
        %v2734 = vunpack.c.l.b16 %v2215
        %v2735 = vunpack.c.l.b16 %v2216
        %v2736 = vunpack.c.l.b16 %v2217
        %v2737 = vunpack.c.l.b16 %v2218
        %v2738 = vunpack.c.l.b16 %v2219
        %v2739 = vunpack.c.l.b16 %v2220
        %v2740 = vunpack.c.l.b16 %v2221
        %v2741 = vunpack.c.l.b16 %v2222
        %v2742 = vunpack.c.l.b16 %v2223
        %v2743 = vunpack.c.l.b16 %v2224
        %v2744 = vunpack.c.l.b16 %v2225
        %v2745 = vunpack.c.l.b16 %v2226
        %v2746 = vunpack.c.l.b16 %v2227
        %v2747 = vunpack.c.l.b16 %v2228
        %v2748 = vunpack.c.l.b16 %v2229
        %v2749 = vunpack.c.l.b16 %v2230
        %v2750 = vunpack.c.l.b16 %v2231
        %v2751 = vunpack.c.l.b16 %v2232
        %v2752 = vunpack.c.l.b16 %v2233
        %v2753 = vunpack.c.l.b16 %v2234
        %v2754 = vunpack.c.l.b16 %v2235
        %v2755 = vunpack.c.l.b16 %v2236
        %v2756 = vunpack.c.l.b16 %v2237
        %v2757 = vunpack.c.l.b16 %v2238
        %v2758 = vunpack.c.l.b16 %v2239
        %v2759 = vunpack.c.l.b16 %v2240
        %v2760 = vunpack.c.l.b16 %v2241
        %v2761 = vunpack.c.l.b16 %v2242
        %v2762 = vunpack.c.l.b16 %v2243
        %v2763 = vunpack.c.l.b16 %v2244
        %v2764 = vunpack.c.l.b16 %v2245
        %v2765 = vunpack.c.l.b16 %v2246
        %v2766 = vunpack.c.l.b16 %v2247
        %v2767 = vunpack.c.l.b16 %v2248
        %v2768 = vunpack.c.l.b16 %v2249
        %v2769 = vunpack.c.l.b16 %v2250
        %v2770 = vunpack.c.l.b16 %v2251
        %v2771 = vunpack.c.l.b16 %v2252
        %v2772 = vunpack.c.l.b16 %v2253
        %v2773 = vunpack.c.l.b16 %v2254
        %v2774 = vunpack.c.l.b16 %v2255
        %v2775 = vunpack.c.l.b16 %v2256
        %v2776 = vunpack.c.l.b16 %v2257
        %v2777 = vunpack.c.l.b16 %v2258
        %v2778 = vunpack.c.l.b16 %v2259
        %v2779 = vunpack.c.l.b16 %v2260
        %v2780 = vunpack.c.l.b16 %v2261
        %v2781 = vunpack.c.l.b16 %v2262
        %v2782 = vunpack.c.l.b16 %v2263
        %v2783 = vunpack.c.l.b16 %v2264
        %v2784 = vunpack.c.l.b16 %v2265
        %v2785 = vunpack.c.l.b16 %v2266
        %v2786 = vunpack.c.l.b16 %v2267
        %v2787 = vunpack.c.l.b16 %v2268
        %v2788 = vunpack.c.l.b16 %v2269
        %v2789 = vunpack.c.l.b16 %v2270
        %v2790 = vunpack.c.l.b16 %v2271
        %v2791 = vunpack.c.l.b16 %v2272
        %v2792 = vunpack.c.l.b16 %v2273
        %v2793 = vunpack.c.l.b16 %v2274
        %v2794 = vunpack.c.l.b16 %v2275
        %v2795 = vunpack.c.l.b16 %v2276
        %v2796 = vunpack.c.l.b16 %v2277
        %v2797 = vunpack.c.l.b16 %v2278
        %v2798 = vunpack.c.l.b16 %v2279
        %v2799 = vunpack.c.l.b16 %v2280
        %v2800 = vunpack.c.l.b16 %v2281
        %v2801 = vunpack.c.l.b16 %v2282
        %v2802 = vunpack.c.l.b16 %v2283
        %v2803 = vunpack.c.l.b16 %v2284
        %v2804 = vunpack.c.l.b16 %v2285
        %v2805 = vunpack.c.l.b16 %v2286
        %v2806 = vunpack.c.l.b16 %v2287
        %v2807 = vunpack.c.l.b16 %v2288
        %v2808 = vunpack.c.l.b16 %v2289
        %v2809 = vunpack.c.l.b16 %v2290
        %v2810 = vunpack.c.l.b16 %v2291
        %v2811 = vunpack.c.l.b16 %v2292
        %v2812 = vunpack.c.l.b16 %v2293
        %v2813 = vunpack.c.l.b16 %v2294
        %v2814 = vunpack.c.l.b16 %v2295
        %v2815 = vunpack.c.l.b16 %v2296
        %v2816 = vunpack.c.l.b16 %v2297
        %v2817 = vunpack.c.l.b16 %v2298
        %v2818 = vunpack.c.l.b16 %v2299
        %v2819 = vunpack.c.l.b16 %v2300
        %v2820 = vunpack.c.l.b16 %v2301
        %v2821 = vunpack.c.l.b16 %v2302
        %v2822 = vunpack.c.l.b16 %v2303
        %v2823 = vunpack.c.l.b16 %v2304
        %v2824 = vunpack.c.l.b16 %v2305
        %v2825 = vunpack.c.l.b16 %v2306
        %v2826 = vunpack.c.l.b16 %v2307
        %v2827 = vunpack.c.l.b16 %v2308
        %v2828 = vunpack.c.l.b16 %v2309
        %v2829 = vunpack.c.l.b16 %v2310
        %v2830 = vunpack.c.l.b16 %v2311
        %v2831 = vunpack.c.l.b16 %v2312
        %v2832 = vunpack.c.l.b16 %v2313
        %v2833 = vunpack.c.l.b16 %v2314
        %v2834 = vunpack.c.l.b16 %v2315
        %v2835 = vunpack.c.l.b16 %v2316
        %v2836 = vunpack.c.l.b16 %v2317
        %v2837 = vunpack.c.l.b16 %v2318
        %v2838 = vunpack.c.l.b16 %v2319
        %v2839 = vunpack.c.l.b16 %v2320
        %v2840 = vunpack.c.l.b16 %v2321
        %v2841 = vunpack.c.l.b16 %v2322
        %v2842 = vunpack.c.l.b16 %v2323
        %v2843 = vunpack.c.l.b16 %v2324
        %v2844 = vunpack.c.l.b16 %v2325
        %v2845 = vunpack.c.l.b16 %v2326
        %v2846 = vunpack.c.l.b16 %v2327
        %v2847 = vunpack.c.l.b16 %v2328
        %v2848 = vunpack.c.l.b16 %v2329
        %v2849 = vunpack.c.l.b16 %v2330
        %v2850 = vunpack.c.l.b16 %v2331
        %v2851 = vunpack.c.l.b16 %v2332
        %v2852 = vunpack.c.l.b16 %v2333
        %v2853 = vunpack.c.l.b16 %v2334
        %v2854 = vunpack.c.l.b16 %v2335
        %v2855 = vunpack.c.l.b16 %v2336
        %v2856 = vunpack.c.l.b16 %v2337
        %v2857 = vunpack.c.l.b16 %v2338
        %v2858 = vunpack.c.l.b16 %v2339
        %v2859 = vunpack.c.l.b16 %v2340
        %v2860 = vunpack.c.l.b16 %v2341
        %v2861 = vunpack.c.l.b16 %v2342
        %v2862 = vunpack.c.l.b16 %v2343
        %v2863 = vunpack.c.l.b16 %v2344
        %v2864 = vunpack.c.l.b16 %v2345
        %v2865 = vunpack.c.l.b16 %v2346
        %v2866 = vunpack.c.l.b16 %v2347
        %v2867 = vunpack.c.l.b16 %v2348
        %v2868 = vunpack.c.l.b16 %v2349
        %v2869 = vunpack.c.l.b16 %v2350
        %v2870 = vunpack.c.l.b16 %v2351
        %v2871 = vunpack.c.l.b16 %v2352
        %v2872 = vunpack.c.l.b16 %v2353
        %v2873 = vunpack.c.l.b16 %v2354
        %v2874 = vunpack.c.l.b16 %v2355
        %v2875 = vunpack.c.l.b16 %v2356
        %v2876 = vunpack.c.l.b16 %v2357
        %v2877 = vunpack.c.l.b16 %v2358
        %v2878 = vunpack.c.l.b16 %v2359
        %v2879 = vunpack.c.l.b16 %v2360
        %v2880 = vunpack.c.l.b16 %v2361
        %v2881 = vunpack.c.l.b16 %v2362
        %v2882 = vunpack.c.l.b16 %v2363
        %v2883 = vunpack.c.l.b16 %v2364
        %v2884 = vunpack.c.l.b16 %v2365
        %v2885 = vunpack.c.l.b16 %v2366
        %v2886 = vunpack.c.l.b16 %v2367
        %v2887 = vunpack.c.l.b16 %v2368
        %v2888 = vunpack.c.l.b16 %v2369
        %v2889 = vunpack.c.l.b16 %v2370
        %v2890 = vunpack.c.l.b16 %v2371
        %v2891 = vunpack.c.l.b16 %v2372
        %v2892 = vunpack.c.l.b16 %v2373
        %v2893 = vunpack.c.l.b16 %v2374
        %v2894 = vunpack.c.l.b16 %v2375
        %v2895 = vunpack.c.l.b16 %v2376
        %v2896 = vunpack.c.l.b16 %v2377
        %v2897 = vunpack.c.l.b16 %v2378
        %v2898 = vunpack.c.l.b16 %v2379
        %v2899 = vunpack.c.l.b16 %v2380
        %v2900 = vunpack.c.l.b16 %v2381
        %v2901 = vunpack.c.l.b16 %v2382
        %v2902 = vunpack.c.l.b16 %v2383
        %v2903 = vpack.c.b16 %v2648, %v2647
        %v2904 = vpack.c.b16 %v2650, %v2649
        %v2905 = vpack.c.b16 %v2652, %v2651
        %v2906 = vpack.c.b16 %v2654, %v2653
        %v2907 = vpack.c.b16 %v2656, %v2655
        %v2908 = vpack.c.b16 %v2658, %v2657
        %v2909 = vpack.c.b16 %v2660, %v2659
        %v2910 = vpack.c.b16 %v2662, %v2661
        %v2911 = vpack.c.b16 %v2664, %v2663
        %v2912 = vpack.c.b16 %v2666, %v2665
        %v2913 = vpack.c.b16 %v2668, %v2667
        %v2914 = vpack.c.b16 %v2670, %v2669
        %v2915 = vpack.c.b16 %v2672, %v2671
        %v2916 = vpack.c.b16 %v2674, %v2673
        %v2917 = vpack.c.b16 %v2676, %v2675
        %v2918 = vpack.c.b16 %v2678, %v2677
        %v2919 = vpack.c.b16 %v2680, %v2679
        %v2920 = vpack.c.b16 %v2682, %v2681
        %v2921 = vpack.c.b16 %v2684, %v2683
        %v2922 = vpack.c.b16 %v2686, %v2685
        %v2923 = vpack.c.b16 %v2688, %v2687
        %v2924 = vpack.c.b16 %v2690, %v2689
        %v2925 = vpack.c.b16 %v2692, %v2691
        %v2926 = vpack.c.b16 %v2694, %v2693
        %v2927 = vpack.c.b16 %v2696, %v2695
        %v2928 = vpack.c.b16 %v2698, %v2697
        %v2929 = vpack.c.b16 %v2700, %v2699
        %v2930 = vpack.c.b16 %v2702, %v2701
        %v2931 = vpack.c.b16 %v2704, %v2703
        %v2932 = vpack.c.b16 %v2706, %v2705
        %v2933 = vpack.c.b16 %v2708, %v2707
        %v2934 = vpack.c.b16 %v2710, %v2709
        %v2935 = vpack.c.b16 %v2712, %v2711
        %v2936 = vpack.c.b16 %v2714, %v2713
        %v2937 = vpack.c.b16 %v2716, %v2715
        %v2938 = vpack.c.b16 %v2718, %v2717
        %v2939 = vpack.c.b16 %v2720, %v2719
        %v2940 = vpack.c.b16 %v2722, %v2721
        %v2941 = vpack.c.b16 %v2724, %v2723
        %v2942 = vpack.c.b16 %v2726, %v2725
        %v2943 = vpack.c.b16 %v2728, %v2727
        %v2944 = vpack.c.b16 %v2730, %v2729
        %v2945 = vpack.c.b16 %v2732, %v2731
        %v2946 = vpack.c.b16 %v2734, %v2733
        %v2947 = vpack.c.b16 %v2736, %v2735
        %v2948 = vpack.c.b16 %v2738, %v2737
        %v2949 = vpack.c.b16 %v2740, %v2739
        %v2950 = vpack.c.b16 %v2742, %v2741
        %v2951 = vpack.c.b16 %v2744, %v2743
        %v2952 = vpack.c.b16 %v2746, %v2745
        %v2953 = vpack.c.b16 %v2748, %v2747
        %v2954 = vpack.c.b16 %v2750, %v2749
        %v2955 = vpack.c.b16 %v2752, %v2751
        %v2956 = vpack.c.b16 %v2754, %v2753
        %v2957 = vpack.c.b16 %v2756, %v2755
        %v2958 = vpack.c.b16 %v2758, %v2757
        %v2959 = vpack.c.b16 %v2760, %v2759
        %v2960 = vpack.c.b16 %v2762, %v2761
        %v2961 = vpack.c.b16 %v2764, %v2763
        %v2962 = vpack.c.b16 %v2766, %v2765
        %v2963 = vpack.c.b16 %v2768, %v2767
        %v2964 = vpack.c.b16 %v2770, %v2769
        %v2965 = vpack.c.b16 %v2772, %v2771
        %v2966 = vpack.c.b16 %v2774, %v2773
        %v2967 = vpack.c.b16 %v2776, %v2775
        %v2968 = vpack.c.b16 %v2778, %v2777
        %v2969 = vpack.c.b16 %v2780, %v2779
        %v2970 = vpack.c.b16 %v2782, %v2781
        %v2971 = vpack.c.b16 %v2784, %v2783
        %v2972 = vpack.c.b16 %v2786, %v2785
        %v2973 = vpack.c.b16 %v2788, %v2787
        %v2974 = vpack.c.b16 %v2790, %v2789
        %v2975 = vpack.c.b16 %v2792, %v2791
        %v2976 = vpack.c.b16 %v2794, %v2793
        %v2977 = vpack.c.b16 %v2796, %v2795
        %v2978 = vpack.c.b16 %v2798, %v2797
        %v2979 = vpack.c.b16 %v2800, %v2799
        %v2980 = vpack.c.b16 %v2802, %v2801
        %v2981 = vpack.c.b16 %v2804, %v2803
        %v2982 = vpack.c.b16 %v2806, %v2805
        %v2983 = vpack.c.b16 %v2808, %v2807
        %v2984 = vpack.c.b16 %v2810, %v2809
        %v2985 = vpack.c.b16 %v2812, %v2811
        %v2986 = vpack.c.b16 %v2814, %v2813
        %v2987 = vpack.c.b16 %v2816, %v2815
        %v2988 = vpack.c.b16 %v2818, %v2817
        %v2989 = vpack.c.b16 %v2820, %v2819
        %v2990 = vpack.c.b16 %v2822, %v2821
        %v2991 = vpack.c.b16 %v2824, %v2823
        %v2992 = vpack.c.b16 %v2826, %v2825
        %v2993 = vpack.c.b16 %v2828, %v2827
        %v2994 = vpack.c.b16 %v2830, %v2829
        %v2995 = vpack.c.b16 %v2832, %v2831
        %v2996 = vpack.c.b16 %v2834, %v2833
        %v2997 = vpack.c.b16 %v2836, %v2835
        %v2998 = vpack.c.b16 %v2838, %v2837
        %v2999 = vpack.c.b16 %v2840, %v2839
        %v3000 = vpack.c.b16 %v2842, %v2841
        %v3001 = vpack.c.b16 %v2844, %v2843
        %v3002 = vpack.c.b16 %v2846, %v2845
        %v3003 = vpack.c.b16 %v2848, %v2847
        %v3004 = vpack.c.b16 %v2850, %v2849
        %v3005 = vpack.c.b16 %v2852, %v2851
        %v3006 = vpack.c.b16 %v2854, %v2853
        %v3007 = vpack.c.b16 %v2856, %v2855
        %v3008 = vpack.c.b16 %v2858, %v2857
        %v3009 = vpack.c.b16 %v2860, %v2859
        %v3010 = vpack.c.b16 %v2862, %v2861
        %v3011 = vpack.c.b16 %v2864, %v2863
        %v3012 = vpack.c.b16 %v2866, %v2865
        %v3013 = vpack.c.b16 %v2868, %v2867
        %v3014 = vpack.c.b16 %v2870, %v2869
        %v3015 = vpack.c.b16 %v2872, %v2871
        %v3016 = vpack.c.b16 %v2874, %v2873
        %v3017 = vpack.c.b16 %v2876, %v2875
        %v3018 = vpack.c.b16 %v2878, %v2877
        %v3019 = vpack.c.b16 %v2880, %v2879
        %v3020 = vpack.c.b16 %v2882, %v2881
        %v3021 = vpack.c.b16 %v2884, %v2883
        %v3022 = vpack.c.b16 %v2886, %v2885
        %v3023 = vpack.c.b16 %v2888, %v2887
        %v3024 = vpack.c.b16 %v2890, %v2889
        %v3025 = vpack.c.b16 %v2892, %v2891
        %v3026 = vpack.c.b16 %v2894, %v2893
        %v3027 = vpack.c.b16 %v2896, %v2895
        %v3028 = vpack.c.b16 %v2898, %v2897
        %v3029 = vpack.c.b16 %v2900, %v2899
        %v3030 = vpack.c.b16 %v2902, %v2901
        %3159 = vmatprep.subr.bf16.mxu0 0
        %3160 = vmatpush1.bf16.msra.mxu0 %v2910
        %3161 = vmatprep.subr.bf16.mxu0 0
        %3162 = vmatpush1.bf16.msra.mxu0 %v2909
        %3163 = vmatprep.subr.bf16.mxu0 0
        %3164 = vmatpush1.bf16.msra.mxu0 %v2908
        %3165 = vmatprep.subr.bf16.mxu0 0
        %3166 = vmatpush1.bf16.msra.mxu0 %v2907
        %3167 = vmatprep.subr.bf16.mxu0 0
        %3168 = vmatpush1.bf16.msra.mxu0 %v2906
        %3169 = vmatprep.subr.bf16.mxu0 0
        %3170 = vmatpush1.bf16.msra.mxu0 %v2905
        %3171 = vmatprep.subr.bf16.mxu0 0
        %3172 = vmatpush1.bf16.msra.mxu0 %v2904
        %3173 = vmatprep.subr.bf16.mxu0 0
        %3174 = vmatpush1.bf16.msra.mxu0 %v2903
        %3175 = vmatprep.subr.bf16.mxu0 0
        %3176 = vmatpush2.bf16.msra.mxu0 %v2918
        %3177 = vmatprep.subr.bf16.mxu0 0
        %3178 = vmatpush2.bf16.msra.mxu0 %v2917
        %3179 = vmatprep.subr.bf16.mxu0 0
        %3180 = vmatpush2.bf16.msra.mxu0 %v2916
        %3181 = vmatprep.subr.bf16.mxu0 0
        %3182 = vmatpush2.bf16.msra.mxu0 %v2915
        %3183 = vmatprep.subr.bf16.mxu0 0
        %3184 = vmatpush2.bf16.msra.mxu0 %v2914
        %3185 = vmatprep.subr.bf16.mxu0 0
        %3186 = vmatpush2.bf16.msra.mxu0 %v2913
        %3187 = vmatprep.subr.bf16.mxu0 0
        %3188 = vmatpush2.bf16.msra.mxu0 %v2912
        %3189 = vmatprep.subr.bf16.mxu0 0
        %3190 = vmatpush2.bf16.msra.mxu0 %v2911
        %3191 = vmatprep.mubr.bf16.mxu0 %v2113
        %3192 = vmatmul.mubr.bf16.gmra.mxu0 %v2112
        %v3193 = vpop.f32.mrf.mxu0
        %v3194 = vadd.f32 %v2389, %v3193
        %v3195 = vpop.f32.mrf.mxu0
        %v3196 = vpop.f32.mrf.mxu0
        %v3197 = vpop.f32.mrf.mxu0
        %3198 = vdwg.mxu0
        %3199 = vmatprep.subr.bf16.mxu0 0
        %3200 = vmatpush1.bf16.msra.mxu0 %v2926
        %3201 = vmatprep.subr.bf16.mxu0 0
        %3202 = vmatpush1.bf16.msra.mxu0 %v2925
        %3203 = vmatprep.subr.bf16.mxu0 0
        %3204 = vmatpush1.bf16.msra.mxu0 %v2924
        %3205 = vmatprep.subr.bf16.mxu0 0
        %3206 = vmatpush1.bf16.msra.mxu0 %v2923
        %3207 = vmatprep.subr.bf16.mxu0 0
        %3208 = vmatpush1.bf16.msra.mxu0 %v2922
        %3209 = vmatprep.subr.bf16.mxu0 0
        %3210 = vmatpush1.bf16.msra.mxu0 %v2921
        %3211 = vmatprep.subr.bf16.mxu0 0
        %3212 = vmatpush1.bf16.msra.mxu0 %v2920
        %3213 = vmatprep.subr.bf16.mxu0 0
        %3214 = vmatpush1.bf16.msra.mxu0 %v2919
        %3215 = vmatprep.subr.bf16.mxu0 0
        %3216 = vmatpush2.bf16.msra.mxu0 %v2934
        %3217 = vmatprep.subr.bf16.mxu0 0
        %3218 = vmatpush2.bf16.msra.mxu0 %v2933
        %3219 = vmatprep.subr.bf16.mxu0 0
        %3220 = vmatpush2.bf16.msra.mxu0 %v2932
        %3221 = vmatprep.subr.bf16.mxu0 0
        %3222 = vmatpush2.bf16.msra.mxu0 %v2931
        %3223 = vmatprep.subr.bf16.mxu0 0
        %3224 = vmatpush2.bf16.msra.mxu0 %v2930
        %3225 = vmatprep.subr.bf16.mxu0 0
        %3226 = vmatpush2.bf16.msra.mxu0 %v2929
        %3227 = vmatprep.subr.bf16.mxu0 0
        %3228 = vmatpush2.bf16.msra.mxu0 %v2928
        %3229 = vmatprep.subr.bf16.mxu0 0
        %3230 = vmatpush2.bf16.msra.mxu0 %v2927
        %3231 = vmatprep.mubr.bf16.mxu0 %v2115
        %3232 = vmatmul.mubr.bf16.gmra.mxu0 %v2114
        %v3233 = vpop.f32.mrf.mxu0
        %v3234 = vadd.f32 %v3194, %v3233
        %v3235 = vpop.f32.mrf.mxu0
        %v3236 = vpop.f32.mrf.mxu0
        %v3237 = vpop.f32.mrf.mxu0
        %3238 = vdwg.mxu0
        %3239 = vmatprep.subr.bf16.mxu0 0
        %3240 = vmatpush1.bf16.msra.mxu0 %v2942
        %3241 = vmatprep.subr.bf16.mxu0 0
        %3242 = vmatpush1.bf16.msra.mxu0 %v2941
        %3243 = vmatprep.subr.bf16.mxu0 0
        %3244 = vmatpush1.bf16.msra.mxu0 %v2940
        %3245 = vmatprep.subr.bf16.mxu0 0
        %3246 = vmatpush1.bf16.msra.mxu0 %v2939
        %3247 = vmatprep.subr.bf16.mxu0 0
        %3248 = vmatpush1.bf16.msra.mxu0 %v2938
        %3249 = vmatprep.subr.bf16.mxu0 0
        %3250 = vmatpush1.bf16.msra.mxu0 %v2937
        %3251 = vmatprep.subr.bf16.mxu0 0
        %3252 = vmatpush1.bf16.msra.mxu0 %v2936
        %3253 = vmatprep.subr.bf16.mxu0 0
        %3254 = vmatpush1.bf16.msra.mxu0 %v2935
        %3255 = vmatprep.subr.bf16.mxu0 0
        %3256 = vmatpush2.bf16.msra.mxu0 %v2950
        %3257 = vmatprep.subr.bf16.mxu0 0
        %3258 = vmatpush2.bf16.msra.mxu0 %v2949
        %3259 = vmatprep.subr.bf16.mxu0 0
        %3260 = vmatpush2.bf16.msra.mxu0 %v2948
        %3261 = vmatprep.subr.bf16.mxu0 0
        %3262 = vmatpush2.bf16.msra.mxu0 %v2947
        %3263 = vmatprep.subr.bf16.mxu0 0
        %3264 = vmatpush2.bf16.msra.mxu0 %v2946
        %3265 = vmatprep.subr.bf16.mxu0 0
        %3266 = vmatpush2.bf16.msra.mxu0 %v2945
        %3267 = vmatprep.subr.bf16.mxu0 0
        %3268 = vmatpush2.bf16.msra.mxu0 %v2944
        %3269 = vmatprep.subr.bf16.mxu0 0
        %3270 = vmatpush2.bf16.msra.mxu0 %v2943
        %3271 = vmatprep.mubr.bf16.mxu0 %v2117
        %3272 = vmatmul.mubr.bf16.gmra.mxu0 %v2116
        %v3273 = vpop.f32.mrf.mxu0
        %v3274 = vadd.f32 %v3234, %v3273
        %v3275 = vpop.f32.mrf.mxu0
        %v3276 = vpop.f32.mrf.mxu0
        %v3277 = vpop.f32.mrf.mxu0
        %3278 = vdwg.mxu0
        %3279 = vmatprep.subr.bf16.mxu0 0
        %3280 = vmatpush1.bf16.msra.mxu0 %v2958
        %3281 = vmatprep.subr.bf16.mxu0 0
        %3282 = vmatpush1.bf16.msra.mxu0 %v2957
        %3283 = vmatprep.subr.bf16.mxu0 0
        %3284 = vmatpush1.bf16.msra.mxu0 %v2956
        %3285 = vmatprep.subr.bf16.mxu0 0
        %3286 = vmatpush1.bf16.msra.mxu0 %v2955
        %3287 = vmatprep.subr.bf16.mxu0 0
        %3288 = vmatpush1.bf16.msra.mxu0 %v2954
        %3289 = vmatprep.subr.bf16.mxu0 0
        %3290 = vmatpush1.bf16.msra.mxu0 %v2953
        %3291 = vmatprep.subr.bf16.mxu0 0
        %3292 = vmatpush1.bf16.msra.mxu0 %v2952
        %3293 = vmatprep.subr.bf16.mxu0 0
        %3294 = vmatpush1.bf16.msra.mxu0 %v2951
        %3295 = vmatprep.subr.bf16.mxu0 0
        %3296 = vmatpush2.bf16.msra.mxu0 %v2966
        %3297 = vmatprep.subr.bf16.mxu0 0
        %3298 = vmatpush2.bf16.msra.mxu0 %v2965
        %3299 = vmatprep.subr.bf16.mxu0 0
        %3300 = vmatpush2.bf16.msra.mxu0 %v2964
        %3301 = vmatprep.subr.bf16.mxu0 0
        %3302 = vmatpush2.bf16.msra.mxu0 %v2963
        %3303 = vmatprep.subr.bf16.mxu0 0
        %3304 = vmatpush2.bf16.msra.mxu0 %v2962
        %3305 = vmatprep.subr.bf16.mxu0 0
        %3306 = vmatpush2.bf16.msra.mxu0 %v2961
        %3307 = vmatprep.subr.bf16.mxu0 0
        %3308 = vmatpush2.bf16.msra.mxu0 %v2960
        %3309 = vmatprep.subr.bf16.mxu0 0
        %3310 = vmatpush2.bf16.msra.mxu0 %v2959
        %3311 = vmatprep.mubr.bf16.mxu0 %v2119
        %3312 = vmatmul.mubr.bf16.gmra.mxu0 %v2118
        %v3313 = vpop.f32.mrf.mxu0
        %v3314 = vadd.f32 %v3274, %v3313
        %v3315 = vpop.f32.mrf.mxu0
        %v3316 = vpop.f32.mrf.mxu0
        %v3317 = vpop.f32.mrf.mxu0
        %3318 = vdwg.mxu0
        %3319 = vmatprep.subr.bf16.mxu0 0
        %3320 = vmatpush1.bf16.msra.mxu0 %v2974
        %3321 = vmatprep.subr.bf16.mxu0 0
        %3322 = vmatpush1.bf16.msra.mxu0 %v2973
        %3323 = vmatprep.subr.bf16.mxu0 0
        %3324 = vmatpush1.bf16.msra.mxu0 %v2972
        %3325 = vmatprep.subr.bf16.mxu0 0
        %3326 = vmatpush1.bf16.msra.mxu0 %v2971
        %3327 = vmatprep.subr.bf16.mxu0 0
        %3328 = vmatpush1.bf16.msra.mxu0 %v2970
        %3329 = vmatprep.subr.bf16.mxu0 0
        %3330 = vmatpush1.bf16.msra.mxu0 %v2969
        %3331 = vmatprep.subr.bf16.mxu0 0
        %3332 = vmatpush1.bf16.msra.mxu0 %v2968
        %3333 = vmatprep.subr.bf16.mxu0 0
        %3334 = vmatpush1.bf16.msra.mxu0 %v2967
        %3335 = vmatprep.subr.bf16.mxu0 0
        %3336 = vmatpush2.bf16.msra.mxu0 %v2982
        %3337 = vmatprep.subr.bf16.mxu0 0
        %3338 = vmatpush2.bf16.msra.mxu0 %v2981
        %3339 = vmatprep.subr.bf16.mxu0 0
        %3340 = vmatpush2.bf16.msra.mxu0 %v2980
        %3341 = vmatprep.subr.bf16.mxu0 0
        %3342 = vmatpush2.bf16.msra.mxu0 %v2979
        %3343 = vmatprep.subr.bf16.mxu0 0
        %3344 = vmatpush2.bf16.msra.mxu0 %v2978
        %3345 = vmatprep.subr.bf16.mxu0 0
        %3346 = vmatpush2.bf16.msra.mxu0 %v2977
        %3347 = vmatprep.subr.bf16.mxu0 0
        %3348 = vmatpush2.bf16.msra.mxu0 %v2976
        %3349 = vmatprep.subr.bf16.mxu0 0
        %3350 = vmatpush2.bf16.msra.mxu0 %v2975
        %3351 = vmatprep.mubr.bf16.mxu0 %v2121
        %3352 = vmatmul.mubr.bf16.gmra.mxu0 %v2120
        %v3353 = vpop.f32.mrf.mxu0
        %v3354 = vadd.f32 %v3314, %v3353
        %v3355 = vpop.f32.mrf.mxu0
        %v3356 = vpop.f32.mrf.mxu0
        %v3357 = vpop.f32.mrf.mxu0
        %3358 = vdwg.mxu0
        %3359 = vmatprep.subr.bf16.mxu0 0
        %3360 = vmatpush1.bf16.msra.mxu0 %v2990
        %3361 = vmatprep.subr.bf16.mxu0 0
        %3362 = vmatpush1.bf16.msra.mxu0 %v2989
        %3363 = vmatprep.subr.bf16.mxu0 0
        %3364 = vmatpush1.bf16.msra.mxu0 %v2988
        %3365 = vmatprep.subr.bf16.mxu0 0
        %3366 = vmatpush1.bf16.msra.mxu0 %v2987
        %3367 = vmatprep.subr.bf16.mxu0 0
        %3368 = vmatpush1.bf16.msra.mxu0 %v2986
        %3369 = vmatprep.subr.bf16.mxu0 0
        %3370 = vmatpush1.bf16.msra.mxu0 %v2985
        %3371 = vmatprep.subr.bf16.mxu0 0
        %3372 = vmatpush1.bf16.msra.mxu0 %v2984
        %3373 = vmatprep.subr.bf16.mxu0 0
        %3374 = vmatpush1.bf16.msra.mxu0 %v2983
        %3375 = vmatprep.subr.bf16.mxu0 0
        %3376 = vmatpush2.bf16.msra.mxu0 %v2998
        %3377 = vmatprep.subr.bf16.mxu0 0
        %3378 = vmatpush2.bf16.msra.mxu0 %v2997
        %3379 = vmatprep.subr.bf16.mxu0 0
        %3380 = vmatpush2.bf16.msra.mxu0 %v2996
        %3381 = vmatprep.subr.bf16.mxu0 0
        %3382 = vmatpush2.bf16.msra.mxu0 %v2995
        %3383 = vmatprep.subr.bf16.mxu0 0
        %3384 = vmatpush2.bf16.msra.mxu0 %v2994
        %3385 = vmatprep.subr.bf16.mxu0 0
        %3386 = vmatpush2.bf16.msra.mxu0 %v2993
        %3387 = vmatprep.subr.bf16.mxu0 0
        %3388 = vmatpush2.bf16.msra.mxu0 %v2992
        %3389 = vmatprep.subr.bf16.mxu0 0
        %3390 = vmatpush2.bf16.msra.mxu0 %v2991
        %3391 = vmatprep.mubr.bf16.mxu0 %v2123
        %3392 = vmatmul.mubr.bf16.gmra.mxu0 %v2122
        %v3393 = vpop.f32.mrf.mxu0
        %v3394 = vadd.f32 %v3354, %v3393
        %v3395 = vpop.f32.mrf.mxu0
        %v3396 = vpop.f32.mrf.mxu0
        %v3397 = vpop.f32.mrf.mxu0
        %3398 = vdwg.mxu0
        %3399 = vmatprep.subr.bf16.mxu0 0
        %3400 = vmatpush1.bf16.msra.mxu0 %v3006
        %3401 = vmatprep.subr.bf16.mxu0 0
        %3402 = vmatpush1.bf16.msra.mxu0 %v3005
        %3403 = vmatprep.subr.bf16.mxu0 0
        %3404 = vmatpush1.bf16.msra.mxu0 %v3004
        %3405 = vmatprep.subr.bf16.mxu0 0
        %3406 = vmatpush1.bf16.msra.mxu0 %v3003
        %3407 = vmatprep.subr.bf16.mxu0 0
        %3408 = vmatpush1.bf16.msra.mxu0 %v3002
        %3409 = vmatprep.subr.bf16.mxu0 0
        %3410 = vmatpush1.bf16.msra.mxu0 %v3001
        %3411 = vmatprep.subr.bf16.mxu0 0
        %3412 = vmatpush1.bf16.msra.mxu0 %v3000
        %3413 = vmatprep.subr.bf16.mxu0 0
        %3414 = vmatpush1.bf16.msra.mxu0 %v2999
        %3415 = vmatprep.subr.bf16.mxu0 0
        %3416 = vmatpush2.bf16.msra.mxu0 %v3014
        %3417 = vmatprep.subr.bf16.mxu0 0
        %3418 = vmatpush2.bf16.msra.mxu0 %v3013
        %3419 = vmatprep.subr.bf16.mxu0 0
        %3420 = vmatpush2.bf16.msra.mxu0 %v3012
        %3421 = vmatprep.subr.bf16.mxu0 0
        %3422 = vmatpush2.bf16.msra.mxu0 %v3011
        %3423 = vmatprep.subr.bf16.mxu0 0
        %3424 = vmatpush2.bf16.msra.mxu0 %v3010
        %3425 = vmatprep.subr.bf16.mxu0 0
        %3426 = vmatpush2.bf16.msra.mxu0 %v3009
        %3427 = vmatprep.subr.bf16.mxu0 0
        %3428 = vmatpush2.bf16.msra.mxu0 %v3008
        %3429 = vmatprep.subr.bf16.mxu0 0
        %3430 = vmatpush2.bf16.msra.mxu0 %v3007
        %3431 = vmatprep.mubr.bf16.mxu0 %v2125
        %3432 = vmatmul.mubr.bf16.gmra.mxu0 %v2124
        %v3433 = vpop.f32.mrf.mxu0
        %v3434 = vadd.f32 %v3394, %v3433
        %v3435 = vpop.f32.mrf.mxu0
        %v3436 = vpop.f32.mrf.mxu0
        %v3437 = vpop.f32.mrf.mxu0
        %3438 = vdwg.mxu0
        %3439 = vmatprep.subr.bf16.mxu0 0
        %3440 = vmatpush1.bf16.msra.mxu0 %v3022
        %3441 = vmatprep.subr.bf16.mxu0 0
        %3442 = vmatpush1.bf16.msra.mxu0 %v3021
        %3443 = vmatprep.subr.bf16.mxu0 0
        %3444 = vmatpush1.bf16.msra.mxu0 %v3020
        %3445 = vmatprep.subr.bf16.mxu0 0
        %3446 = vmatpush1.bf16.msra.mxu0 %v3019
        %3447 = vmatprep.subr.bf16.mxu0 0
        %3448 = vmatpush1.bf16.msra.mxu0 %v3018
        %3449 = vmatprep.subr.bf16.mxu0 0
        %3450 = vmatpush1.bf16.msra.mxu0 %v3017
        %3451 = vmatprep.subr.bf16.mxu0 0
        %3452 = vmatpush1.bf16.msra.mxu0 %v3016
        %3453 = vmatprep.subr.bf16.mxu0 0
        %3454 = vmatpush1.bf16.msra.mxu0 %v3015
        %3455 = vmatprep.subr.bf16.mxu0 0
        %3456 = vmatpush2.bf16.msra.mxu0 %v3030
        %3457 = vmatprep.subr.bf16.mxu0 0
        %3458 = vmatpush2.bf16.msra.mxu0 %v3029
        %3459 = vmatprep.subr.bf16.mxu0 0
        %3460 = vmatpush2.bf16.msra.mxu0 %v3028
        %3461 = vmatprep.subr.bf16.mxu0 0
        %3462 = vmatpush2.bf16.msra.mxu0 %v3027
        %3463 = vmatprep.subr.bf16.mxu0 0
        %3464 = vmatpush2.bf16.msra.mxu0 %v3026
        %3465 = vmatprep.subr.bf16.mxu0 0
        %3466 = vmatpush2.bf16.msra.mxu0 %v3025
        %3467 = vmatprep.subr.bf16.mxu0 0
        %3468 = vmatpush2.bf16.msra.mxu0 %v3024
        %3469 = vmatprep.subr.bf16.mxu0 0
        %3470 = vmatpush2.bf16.msra.mxu0 %v3023
        %3471 = vmatprep.mubr.bf16.mxu0 %v2127
        %3472 = vmatmul.mubr.bf16.gmra.mxu0 %v2126
        %v3473 = vpop.f32.mrf.mxu0
        %v3474 = vadd.f32 %v3434, %v3473
        %v3475 = vpop.f32.mrf.mxu0
        %v3476 = vpop.f32.mrf.mxu0
        %v3477 = vpop.f32.mrf.mxu0
        %3478 = vdwg.mxu0
        %v3479 = vadd.f32 %v1451, %v3474
        %3480 = vst.msk [vmem:[%s601] sm:$0xff] %vm797, %v3479
        %s3481 = sand.u32 %s444, 1
        %s3482 = scalar_lea.sflag [#allocation6], %s3481
        %s3483 = sand.u32 %s444, 1
        %s3484 = smul.addr %s3483, 8
        %s3485 = scalar_lea.vmem [#allocation5], %s3484
        // Predicated region
        $region97: #{tpu_custom_call.1} parent=91 // pred_check
          %p3486 = pneg %p454
        $region98: #{tpu_custom_call.1} parent=91 // pred_check_branch
          %3488 = sbr.rel (%p3486) target = $region100
        $region99: #{tpu_custom_call.1} parent=91 // pred_region
          %s3490 = ssub.s32 128, 128
          %3491 = vsyncadd %s3482, %s3490
          %s3492 = sadd.s32 %s37, %s36
          %s3493 = smul.addr %s3492, 128
          %s3494 = scalar_lea.hbm %s18, %s3493
          %s3496 = sshll.u32 %s3485, 4
          %s3497 = int_to_ptr.vmem [resolvable:$true] %s3496
          %3499 = dma.vmem_to_hbm [thread:$0]  %s3497, 128, %s3494, %s3482
        $region100: #{tpu_custom_call.1} parent=91 // pred_fallthru
          _
      $region92: #{tpu_custom_call.1} parent=5 // pred_fallthru
        _
      %p3500 = scmp.le.s32.totalorder 2, %s27
      // Predicated region
      $region101: #{tpu_custom_call.1} parent=5 // pred_check
        %p3501 = pneg %p3500
      $region102: #{tpu_custom_call.1} parent=5 // pred_check_branch
        %3503 = sbr.rel (%p3501) target = $region104
      $region103: #{tpu_custom_call.1} parent=5 // pred_region
        %s3504 = ssub.s32 %s27, 2
        // Predicated region
        $region105: #{tpu_custom_call.1} parent=103 // pred_check
          %p3505 = pneg %p460
        $region106: #{tpu_custom_call.1} parent=103 // pred_check_branch
          %3507 = sbr.rel (%p3505) target = $region108
        $region107: #{tpu_custom_call.1} parent=103 // pred_region
          %s3508 = sand.u32 %s445, 1
          %s3509 = scalar_lea.sflag [#allocation6], %s3508
          %s3510 = sand.u32 %s445, 1
          %s3511 = smul.addr %s3510, 8
          %s3512 = scalar_lea.vmem [#allocation5], %s3511
          %3513 = dma.done %s3509, 128
        $region108: #{tpu_custom_call.1} parent=103 // pred_fallthru
          _
      $region104: #{tpu_custom_call.1} parent=5 // pred_fallthru
        _
    $region6: #{tpu_custom_call.1} parent=1 // loop_footer
      %s31 = sadd.s32 1, %s27
    $region7: #{tpu_custom_call.1} parent=1 // loop_footer_branch
      %26 = sbr.rel target = $region3
    $region8: #{tpu_custom_call.1} parent=1 // loop_exit
      _
    %3514 = vsyncpa [#allocation6], 1
    %s3515 = scalar_lea.sflag [#allocation6], 1
    %3516 = vsyncpa %s3515, 1

// kernel: tpu_custom_call.1
$region0: #{tpu_custom_call.1}
  #allocation0 [shape = 'u32[]', space=smem, size = 0x4, offset = 0x4, fixed_abs, tag = 'smem constant byte address 0x4 - core index']
  #allocation1 [shape = 'u32[144,128]{1,0:T(1,128)}', space=vmem, size = 0x12000, scoped, tag = 'internal scratch']
  #allocation2 [shape = 'bf16[8,32]{1,0:T(8,128)(2,1)}', space=vmem, size = 0x800, scoped, tag = 'scratch operand']
  #allocation3 [shape = 'bf16[8,32]{1,0:T(8,128)(2,1)}', space=vmem, size = 0x800, scoped, tag = 'scratch operand']
  #allocation4 [shape = 'f32[8,32]{1,0:T(8,128)}', space=vmem, size = 0x1000, scoped, tag = 'scratch operand']
  %s0 = inlined_call_operand.vmem [shape: f32[2,8,32], index: 0, kind: input, shape index: {}]
  %s1 = inlined_call_operand.vmem [shape: bf16[2,8,8], index: 1, kind: input, shape index: {}]
  %s2 = inlined_call_operand.vmem [shape: f32[1,32], index: 2, kind: input, shape index: {}]
  %s3 = inlined_call_operand.vmem [shape: f32[1,32], index: 3, kind: input, shape index: {}]
  %s4 = inlined_call_operand.vmem [shape: bf16[32,32], index: 4, kind: input, shape index: {}]
  %s5 = inlined_call_operand.vmem [shape: f32[1,32], index: 5, kind: input, shape index: {}]
  %s6 = inlined_call_operand.vmem [shape: bf16[32,32], index: 6, kind: input, shape index: {}]
  %s7 = inlined_call_operand.vmem [shape: f32[1,32], index: 7, kind: input, shape index: {}]
  %s8 = inlined_call_operand.vmem [shape: bf16[32,32], index: 8, kind: input, shape index: {}]
  %s9 = inlined_call_operand.vmem [shape: f32[1,32], index: 9, kind: input, shape index: {}]
  %s10 = inlined_call_operand.vmem [shape: bf16[32,32], index: 10, kind: input, shape index: {}]
  %s11 = inlined_call_operand.vmem [shape: f32[1,32], index: 11, kind: input, shape index: {}]
  %s12 = inlined_call_operand.vmem [shape: f32[1,32], index: 12, kind: input, shape index: {}]
  %s13 = inlined_call_operand.vmem [shape: f32[1,32], index: 13, kind: input, shape index: {}]
  %s14 = inlined_call_operand.vmem [shape: bf16[32,2048], index: 14, kind: input, shape index: {}]
  %s15 = inlined_call_operand.vmem [shape: f32[1,2048], index: 15, kind: input, shape index: {}]
  %s16 = inlined_call_operand.vmem [shape: bf16[2048,32], index: 16, kind: input, shape index: {}]
  %s17 = inlined_call_operand.vmem [shape: f32[1,32], index: 17, kind: input, shape index: {}]
  %s18 = inlined_call_operand.hbm [shape: f32[2,8,32], index: 18, kind: output, shape index: {}]
  %s19 = sld [smem:[#allocation0]]
  $region109: #{tpu_custom_call.1} parent=0
    _
  %s21 = ssub.s32 1, %s19
  %s22 = scalar_select 0, %s21, %s19
  $region1: #{tpu_custom_call.1} parent=0
    #allocation5 [shape = 'u8[8192]{0}', space=vmem, size = 0x2000, scoped, tag = 'output window, operand 0']
    #allocation6 [shape = 's32[2]{0}', space=sflag, size = 0x8, scoped, tag = 'scoped memory for tpu_custom_call.1']
    %23 = vsyncpa [#allocation6], 0
    %s24 = scalar_lea.sflag [#allocation6], 1
    %25 = vsyncpa %s24, 0
    loop: start=0, step=1, limit=4
    $region2: #{tpu_custom_call.1} parent=1 // loop_pre_header
      _
    $region3: #{tpu_custom_call.1} parent=1 // loop_header
      %s27 = sphi 0, %s31
      %p28 = scmp.ge.s32.totalorder %s27, 4
      %s34 = sphi 0, %s46
      %s35 = sphi 0, %s42
      %s36 = sphi 0, %s34
      %s37 = sphi 0, %s35
      %s38 = sphi 0, %s36
      %s39 = sphi 0, %s37
      %s49 = sphi 0, %s51
      %s52 = sphi 0, %s49
      %s53 = sphi 0, %s52
      %s69 = sphi 0, %s53
      %s77 = sphi 0, %s79
      %s80 = sphi 0, %s77
      %s81 = sphi 0, %s80
      %s97 = sphi 0, %s81
      %s101 = sphi 0, %s101
      %s103 = sphi 0, %s101
      %s104 = sphi 0, %s103
      %s118 = sphi 0, %s104
      %s122 = sphi 0, %s122
      %s124 = sphi 0, %s122
      %s125 = sphi 0, %s124
      %s139 = sphi 0, %s125
      %s143 = sphi 0, %s143
      %s145 = sphi 0, %s143
      %s146 = sphi 0, %s145
      %s160 = sphi 0, %s146
      %s164 = sphi 0, %s164
      %s166 = sphi 0, %s164
      %s167 = sphi 0, %s166
      %s181 = sphi 0, %s167
      %s185 = sphi 0, %s185
      %s187 = sphi 0, %s185
      %s188 = sphi 0, %s187
      %s202 = sphi 0, %s188
      %s206 = sphi 0, %s206
      %s208 = sphi 0, %s206
      %s209 = sphi 0, %s208
      %s223 = sphi 0, %s209
      %s227 = sphi 0, %s227
      %s229 = sphi 0, %s227
      %s230 = sphi 0, %s229
      %s244 = sphi 0, %s230
      %s248 = sphi 0, %s248
      %s250 = sphi 0, %s248
      %s251 = sphi 0, %s250
      %s265 = sphi 0, %s251
      %s269 = sphi 0, %s269
      %s271 = sphi 0, %s269
      %s272 = sphi 0, %s271
      %s286 = sphi 0, %s272
      %s290 = sphi 0, %s290
      %s292 = sphi 0, %s290
      %s293 = sphi 0, %s292
      %s307 = sphi 0, %s293
      %s311 = sphi 0, %s311
      %s313 = sphi 0, %s311
      %s314 = sphi 0, %s313
      %s328 = sphi 0, %s314
      %s332 = sphi 0, %s332
      %s334 = sphi 0, %s332
      %s335 = sphi 0, %s334
      %s349 = sphi 0, %s335
      %s353 = sphi 0, %s353
      %s355 = sphi 0, %s353
      %s356 = sphi 0, %s355
      %s370 = sphi 0, %s356
      %s374 = sphi 0, %s374
      %s376 = sphi 0, %s374
      %s377 = sphi 0, %s376
      %s391 = sphi 0, %s377
      %s395 = sphi 0, %s395
      %s397 = sphi 0, %s395
      %s398 = sphi 0, %s397
      %s412 = sphi 0, %s398
      %s416 = sphi 0, %s416
      %s418 = sphi 0, %s416
      %s419 = sphi 0, %s418
      %s433 = sphi 0, %s419
      %s441 = sphi 0, %s443
      %s444 = sphi 0, %s441
      %s445 = sphi 0, %s444
      %s461 = sphi 0, %s445
    $region4: #{tpu_custom_call.1} parent=1 // loop_header_branch
      %30 = sbr.rel (%p28) target = $region8
    $region5: #{tpu_custom_call.1} parent=1 // loop_body
      %s32 = ssub.s32 %s27, 1
      %s33 = ssub.s32 %s27, 2
      %s40 = sadd.s32 1, %s35
      %p41 = scmp.ge.s32.totalorder %s40, 1
      %s42 = scalar_select %p41, 0, %s40
      %s43 = sadd.s32 1, %s34
      %s44 = scalar_select %p41, %s43, %s34
      %p45 = scmp.ge.s32.totalorder %s44, 2
      %s46 = scalar_select %p45, 0, %s44
      %s47 = ssub.s32 %s34, %s46
      %p48 = scmp.eq.s32.totalorder %s47, 0
      %s50 = sadd.s32 %s49, 1
      %s51 = scalar_select %p48, %s49, %s50
      %p54 = pneg %p48
      %p55 = scmp.eq.s32.totalorder %s27, 1
      %p56 = por %p54, %p55
      %p57 = scmp.ne.s32.totalorder %s49, %s52
      %p58 = scmp.eq.s32.totalorder %s27, 0
      %p59 = por %p57, %p58
      %p60 = scmp.ne.s32.totalorder %s49, %s52
      %p61 = scmp.eq.s32.totalorder %s32, 1
      %p62 = por %p60, %p61
      %p63 = scmp.ne.s32.totalorder %s52, %s53
      %p64 = scmp.eq.s32.totalorder %s32, 0
      %p65 = por %p63, %p64
      %p66 = scmp.ne.s32.totalorder %s52, %s53
      %p67 = scmp.eq.s32.totalorder %s33, 1
      %p68 = por %p66, %p67
      %p70 = scmp.ne.s32.totalorder %s53, %s69
      %p71 = scmp.eq.s32.totalorder %s33, 0
      %p72 = por %p70, %p71
      %s73 = ssub.s32 %s34, %s46
      %s74 = ssub.s32 %s35, %s42
      %s75 = sor.u32 %s73, %s74
      %p76 = scmp.eq.s32.totalorder %s75, 0
      %s78 = sadd.s32 %s77, 1
      %s79 = scalar_select %p76, %s77, %s78
      %p82 = pneg %p76
      %p83 = scmp.eq.s32.totalorder %s27, 1
      %p84 = por %p82, %p83
      %p85 = scmp.ne.s32.totalorder %s77, %s80
      %p86 = scmp.eq.s32.totalorder %s27, 0
      %p87 = por %p85, %p86
      %p88 = scmp.ne.s32.totalorder %s77, %s80
      %p89 = scmp.eq.s32.totalorder %s32, 1
      %p90 = por %p88, %p89
      %p91 = scmp.ne.s32.totalorder %s80, %s81
      %p92 = scmp.eq.s32.totalorder %s32, 0
      %p93 = por %p91, %p92
      %p94 = scmp.ne.s32.totalorder %s80, %s81
      %p95 = scmp.eq.s32.totalorder %s33, 1
      %p96 = por %p94, %p95
      %p98 = scmp.ne.s32.totalorder %s81, %s97
      %p99 = scmp.eq.s32.totalorder %s33, 0
      %p100 = por %p98, %p99
      %s102 = sadd.s32 %s101, 1
      %p105 = scmp.eq.s32.totalorder %s27, 1
      %p106 = scmp.ne.s32.totalorder %s101, %s103
      %p107 = scmp.eq.s32.totalorder %s27, 0
      %p108 = por %p106, %p107
      %p109 = scmp.ne.s32.totalorder %s101, %s103
      %p110 = scmp.eq.s32.totalorder %s32, 1
      %p111 = por %p109, %p110
      %p112 = scmp.ne.s32.totalorder %s103, %s104
      %p113 = scmp.eq.s32.totalorder %s32, 0
      %p114 = por %p112, %p113
      %p115 = scmp.ne.s32.totalorder %s103, %s104
      %p116 = scmp.eq.s32.totalorder %s33, 1
      %p117 = por %p115, %p116
      %p119 = scmp.ne.s32.totalorder %s104, %s118
      %p120 = scmp.eq.s32.totalorder %s33, 0
      %p121 = por %p119, %p120
      %s123 = sadd.s32 %s122, 1
      %p126 = scmp.eq.s32.totalorder %s27, 1
      %p127 = scmp.ne.s32.totalorder %s122, %s124
      %p128 = scmp.eq.s32.totalorder %s27, 0
      %p129 = por %p127, %p128
      %p130 = scmp.ne.s32.totalorder %s122, %s124
      %p131 = scmp.eq.s32.totalorder %s32, 1
      %p132 = por %p130, %p131
      %p133 = scmp.ne.s32.totalorder %s124, %s125
      %p134 = scmp.eq.s32.totalorder %s32, 0
      %p135 = por %p133, %p134
      %p136 = scmp.ne.s32.totalorder %s124, %s125
      %p137 = scmp.eq.s32.totalorder %s33, 1
      %p138 = por %p136, %p137
      %p140 = scmp.ne.s32.totalorder %s125, %s139
      %p141 = scmp.eq.s32.totalorder %s33, 0
      %p142 = por %p140, %p141
      %s144 = sadd.s32 %s143, 1
      %p147 = scmp.eq.s32.totalorder %s27, 1
      %p148 = scmp.ne.s32.totalorder %s143, %s145
      %p149 = scmp.eq.s32.totalorder %s27, 0
      %p150 = por %p148, %p149
      %p151 = scmp.ne.s32.totalorder %s143, %s145
      %p152 = scmp.eq.s32.totalorder %s32, 1
      %p153 = por %p151, %p152
      %p154 = scmp.ne.s32.totalorder %s145, %s146
      %p155 = scmp.eq.s32.totalorder %s32, 0
      %p156 = por %p154, %p155
      %p157 = scmp.ne.s32.totalorder %s145, %s146
      %p158 = scmp.eq.s32.totalorder %s33, 1
      %p159 = por %p157, %p158
      %p161 = scmp.ne.s32.totalorder %s146, %s160
      %p162 = scmp.eq.s32.totalorder %s33, 0
      %p163 = por %p161, %p162
      %s165 = sadd.s32 %s164, 1
      %p168 = scmp.eq.s32.totalorder %s27, 1
      %p169 = scmp.ne.s32.totalorder %s164, %s166
      %p170 = scmp.eq.s32.totalorder %s27, 0
      %p171 = por %p169, %p170
      %p172 = scmp.ne.s32.totalorder %s164, %s166
      %p173 = scmp.eq.s32.totalorder %s32, 1
      %p174 = por %p172, %p173
      %p175 = scmp.ne.s32.totalorder %s166, %s167
      %p176 = scmp.eq.s32.totalorder %s32, 0
      %p177 = por %p175, %p176
      %p178 = scmp.ne.s32.totalorder %s166, %s167
      %p179 = scmp.eq.s32.totalorder %s33, 1
      %p180 = por %p178, %p179
      %p182 = scmp.ne.s32.totalorder %s167, %s181
      %p183 = scmp.eq.s32.totalorder %s33, 0
      %p184 = por %p182, %p183
      %s186 = sadd.s32 %s185, 1
      %p189 = scmp.eq.s32.totalorder %s27, 1
      %p190 = scmp.ne.s32.totalorder %s185, %s187
      %p191 = scmp.eq.s32.totalorder %s27, 0
      %p192 = por %p190, %p191
      %p193 = scmp.ne.s32.totalorder %s185, %s187
      %p194 = scmp.eq.s32.totalorder %s32, 1
      %p195 = por %p193, %p194
      %p196 = scmp.ne.s32.totalorder %s187, %s188
      %p197 = scmp.eq.s32.totalorder %s32, 0
      %p198 = por %p196, %p197
      %p199 = scmp.ne.s32.totalorder %s187, %s188
      %p200 = scmp.eq.s32.totalorder %s33, 1
      %p201 = por %p199, %p200
      %p203 = scmp.ne.s32.totalorder %s188, %s202
      %p204 = scmp.eq.s32.totalorder %s33, 0
      %p205 = por %p203, %p204
      %s207 = sadd.s32 %s206, 1
      %p210 = scmp.eq.s32.totalorder %s27, 1
      %p211 = scmp.ne.s32.totalorder %s206, %s208
      %p212 = scmp.eq.s32.totalorder %s27, 0
      %p213 = por %p211, %p212
      %p214 = scmp.ne.s32.totalorder %s206, %s208
      %p215 = scmp.eq.s32.totalorder %s32, 1
      %p216 = por %p214, %p215
      %p217 = scmp.ne.s32.totalorder %s208, %s209
      %p218 = scmp.eq.s32.totalorder %s32, 0
      %p219 = por %p217, %p218
      %p220 = scmp.ne.s32.totalorder %s208, %s209
      %p221 = scmp.eq.s32.totalorder %s33, 1
      %p222 = por %p220, %p221
      %p224 = scmp.ne.s32.totalorder %s209, %s223
      %p225 = scmp.eq.s32.totalorder %s33, 0
      %p226 = por %p224, %p225
      %s228 = sadd.s32 %s227, 1
      %p231 = scmp.eq.s32.totalorder %s27, 1
      %p232 = scmp.ne.s32.totalorder %s227, %s229
      %p233 = scmp.eq.s32.totalorder %s27, 0
      %p234 = por %p232, %p233
      %p235 = scmp.ne.s32.totalorder %s227, %s229
      %p236 = scmp.eq.s32.totalorder %s32, 1
      %p237 = por %p235, %p236
      %p238 = scmp.ne.s32.totalorder %s229, %s230
      %p239 = scmp.eq.s32.totalorder %s32, 0
      %p240 = por %p238, %p239
      %p241 = scmp.ne.s32.totalorder %s229, %s230
      %p242 = scmp.eq.s32.totalorder %s33, 1
      %p243 = por %p241, %p242
      %p245 = scmp.ne.s32.totalorder %s230, %s244
      %p246 = scmp.eq.s32.totalorder %s33, 0
      %p247 = por %p245, %p246
      %s249 = sadd.s32 %s248, 1
      %p252 = scmp.eq.s32.totalorder %s27, 1
      %p253 = scmp.ne.s32.totalorder %s248, %s250
      %p254 = scmp.eq.s32.totalorder %s27, 0
      %p255 = por %p253, %p254
      %p256 = scmp.ne.s32.totalorder %s248, %s250
      %p257 = scmp.eq.s32.totalorder %s32, 1
      %p258 = por %p256, %p257
      %p259 = scmp.ne.s32.totalorder %s250, %s251
      %p260 = scmp.eq.s32.totalorder %s32, 0
      %p261 = por %p259, %p260
      %p262 = scmp.ne.s32.totalorder %s250, %s251
      %p263 = scmp.eq.s32.totalorder %s33, 1
      %p264 = por %p262, %p263
      %p266 = scmp.ne.s32.totalorder %s251, %s265
      %p267 = scmp.eq.s32.totalorder %s33, 0
      %p268 = por %p266, %p267
      %s270 = sadd.s32 %s269, 1
      %p273 = scmp.eq.s32.totalorder %s27, 1
      %p274 = scmp.ne.s32.totalorder %s269, %s271
      %p275 = scmp.eq.s32.totalorder %s27, 0
      %p276 = por %p274, %p275
      %p277 = scmp.ne.s32.totalorder %s269, %s271
      %p278 = scmp.eq.s32.totalorder %s32, 1
      %p279 = por %p277, %p278
      %p280 = scmp.ne.s32.totalorder %s271, %s272
      %p281 = scmp.eq.s32.totalorder %s32, 0
      %p282 = por %p280, %p281
      %p283 = scmp.ne.s32.totalorder %s271, %s272
      %p284 = scmp.eq.s32.totalorder %s33, 1
      %p285 = por %p283, %p284
      %p287 = scmp.ne.s32.totalorder %s272, %s286
      %p288 = scmp.eq.s32.totalorder %s33, 0
      %p289 = por %p287, %p288
      %s291 = sadd.s32 %s290, 1
      %p294 = scmp.eq.s32.totalorder %s27, 1
      %p295 = scmp.ne.s32.totalorder %s290, %s292
      %p296 = scmp.eq.s32.totalorder %s27, 0
      %p297 = por %p295, %p296
      %p298 = scmp.ne.s32.totalorder %s290, %s292
      %p299 = scmp.eq.s32.totalorder %s32, 1
      %p300 = por %p298, %p299
      %p301 = scmp.ne.s32.totalorder %s292, %s293
      %p302 = scmp.eq.s32.totalorder %s32, 0
      %p303 = por %p301, %p302
      %p304 = scmp.ne.s32.totalorder %s292, %s293
      %p305 = scmp.eq.s32.totalorder %s33, 1
      %p306 = por %p304, %p305
      %p308 = scmp.ne.s32.totalorder %s293, %s307
      %p309 = scmp.eq.s32.totalorder %s33, 0
      %p310 = por %p308, %p309
      %s312 = sadd.s32 %s311, 1
      %p315 = scmp.eq.s32.totalorder %s27, 1
      %p316 = scmp.ne.s32.totalorder %s311, %s313
      %p317 = scmp.eq.s32.totalorder %s27, 0
      %p318 = por %p316, %p317
      %p319 = scmp.ne.s32.totalorder %s311, %s313
      %p320 = scmp.eq.s32.totalorder %s32, 1
      %p321 = por %p319, %p320
      %p322 = scmp.ne.s32.totalorder %s313, %s314
      %p323 = scmp.eq.s32.totalorder %s32, 0
      %p324 = por %p322, %p323
      %p325 = scmp.ne.s32.totalorder %s313, %s314
      %p326 = scmp.eq.s32.totalorder %s33, 1
      %p327 = por %p325, %p326
      %p329 = scmp.ne.s32.totalorder %s314, %s328
      %p330 = scmp.eq.s32.totalorder %s33, 0
      %p331 = por %p329, %p330
      %s333 = sadd.s32 %s332, 1
      %p336 = scmp.eq.s32.totalorder %s27, 1
      %p337 = scmp.ne.s32.totalorder %s332, %s334
      %p338 = scmp.eq.s32.totalorder %s27, 0
      %p339 = por %p337, %p338
      %p340 = scmp.ne.s32.totalorder %s332, %s334
      %p341 = scmp.eq.s32.totalorder %s32, 1
      %p342 = por %p340, %p341
      %p343 = scmp.ne.s32.totalorder %s334, %s335
      %p344 = scmp.eq.s32.totalorder %s32, 0
      %p345 = por %p343, %p344
      %p346 = scmp.ne.s32.totalorder %s334, %s335
      %p347 = scmp.eq.s32.totalorder %s33, 1
      %p348 = por %p346, %p347
      %p350 = scmp.ne.s32.totalorder %s335, %s349
      %p351 = scmp.eq.s32.totalorder %s33, 0
      %p352 = por %p350, %p351
      %s354 = sadd.s32 %s353, 1
      %p357 = scmp.eq.s32.totalorder %s27, 1
      %p358 = scmp.ne.s32.totalorder %s353, %s355
      %p359 = scmp.eq.s32.totalorder %s27, 0
      %p360 = por %p358, %p359
      %p361 = scmp.ne.s32.totalorder %s353, %s355
      %p362 = scmp.eq.s32.totalorder %s32, 1
      %p363 = por %p361, %p362
      %p364 = scmp.ne.s32.totalorder %s355, %s356
      %p365 = scmp.eq.s32.totalorder %s32, 0
      %p366 = por %p364, %p365
      %p367 = scmp.ne.s32.totalorder %s355, %s356
      %p368 = scmp.eq.s32.totalorder %s33, 1
      %p369 = por %p367, %p368
      %p371 = scmp.ne.s32.totalorder %s356, %s370
      %p372 = scmp.eq.s32.totalorder %s33, 0
      %p373 = por %p371, %p372
      %s375 = sadd.s32 %s374, 1
      %p378 = scmp.eq.s32.totalorder %s27, 1
      %p379 = scmp.ne.s32.totalorder %s374, %s376
      %p380 = scmp.eq.s32.totalorder %s27, 0
      %p381 = por %p379, %p380
      %p382 = scmp.ne.s32.totalorder %s374, %s376
      %p383 = scmp.eq.s32.totalorder %s32, 1
      %p384 = por %p382, %p383
      %p385 = scmp.ne.s32.totalorder %s376, %s377
      %p386 = scmp.eq.s32.totalorder %s32, 0
      %p387 = por %p385, %p386
      %p388 = scmp.ne.s32.totalorder %s376, %s377
      %p389 = scmp.eq.s32.totalorder %s33, 1
      %p390 = por %p388, %p389
      %p392 = scmp.ne.s32.totalorder %s377, %s391
      %p393 = scmp.eq.s32.totalorder %s33, 0
      %p394 = por %p392, %p393
      %s396 = sadd.s32 %s395, 1
      %p399 = scmp.eq.s32.totalorder %s27, 1
      %p400 = scmp.ne.s32.totalorder %s395, %s397
      %p401 = scmp.eq.s32.totalorder %s27, 0
      %p402 = por %p400, %p401
      %p403 = scmp.ne.s32.totalorder %s395, %s397
      %p404 = scmp.eq.s32.totalorder %s32, 1
      %p405 = por %p403, %p404
      %p406 = scmp.ne.s32.totalorder %s397, %s398
      %p407 = scmp.eq.s32.totalorder %s32, 0
      %p408 = por %p406, %p407
      %p409 = scmp.ne.s32.totalorder %s397, %s398
      %p410 = scmp.eq.s32.totalorder %s33, 1
      %p411 = por %p409, %p410
      %p413 = scmp.ne.s32.totalorder %s398, %s412
      %p414 = scmp.eq.s32.totalorder %s33, 0
      %p415 = por %p413, %p414
      %s417 = sadd.s32 %s416, 1
      %p420 = scmp.eq.s32.totalorder %s27, 1
      %p421 = scmp.ne.s32.totalorder %s416, %s418
      %p422 = scmp.eq.s32.totalorder %s27, 0
      %p423 = por %p421, %p422
      %p424 = scmp.ne.s32.totalorder %s416, %s418
      %p425 = scmp.eq.s32.totalorder %s32, 1
      %p426 = por %p424, %p425
      %p427 = scmp.ne.s32.totalorder %s418, %s419
      %p428 = scmp.eq.s32.totalorder %s32, 0
      %p429 = por %p427, %p428
      %p430 = scmp.ne.s32.totalorder %s418, %s419
      %p431 = scmp.eq.s32.totalorder %s33, 1
      %p432 = por %p430, %p431
      %p434 = scmp.ne.s32.totalorder %s419, %s433
      %p435 = scmp.eq.s32.totalorder %s33, 0
      %p436 = por %p434, %p435
      %s437 = ssub.s32 %s34, %s46
      %s438 = ssub.s32 %s35, %s42
      %s439 = sor.u32 %s437, %s438
      %p440 = scmp.eq.s32.totalorder %s439, 0
      %s442 = sadd.s32 %s441, 1
      %s443 = scalar_select %p440, %s441, %s442
      %p446 = pneg %p440
      %p447 = scmp.eq.s32.totalorder %s27, 1
      %p448 = por %p446, %p447
      %p449 = scmp.ne.s32.totalorder %s441, %s444
      %p450 = scmp.eq.s32.totalorder %s27, 0
      %p451 = por %p449, %p450
      %p452 = scmp.ne.s32.totalorder %s441, %s444
      %p453 = scmp.eq.s32.totalorder %s32, 1
      %p454 = por %p452, %p453
      %p455 = scmp.ne.s32.totalorder %s444, %s445
      %p456 = scmp.eq.s32.totalorder %s32, 0
      %p457 = por %p455, %p456
      %p458 = scmp.ne.s32.totalorder %s444, %s445
      %p459 = scmp.eq.s32.totalorder %s33, 1
      %p460 = por %p458, %p459
      %p462 = scmp.ne.s32.totalorder %s445, %s461
      %p463 = scmp.eq.s32.totalorder %s33, 0
      %p464 = por %p462, %p463
      %p465 = scmp.le.s32.totalorder 1, %s27
      %p466 = scmp.lt.s32.totalorder %s27, 3
      %p467 = pnand %p465, %p466
      %p468 = pneg %p467
      // Predicated region
      $region9: #{tpu_custom_call.1} parent=5 // pred_check
        _
      $region10: #{tpu_custom_call.1} parent=5 // pred_check_branch
        %470 = sbr.rel (%p467) target = $region12
      $region11: #{tpu_custom_call.1} parent=5 // pred_region
        %s471 = ssub.s32 %s27, 1
        // Predicated region
        $region13: #{tpu_custom_call.1} parent=11 // pred_check
          %p472 = pneg %p114
        $region14: #{tpu_custom_call.1} parent=11 // pred_check_branch
          %474 = sbr.rel (%p472) target = $region16
        $region15: #{tpu_custom_call.1} parent=11 // pred_region
          _
        $region16: #{tpu_custom_call.1} parent=11 // pred_fallthru
          _
        // Predicated region
        $region17: #{tpu_custom_call.1} parent=11 // pred_check
          %p475 = pneg %p135
        $region18: #{tpu_custom_call.1} parent=11 // pred_check_branch
          %477 = sbr.rel (%p475) target = $region20
        $region19: #{tpu_custom_call.1} parent=11 // pred_region
          _
        $region20: #{tpu_custom_call.1} parent=11 // pred_fallthru
          _
        // Predicated region
        $region21: #{tpu_custom_call.1} parent=11 // pred_check
          %p478 = pneg %p156
        $region22: #{tpu_custom_call.1} parent=11 // pred_check_branch
          %480 = sbr.rel (%p478) target = $region24
        $region23: #{tpu_custom_call.1} parent=11 // pred_region
          _
        $region24: #{tpu_custom_call.1} parent=11 // pred_fallthru
          _
        // Predicated region
        $region25: #{tpu_custom_call.1} parent=11 // pred_check
          %p481 = pneg %p177
        $region26: #{tpu_custom_call.1} parent=11 // pred_check_branch
          %483 = sbr.rel (%p481) target = $region28
        $region27: #{tpu_custom_call.1} parent=11 // pred_region
          _
        $region28: #{tpu_custom_call.1} parent=11 // pred_fallthru
          _
        // Predicated region
        $region29: #{tpu_custom_call.1} parent=11 // pred_check
          %p484 = pneg %p198
        $region30: #{tpu_custom_call.1} parent=11 // pred_check_branch
          %486 = sbr.rel (%p484) target = $region32
        $region31: #{tpu_custom_call.1} parent=11 // pred_region
          _
        $region32: #{tpu_custom_call.1} parent=11 // pred_fallthru
          _
        // Predicated region
        $region33: #{tpu_custom_call.1} parent=11 // pred_check
          %p487 = pneg %p219
        $region34: #{tpu_custom_call.1} parent=11 // pred_check_branch
          %489 = sbr.rel (%p487) target = $region36
        $region35: #{tpu_custom_call.1} parent=11 // pred_region
          _
        $region36: #{tpu_custom_call.1} parent=11 // pred_fallthru
          _
        // Predicated region
        $region37: #{tpu_custom_call.1} parent=11 // pred_check
          %p490 = pneg %p240
        $region38: #{tpu_custom_call.1} parent=11 // pred_check_branch
          %492 = sbr.rel (%p490) target = $region40
        $region39: #{tpu_custom_call.1} parent=11 // pred_region
          _
        $region40: #{tpu_custom_call.1} parent=11 // pred_fallthru
          _
        // Predicated region
        $region41: #{tpu_custom_call.1} parent=11 // pred_check
          %p493 = pneg %p261
        $region42: #{tpu_custom_call.1} parent=11 // pred_check_branch
          %495 = sbr.rel (%p493) target = $region44
        $region43: #{tpu_custom_call.1} parent=11 // pred_region
          _
        $region44: #{tpu_custom_call.1} parent=11 // pred_fallthru
          _
        // Predicated region
        $region45: #{tpu_custom_call.1} parent=11 // pred_check
          %p496 = pneg %p282
        $region46: #{tpu_custom_call.1} parent=11 // pred_check_branch
          %498 = sbr.rel (%p496) target = $region48
        $region47: #{tpu_custom_call.1} parent=11 // pred_region
          _
        $region48: #{tpu_custom_call.1} parent=11 // pred_fallthru
          _
        // Predicated region
        $region49: #{tpu_custom_call.1} parent=11 // pred_check
          %p499 = pneg %p303
        $region50: #{tpu_custom_call.1} parent=11 // pred_check_branch
          %501 = sbr.rel (%p499) target = $region52
        $region51: #{tpu_custom_call.1} parent=11 // pred_region
          _
        $region52: #{tpu_custom_call.1} parent=11 // pred_fallthru
          _
        // Predicated region
        $region53: #{tpu_custom_call.1} parent=11 // pred_check
          %p502 = pneg %p324
        $region54: #{tpu_custom_call.1} parent=11 // pred_check_branch
          %504 = sbr.rel (%p502) target = $region56
        $region55: #{tpu_custom_call.1} parent=11 // pred_region
          _
        $region56: #{tpu_custom_call.1} parent=11 // pred_fallthru
          _
        // Predicated region
        $region57: #{tpu_custom_call.1} parent=11 // pred_check
          %p505 = pneg %p345
        $region58: #{tpu_custom_call.1} parent=11 // pred_check_branch
          %507 = sbr.rel (%p505) target = $region60
        $region59: #{tpu_custom_call.1} parent=11 // pred_region
          _
        $region60: #{tpu_custom_call.1} parent=11 // pred_fallthru
          _
        // Predicated region
        $region61: #{tpu_custom_call.1} parent=11 // pred_check
          %p508 = pneg %p366
        $region62: #{tpu_custom_call.1} parent=11 // pred_check_branch
          %510 = sbr.rel (%p508) target = $region64
        $region63: #{tpu_custom_call.1} parent=11 // pred_region
          _
        $region64: #{tpu_custom_call.1} parent=11 // pred_fallthru
          _
        // Predicated region
        $region65: #{tpu_custom_call.1} parent=11 // pred_check
          %p511 = pneg %p387
        $region66: #{tpu_custom_call.1} parent=11 // pred_check_branch
          %513 = sbr.rel (%p511) target = $region68
        $region67: #{tpu_custom_call.1} parent=11 // pred_region
          _
        $region68: #{tpu_custom_call.1} parent=11 // pred_fallthru
          _
        // Predicated region
        $region69: #{tpu_custom_call.1} parent=11 // pred_check
          %p514 = pneg %p408
        $region70: #{tpu_custom_call.1} parent=11 // pred_check_branch
          %516 = sbr.rel (%p514) target = $region72
        $region71: #{tpu_custom_call.1} parent=11 // pred_region
          _
        $region72: #{tpu_custom_call.1} parent=11 // pred_fallthru
          _
        // Predicated region
        $region73: #{tpu_custom_call.1} parent=11 // pred_check
          %p517 = pneg %p429
        $region74: #{tpu_custom_call.1} parent=11 // pred_check_branch
          %519 = sbr.rel (%p517) target = $region76
        $region75: #{tpu_custom_call.1} parent=11 // pred_region
          _
        $region76: #{tpu_custom_call.1} parent=11 // pred_fallthru
          _
      $region12: #{tpu_custom_call.1} parent=5 // pred_fallthru
        _
      %p520 = scmp.lt.s32.totalorder %s27, 2
      // Predicated region
      $region77: #{tpu_custom_call.1} parent=5 // pred_check
        %p521 = pneg %p520
      $region78: #{tpu_custom_call.1} parent=5 // pred_check_branch
        %523 = sbr.rel (%p521) target = $region80
      $region79: #{tpu_custom_call.1} parent=5 // pred_region
        // Predicated region
        $region81: #{tpu_custom_call.1} parent=79 // pred_check
          %p524 = pneg %p59
        $region82: #{tpu_custom_call.1} parent=79 // pred_check_branch
          %526 = sbr.rel (%p524) target = $region84
        $region83: #{tpu_custom_call.1} parent=79 // pred_region
          %p527 = scmp.lt.s32.totalorder %s34, 1
          %s528 = scalar_select %p527, %s34, 1
          %s529 = smul.addr %s528, 8
          %s530 = scalar_lea.vmem %s0, %s529
        $region84: #{tpu_custom_call.1} parent=79 // pred_fallthru
          _
        // Predicated region
        $region85: #{tpu_custom_call.1} parent=79 // pred_check
          %p531 = pneg %p87
        $region86: #{tpu_custom_call.1} parent=79 // pred_check_branch
          %533 = sbr.rel (%p531) target = $region88
        $region87: #{tpu_custom_call.1} parent=79 // pred_region
          %p534 = scmp.lt.s32.totalorder %s34, 1
          %s535 = scalar_select %p534, %s34, 1
          %p536 = scmp.lt.s32.totalorder %s35, 0
          %s537 = scalar_select %p536, %s35, 0
          %s538 = sadd.s32 %s537, %s535
          %s539 = smul.addr %s538, 4
          %s540 = scalar_lea.vmem %s1, %s539
        $region88: #{tpu_custom_call.1} parent=79 // pred_fallthru
          _
      $region80: #{tpu_custom_call.1} parent=5 // pred_fallthru
        _
      %p541 = scmp.le.s32.totalorder 1, %s27
      %p542 = scmp.lt.s32.totalorder %s27, 3
      %p543 = pnand %p541, %p542
      %p544 = pneg %p543
      // Predicated region
      $region89: #{tpu_custom_call.1} parent=5 // pred_check
        _
      $region90: #{tpu_custom_call.1} parent=5 // pred_check_branch
        %546 = sbr.rel (%p543) target = $region92
      $region91: #{tpu_custom_call.1} parent=5 // pred_region
        %s547 = ssub.s32 %s27, 1
        %p548 = scmp.lt.s32.totalorder %s36, 1
        %s549 = scalar_select %p548, %s36, 1
        %s550 = smul.addr %s549, 8
        %s551 = scalar_lea.vmem %s0, %s550
        %p552 = pneg %p65
        %p553 = pneg %p62
        %p554 = scmp.lt.s32.totalorder %s36, 1
        %s555 = scalar_select %p554, %s36, 1
        %p556 = scmp.lt.s32.totalorder %s37, 0
        %s557 = scalar_select %p556, %s37, 0
        %s558 = sadd.s32 %s557, %s555
        %s559 = smul.addr %s558, 4
        %s560 = scalar_lea.vmem %s1, %s559
        %p561 = pneg %p93
        %p562 = pneg %p90
        %p563 = pneg %p114
        %p564 = pneg %p111
        %p565 = pneg %p135
        %p566 = pneg %p132
        %p567 = pneg %p156
        %p568 = pneg %p153
        %p569 = pneg %p177
        %p570 = pneg %p174
        %p571 = pneg %p198
        %p572 = pneg %p195
        %p573 = pneg %p219
        %p574 = pneg %p216
        %p575 = pneg %p240
        %p576 = pneg %p237
        %p577 = pneg %p261
        %p578 = pneg %p258
        %p579 = pneg %p282
        %p580 = pneg %p279
        %p581 = pneg %p303
        %p582 = pneg %p300
        %p583 = pneg %p324
        %p584 = pneg %p321
        %p585 = pneg %p345
        %p586 = pneg %p342
        %p587 = pneg %p366
        %p588 = pneg %p363
        %p589 = pneg %p387
        %p590 = pneg %p384
        %p591 = pneg %p408
        %p592 = pneg %p405
        %p593 = pneg %p429
        %p594 = pneg %p426
        %p595 = pneg %p457
        %p596 = pneg %p454
        %s597 = sand.u32 %s444, 1
        %s598 = scalar_lea.sflag [#allocation6], %s597
        %s599 = sand.u32 %s444, 1
        %s600 = smul.addr %s599, 8
        %s601 = scalar_lea.vmem [#allocation5], %s600
        %p602 = scmp.lt.s32.totalorder %s36, 1
        %s603 = scalar_select %p602, %s36, 1
        %s604 = smul.addr %s603, 8
        %s605 = scalar_lea.vmem %s0, %s604
        %p606 = scmp.lt.s32.totalorder %s36, 1
        %s607 = scalar_select %p606, %s36, 1
        %p608 = scmp.lt.s32.totalorder %s37, 0
        %s609 = scalar_select %p608, %s37, 0
        %s610 = sadd.s32 %s609, %s607
        %s611 = smul.addr %s610, 4
        %s612 = scalar_lea.vmem %s1, %s611
        %p614 = scmp.eq.s32.totalorder %s37, 0
        // Predicated region
        $region93: #{tpu_custom_call.1} parent=91 // pred_check
          %p615 = pneg %p614
        $region94: #{tpu_custom_call.1} parent=91 // pred_check_branch
          %617 = sbr.rel (%p615) target = $region96
        $region95: #{tpu_custom_call.1} parent=91 // pred_region
          %v618 = vld [vmem:[%s605] sm:$0xff]
          %v619 = vld [vmem:[%s2] sm:$0x1]
          %v620 = vld [vmem:[%s3] sm:$0x1]
          %vm621 = vcmask 261120
          %v622 = vsel %vm621, %v618, 0.0
          %623 = vadd.xlane.f32.xlu0 %v622
          %v624 = vpop.xlane.xlu0 %623
          %v625 = vrcp.pop 32.0
          %v626 = vmul.f32 %v624, %v625
          %v627 = vsub.f32 %v618, %v626
          %v628 = vmul.f32 %v627, %v627
          %v629 = vsel %vm621, %v628, 0.0
          %630 = vadd.xlane.f32.xlu0 %v629
          %v631 = vpop.xlane.xlu0 %630
          %v632 = vmul.f32 %v631, 0.032258064
          %v633 = vrsqrt.pop %v632
          %v634 = vmul.f32 %v632, %v633
          %vm635 = vcmp.eq.f32.partialorder %v632, inf
          %v636 = vsel %vm635, %v632, %v634
          %vm637 = vcmp.eq.f32.partialorder %v632, 0.0
          %v638 = vand.u32 %v632, 2147483648
          %v639 = vsel %vm637, %v638, %v636
          %v640 = vadd.f32 %v639, 1e-06
          %v641 = vrcp.pop %v640
          %v643 = vlaneseq
          %v644 = vshrl.u32 %v643, 7
          %v645 = vsub.s32 0, %v644
          %v646 = vrot.slane %v619, %v645
          %v648 = vmul.f32 %v646, %v627
          %v649 = vmul.f32 %v648, %v641
          %v651 = vlaneseq
          %v652 = vshrl.u32 %v651, 7
          %v653 = vsub.s32 0, %v652
          %v654 = vrot.slane %v620, %v653
          %v656 = vadd.f32 %v649, %v654
          %v657 = vpack.c.bf16 %v656, %v656
          %v658 = vld [vmem:[%s6] sm:$0xf]
          %v659 = vld [vmem:[%s6 + $0x4] sm:$0xf]
          %v660 = vld [vmem:[%s6 + $0x8] sm:$0xf]
          %v661 = vld [vmem:[%s6 + $0xc] sm:$0xf]
          %v662 = vld [vmem:[%s7] sm:$0x1]
          %v664 = vlaneseq
          %v665 = vshrl.u32 %v664, 7
          %v666 = vsub.s32 0, %v665
          %v667 = vrot.slane %v662, %v666
          %v673 = vunpack.c.l.b16 %v658
          %v674 = vunpack.c.l.b16 %v659
          %v675 = vunpack.c.l.b16 %v660
          %v676 = vunpack.c.l.b16 %v661
          %v677 = vpack.c.b16 %v674, %v673
          %v678 = vpack.c.b16 %v676, %v675
          %v682 = vsel %vm621, %v657, 0
          %684 = vmatprep.subr.bf16.mxu0 0
          %685 = vmatpush1.bf16.msra.mxu0 0
          %686 = vmatprep.subr.bf16.mxu0 0
          %687 = vmatpush1.bf16.msra.mxu0 0
          %688 = vmatprep.subr.bf16.mxu0 0
          %689 = vmatpush1.bf16.msra.mxu0 0
          %690 = vmatprep.subr.bf16.mxu0 0
          %691 = vmatpush1.bf16.msra.mxu0 0
          %692 = vmatprep.subr.bf16.mxu0 0
          %693 = vmatpush1.bf16.msra.mxu0 0
          %694 = vmatprep.subr.bf16.mxu0 0
          %695 = vmatpush1.bf16.msra.mxu0 0
          %696 = vmatprep.subr.bf16.mxu0 0
          %697 = vmatpush1.bf16.msra.mxu0 %v678
          %698 = vmatprep.subr.bf16.mxu0 0
          %699 = vmatpush1.bf16.msra.mxu0 %v677
          %700 = vmatprep.subr.bf16.mxu0 0
          %701 = vmatpush2.bf16.msra.mxu0 0
          %702 = vmatprep.subr.bf16.mxu0 0
          %703 = vmatpush2.bf16.msra.mxu0 0
          %704 = vmatprep.subr.bf16.mxu0 0
          %705 = vmatpush2.bf16.msra.mxu0 0
          %706 = vmatprep.subr.bf16.mxu0 0
          %707 = vmatpush2.bf16.msra.mxu0 0
          %708 = vmatprep.subr.bf16.mxu0 0
          %709 = vmatpush2.bf16.msra.mxu0 0
          %710 = vmatprep.subr.bf16.mxu0 0
          %711 = vmatpush2.bf16.msra.mxu0 0
          %712 = vmatprep.subr.bf16.mxu0 0
          %713 = vmatpush2.bf16.msra.mxu0 0
          %714 = vmatprep.subr.bf16.mxu0 0
          %715 = vmatpush2.bf16.msra.mxu0 0
          %716 = vmatprep.mubr.bf16.mxu0 0
          %717 = vmatmul.mubr.bf16.gmra.mxu0 %v682
          %v718 = vpop.f32.mrf.mxu0
          %v719 = vadd.f32 %v667, %v718
          %v720 = vpop.f32.mrf.mxu0
          %v721 = vpop.f32.mrf.mxu0
          %v722 = vpop.f32.mrf.mxu0
          %723 = vdwg.mxu0
          %v724 = vpack.c.bf16 %v719, %v719
          %vm725 = vcmask 257024
          %726 = vst.msk [vmem:[#allocation2] sm:$0xf] %vm725, %v724
          %v727 = vld [vmem:[%s8] sm:$0xf]
          %v728 = vld [vmem:[%s8 + $0x4] sm:$0xf]
          %v729 = vld [vmem:[%s8 + $0x8] sm:$0xf]
          %v730 = vld [vmem:[%s8 + $0xc] sm:$0xf]
          %v731 = vld [vmem:[%s9] sm:$0x1]
          %v733 = vlaneseq
          %v734 = vshrl.u32 %v733, 7
          %v735 = vsub.s32 0, %v734
          %v736 = vrot.slane %v731, %v735
          %v742 = vunpack.c.l.b16 %v727
          %v743 = vunpack.c.l.b16 %v728
          %v744 = vunpack.c.l.b16 %v729
          %v745 = vunpack.c.l.b16 %v730
          %v746 = vpack.c.b16 %v743, %v742
          %v747 = vpack.c.b16 %v745, %v744
          %750 = vmatprep.subr.bf16.mxu0 0
          %751 = vmatpush1.bf16.msra.mxu0 0
          %752 = vmatprep.subr.bf16.mxu0 0
          %753 = vmatpush1.bf16.msra.mxu0 0
          %754 = vmatprep.subr.bf16.mxu0 0
          %755 = vmatpush1.bf16.msra.mxu0 0
          %756 = vmatprep.subr.bf16.mxu0 0
          %757 = vmatpush1.bf16.msra.mxu0 0
          %758 = vmatprep.subr.bf16.mxu0 0
          %759 = vmatpush1.bf16.msra.mxu0 0
          %760 = vmatprep.subr.bf16.mxu0 0
          %761 = vmatpush1.bf16.msra.mxu0 0
          %762 = vmatprep.subr.bf16.mxu0 0
          %763 = vmatpush1.bf16.msra.mxu0 %v747
          %764 = vmatprep.subr.bf16.mxu0 0
          %765 = vmatpush1.bf16.msra.mxu0 %v746
          %766 = vmatprep.subr.bf16.mxu0 0
          %767 = vmatpush2.bf16.msra.mxu0 0
          %768 = vmatprep.subr.bf16.mxu0 0
          %769 = vmatpush2.bf16.msra.mxu0 0
          %770 = vmatprep.subr.bf16.mxu0 0
          %771 = vmatpush2.bf16.msra.mxu0 0
          %772 = vmatprep.subr.bf16.mxu0 0
          %773 = vmatpush2.bf16.msra.mxu0 0
          %774 = vmatprep.subr.bf16.mxu0 0
          %775 = vmatpush2.bf16.msra.mxu0 0
          %776 = vmatprep.subr.bf16.mxu0 0
          %777 = vmatpush2.bf16.msra.mxu0 0
          %778 = vmatprep.subr.bf16.mxu0 0
          %779 = vmatpush2.bf16.msra.mxu0 0
          %780 = vmatprep.subr.bf16.mxu0 0
          %781 = vmatpush2.bf16.msra.mxu0 0
          %782 = vmatprep.mubr.bf16.mxu0 0
          %783 = vmatmul.mubr.bf16.gmra.mxu0 %v682
          %v784 = vpop.f32.mrf.mxu0
          %v785 = vadd.f32 %v736, %v784
          %v786 = vpop.f32.mrf.mxu0
          %v787 = vpop.f32.mrf.mxu0
          %v788 = vpop.f32.mrf.mxu0
          %789 = vdwg.mxu0
          %v790 = vpack.c.bf16 %v785, %v785
          %791 = vst.msk [vmem:[#allocation3] sm:$0xf] %vm725, %v790
        $region96: #{tpu_custom_call.1} parent=91 // pred_fallthru
          _
        %v792 = vld [vmem:[%s605] sm:$0xff]
        %v793 = vld [vmem:[%s612] sm:$0xf]
        %v794 = vunpack.c.l.bf16 %v793
        %v795 = vld [vmem:[%s2] sm:$0x1]
        %v796 = vld [vmem:[%s3] sm:$0x1]
        %vm797 = vcmask 261120
        %v798 = vsel %vm797, %v792, 0.0
        %799 = vadd.xlane.f32.xlu0 %v798
        %v800 = vpop.xlane.xlu0 %799
        %v801 = vrcp.pop 32.0
        %v802 = vmul.f32 %v800, %v801
        %v803 = vsub.f32 %v792, %v802
        %v804 = vmul.f32 %v803, %v803
        %v805 = vsel %vm797, %v804, 0.0
        %806 = vadd.xlane.f32.xlu0 %v805
        %v807 = vpop.xlane.xlu0 %806
        %v808 = vmul.f32 %v807, 0.032258064
        %v809 = vrsqrt.pop %v808
        %v810 = vmul.f32 %v808, %v809
        %vm811 = vcmp.eq.f32.partialorder %v808, inf
        %v812 = vsel %vm811, %v808, %v810
        %vm813 = vcmp.eq.f32.partialorder %v808, 0.0
        %v814 = vand.u32 %v808, 2147483648
        %v815 = vsel %vm813, %v814, %v812
        %v816 = vadd.f32 %v815, 1e-06
        %v817 = vrcp.pop %v816
        %v819 = vlaneseq
        %v820 = vshrl.u32 %v819, 7
        %v821 = vsub.s32 0, %v820
        %v822 = vrot.slane %v795, %v821
        %v824 = vmul.f32 %v822, %v803
        %v825 = vmul.f32 %v824, %v817
        %v827 = vlaneseq
        %v828 = vshrl.u32 %v827, 7
        %v829 = vsub.s32 0, %v828
        %v830 = vrot.slane %v796, %v829
        %v832 = vadd.f32 %v825, %v830
        %v833 = vpack.c.bf16 %v832, %v832
        %v834 = vld [vmem:[%s4] sm:$0xf]
        %v835 = vld [vmem:[%s4 + $0x4] sm:$0xf]
        %v836 = vld [vmem:[%s4 + $0x8] sm:$0xf]
        %v837 = vld [vmem:[%s4 + $0xc] sm:$0xf]
        %v838 = vld [vmem:[%s5] sm:$0x1]
        %v840 = vlaneseq
        %v841 = vshrl.u32 %v840, 7
        %v842 = vsub.s32 0, %v841
        %v843 = vrot.slane %v838, %v842
        %v849 = vunpack.c.l.b16 %v834
        %v850 = vunpack.c.l.b16 %v835
        %v851 = vunpack.c.l.b16 %v836
        %v852 = vunpack.c.l.b16 %v837
        %v853 = vpack.c.b16 %v850, %v849
        %v854 = vpack.c.b16 %v852, %v851
        %v858 = vsel %vm797, %v833, 0
        %860 = vmatprep.subr.bf16.mxu0 0
        %861 = vmatpush1.bf16.msra.mxu0 0
        %862 = vmatprep.subr.bf16.mxu0 0
        %863 = vmatpush1.bf16.msra.mxu0 0
        %864 = vmatprep.subr.bf16.mxu0 0
        %865 = vmatpush1.bf16.msra.mxu0 0
        %866 = vmatprep.subr.bf16.mxu0 0
        %867 = vmatpush1.bf16.msra.mxu0 0
        %868 = vmatprep.subr.bf16.mxu0 0
        %869 = vmatpush1.bf16.msra.mxu0 0
        %870 = vmatprep.subr.bf16.mxu0 0
        %871 = vmatpush1.bf16.msra.mxu0 0
        %872 = vmatprep.subr.bf16.mxu0 0
        %873 = vmatpush1.bf16.msra.mxu0 %v854
        %874 = vmatprep.subr.bf16.mxu0 0
        %875 = vmatpush1.bf16.msra.mxu0 %v853
        %876 = vmatprep.subr.bf16.mxu0 0
        %877 = vmatpush2.bf16.msra.mxu0 0
        %878 = vmatprep.subr.bf16.mxu0 0
        %879 = vmatpush2.bf16.msra.mxu0 0
        %880 = vmatprep.subr.bf16.mxu0 0
        %881 = vmatpush2.bf16.msra.mxu0 0
        %882 = vmatprep.subr.bf16.mxu0 0
        %883 = vmatpush2.bf16.msra.mxu0 0
        %884 = vmatprep.subr.bf16.mxu0 0
        %885 = vmatpush2.bf16.msra.mxu0 0
        %886 = vmatprep.subr.bf16.mxu0 0
        %887 = vmatpush2.bf16.msra.mxu0 0
        %888 = vmatprep.subr.bf16.mxu0 0
        %889 = vmatpush2.bf16.msra.mxu0 0
        %890 = vmatprep.subr.bf16.mxu0 0
        %891 = vmatpush2.bf16.msra.mxu0 0
        %892 = vmatprep.mubr.bf16.mxu0 0
        %893 = vmatmul.mubr.bf16.gmra.mxu0 %v858
        %v894 = vpop.f32.mrf.mxu0
        %v895 = vadd.f32 %v843, %v894
        %v896 = vpop.f32.mrf.mxu0
        %v897 = vpop.f32.mrf.mxu0
        %v898 = vpop.f32.mrf.mxu0
        %899 = vdwg.mxu0
        %v900 = vpack.c.bf16 %v895, %v895
        %v901 = vld [vmem:[#allocation2] sm:$0xf]
        %vm902 = vcmask 64512
        %v904 = vsel %vm902, %v900, 0
        %v907 = vsel %vm902, %v901, 0
        %909 = vmatprep.subr.bf16.mxu0 0
        %910 = vmatpush1.bf16.xpose.msra.mxu0 0
        %911 = vmatprep.subr.bf16.mxu0 0
        %912 = vmatpush1.bf16.xpose.msra.mxu0 0
        %913 = vmatprep.subr.bf16.mxu0 0
        %914 = vmatpush1.bf16.xpose.msra.mxu0 0
        %915 = vmatprep.subr.bf16.mxu0 0
        %916 = vmatpush1.bf16.xpose.msra.mxu0 0
        %917 = vmatprep.subr.bf16.mxu0 0
        %918 = vmatpush1.bf16.xpose.msra.mxu0 0
        %919 = vmatprep.subr.bf16.mxu0 0
        %920 = vmatpush1.bf16.xpose.msra.mxu0 0
        %921 = vmatprep.subr.bf16.mxu0 0
        %922 = vmatpush1.bf16.xpose.msra.mxu0 0
        %923 = vmatprep.subr.bf16.mxu0 0
        %924 = vmatpush1.bf16.xpose.msra.mxu0 %v907
        %925 = vmatprep.subr.bf16.mxu0 0
        %926 = vmatpush2.bf16.xpose.msra.mxu0 0
        %927 = vmatprep.subr.bf16.mxu0 0
        %928 = vmatpush2.bf16.xpose.msra.mxu0 0
        %929 = vmatprep.subr.bf16.mxu0 0
        %930 = vmatpush2.bf16.xpose.msra.mxu0 0
        %931 = vmatprep.subr.bf16.mxu0 0
        %932 = vmatpush2.bf16.xpose.msra.mxu0 0
        %933 = vmatprep.subr.bf16.mxu0 0
        %934 = vmatpush2.bf16.xpose.msra.mxu0 0
        %935 = vmatprep.subr.bf16.mxu0 0
        %936 = vmatpush2.bf16.xpose.msra.mxu0 0
        %937 = vmatprep.subr.bf16.mxu0 0
        %938 = vmatpush2.bf16.xpose.msra.mxu0 0
        %939 = vmatprep.subr.bf16.mxu0 0
        %940 = vmatpush2.bf16.xpose.msra.mxu0 0
        %941 = vmatprep.mubr.bf16.mxu0 0
        %942 = vmatmul.mubr.bf16.gmra.mxu0 %v904
        %v943 = vpop.f32.mrf.mxu0
        %v944 = vadd.f32 %v794, %v943
        %v945 = vpop.f32.mrf.mxu0
        %v946 = vpop.f32.mrf.mxu0
        %v947 = vpop.f32.mrf.mxu0
        %948 = vdwg.mxu0
        %v949 = vsel %vm902, %v944, -inf
        %950 = vmax.xlane.f32.xlu0 %v949
        %v951 = vpop.xlane.xlu0 %950
        %v952 = vsub.f32 %v944, %v951
        %v953 = vmul.f32 %v952, 1.442695
        %v954 = vpow.pop %v953
        %v955 = vsel %vm902, %v954, 0.0
        %956 = vadd.xlane.f32.xlu0 %v955
        %v957 = vpop.xlane.xlu0 %956
        %v958 = vrcp.pop %v957
        %v959 = vmul.f32 %v954, %v958
        %v960 = vpack.c.bf16 %v959, %v959
        %v961 = vld [vmem:[#allocation3] sm:$0xf]
        %v963 = vsel %vm902, %v960, 0
        %vm965 = vcmask 1043456
        %v967 = vsel %vm965, %v961, 0
        %969 = vmatprep.subr.bf16.mxu0 0
        %970 = vmatpush1.bf16.msra.mxu0 0
        %971 = vmatprep.subr.bf16.mxu0 0
        %972 = vmatpush1.bf16.msra.mxu0 0
        %973 = vmatprep.subr.bf16.mxu0 0
        %974 = vmatpush1.bf16.msra.mxu0 0
        %975 = vmatprep.subr.bf16.mxu0 0
        %976 = vmatpush1.bf16.msra.mxu0 0
        %977 = vmatprep.subr.bf16.mxu0 0
        %978 = vmatpush1.bf16.msra.mxu0 0
        %979 = vmatprep.subr.bf16.mxu0 0
        %980 = vmatpush1.bf16.msra.mxu0 0
        %981 = vmatprep.subr.bf16.mxu0 0
        %982 = vmatpush1.bf16.msra.mxu0 0
        %983 = vmatprep.subr.bf16.mxu0 0
        %984 = vmatpush1.bf16.msra.mxu0 %v967
        %985 = vmatprep.subr.bf16.mxu0 0
        %986 = vmatpush2.bf16.msra.mxu0 0
        %987 = vmatprep.subr.bf16.mxu0 0
        %988 = vmatpush2.bf16.msra.mxu0 0
        %989 = vmatprep.subr.bf16.mxu0 0
        %990 = vmatpush2.bf16.msra.mxu0 0
        %991 = vmatprep.subr.bf16.mxu0 0
        %992 = vmatpush2.bf16.msra.mxu0 0
        %993 = vmatprep.subr.bf16.mxu0 0
        %994 = vmatpush2.bf16.msra.mxu0 0
        %995 = vmatprep.subr.bf16.mxu0 0
        %996 = vmatpush2.bf16.msra.mxu0 0
        %997 = vmatprep.subr.bf16.mxu0 0
        %998 = vmatpush2.bf16.msra.mxu0 0
        %999 = vmatprep.subr.bf16.mxu0 0
        %1000 = vmatpush2.bf16.msra.mxu0 0
        %1001 = vmatprep.mubr.bf16.mxu0 0
        %1002 = vmatmul.mubr.bf16.gmra.mxu0 %v963
        %v1003 = vpop.f32.mrf.mxu0
        %v1004 = vadd.f32 0.0, %v1003
        %v1005 = vpop.f32.mrf.mxu0
        %v1006 = vpop.f32.mrf.mxu0
        %v1007 = vpop.f32.mrf.mxu0
        %1008 = vdwg.mxu0
        %1009 = vst.msk [vmem:[#allocation4] sm:$0xff] %vm902, %v1004
        %v1010 = vld [vmem:[#allocation2] sm:$0xf]
        %1012 = vrot.lane.b32.xlu0 %v900, 120
        %v1013 = vpop.permute.xlu0 %1012
        %v1015 = vunpack.c.l.b16 %v1010
        %v1016 = vpack.c.b16 %v1015, %v1015
        %1017 = vrot.lane.b32.xlu0 %v1016, 120
        %v1018 = vpop.permute.xlu0 %1017
        %v1020 = vsel %vm902, %v1013, 0
        %v1023 = vsel %vm902, %v1018, 0
        %1025 = vmatprep.subr.bf16.mxu0 0
        %1026 = vmatpush1.bf16.xpose.msra.mxu0 0
        %1027 = vmatprep.subr.bf16.mxu0 0
        %1028 = vmatpush1.bf16.xpose.msra.mxu0 0
        %1029 = vmatprep.subr.bf16.mxu0 0
        %1030 = vmatpush1.bf16.xpose.msra.mxu0 0
        %1031 = vmatprep.subr.bf16.mxu0 0
        %1032 = vmatpush1.bf16.xpose.msra.mxu0 0
        %1033 = vmatprep.subr.bf16.mxu0 0
        %1034 = vmatpush1.bf16.xpose.msra.mxu0 0
        %1035 = vmatprep.subr.bf16.mxu0 0
        %1036 = vmatpush1.bf16.xpose.msra.mxu0 0
        %1037 = vmatprep.subr.bf16.mxu0 0
        %1038 = vmatpush1.bf16.xpose.msra.mxu0 0
        %1039 = vmatprep.subr.bf16.mxu0 0
        %1040 = vmatpush1.bf16.xpose.msra.mxu0 %v1023
        %1041 = vmatprep.subr.bf16.mxu0 0
        %1042 = vmatpush2.bf16.xpose.msra.mxu0 0
        %1043 = vmatprep.subr.bf16.mxu0 0
        %1044 = vmatpush2.bf16.xpose.msra.mxu0 0
        %1045 = vmatprep.subr.bf16.mxu0 0
        %1046 = vmatpush2.bf16.xpose.msra.mxu0 0
        %1047 = vmatprep.subr.bf16.mxu0 0
        %1048 = vmatpush2.bf16.xpose.msra.mxu0 0
        %1049 = vmatprep.subr.bf16.mxu0 0
        %1050 = vmatpush2.bf16.xpose.msra.mxu0 0
        %1051 = vmatprep.subr.bf16.mxu0 0
        %1052 = vmatpush2.bf16.xpose.msra.mxu0 0
        %1053 = vmatprep.subr.bf16.mxu0 0
        %1054 = vmatpush2.bf16.xpose.msra.mxu0 0
        %1055 = vmatprep.subr.bf16.mxu0 0
        %1056 = vmatpush2.bf16.xpose.msra.mxu0 0
        %1057 = vmatprep.mubr.bf16.mxu0 0
        %1058 = vmatmul.mubr.bf16.gmra.mxu0 %v1020
        %v1059 = vpop.f32.mrf.mxu0
        %v1060 = vadd.f32 %v794, %v1059
        %v1061 = vpop.f32.mrf.mxu0
        %v1062 = vpop.f32.mrf.mxu0
        %v1063 = vpop.f32.mrf.mxu0
        %1064 = vdwg.mxu0
        %v1065 = vsel %vm902, %v1060, -inf
        %1066 = vmax.xlane.f32.xlu0 %v1065
        %v1067 = vpop.xlane.xlu0 %1066
        %v1068 = vsub.f32 %v1060, %v1067
        %v1069 = vmul.f32 %v1068, 1.442695
        %v1070 = vpow.pop %v1069
        %v1071 = vsel %vm902, %v1070, 0.0
        %1072 = vadd.xlane.f32.xlu0 %v1071
        %v1073 = vpop.xlane.xlu0 %1072
        %v1074 = vrcp.pop %v1073
        %v1075 = vmul.f32 %v1070, %v1074
        %v1076 = vpack.c.bf16 %v1075, %v1075
        %v1077 = vld [vmem:[#allocation3] sm:$0xf]
        %v1079 = vunpack.c.l.b16 %v1077
        %v1080 = vpack.c.b16 %v1079, %v1079
        %1081 = vrot.lane.b32.xlu0 %v1080, 120
        %v1082 = vpop.permute.xlu0 %1081
        %v1084 = vsel %vm902, %v1076, 0
        %v1087 = vsel %vm965, %v1082, 0
        %1089 = vmatprep.subr.bf16.mxu0 0
        %1090 = vmatpush1.bf16.msra.mxu0 0
        %1091 = vmatprep.subr.bf16.mxu0 0
        %1092 = vmatpush1.bf16.msra.mxu0 0
        %1093 = vmatprep.subr.bf16.mxu0 0
        %1094 = vmatpush1.bf16.msra.mxu0 0
        %1095 = vmatprep.subr.bf16.mxu0 0
        %1096 = vmatpush1.bf16.msra.mxu0 0
        %1097 = vmatprep.subr.bf16.mxu0 0
        %1098 = vmatpush1.bf16.msra.mxu0 0
        %1099 = vmatprep.subr.bf16.mxu0 0
        %1100 = vmatpush1.bf16.msra.mxu0 0
        %1101 = vmatprep.subr.bf16.mxu0 0
        %1102 = vmatpush1.bf16.msra.mxu0 0
        %1103 = vmatprep.subr.bf16.mxu0 0
        %1104 = vmatpush1.bf16.msra.mxu0 %v1087
        %1105 = vmatprep.subr.bf16.mxu0 0
        %1106 = vmatpush2.bf16.msra.mxu0 0
        %1107 = vmatprep.subr.bf16.mxu0 0
        %1108 = vmatpush2.bf16.msra.mxu0 0
        %1109 = vmatprep.subr.bf16.mxu0 0
        %1110 = vmatpush2.bf16.msra.mxu0 0
        %1111 = vmatprep.subr.bf16.mxu0 0
        %1112 = vmatpush2.bf16.msra.mxu0 0
        %1113 = vmatprep.subr.bf16.mxu0 0
        %1114 = vmatpush2.bf16.msra.mxu0 0
        %1115 = vmatprep.subr.bf16.mxu0 0
        %1116 = vmatpush2.bf16.msra.mxu0 0
        %1117 = vmatprep.subr.bf16.mxu0 0
        %1118 = vmatpush2.bf16.msra.mxu0 0
        %1119 = vmatprep.subr.bf16.mxu0 0
        %1120 = vmatpush2.bf16.msra.mxu0 0
        %1121 = vmatprep.mubr.bf16.mxu0 0
        %1122 = vmatmul.mubr.bf16.gmra.mxu0 %v1084
        %v1123 = vpop.f32.mrf.mxu0
        %v1124 = vadd.f32 0.0, %v1123
        %v1125 = vpop.f32.mrf.mxu0
        %v1126 = vpop.f32.mrf.mxu0
        %v1127 = vpop.f32.mrf.mxu0
        %1128 = vdwg.mxu0
        %1130 = vrot.lane.b32.xlu0 %v1124, 8
        %v1131 = vpop.permute.xlu0 %1130
        %vm1133 = vcmask 130112
        %1134 = vst.msk [vmem:[#allocation4] sm:$0xff] %vm1133, %v1131
        %v1135 = vld [vmem:[#allocation2] sm:$0xf]
        %1136 = vrot.lane.b32.xlu0 %v900, 112
        %v1137 = vpop.permute.xlu0 %1136
        %v1139 = vunpack.c.l.b16 %v1135
        %v1140 = vpack.c.b16 %v1139, %v1139
        %1141 = vrot.lane.b32.xlu0 %v1140, 112
        %v1142 = vpop.permute.xlu0 %1141
        %v1144 = vsel %vm902, %v1137, 0
        %v1147 = vsel %vm902, %v1142, 0
        %1149 = vmatprep.subr.bf16.mxu0 0
        %1150 = vmatpush1.bf16.xpose.msra.mxu0 0
        %1151 = vmatprep.subr.bf16.mxu0 0
        %1152 = vmatpush1.bf16.xpose.msra.mxu0 0
        %1153 = vmatprep.subr.bf16.mxu0 0
        %1154 = vmatpush1.bf16.xpose.msra.mxu0 0
        %1155 = vmatprep.subr.bf16.mxu0 0
        %1156 = vmatpush1.bf16.xpose.msra.mxu0 0
        %1157 = vmatprep.subr.bf16.mxu0 0
        %1158 = vmatpush1.bf16.xpose.msra.mxu0 0
        %1159 = vmatprep.subr.bf16.mxu0 0
        %1160 = vmatpush1.bf16.xpose.msra.mxu0 0
        %1161 = vmatprep.subr.bf16.mxu0 0
        %1162 = vmatpush1.bf16.xpose.msra.mxu0 0
        %1163 = vmatprep.subr.bf16.mxu0 0
        %1164 = vmatpush1.bf16.xpose.msra.mxu0 %v1147
        %1165 = vmatprep.subr.bf16.mxu0 0
        %1166 = vmatpush2.bf16.xpose.msra.mxu0 0
        %1167 = vmatprep.subr.bf16.mxu0 0
        %1168 = vmatpush2.bf16.xpose.msra.mxu0 0
        %1169 = vmatprep.subr.bf16.mxu0 0
        %1170 = vmatpush2.bf16.xpose.msra.mxu0 0
        %1171 = vmatprep.subr.bf16.mxu0 0
        %1172 = vmatpush2.bf16.xpose.msra.mxu0 0
        %1173 = vmatprep.subr.bf16.mxu0 0
        %1174 = vmatpush2.bf16.xpose.msra.mxu0 0
        %1175 = vmatprep.subr.bf16.mxu0 0
        %1176 = vmatpush2.bf16.xpose.msra.mxu0 0
        %1177 = vmatprep.subr.bf16.mxu0 0
        %1178 = vmatpush2.bf16.xpose.msra.mxu0 0
        %1179 = vmatprep.subr.bf16.mxu0 0
        %1180 = vmatpush2.bf16.xpose.msra.mxu0 0
        %1181 = vmatprep.mubr.bf16.mxu0 0
        %1182 = vmatmul.mubr.bf16.gmra.mxu0 %v1144
        %v1183 = vpop.f32.mrf.mxu0
        %v1184 = vadd.f32 %v794, %v1183
        %v1185 = vpop.f32.mrf.mxu0
        %v1186 = vpop.f32.mrf.mxu0
        %v1187 = vpop.f32.mrf.mxu0
        %1188 = vdwg.mxu0
        %v1189 = vsel %vm902, %v1184, -inf
        %1190 = vmax.xlane.f32.xlu0 %v1189
        %v1191 = vpop.xlane.xlu0 %1190
        %v1192 = vsub.f32 %v1184, %v1191
        %v1193 = vmul.f32 %v1192, 1.442695
        %v1194 = vpow.pop %v1193
        %v1195 = vsel %vm902, %v1194, 0.0
        %1196 = vadd.xlane.f32.xlu0 %v1195
        %v1197 = vpop.xlane.xlu0 %1196
        %v1198 = vrcp.pop %v1197
        %v1199 = vmul.f32 %v1194, %v1198
        %v1200 = vpack.c.bf16 %v1199, %v1199
        %v1201 = vld [vmem:[#allocation3] sm:$0xf]
        %v1203 = vunpack.c.l.b16 %v1201
        %v1204 = vpack.c.b16 %v1203, %v1203
        %1205 = vrot.lane.b32.xlu0 %v1204, 112
        %v1206 = vpop.permute.xlu0 %1205
        %v1208 = vsel %vm902, %v1200, 0
        %v1211 = vsel %vm965, %v1206, 0
        %1213 = vmatprep.subr.bf16.mxu0 0
        %1214 = vmatpush1.bf16.msra.mxu0 0
        %1215 = vmatprep.subr.bf16.mxu0 0
        %1216 = vmatpush1.bf16.msra.mxu0 0
        %1217 = vmatprep.subr.bf16.mxu0 0
        %1218 = vmatpush1.bf16.msra.mxu0 0
        %1219 = vmatprep.subr.bf16.mxu0 0
        %1220 = vmatpush1.bf16.msra.mxu0 0
        %1221 = vmatprep.subr.bf16.mxu0 0
        %1222 = vmatpush1.bf16.msra.mxu0 0
        %1223 = vmatprep.subr.bf16.mxu0 0
        %1224 = vmatpush1.bf16.msra.mxu0 0
        %1225 = vmatprep.subr.bf16.mxu0 0
        %1226 = vmatpush1.bf16.msra.mxu0 0
        %1227 = vmatprep.subr.bf16.mxu0 0
        %1228 = vmatpush1.bf16.msra.mxu0 %v1211
        %1229 = vmatprep.subr.bf16.mxu0 0
        %1230 = vmatpush2.bf16.msra.mxu0 0
        %1231 = vmatprep.subr.bf16.mxu0 0
        %1232 = vmatpush2.bf16.msra.mxu0 0
        %1233 = vmatprep.subr.bf16.mxu0 0
        %1234 = vmatpush2.bf16.msra.mxu0 0
        %1235 = vmatprep.subr.bf16.mxu0 0
        %1236 = vmatpush2.bf16.msra.mxu0 0
        %1237 = vmatprep.subr.bf16.mxu0 0
        %1238 = vmatpush2.bf16.msra.mxu0 0
        %1239 = vmatprep.subr.bf16.mxu0 0
        %1240 = vmatpush2.bf16.msra.mxu0 0
        %1241 = vmatprep.subr.bf16.mxu0 0
        %1242 = vmatpush2.bf16.msra.mxu0 0
        %1243 = vmatprep.subr.bf16.mxu0 0
        %1244 = vmatpush2.bf16.msra.mxu0 0
        %1245 = vmatprep.mubr.bf16.mxu0 0
        %1246 = vmatmul.mubr.bf16.gmra.mxu0 %v1208
        %v1247 = vpop.f32.mrf.mxu0
        %v1248 = vadd.f32 0.0, %v1247
        %v1249 = vpop.f32.mrf.mxu0
        %v1250 = vpop.f32.mrf.mxu0
        %v1251 = vpop.f32.mrf.mxu0
        %1252 = vdwg.mxu0
        %1254 = vrot.lane.b32.xlu0 %v1248, 16
        %v1255 = vpop.permute.xlu0 %1254
        %vm1257 = vcmask 195712
        %1258 = vst.msk [vmem:[#allocation4] sm:$0xff] %vm1257, %v1255
        %v1259 = vld [vmem:[#allocation2] sm:$0xf]
        %1260 = vrot.lane.b32.xlu0 %v900, 104
        %v1261 = vpop.permute.xlu0 %1260
        %v1263 = vunpack.c.l.b16 %v1259
        %v1264 = vpack.c.b16 %v1263, %v1263
        %1265 = vrot.lane.b32.xlu0 %v1264, 104
        %v1266 = vpop.permute.xlu0 %1265
        %v1268 = vsel %vm902, %v1261, 0
        %v1271 = vsel %vm902, %v1266, 0
        %1273 = vmatprep.subr.bf16.mxu0 0
        %1274 = vmatpush1.bf16.xpose.msra.mxu0 0
        %1275 = vmatprep.subr.bf16.mxu0 0
        %1276 = vmatpush1.bf16.xpose.msra.mxu0 0
        %1277 = vmatprep.subr.bf16.mxu0 0
        %1278 = vmatpush1.bf16.xpose.msra.mxu0 0
        %1279 = vmatprep.subr.bf16.mxu0 0
        %1280 = vmatpush1.bf16.xpose.msra.mxu0 0
        %1281 = vmatprep.subr.bf16.mxu0 0
        %1282 = vmatpush1.bf16.xpose.msra.mxu0 0
        %1283 = vmatprep.subr.bf16.mxu0 0
        %1284 = vmatpush1.bf16.xpose.msra.mxu0 0
        %1285 = vmatprep.subr.bf16.mxu0 0
        %1286 = vmatpush1.bf16.xpose.msra.mxu0 0
        %1287 = vmatprep.subr.bf16.mxu0 0
        %1288 = vmatpush1.bf16.xpose.msra.mxu0 %v1271
        %1289 = vmatprep.subr.bf16.mxu0 0
        %1290 = vmatpush2.bf16.xpose.msra.mxu0 0
        %1291 = vmatprep.subr.bf16.mxu0 0
        %1292 = vmatpush2.bf16.xpose.msra.mxu0 0
        %1293 = vmatprep.subr.bf16.mxu0 0
        %1294 = vmatpush2.bf16.xpose.msra.mxu0 0
        %1295 = vmatprep.subr.bf16.mxu0 0
        %1296 = vmatpush2.bf16.xpose.msra.mxu0 0
        %1297 = vmatprep.subr.bf16.mxu0 0
        %1298 = vmatpush2.bf16.xpose.msra.mxu0 0
        %1299 = vmatprep.subr.bf16.mxu0 0
        %1300 = vmatpush2.bf16.xpose.msra.mxu0 0
        %1301 = vmatprep.subr.bf16.mxu0 0
        %1302 = vmatpush2.bf16.xpose.msra.mxu0 0
        %1303 = vmatprep.subr.bf16.mxu0 0
        %1304 = vmatpush2.bf16.xpose.msra.mxu0 0
        %1305 = vmatprep.mubr.bf16.mxu0 0
        %1306 = vmatmul.mubr.bf16.gmra.mxu0 %v1268
        %v1307 = vpop.f32.mrf.mxu0
        %v1308 = vadd.f32 %v794, %v1307
        %v1309 = vpop.f32.mrf.mxu0
        %v1310 = vpop.f32.mrf.mxu0
        %v1311 = vpop.f32.mrf.mxu0
        %1312 = vdwg.mxu0
        %v1313 = vsel %vm902, %v1308, -inf
        %1314 = vmax.xlane.f32.xlu0 %v1313
        %v1315 = vpop.xlane.xlu0 %1314
        %v1316 = vsub.f32 %v1308, %v1315
        %v1317 = vmul.f32 %v1316, 1.442695
        %v1318 = vpow.pop %v1317
        %v1319 = vsel %vm902, %v1318, 0.0
        %1320 = vadd.xlane.f32.xlu0 %v1319
        %v1321 = vpop.xlane.xlu0 %1320
        %v1322 = vrcp.pop %v1321
        %v1323 = vmul.f32 %v1318, %v1322
        %v1324 = vpack.c.bf16 %v1323, %v1323
        %v1325 = vld [vmem:[#allocation3] sm:$0xf]
        %v1327 = vunpack.c.l.b16 %v1325
        %v1328 = vpack.c.b16 %v1327, %v1327
        %1329 = vrot.lane.b32.xlu0 %v1328, 104
        %v1330 = vpop.permute.xlu0 %1329
        %v1332 = vsel %vm902, %v1324, 0
        %v1335 = vsel %vm965, %v1330, 0
        %1337 = vmatprep.subr.bf16.mxu0 0
        %1338 = vmatpush1.bf16.msra.mxu0 0
        %1339 = vmatprep.subr.bf16.mxu0 0
        %1340 = vmatpush1.bf16.msra.mxu0 0
        %1341 = vmatprep.subr.bf16.mxu0 0
        %1342 = vmatpush1.bf16.msra.mxu0 0
        %1343 = vmatprep.subr.bf16.mxu0 0
        %1344 = vmatpush1.bf16.msra.mxu0 0
        %1345 = vmatprep.subr.bf16.mxu0 0
        %1346 = vmatpush1.bf16.msra.mxu0 0
        %1347 = vmatprep.subr.bf16.mxu0 0
        %1348 = vmatpush1.bf16.msra.mxu0 0
        %1349 = vmatprep.subr.bf16.mxu0 0
        %1350 = vmatpush1.bf16.msra.mxu0 0
        %1351 = vmatprep.subr.bf16.mxu0 0
        %1352 = vmatpush1.bf16.msra.mxu0 %v1335
        %1353 = vmatprep.subr.bf16.mxu0 0
        %1354 = vmatpush2.bf16.msra.mxu0 0
        %1355 = vmatprep.subr.bf16.mxu0 0
        %1356 = vmatpush2.bf16.msra.mxu0 0
        %1357 = vmatprep.subr.bf16.mxu0 0
        %1358 = vmatpush2.bf16.msra.mxu0 0
        %1359 = vmatprep.subr.bf16.mxu0 0
        %1360 = vmatpush2.bf16.msra.mxu0 0
        %1361 = vmatprep.subr.bf16.mxu0 0
        %1362 = vmatpush2.bf16.msra.mxu0 0
        %1363 = vmatprep.subr.bf16.mxu0 0
        %1364 = vmatpush2.bf16.msra.mxu0 0
        %1365 = vmatprep.subr.bf16.mxu0 0
        %1366 = vmatpush2.bf16.msra.mxu0 0
        %1367 = vmatprep.subr.bf16.mxu0 0
        %1368 = vmatpush2.bf16.msra.mxu0 0
        %1369 = vmatprep.mubr.bf16.mxu0 0
        %1370 = vmatmul.mubr.bf16.gmra.mxu0 %v1332
        %v1371 = vpop.f32.mrf.mxu0
        %v1372 = vadd.f32 0.0, %v1371
        %v1373 = vpop.f32.mrf.mxu0
        %v1374 = vpop.f32.mrf.mxu0
        %v1375 = vpop.f32.mrf.mxu0
        %1376 = vdwg.mxu0
        %1378 = vrot.lane.b32.xlu0 %v1372, 24
        %v1379 = vpop.permute.xlu0 %1378
        %vm1381 = vcmask 261312
        %1382 = vst.msk [vmem:[#allocation4] sm:$0xff] %vm1381, %v1379
        %v1383 = vld [vmem:[#allocation4] sm:$0xff]
        %v1384 = vpack.c.bf16 %v1383, %v1383
        %v1385 = vld [vmem:[%s10] sm:$0xf]
        %v1386 = vld [vmem:[%s10 + $0x4] sm:$0xf]
        %v1387 = vld [vmem:[%s10 + $0x8] sm:$0xf]
        %v1388 = vld [vmem:[%s10 + $0xc] sm:$0xf]
        %v1389 = vld [vmem:[%s11] sm:$0x1]
        %v1391 = vlaneseq
        %v1392 = vshrl.u32 %v1391, 7
        %v1393 = vsub.s32 0, %v1392
        %v1394 = vrot.slane %v1389, %v1393
        %v1400 = vunpack.c.l.b16 %v1385
        %v1401 = vunpack.c.l.b16 %v1386
        %v1402 = vunpack.c.l.b16 %v1387
        %v1403 = vunpack.c.l.b16 %v1388
        %v1404 = vpack.c.b16 %v1401, %v1400
        %v1405 = vpack.c.b16 %v1403, %v1402
        %v1409 = vsel %vm797, %v1384, 0
        %1411 = vmatprep.subr.bf16.mxu0 0
        %1412 = vmatpush1.bf16.msra.mxu0 0
        %1413 = vmatprep.subr.bf16.mxu0 0
        %1414 = vmatpush1.bf16.msra.mxu0 0
        %1415 = vmatprep.subr.bf16.mxu0 0
        %1416 = vmatpush1.bf16.msra.mxu0 0
        %1417 = vmatprep.subr.bf16.mxu0 0
        %1418 = vmatpush1.bf16.msra.mxu0 0
        %1419 = vmatprep.subr.bf16.mxu0 0
        %1420 = vmatpush1.bf16.msra.mxu0 0
        %1421 = vmatprep.subr.bf16.mxu0 0
        %1422 = vmatpush1.bf16.msra.mxu0 0
        %1423 = vmatprep.subr.bf16.mxu0 0
        %1424 = vmatpush1.bf16.msra.mxu0 %v1405
        %1425 = vmatprep.subr.bf16.mxu0 0
        %1426 = vmatpush1.bf16.msra.mxu0 %v1404
        %1427 = vmatprep.subr.bf16.mxu0 0
        %1428 = vmatpush2.bf16.msra.mxu0 0
        %1429 = vmatprep.subr.bf16.mxu0 0
        %1430 = vmatpush2.bf16.msra.mxu0 0
        %1431 = vmatprep.subr.bf16.mxu0 0
        %1432 = vmatpush2.bf16.msra.mxu0 0
        %1433 = vmatprep.subr.bf16.mxu0 0
        %1434 = vmatpush2.bf16.msra.mxu0 0
        %1435 = vmatprep.subr.bf16.mxu0 0
        %1436 = vmatpush2.bf16.msra.mxu0 0
        %1437 = vmatprep.subr.bf16.mxu0 0
        %1438 = vmatpush2.bf16.msra.mxu0 0
        %1439 = vmatprep.subr.bf16.mxu0 0
        %1440 = vmatpush2.bf16.msra.mxu0 0
        %1441 = vmatprep.subr.bf16.mxu0 0
        %1442 = vmatpush2.bf16.msra.mxu0 0
        %1443 = vmatprep.mubr.bf16.mxu0 0
        %1444 = vmatmul.mubr.bf16.gmra.mxu0 %v1409
        %v1445 = vpop.f32.mrf.mxu0
        %v1446 = vadd.f32 %v1394, %v1445
        %v1447 = vpop.f32.mrf.mxu0
        %v1448 = vpop.f32.mrf.mxu0
        %v1449 = vpop.f32.mrf.mxu0
        %1450 = vdwg.mxu0
        %v1451 = vadd.f32 %v792, %v1446
        %v1452 = vld [vmem:[%s12] sm:$0x1]
        %v1453 = vld [vmem:[%s13] sm:$0x1]
        %v1454 = vsel %vm797, %v1451, 0.0
        %1455 = vadd.xlane.f32.xlu0 %v1454
        %v1456 = vpop.xlane.xlu0 %1455
        %v1457 = vmul.f32 %v1456, %v801
        %v1458 = vsub.f32 %v1451, %v1457
        %v1459 = vmul.f32 %v1458, %v1458
        %v1460 = vsel %vm797, %v1459, 0.0
        %1461 = vadd.xlane.f32.xlu0 %v1460
        %v1462 = vpop.xlane.xlu0 %1461
        %v1463 = vmul.f32 %v1462, 0.032258064
        %v1464 = vrsqrt.pop %v1463
        %v1465 = vmul.f32 %v1463, %v1464
        %vm1466 = vcmp.eq.f32.partialorder %v1463, inf
        %v1467 = vsel %vm1466, %v1463, %v1465
        %vm1468 = vcmp.eq.f32.partialorder %v1463, 0.0
        %v1469 = vand.u32 %v1463, 2147483648
        %v1470 = vsel %vm1468, %v1469, %v1467
        %v1471 = vadd.f32 %v1470, 1e-06
        %v1472 = vrcp.pop %v1471
        %v1474 = vlaneseq
        %v1475 = vshrl.u32 %v1474, 7
        %v1476 = vsub.s32 0, %v1475
        %v1477 = vrot.slane %v1452, %v1476
        %v1479 = vmul.f32 %v1477, %v1458
        %v1480 = vmul.f32 %v1479, %v1472
        %v1482 = vlaneseq
        %v1483 = vshrl.u32 %v1482, 7
        %v1484 = vsub.s32 0, %v1483
        %v1485 = vrot.slane %v1453, %v1484
        %v1487 = vadd.f32 %v1480, %v1485
        %v1488 = vpack.c.bf16 %v1487, %v1487
        %v1489 = vld [vmem:[%s14] sm:$0xff]
        %v1490 = vld [vmem:[%s14 + $0x8] sm:$0xff]
        %v1491 = vld [vmem:[%s14 + $0x10] sm:$0xff]
        %v1492 = vld [vmem:[%s14 + $0x18] sm:$0xff]
        %v1493 = vld [vmem:[%s14 + $0x20] sm:$0xff]
        %v1494 = vld [vmem:[%s14 + $0x28] sm:$0xff]
        %v1495 = vld [vmem:[%s14 + $0x30] sm:$0xff]
        %v1496 = vld [vmem:[%s14 + $0x38] sm:$0xff]
        %v1497 = vld [vmem:[%s14 + $0x40] sm:$0xff]
        %v1498 = vld [vmem:[%s14 + $0x48] sm:$0xff]
        %v1499 = vld [vmem:[%s14 + $0x50] sm:$0xff]
        %v1500 = vld [vmem:[%s14 + $0x58] sm:$0xff]
        %v1501 = vld [vmem:[%s14 + $0x60] sm:$0xff]
        %v1502 = vld [vmem:[%s14 + $0x68] sm:$0xff]
        %v1503 = vld [vmem:[%s14 + $0x70] sm:$0xff]
        %v1504 = vld [vmem:[%s14 + $0x78] sm:$0xff]
        %v1505 = vld [vmem:[%s14 + $0x80] sm:$0xff]
        %v1506 = vld [vmem:[%s14 + $0x88] sm:$0xff]
        %v1507 = vld [vmem:[%s14 + $0x90] sm:$0xff]
        %v1508 = vld [vmem:[%s14 + $0x98] sm:$0xff]
        %v1509 = vld [vmem:[%s14 + $0xa0] sm:$0xff]
        %v1510 = vld [vmem:[%s14 + $0xa8] sm:$0xff]
        %v1511 = vld [vmem:[%s14 + $0xb0] sm:$0xff]
        %v1512 = vld [vmem:[%s14 + $0xb8] sm:$0xff]
        %v1513 = vld [vmem:[%s14 + $0xc0] sm:$0xff]
        %v1514 = vld [vmem:[%s14 + $0xc8] sm:$0xff]
        %v1515 = vld [vmem:[%s14 + $0xd0] sm:$0xff]
        %v1516 = vld [vmem:[%s14 + $0xd8] sm:$0xff]
        %v1517 = vld [vmem:[%s14 + $0xe0] sm:$0xff]
        %v1518 = vld [vmem:[%s14 + $0xe8] sm:$0xff]
        %v1519 = vld [vmem:[%s14 + $0xf0] sm:$0xff]
        %v1520 = vld [vmem:[%s14 + $0xf8] sm:$0xff]
        %v1521 = vld [vmem:[%s15] sm:$0xff]
        %v1522 = vld [vmem:[%s15 + $0x8] sm:$0xff]
        %v1525 = vlaneseq
        %v1526 = vshrl.u32 %v1525, 7
        %v1527 = vsub.s32 0, %v1526
        %v1528 = vrot.slane %v1521, %v1527
        %v1529 = vlaneseq
        %v1530 = vshrl.u32 %v1529, 7
        %v1531 = vsub.s32 1, %v1530
        %v1532 = vrot.slane %v1521, %v1531
        %v1533 = vlaneseq
        %v1534 = vshrl.u32 %v1533, 7
        %v1535 = vsub.s32 2, %v1534
        %v1536 = vrot.slane %v1521, %v1535
        %v1537 = vlaneseq
        %v1538 = vshrl.u32 %v1537, 7
        %v1539 = vsub.s32 3, %v1538
        %v1540 = vrot.slane %v1521, %v1539
        %v1541 = vlaneseq
        %v1542 = vshrl.u32 %v1541, 7
        %v1543 = vsub.s32 4, %v1542
        %v1544 = vrot.slane %v1521, %v1543
        %v1545 = vlaneseq
        %v1546 = vshrl.u32 %v1545, 7
        %v1547 = vsub.s32 5, %v1546
        %v1548 = vrot.slane %v1521, %v1547
        %v1549 = vlaneseq
        %v1550 = vshrl.u32 %v1549, 7
        %v1551 = vsub.s32 6, %v1550
        %v1552 = vrot.slane %v1521, %v1551
        %v1553 = vlaneseq
        %v1554 = vshrl.u32 %v1553, 7
        %v1555 = vsub.s32 7, %v1554
        %v1556 = vrot.slane %v1521, %v1555
        %v1557 = vlaneseq
        %v1558 = vshrl.u32 %v1557, 7
        %v1559 = vsub.s32 0, %v1558
        %v1560 = vrot.slane %v1522, %v1559
        %v1561 = vlaneseq
        %v1562 = vshrl.u32 %v1561, 7
        %v1563 = vsub.s32 1, %v1562
        %v1564 = vrot.slane %v1522, %v1563
        %v1565 = vlaneseq
        %v1566 = vshrl.u32 %v1565, 7
        %v1567 = vsub.s32 2, %v1566
        %v1568 = vrot.slane %v1522, %v1567
        %v1569 = vlaneseq
        %v1570 = vshrl.u32 %v1569, 7
        %v1571 = vsub.s32 3, %v1570
        %v1572 = vrot.slane %v1522, %v1571
        %v1573 = vlaneseq
        %v1574 = vshrl.u32 %v1573, 7
        %v1575 = vsub.s32 4, %v1574
        %v1576 = vrot.slane %v1522, %v1575
        %v1577 = vlaneseq
        %v1578 = vshrl.u32 %v1577, 7
        %v1579 = vsub.s32 5, %v1578
        %v1580 = vrot.slane %v1522, %v1579
        %v1581 = vlaneseq
        %v1582 = vshrl.u32 %v1581, 7
        %v1583 = vsub.s32 6, %v1582
        %v1584 = vrot.slane %v1522, %v1583
        %v1585 = vlaneseq
        %v1586 = vshrl.u32 %v1585, 7
        %v1587 = vsub.s32 7, %v1586
        %v1588 = vrot.slane %v1522, %v1587
        %v1637 = vunpack.c.l.b16 %v1489
        %v1638 = vunpack.c.h.b16 %v1489
        %v1639 = vunpack.c.l.b16 %v1490
        %v1640 = vunpack.c.h.b16 %v1490
        %v1641 = vunpack.c.l.b16 %v1491
        %v1642 = vunpack.c.h.b16 %v1491
        %v1643 = vunpack.c.l.b16 %v1492
        %v1644 = vunpack.c.h.b16 %v1492
        %v1645 = vunpack.c.l.b16 %v1493
        %v1646 = vunpack.c.h.b16 %v1493
        %v1647 = vunpack.c.l.b16 %v1494
        %v1648 = vunpack.c.h.b16 %v1494
        %v1649 = vunpack.c.l.b16 %v1495
        %v1650 = vunpack.c.h.b16 %v1495
        %v1651 = vunpack.c.l.b16 %v1496
        %v1652 = vunpack.c.h.b16 %v1496
        %v1653 = vunpack.c.l.b16 %v1497
        %v1654 = vunpack.c.h.b16 %v1497
        %v1655 = vunpack.c.l.b16 %v1498
        %v1656 = vunpack.c.h.b16 %v1498
        %v1657 = vunpack.c.l.b16 %v1499
        %v1658 = vunpack.c.h.b16 %v1499
        %v1659 = vunpack.c.l.b16 %v1500
        %v1660 = vunpack.c.h.b16 %v1500
        %v1661 = vunpack.c.l.b16 %v1501
        %v1662 = vunpack.c.h.b16 %v1501
        %v1663 = vunpack.c.l.b16 %v1502
        %v1664 = vunpack.c.h.b16 %v1502
        %v1665 = vunpack.c.l.b16 %v1503
        %v1666 = vunpack.c.h.b16 %v1503
        %v1667 = vunpack.c.l.b16 %v1504
        %v1668 = vunpack.c.h.b16 %v1504
        %v1669 = vunpack.c.l.b16 %v1505
        %v1670 = vunpack.c.h.b16 %v1505
        %v1671 = vunpack.c.l.b16 %v1506
        %v1672 = vunpack.c.h.b16 %v1506
        %v1673 = vunpack.c.l.b16 %v1507
        %v1674 = vunpack.c.h.b16 %v1507
        %v1675 = vunpack.c.l.b16 %v1508
        %v1676 = vunpack.c.h.b16 %v1508
        %v1677 = vunpack.c.l.b16 %v1509
        %v1678 = vunpack.c.h.b16 %v1509
        %v1679 = vunpack.c.l.b16 %v1510
        %v1680 = vunpack.c.h.b16 %v1510
        %v1681 = vunpack.c.l.b16 %v1511
        %v1682 = vunpack.c.h.b16 %v1511
        %v1683 = vunpack.c.l.b16 %v1512
        %v1684 = vunpack.c.h.b16 %v1512
        %v1685 = vunpack.c.l.b16 %v1513
        %v1686 = vunpack.c.h.b16 %v1513
        %v1687 = vunpack.c.l.b16 %v1514
        %v1688 = vunpack.c.h.b16 %v1514
        %v1689 = vunpack.c.l.b16 %v1515
        %v1690 = vunpack.c.h.b16 %v1515
        %v1691 = vunpack.c.l.b16 %v1516
        %v1692 = vunpack.c.h.b16 %v1516
        %v1693 = vunpack.c.l.b16 %v1517
        %v1694 = vunpack.c.h.b16 %v1517
        %v1695 = vunpack.c.l.b16 %v1518
        %v1696 = vunpack.c.h.b16 %v1518
        %v1697 = vunpack.c.l.b16 %v1519
        %v1698 = vunpack.c.h.b16 %v1519
        %v1699 = vunpack.c.l.b16 %v1520
        %v1700 = vunpack.c.h.b16 %v1520
        %v1701 = vpack.c.b16 %v1653, %v1637
        %v1702 = vpack.c.b16 %v1654, %v1638
        %v1703 = vpack.c.b16 %v1655, %v1639
        %v1704 = vpack.c.b16 %v1656, %v1640
        %v1705 = vpack.c.b16 %v1657, %v1641
        %v1706 = vpack.c.b16 %v1658, %v1642
        %v1707 = vpack.c.b16 %v1659, %v1643
        %v1708 = vpack.c.b16 %v1660, %v1644
        %v1709 = vpack.c.b16 %v1661, %v1645
        %v1710 = vpack.c.b16 %v1662, %v1646
        %v1711 = vpack.c.b16 %v1663, %v1647
        %v1712 = vpack.c.b16 %v1664, %v1648
        %v1713 = vpack.c.b16 %v1665, %v1649
        %v1714 = vpack.c.b16 %v1666, %v1650
        %v1715 = vpack.c.b16 %v1667, %v1651
        %v1716 = vpack.c.b16 %v1668, %v1652
        %v1717 = vpack.c.b16 %v1685, %v1669
        %v1718 = vpack.c.b16 %v1686, %v1670
        %v1719 = vpack.c.b16 %v1687, %v1671
        %v1720 = vpack.c.b16 %v1688, %v1672
        %v1721 = vpack.c.b16 %v1689, %v1673
        %v1722 = vpack.c.b16 %v1690, %v1674
        %v1723 = vpack.c.b16 %v1691, %v1675
        %v1724 = vpack.c.b16 %v1692, %v1676
        %v1725 = vpack.c.b16 %v1693, %v1677
        %v1726 = vpack.c.b16 %v1694, %v1678
        %v1727 = vpack.c.b16 %v1695, %v1679
        %v1728 = vpack.c.b16 %v1696, %v1680
        %v1729 = vpack.c.b16 %v1697, %v1681
        %v1730 = vpack.c.b16 %v1698, %v1682
        %v1731 = vpack.c.b16 %v1699, %v1683
        %v1732 = vpack.c.b16 %v1700, %v1684
        %v1766 = vsel %vm797, %v1488, 0
        %1768 = vmatprep.subr.bf16.mxu0 0
        %1769 = vmatpush1.bf16.msra.mxu0 0
        %1770 = vmatprep.subr.bf16.mxu0 0
        %1771 = vmatpush1.bf16.msra.mxu0 0
        %1772 = vmatprep.subr.bf16.mxu0 0
        %1773 = vmatpush1.bf16.msra.mxu0 0
        %1774 = vmatprep.subr.bf16.mxu0 0
        %1775 = vmatpush1.bf16.msra.mxu0 0
        %1776 = vmatprep.subr.bf16.mxu0 0
        %1777 = vmatpush1.bf16.msra.mxu0 0
        %1778 = vmatprep.subr.bf16.mxu0 0
        %1779 = vmatpush1.bf16.msra.mxu0 0
        %1780 = vmatprep.subr.bf16.mxu0 %v1718
        %1781 = vmatpush1.bf16.msra.mxu0 %v1717
        %1782 = vmatprep.subr.bf16.mxu0 %v1702
        %1783 = vmatpush1.bf16.msra.mxu0 %v1701
        %1784 = vmatprep.subr.bf16.mxu0 0
        %1785 = vmatpush2.bf16.msra.mxu0 0
        %1786 = vmatprep.subr.bf16.mxu0 0
        %1787 = vmatpush2.bf16.msra.mxu0 0
        %1788 = vmatprep.subr.bf16.mxu0 0
        %1789 = vmatpush2.bf16.msra.mxu0 0
        %1790 = vmatprep.subr.bf16.mxu0 0
        %1791 = vmatpush2.bf16.msra.mxu0 0
        %1792 = vmatprep.subr.bf16.mxu0 0
        %1793 = vmatpush2.bf16.msra.mxu0 0
        %1794 = vmatprep.subr.bf16.mxu0 0
        %1795 = vmatpush2.bf16.msra.mxu0 0
        %1796 = vmatprep.subr.bf16.mxu0 0
        %1797 = vmatpush2.bf16.msra.mxu0 0
        %1798 = vmatprep.subr.bf16.mxu0 0
        %1799 = vmatpush2.bf16.msra.mxu0 0
        %1800 = vmatprep.mubr.bf16.mxu0 0
        %1801 = vmatmul.mubr.bf16.gmra.mxu0 %v1766
        %v1802 = vpop.f32.mrf.mxu0
        %v1803 = vadd.f32 %v1528, %v1802
        %v1804 = vpop.f32.mrf.mxu0
        %v1805 = vadd.f32 %v1532, %v1804
        %v1806 = vpop.f32.mrf.mxu0
        %v1807 = vpop.f32.mrf.mxu0
        %1808 = vdwg.mxu0
        %1809 = vmatprep.subr.bf16.mxu0 0
        %1810 = vmatpush1.bf16.msra.mxu0 0
        %1811 = vmatprep.subr.bf16.mxu0 0
        %1812 = vmatpush1.bf16.msra.mxu0 0
        %1813 = vmatprep.subr.bf16.mxu0 0
        %1814 = vmatpush1.bf16.msra.mxu0 0
        %1815 = vmatprep.subr.bf16.mxu0 0
        %1816 = vmatpush1.bf16.msra.mxu0 0
        %1817 = vmatprep.subr.bf16.mxu0 0
        %1818 = vmatpush1.bf16.msra.mxu0 0
        %1819 = vmatprep.subr.bf16.mxu0 0
        %1820 = vmatpush1.bf16.msra.mxu0 0
        %1821 = vmatprep.subr.bf16.mxu0 %v1720
        %1822 = vmatpush1.bf16.msra.mxu0 %v1719
        %1823 = vmatprep.subr.bf16.mxu0 %v1704
        %1824 = vmatpush1.bf16.msra.mxu0 %v1703
        %1825 = vmatprep.subr.bf16.mxu0 0
        %1826 = vmatpush2.bf16.msra.mxu0 0
        %1827 = vmatprep.subr.bf16.mxu0 0
        %1828 = vmatpush2.bf16.msra.mxu0 0
        %1829 = vmatprep.subr.bf16.mxu0 0
        %1830 = vmatpush2.bf16.msra.mxu0 0
        %1831 = vmatprep.subr.bf16.mxu0 0
        %1832 = vmatpush2.bf16.msra.mxu0 0
        %1833 = vmatprep.subr.bf16.mxu0 0
        %1834 = vmatpush2.bf16.msra.mxu0 0
        %1835 = vmatprep.subr.bf16.mxu0 0
        %1836 = vmatpush2.bf16.msra.mxu0 0
        %1837 = vmatprep.subr.bf16.mxu0 0
        %1838 = vmatpush2.bf16.msra.mxu0 0
        %1839 = vmatprep.subr.bf16.mxu0 0
        %1840 = vmatpush2.bf16.msra.mxu0 0
        %1841 = vmatprep.mubr.bf16.mxu0 0
        %1842 = vmatmul.mubr.bf16.gmra.mxu0 %v1766
        %v1843 = vpop.f32.mrf.mxu0
        %v1844 = vadd.f32 %v1536, %v1843
        %v1845 = vpop.f32.mrf.mxu0
        %v1846 = vadd.f32 %v1540, %v1845
        %v1847 = vpop.f32.mrf.mxu0
        %v1848 = vpop.f32.mrf.mxu0
        %1849 = vdwg.mxu0
        %1850 = vmatprep.subr.bf16.mxu0 0
        %1851 = vmatpush1.bf16.msra.mxu0 0
        %1852 = vmatprep.subr.bf16.mxu0 0
        %1853 = vmatpush1.bf16.msra.mxu0 0
        %1854 = vmatprep.subr.bf16.mxu0 0
        %1855 = vmatpush1.bf16.msra.mxu0 0
        %1856 = vmatprep.subr.bf16.mxu0 0
        %1857 = vmatpush1.bf16.msra.mxu0 0
        %1858 = vmatprep.subr.bf16.mxu0 0
        %1859 = vmatpush1.bf16.msra.mxu0 0
        %1860 = vmatprep.subr.bf16.mxu0 0
        %1861 = vmatpush1.bf16.msra.mxu0 0
        %1862 = vmatprep.subr.bf16.mxu0 %v1722
        %1863 = vmatpush1.bf16.msra.mxu0 %v1721
        %1864 = vmatprep.subr.bf16.mxu0 %v1706
        %1865 = vmatpush1.bf16.msra.mxu0 %v1705
        %1866 = vmatprep.subr.bf16.mxu0 0
        %1867 = vmatpush2.bf16.msra.mxu0 0
        %1868 = vmatprep.subr.bf16.mxu0 0
        %1869 = vmatpush2.bf16.msra.mxu0 0
        %1870 = vmatprep.subr.bf16.mxu0 0
        %1871 = vmatpush2.bf16.msra.mxu0 0
        %1872 = vmatprep.subr.bf16.mxu0 0
        %1873 = vmatpush2.bf16.msra.mxu0 0
        %1874 = vmatprep.subr.bf16.mxu0 0
        %1875 = vmatpush2.bf16.msra.mxu0 0
        %1876 = vmatprep.subr.bf16.mxu0 0
        %1877 = vmatpush2.bf16.msra.mxu0 0
        %1878 = vmatprep.subr.bf16.mxu0 0
        %1879 = vmatpush2.bf16.msra.mxu0 0
        %1880 = vmatprep.subr.bf16.mxu0 0
        %1881 = vmatpush2.bf16.msra.mxu0 0
        %1882 = vmatprep.mubr.bf16.mxu0 0
        %1883 = vmatmul.mubr.bf16.gmra.mxu0 %v1766
        %v1884 = vpop.f32.mrf.mxu0
        %v1885 = vadd.f32 %v1544, %v1884
        %v1886 = vpop.f32.mrf.mxu0
        %v1887 = vadd.f32 %v1548, %v1886
        %v1888 = vpop.f32.mrf.mxu0
        %v1889 = vpop.f32.mrf.mxu0
        %1890 = vdwg.mxu0
        %1891 = vmatprep.subr.bf16.mxu0 0
        %1892 = vmatpush1.bf16.msra.mxu0 0
        %1893 = vmatprep.subr.bf16.mxu0 0
        %1894 = vmatpush1.bf16.msra.mxu0 0
        %1895 = vmatprep.subr.bf16.mxu0 0
        %1896 = vmatpush1.bf16.msra.mxu0 0
        %1897 = vmatprep.subr.bf16.mxu0 0
        %1898 = vmatpush1.bf16.msra.mxu0 0
        %1899 = vmatprep.subr.bf16.mxu0 0
        %1900 = vmatpush1.bf16.msra.mxu0 0
        %1901 = vmatprep.subr.bf16.mxu0 0
        %1902 = vmatpush1.bf16.msra.mxu0 0
        %1903 = vmatprep.subr.bf16.mxu0 %v1724
        %1904 = vmatpush1.bf16.msra.mxu0 %v1723
        %1905 = vmatprep.subr.bf16.mxu0 %v1708
        %1906 = vmatpush1.bf16.msra.mxu0 %v1707
        %1907 = vmatprep.subr.bf16.mxu0 0
        %1908 = vmatpush2.bf16.msra.mxu0 0
        %1909 = vmatprep.subr.bf16.mxu0 0
        %1910 = vmatpush2.bf16.msra.mxu0 0
        %1911 = vmatprep.subr.bf16.mxu0 0
        %1912 = vmatpush2.bf16.msra.mxu0 0
        %1913 = vmatprep.subr.bf16.mxu0 0
        %1914 = vmatpush2.bf16.msra.mxu0 0
        %1915 = vmatprep.subr.bf16.mxu0 0
        %1916 = vmatpush2.bf16.msra.mxu0 0
        %1917 = vmatprep.subr.bf16.mxu0 0
        %1918 = vmatpush2.bf16.msra.mxu0 0
        %1919 = vmatprep.subr.bf16.mxu0 0
        %1920 = vmatpush2.bf16.msra.mxu0 0
        %1921 = vmatprep.subr.bf16.mxu0 0
        %1922 = vmatpush2.bf16.msra.mxu0 0
        %1923 = vmatprep.mubr.bf16.mxu0 0
        %1924 = vmatmul.mubr.bf16.gmra.mxu0 %v1766
        %v1925 = vpop.f32.mrf.mxu0
        %v1926 = vadd.f32 %v1552, %v1925
        %v1927 = vpop.f32.mrf.mxu0
        %v1928 = vadd.f32 %v1556, %v1927
        %v1929 = vpop.f32.mrf.mxu0
        %v1930 = vpop.f32.mrf.mxu0
        %1931 = vdwg.mxu0
        %1932 = vmatprep.subr.bf16.mxu0 0
        %1933 = vmatpush1.bf16.msra.mxu0 0
        %1934 = vmatprep.subr.bf16.mxu0 0
        %1935 = vmatpush1.bf16.msra.mxu0 0
        %1936 = vmatprep.subr.bf16.mxu0 0
        %1937 = vmatpush1.bf16.msra.mxu0 0
        %1938 = vmatprep.subr.bf16.mxu0 0
        %1939 = vmatpush1.bf16.msra.mxu0 0
        %1940 = vmatprep.subr.bf16.mxu0 0
        %1941 = vmatpush1.bf16.msra.mxu0 0
        %1942 = vmatprep.subr.bf16.mxu0 0
        %1943 = vmatpush1.bf16.msra.mxu0 0
        %1944 = vmatprep.subr.bf16.mxu0 %v1726
        %1945 = vmatpush1.bf16.msra.mxu0 %v1725
        %1946 = vmatprep.subr.bf16.mxu0 %v1710
        %1947 = vmatpush1.bf16.msra.mxu0 %v1709
        %1948 = vmatprep.subr.bf16.mxu0 0
        %1949 = vmatpush2.bf16.msra.mxu0 0
        %1950 = vmatprep.subr.bf16.mxu0 0
        %1951 = vmatpush2.bf16.msra.mxu0 0
        %1952 = vmatprep.subr.bf16.mxu0 0
        %1953 = vmatpush2.bf16.msra.mxu0 0
        %1954 = vmatprep.subr.bf16.mxu0 0
        %1955 = vmatpush2.bf16.msra.mxu0 0
        %1956 = vmatprep.subr.bf16.mxu0 0
        %1957 = vmatpush2.bf16.msra.mxu0 0
        %1958 = vmatprep.subr.bf16.mxu0 0
        %1959 = vmatpush2.bf16.msra.mxu0 0
        %1960 = vmatprep.subr.bf16.mxu0 0
        %1961 = vmatpush2.bf16.msra.mxu0 0
        %1962 = vmatprep.subr.bf16.mxu0 0
        %1963 = vmatpush2.bf16.msra.mxu0 0
        %1964 = vmatprep.mubr.bf16.mxu0 0
        %1965 = vmatmul.mubr.bf16.gmra.mxu0 %v1766
        %v1966 = vpop.f32.mrf.mxu0
        %v1967 = vadd.f32 %v1560, %v1966
        %v1968 = vpop.f32.mrf.mxu0
        %v1969 = vadd.f32 %v1564, %v1968
        %v1970 = vpop.f32.mrf.mxu0
        %v1971 = vpop.f32.mrf.mxu0
        %1972 = vdwg.mxu0
        %1973 = vmatprep.subr.bf16.mxu0 0
        %1974 = vmatpush1.bf16.msra.mxu0 0
        %1975 = vmatprep.subr.bf16.mxu0 0
        %1976 = vmatpush1.bf16.msra.mxu0 0
        %1977 = vmatprep.subr.bf16.mxu0 0
        %1978 = vmatpush1.bf16.msra.mxu0 0
        %1979 = vmatprep.subr.bf16.mxu0 0
        %1980 = vmatpush1.bf16.msra.mxu0 0
        %1981 = vmatprep.subr.bf16.mxu0 0
        %1982 = vmatpush1.bf16.msra.mxu0 0
        %1983 = vmatprep.subr.bf16.mxu0 0
        %1984 = vmatpush1.bf16.msra.mxu0 0
        %1985 = vmatprep.subr.bf16.mxu0 %v1728
        %1986 = vmatpush1.bf16.msra.mxu0 %v1727
        %1987 = vmatprep.subr.bf16.mxu0 %v1712
        %1988 = vmatpush1.bf16.msra.mxu0 %v1711
        %1989 = vmatprep.subr.bf16.mxu0 0
        %1990 = vmatpush2.bf16.msra.mxu0 0
        %1991 = vmatprep.subr.bf16.mxu0 0
        %1992 = vmatpush2.bf16.msra.mxu0 0
        %1993 = vmatprep.subr.bf16.mxu0 0
        %1994 = vmatpush2.bf16.msra.mxu0 0
        %1995 = vmatprep.subr.bf16.mxu0 0
        %1996 = vmatpush2.bf16.msra.mxu0 0
        %1997 = vmatprep.subr.bf16.mxu0 0
        %1998 = vmatpush2.bf16.msra.mxu0 0
        %1999 = vmatprep.subr.bf16.mxu0 0
        %2000 = vmatpush2.bf16.msra.mxu0 0
        %2001 = vmatprep.subr.bf16.mxu0 0
        %2002 = vmatpush2.bf16.msra.mxu0 0
        %2003 = vmatprep.subr.bf16.mxu0 0
        %2004 = vmatpush2.bf16.msra.mxu0 0
        %2005 = vmatprep.mubr.bf16.mxu0 0
        %2006 = vmatmul.mubr.bf16.gmra.mxu0 %v1766
        %v2007 = vpop.f32.mrf.mxu0
        %v2008 = vadd.f32 %v1568, %v2007
        %v2009 = vpop.f32.mrf.mxu0
        %v2010 = vadd.f32 %v1572, %v2009
        %v2011 = vpop.f32.mrf.mxu0
        %v2012 = vpop.f32.mrf.mxu0
        %2013 = vdwg.mxu0
        %2014 = vmatprep.subr.bf16.mxu0 0
        %2015 = vmatpush1.bf16.msra.mxu0 0
        %2016 = vmatprep.subr.bf16.mxu0 0
        %2017 = vmatpush1.bf16.msra.mxu0 0
        %2018 = vmatprep.subr.bf16.mxu0 0
        %2019 = vmatpush1.bf16.msra.mxu0 0
        %2020 = vmatprep.subr.bf16.mxu0 0
        %2021 = vmatpush1.bf16.msra.mxu0 0
        %2022 = vmatprep.subr.bf16.mxu0 0
        %2023 = vmatpush1.bf16.msra.mxu0 0
        %2024 = vmatprep.subr.bf16.mxu0 0
        %2025 = vmatpush1.bf16.msra.mxu0 0
        %2026 = vmatprep.subr.bf16.mxu0 %v1730
        %2027 = vmatpush1.bf16.msra.mxu0 %v1729
        %2028 = vmatprep.subr.bf16.mxu0 %v1714
        %2029 = vmatpush1.bf16.msra.mxu0 %v1713
        %2030 = vmatprep.subr.bf16.mxu0 0
        %2031 = vmatpush2.bf16.msra.mxu0 0
        %2032 = vmatprep.subr.bf16.mxu0 0
        %2033 = vmatpush2.bf16.msra.mxu0 0
        %2034 = vmatprep.subr.bf16.mxu0 0
        %2035 = vmatpush2.bf16.msra.mxu0 0
        %2036 = vmatprep.subr.bf16.mxu0 0
        %2037 = vmatpush2.bf16.msra.mxu0 0
        %2038 = vmatprep.subr.bf16.mxu0 0
        %2039 = vmatpush2.bf16.msra.mxu0 0
        %2040 = vmatprep.subr.bf16.mxu0 0
        %2041 = vmatpush2.bf16.msra.mxu0 0
        %2042 = vmatprep.subr.bf16.mxu0 0
        %2043 = vmatpush2.bf16.msra.mxu0 0
        %2044 = vmatprep.subr.bf16.mxu0 0
        %2045 = vmatpush2.bf16.msra.mxu0 0
        %2046 = vmatprep.mubr.bf16.mxu0 0
        %2047 = vmatmul.mubr.bf16.gmra.mxu0 %v1766
        %v2048 = vpop.f32.mrf.mxu0
        %v2049 = vadd.f32 %v1576, %v2048
        %v2050 = vpop.f32.mrf.mxu0
        %v2051 = vadd.f32 %v1580, %v2050
        %v2052 = vpop.f32.mrf.mxu0
        %v2053 = vpop.f32.mrf.mxu0
        %2054 = vdwg.mxu0
        %2055 = vmatprep.subr.bf16.mxu0 0
        %2056 = vmatpush1.bf16.msra.mxu0 0
        %2057 = vmatprep.subr.bf16.mxu0 0
        %2058 = vmatpush1.bf16.msra.mxu0 0
        %2059 = vmatprep.subr.bf16.mxu0 0
        %2060 = vmatpush1.bf16.msra.mxu0 0
        %2061 = vmatprep.subr.bf16.mxu0 0
        %2062 = vmatpush1.bf16.msra.mxu0 0
        %2063 = vmatprep.subr.bf16.mxu0 0
        %2064 = vmatpush1.bf16.msra.mxu0 0
        %2065 = vmatprep.subr.bf16.mxu0 0
        %2066 = vmatpush1.bf16.msra.mxu0 0
        %2067 = vmatprep.subr.bf16.mxu0 %v1732
        %2068 = vmatpush1.bf16.msra.mxu0 %v1731
        %2069 = vmatprep.subr.bf16.mxu0 %v1716
        %2070 = vmatpush1.bf16.msra.mxu0 %v1715
        %2071 = vmatprep.subr.bf16.mxu0 0
        %2072 = vmatpush2.bf16.msra.mxu0 0
        %2073 = vmatprep.subr.bf16.mxu0 0
        %2074 = vmatpush2.bf16.msra.mxu0 0
        %2075 = vmatprep.subr.bf16.mxu0 0
        %2076 = vmatpush2.bf16.msra.mxu0 0
        %2077 = vmatprep.subr.bf16.mxu0 0
        %2078 = vmatpush2.bf16.msra.mxu0 0
        %2079 = vmatprep.subr.bf16.mxu0 0
        %2080 = vmatpush2.bf16.msra.mxu0 0
        %2081 = vmatprep.subr.bf16.mxu0 0
        %2082 = vmatpush2.bf16.msra.mxu0 0
        %2083 = vmatprep.subr.bf16.mxu0 0
        %2084 = vmatpush2.bf16.msra.mxu0 0
        %2085 = vmatprep.subr.bf16.mxu0 0
        %2086 = vmatpush2.bf16.msra.mxu0 0
        %2087 = vmatprep.mubr.bf16.mxu0 0
        %2088 = vmatmul.mubr.bf16.gmra.mxu0 %v1766
        %v2089 = vpop.f32.mrf.mxu0
        %v2090 = vadd.f32 %v1584, %v2089
        %v2091 = vpop.f32.mrf.mxu0
        %v2092 = vadd.f32 %v1588, %v2091
        %v2093 = vpop.f32.mrf.mxu0
        %v2094 = vpop.f32.mrf.mxu0
        %2095 = vdwg.mxu0
        %v2096 = vmax.f32 %v1803, 0.0
        %v2097 = vmax.f32 %v1805, 0.0
        %v2098 = vmax.f32 %v1844, 0.0
        %v2099 = vmax.f32 %v1846, 0.0
        %v2100 = vmax.f32 %v1885, 0.0
        %v2101 = vmax.f32 %v1887, 0.0
        %v2102 = vmax.f32 %v1926, 0.0
        %v2103 = vmax.f32 %v1928, 0.0
        %v2104 = vmax.f32 %v1967, 0.0
        %v2105 = vmax.f32 %v1969, 0.0
        %v2106 = vmax.f32 %v2008, 0.0
        %v2107 = vmax.f32 %v2010, 0.0
        %v2108 = vmax.f32 %v2049, 0.0
        %v2109 = vmax.f32 %v2051, 0.0
        %v2110 = vmax.f32 %v2090, 0.0
        %v2111 = vmax.f32 %v2092, 0.0
        %v2112 = vpack.c.bf16 %v2096, %v2096
        %v2113 = vpack.c.bf16 %v2097, %v2097
        %v2114 = vpack.c.bf16 %v2098, %v2098
        %v2115 = vpack.c.bf16 %v2099, %v2099
        %v2116 = vpack.c.bf16 %v2100, %v2100
        %v2117 = vpack.c.bf16 %v2101, %v2101
        %v2118 = vpack.c.bf16 %v2102, %v2102
        %v2119 = vpack.c.bf16 %v2103, %v2103
        %v2120 = vpack.c.bf16 %v2104, %v2104
        %v2121 = vpack.c.bf16 %v2105, %v2105
        %v2122 = vpack.c.bf16 %v2106, %v2106
        %v2123 = vpack.c.bf16 %v2107, %v2107
        %v2124 = vpack.c.bf16 %v2108, %v2108
        %v2125 = vpack.c.bf16 %v2109, %v2109
        %v2126 = vpack.c.bf16 %v2110, %v2110
        %v2127 = vpack.c.bf16 %v2111, %v2111
        %v2128 = vld [vmem:[%s16] sm:$0xf]
        %v2129 = vld [vmem:[%s16 + $0x4] sm:$0xf]
        %v2130 = vld [vmem:[%s16 + $0x8] sm:$0xf]
        %v2131 = vld [vmem:[%s16 + $0xc] sm:$0xf]
        %v2132 = vld [vmem:[%s16 + $0x10] sm:$0xf]
        %v2133 = vld [vmem:[%s16 + $0x14] sm:$0xf]
        %v2134 = vld [vmem:[%s16 + $0x18] sm:$0xf]
        %v2135 = vld [vmem:[%s16 + $0x1c] sm:$0xf]
        %v2136 = vld [vmem:[%s16 + $0x20] sm:$0xf]
        %v2137 = vld [vmem:[%s16 + $0x24] sm:$0xf]
        %v2138 = vld [vmem:[%s16 + $0x28] sm:$0xf]
        %v2139 = vld [vmem:[%s16 + $0x2c] sm:$0xf]
        %v2140 = vld [vmem:[%s16 + $0x30] sm:$0xf]
        %v2141 = vld [vmem:[%s16 + $0x34] sm:$0xf]
        %v2142 = vld [vmem:[%s16 + $0x38] sm:$0xf]
        %v2143 = vld [vmem:[%s16 + $0x3c] sm:$0xf]
        %v2144 = vld [vmem:[%s16 + $0x40] sm:$0xf]
        %v2145 = vld [vmem:[%s16 + $0x44] sm:$0xf]
        %v2146 = vld [vmem:[%s16 + $0x48] sm:$0xf]
        %v2147 = vld [vmem:[%s16 + $0x4c] sm:$0xf]
        %v2148 = vld [vmem:[%s16 + $0x50] sm:$0xf]
        %v2149 = vld [vmem:[%s16 + $0x54] sm:$0xf]
        %v2150 = vld [vmem:[%s16 + $0x58] sm:$0xf]
        %v2151 = vld [vmem:[%s16 + $0x5c] sm:$0xf]
        %v2152 = vld [vmem:[%s16 + $0x60] sm:$0xf]
        %v2153 = vld [vmem:[%s16 + $0x64] sm:$0xf]
        %v2154 = vld [vmem:[%s16 + $0x68] sm:$0xf]
        %v2155 = vld [vmem:[%s16 + $0x6c] sm:$0xf]
        %v2156 = vld [vmem:[%s16 + $0x70] sm:$0xf]
        %v2157 = vld [vmem:[%s16 + $0x74] sm:$0xf]
        %v2158 = vld [vmem:[%s16 + $0x78] sm:$0xf]
        %v2159 = vld [vmem:[%s16 + $0x7c] sm:$0xf]
        %v2160 = vld [vmem:[%s16 + $0x80] sm:$0xf]
        %v2161 = vld [vmem:[%s16 + $0x84] sm:$0xf]
        %v2162 = vld [vmem:[%s16 + $0x88] sm:$0xf]
        %v2163 = vld [vmem:[%s16 + $0x8c] sm:$0xf]
        %v2164 = vld [vmem:[%s16 + $0x90] sm:$0xf]
        %v2165 = vld [vmem:[%s16 + $0x94] sm:$0xf]
        %v2166 = vld [vmem:[%s16 + $0x98] sm:$0xf]
        %v2167 = vld [vmem:[%s16 + $0x9c] sm:$0xf]
        %v2168 = vld [vmem:[%s16 + $0xa0] sm:$0xf]
        %v2169 = vld [vmem:[%s16 + $0xa4] sm:$0xf]
        %v2170 = vld [vmem:[%s16 + $0xa8] sm:$0xf]
        %v2171 = vld [vmem:[%s16 + $0xac] sm:$0xf]
        %v2172 = vld [vmem:[%s16 + $0xb0] sm:$0xf]
        %v2173 = vld [vmem:[%s16 + $0xb4] sm:$0xf]
        %v2174 = vld [vmem:[%s16 + $0xb8] sm:$0xf]
        %v2175 = vld [vmem:[%s16 + $0xbc] sm:$0xf]
        %v2176 = vld [vmem:[%s16 + $0xc0] sm:$0xf]
        %v2177 = vld [vmem:[%s16 + $0xc4] sm:$0xf]
        %v2178 = vld [vmem:[%s16 + $0xc8] sm:$0xf]
        %v2179 = vld [vmem:[%s16 + $0xcc] sm:$0xf]
        %v2180 = vld [vmem:[%s16 + $0xd0] sm:$0xf]
        %v2181 = vld [vmem:[%s16 + $0xd4] sm:$0xf]
        %v2182 = vld [vmem:[%s16 + $0xd8] sm:$0xf]
        %v2183 = vld [vmem:[%s16 + $0xdc] sm:$0xf]
        %v2184 = vld [vmem:[%s16 + $0xe0] sm:$0xf]
        %v2185 = vld [vmem:[%s16 + $0xe4] sm:$0xf]
        %v2186 = vld [vmem:[%s16 + $0xe8] sm:$0xf]
        %v2187 = vld [vmem:[%s16 + $0xec] sm:$0xf]
        %v2188 = vld [vmem:[%s16 + $0xf0] sm:$0xf]
        %v2189 = vld [vmem:[%s16 + $0xf4] sm:$0xf]
        %v2190 = vld [vmem:[%s16 + $0xf8] sm:$0xf]
        %v2191 = vld [vmem:[%s16 + $0xfc] sm:$0xf]
        %v2192 = vld [vmem:[%s16 + $0x100] sm:$0xf]
        %v2193 = vld [vmem:[%s16 + $0x104] sm:$0xf]
        %v2194 = vld [vmem:[%s16 + $0x108] sm:$0xf]
        %v2195 = vld [vmem:[%s16 + $0x10c] sm:$0xf]
        %v2196 = vld [vmem:[%s16 + $0x110] sm:$0xf]
        %v2197 = vld [vmem:[%s16 + $0x114] sm:$0xf]
        %v2198 = vld [vmem:[%s16 + $0x118] sm:$0xf]
        %v2199 = vld [vmem:[%s16 + $0x11c] sm:$0xf]
        %v2200 = vld [vmem:[%s16 + $0x120] sm:$0xf]
        %v2201 = vld [vmem:[%s16 + $0x124] sm:$0xf]
        %v2202 = vld [vmem:[%s16 + $0x128] sm:$0xf]
        %v2203 = vld [vmem:[%s16 + $0x12c] sm:$0xf]
        %v2204 = vld [vmem:[%s16 + $0x130] sm:$0xf]
        %v2205 = vld [vmem:[%s16 + $0x134] sm:$0xf]
        %v2206 = vld [vmem:[%s16 + $0x138] sm:$0xf]
        %v2207 = vld [vmem:[%s16 + $0x13c] sm:$0xf]
        %v2208 = vld [vmem:[%s16 + $0x140] sm:$0xf]
        %v2209 = vld [vmem:[%s16 + $0x144] sm:$0xf]
        %v2210 = vld [vmem:[%s16 + $0x148] sm:$0xf]
        %v2211 = vld [vmem:[%s16 + $0x14c] sm:$0xf]
        %v2212 = vld [vmem:[%s16 + $0x150] sm:$0xf]
        %v2213 = vld [vmem:[%s16 + $0x154] sm:$0xf]
        %v2214 = vld [vmem:[%s16 + $0x158] sm:$0xf]
        %v2215 = vld [vmem:[%s16 + $0x15c] sm:$0xf]
        %v2216 = vld [vmem:[%s16 + $0x160] sm:$0xf]
        %v2217 = vld [vmem:[%s16 + $0x164] sm:$0xf]
        %v2218 = vld [vmem:[%s16 + $0x168] sm:$0xf]
        %v2219 = vld [vmem:[%s16 + $0x16c] sm:$0xf]
        %v2220 = vld [vmem:[%s16 + $0x170] sm:$0xf]
        %v2221 = vld [vmem:[%s16 + $0x174] sm:$0xf]
        %v2222 = vld [vmem:[%s16 + $0x178] sm:$0xf]
        %v2223 = vld [vmem:[%s16 + $0x17c] sm:$0xf]
        %v2224 = vld [vmem:[%s16 + $0x180] sm:$0xf]
        %v2225 = vld [vmem:[%s16 + $0x184] sm:$0xf]
        %v2226 = vld [vmem:[%s16 + $0x188] sm:$0xf]
        %v2227 = vld [vmem:[%s16 + $0x18c] sm:$0xf]
        %v2228 = vld [vmem:[%s16 + $0x190] sm:$0xf]
        %v2229 = vld [vmem:[%s16 + $0x194] sm:$0xf]
        %v2230 = vld [vmem:[%s16 + $0x198] sm:$0xf]
        %v2231 = vld [vmem:[%s16 + $0x19c] sm:$0xf]
        %v2232 = vld [vmem:[%s16 + $0x1a0] sm:$0xf]
        %v2233 = vld [vmem:[%s16 + $0x1a4] sm:$0xf]
        %v2234 = vld [vmem:[%s16 + $0x1a8] sm:$0xf]
        %v2235 = vld [vmem:[%s16 + $0x1ac] sm:$0xf]
        %v2236 = vld [vmem:[%s16 + $0x1b0] sm:$0xf]
        %v2237 = vld [vmem:[%s16 + $0x1b4] sm:$0xf]
        %v2238 = vld [vmem:[%s16 + $0x1b8] sm:$0xf]
        %v2239 = vld [vmem:[%s16 + $0x1bc] sm:$0xf]
        %v2240 = vld [vmem:[%s16 + $0x1c0] sm:$0xf]
        %v2241 = vld [vmem:[%s16 + $0x1c4] sm:$0xf]
        %v2242 = vld [vmem:[%s16 + $0x1c8] sm:$0xf]
        %v2243 = vld [vmem:[%s16 + $0x1cc] sm:$0xf]
        %v2244 = vld [vmem:[%s16 + $0x1d0] sm:$0xf]
        %v2245 = vld [vmem:[%s16 + $0x1d4] sm:$0xf]
        %v2246 = vld [vmem:[%s16 + $0x1d8] sm:$0xf]
        %v2247 = vld [vmem:[%s16 + $0x1dc] sm:$0xf]
        %v2248 = vld [vmem:[%s16 + $0x1e0] sm:$0xf]
        %v2249 = vld [vmem:[%s16 + $0x1e4] sm:$0xf]
        %v2250 = vld [vmem:[%s16 + $0x1e8] sm:$0xf]
        %v2251 = vld [vmem:[%s16 + $0x1ec] sm:$0xf]
        %v2252 = vld [vmem:[%s16 + $0x1f0] sm:$0xf]
        %v2253 = vld [vmem:[%s16 + $0x1f4] sm:$0xf]
        %v2254 = vld [vmem:[%s16 + $0x1f8] sm:$0xf]
        %v2255 = vld [vmem:[%s16 + $0x1fc] sm:$0xf]
        %v2256 = vld [vmem:[%s16 + $0x200] sm:$0xf]
        %v2257 = vld [vmem:[%s16 + $0x204] sm:$0xf]
        %v2258 = vld [vmem:[%s16 + $0x208] sm:$0xf]
        %v2259 = vld [vmem:[%s16 + $0x20c] sm:$0xf]
        %v2260 = vld [vmem:[%s16 + $0x210] sm:$0xf]
        %v2261 = vld [vmem:[%s16 + $0x214] sm:$0xf]
        %v2262 = vld [vmem:[%s16 + $0x218] sm:$0xf]
        %v2263 = vld [vmem:[%s16 + $0x21c] sm:$0xf]
        %v2264 = vld [vmem:[%s16 + $0x220] sm:$0xf]
        %v2265 = vld [vmem:[%s16 + $0x224] sm:$0xf]
        %v2266 = vld [vmem:[%s16 + $0x228] sm:$0xf]
        %v2267 = vld [vmem:[%s16 + $0x22c] sm:$0xf]
        %v2268 = vld [vmem:[%s16 + $0x230] sm:$0xf]
        %v2269 = vld [vmem:[%s16 + $0x234] sm:$0xf]
        %v2270 = vld [vmem:[%s16 + $0x238] sm:$0xf]
        %v2271 = vld [vmem:[%s16 + $0x23c] sm:$0xf]
        %v2272 = vld [vmem:[%s16 + $0x240] sm:$0xf]
        %v2273 = vld [vmem:[%s16 + $0x244] sm:$0xf]
        %v2274 = vld [vmem:[%s16 + $0x248] sm:$0xf]
        %v2275 = vld [vmem:[%s16 + $0x24c] sm:$0xf]
        %v2276 = vld [vmem:[%s16 + $0x250] sm:$0xf]
        %v2277 = vld [vmem:[%s16 + $0x254] sm:$0xf]
        %v2278 = vld [vmem:[%s16 + $0x258] sm:$0xf]
        %v2279 = vld [vmem:[%s16 + $0x25c] sm:$0xf]
        %v2280 = vld [vmem:[%s16 + $0x260] sm:$0xf]
        %v2281 = vld [vmem:[%s16 + $0x264] sm:$0xf]
        %v2282 = vld [vmem:[%s16 + $0x268] sm:$0xf]
        %v2283 = vld [vmem:[%s16 + $0x26c] sm:$0xf]
        %v2284 = vld [vmem:[%s16 + $0x270] sm:$0xf]
        %v2285 = vld [vmem:[%s16 + $0x274] sm:$0xf]
        %v2286 = vld [vmem:[%s16 + $0x278] sm:$0xf]
        %v2287 = vld [vmem:[%s16 + $0x27c] sm:$0xf]
        %v2288 = vld [vmem:[%s16 + $0x280] sm:$0xf]
        %v2289 = vld [vmem:[%s16 + $0x284] sm:$0xf]
        %v2290 = vld [vmem:[%s16 + $0x288] sm:$0xf]
        %v2291 = vld [vmem:[%s16 + $0x28c] sm:$0xf]
        %v2292 = vld [vmem:[%s16 + $0x290] sm:$0xf]
        %v2293 = vld [vmem:[%s16 + $0x294] sm:$0xf]
        %v2294 = vld [vmem:[%s16 + $0x298] sm:$0xf]
        %v2295 = vld [vmem:[%s16 + $0x29c] sm:$0xf]
        %v2296 = vld [vmem:[%s16 + $0x2a0] sm:$0xf]
        %v2297 = vld [vmem:[%s16 + $0x2a4] sm:$0xf]
        %v2298 = vld [vmem:[%s16 + $0x2a8] sm:$0xf]
        %v2299 = vld [vmem:[%s16 + $0x2ac] sm:$0xf]
        %v2300 = vld [vmem:[%s16 + $0x2b0] sm:$0xf]
        %v2301 = vld [vmem:[%s16 + $0x2b4] sm:$0xf]
        %v2302 = vld [vmem:[%s16 + $0x2b8] sm:$0xf]
        %v2303 = vld [vmem:[%s16 + $0x2bc] sm:$0xf]
        %v2304 = vld [vmem:[%s16 + $0x2c0] sm:$0xf]
        %v2305 = vld [vmem:[%s16 + $0x2c4] sm:$0xf]
        %v2306 = vld [vmem:[%s16 + $0x2c8] sm:$0xf]
        %v2307 = vld [vmem:[%s16 + $0x2cc] sm:$0xf]
        %v2308 = vld [vmem:[%s16 + $0x2d0] sm:$0xf]
        %v2309 = vld [vmem:[%s16 + $0x2d4] sm:$0xf]
        %v2310 = vld [vmem:[%s16 + $0x2d8] sm:$0xf]
        %v2311 = vld [vmem:[%s16 + $0x2dc] sm:$0xf]
        %v2312 = vld [vmem:[%s16 + $0x2e0] sm:$0xf]
        %v2313 = vld [vmem:[%s16 + $0x2e4] sm:$0xf]
        %v2314 = vld [vmem:[%s16 + $0x2e8] sm:$0xf]
        %v2315 = vld [vmem:[%s16 + $0x2ec] sm:$0xf]
        %v2316 = vld [vmem:[%s16 + $0x2f0] sm:$0xf]
        %v2317 = vld [vmem:[%s16 + $0x2f4] sm:$0xf]
        %v2318 = vld [vmem:[%s16 + $0x2f8] sm:$0xf]
        %v2319 = vld [vmem:[%s16 + $0x2fc] sm:$0xf]
        %v2320 = vld [vmem:[%s16 + $0x300] sm:$0xf]
        %v2321 = vld [vmem:[%s16 + $0x304] sm:$0xf]
        %v2322 = vld [vmem:[%s16 + $0x308] sm:$0xf]
        %v2323 = vld [vmem:[%s16 + $0x30c] sm:$0xf]
        %v2324 = vld [vmem:[%s16 + $0x310] sm:$0xf]
        %v2325 = vld [vmem:[%s16 + $0x314] sm:$0xf]
        %v2326 = vld [vmem:[%s16 + $0x318] sm:$0xf]
        %v2327 = vld [vmem:[%s16 + $0x31c] sm:$0xf]
        %v2328 = vld [vmem:[%s16 + $0x320] sm:$0xf]
        %v2329 = vld [vmem:[%s16 + $0x324] sm:$0xf]
        %v2330 = vld [vmem:[%s16 + $0x328] sm:$0xf]
        %v2331 = vld [vmem:[%s16 + $0x32c] sm:$0xf]
        %v2332 = vld [vmem:[%s16 + $0x330] sm:$0xf]
        %v2333 = vld [vmem:[%s16 + $0x334] sm:$0xf]
        %v2334 = vld [vmem:[%s16 + $0x338] sm:$0xf]
        %v2335 = vld [vmem:[%s16 + $0x33c] sm:$0xf]
        %v2336 = vld [vmem:[%s16 + $0x340] sm:$0xf]
        %v2337 = vld [vmem:[%s16 + $0x344] sm:$0xf]
        %v2338 = vld [vmem:[%s16 + $0x348] sm:$0xf]
        %v2339 = vld [vmem:[%s16 + $0x34c] sm:$0xf]
        %v2340 = vld [vmem:[%s16 + $0x350] sm:$0xf]
        %v2341 = vld [vmem:[%s16 + $0x354] sm:$0xf]
        %v2342 = vld [vmem:[%s16 + $0x358] sm:$0xf]
        %v2343 = vld [vmem:[%s16 + $0x35c] sm:$0xf]
        %v2344 = vld [vmem:[%s16 + $0x360] sm:$0xf]
        %v2345 = vld [vmem:[%s16 + $0x364] sm:$0xf]
        %v2346 = vld [vmem:[%s16 + $0x368] sm:$0xf]
        %v2347 = vld [vmem:[%s16 + $0x36c] sm:$0xf]
        %v2348 = vld [vmem:[%s16 + $0x370] sm:$0xf]
        %v2349 = vld [vmem:[%s16 + $0x374] sm:$0xf]
        %v2350 = vld [vmem:[%s16 + $0x378] sm:$0xf]
        %v2351 = vld [vmem:[%s16 + $0x37c] sm:$0xf]
        %v2352 = vld [vmem:[%s16 + $0x380] sm:$0xf]
        %v2353 = vld [vmem:[%s16 + $0x384] sm:$0xf]
        %v2354 = vld [vmem:[%s16 + $0x388] sm:$0xf]
        %v2355 = vld [vmem:[%s16 + $0x38c] sm:$0xf]
        %v2356 = vld [vmem:[%s16 + $0x390] sm:$0xf]
        %v2357 = vld [vmem:[%s16 + $0x394] sm:$0xf]
        %v2358 = vld [vmem:[%s16 + $0x398] sm:$0xf]
        %v2359 = vld [vmem:[%s16 + $0x39c] sm:$0xf]
        %v2360 = vld [vmem:[%s16 + $0x3a0] sm:$0xf]
        %v2361 = vld [vmem:[%s16 + $0x3a4] sm:$0xf]
        %v2362 = vld [vmem:[%s16 + $0x3a8] sm:$0xf]
        %v2363 = vld [vmem:[%s16 + $0x3ac] sm:$0xf]
        %v2364 = vld [vmem:[%s16 + $0x3b0] sm:$0xf]
        %v2365 = vld [vmem:[%s16 + $0x3b4] sm:$0xf]
        %v2366 = vld [vmem:[%s16 + $0x3b8] sm:$0xf]
        %v2367 = vld [vmem:[%s16 + $0x3bc] sm:$0xf]
        %v2368 = vld [vmem:[%s16 + $0x3c0] sm:$0xf]
        %v2369 = vld [vmem:[%s16 + $0x3c4] sm:$0xf]
        %v2370 = vld [vmem:[%s16 + $0x3c8] sm:$0xf]
        %v2371 = vld [vmem:[%s16 + $0x3cc] sm:$0xf]
        %v2372 = vld [vmem:[%s16 + $0x3d0] sm:$0xf]
        %v2373 = vld [vmem:[%s16 + $0x3d4] sm:$0xf]
        %v2374 = vld [vmem:[%s16 + $0x3d8] sm:$0xf]
        %v2375 = vld [vmem:[%s16 + $0x3dc] sm:$0xf]
        %v2376 = vld [vmem:[%s16 + $0x3e0] sm:$0xf]
        %v2377 = vld [vmem:[%s16 + $0x3e4] sm:$0xf]
        %v2378 = vld [vmem:[%s16 + $0x3e8] sm:$0xf]
        %v2379 = vld [vmem:[%s16 + $0x3ec] sm:$0xf]
        %v2380 = vld [vmem:[%s16 + $0x3f0] sm:$0xf]
        %v2381 = vld [vmem:[%s16 + $0x3f4] sm:$0xf]
        %v2382 = vld [vmem:[%s16 + $0x3f8] sm:$0xf]
        %v2383 = vld [vmem:[%s16 + $0x3fc] sm:$0xf]
        %v2384 = vld [vmem:[%s17] sm:$0x1]
        %v2386 = vlaneseq
        %v2387 = vshrl.u32 %v2386, 7
        %v2388 = vsub.s32 0, %v2387
        %v2389 = vrot.slane %v2384, %v2388
        %v2647 = vunpack.c.l.b16 %v2128
        %v2648 = vunpack.c.l.b16 %v2129
        %v2649 = vunpack.c.l.b16 %v2130
        %v2650 = vunpack.c.l.b16 %v2131
        %v2651 = vunpack.c.l.b16 %v2132
        %v2652 = vunpack.c.l.b16 %v2133
        %v2653 = vunpack.c.l.b16 %v2134
        %v2654 = vunpack.c.l.b16 %v2135
        %v2655 = vunpack.c.l.b16 %v2136
        %v2656 = vunpack.c.l.b16 %v2137
        %v2657 = vunpack.c.l.b16 %v2138
        %v2658 = vunpack.c.l.b16 %v2139
        %v2659 = vunpack.c.l.b16 %v2140
        %v2660 = vunpack.c.l.b16 %v2141
        %v2661 = vunpack.c.l.b16 %v2142
        %v2662 = vunpack.c.l.b16 %v2143
        %v2663 = vunpack.c.l.b16 %v2144
        %v2664 = vunpack.c.l.b16 %v2145
        %v2665 = vunpack.c.l.b16 %v2146
        %v2666 = vunpack.c.l.b16 %v2147
        %v2667 = vunpack.c.l.b16 %v2148
        %v2668 = vunpack.c.l.b16 %v2149
        %v2669 = vunpack.c.l.b16 %v2150
        %v2670 = vunpack.c.l.b16 %v2151
        %v2671 = vunpack.c.l.b16 %v2152
        %v2672 = vunpack.c.l.b16 %v2153
        %v2673 = vunpack.c.l.b16 %v2154
        %v2674 = vunpack.c.l.b16 %v2155
        %v2675 = vunpack.c.l.b16 %v2156
        %v2676 = vunpack.c.l.b16 %v2157
        %v2677 = vunpack.c.l.b16 %v2158
        %v2678 = vunpack.c.l.b16 %v2159
        %v2679 = vunpack.c.l.b16 %v2160
        %v2680 = vunpack.c.l.b16 %v2161
        %v2681 = vunpack.c.l.b16 %v2162
        %v2682 = vunpack.c.l.b16 %v2163
        %v2683 = vunpack.c.l.b16 %v2164
        %v2684 = vunpack.c.l.b16 %v2165
        %v2685 = vunpack.c.l.b16 %v2166
        %v2686 = vunpack.c.l.b16 %v2167
        %v2687 = vunpack.c.l.b16 %v2168
        %v2688 = vunpack.c.l.b16 %v2169
        %v2689 = vunpack.c.l.b16 %v2170
        %v2690 = vunpack.c.l.b16 %v2171
        %v2691 = vunpack.c.l.b16 %v2172
        %v2692 = vunpack.c.l.b16 %v2173
        %v2693 = vunpack.c.l.b16 %v2174
        %v2694 = vunpack.c.l.b16 %v2175
        %v2695 = vunpack.c.l.b16 %v2176
        %v2696 = vunpack.c.l.b16 %v2177
        %v2697 = vunpack.c.l.b16 %v2178
        %v2698 = vunpack.c.l.b16 %v2179
        %v2699 = vunpack.c.l.b16 %v2180
        %v2700 = vunpack.c.l.b16 %v2181
        %v2701 = vunpack.c.l.b16 %v2182
        %v2702 = vunpack.c.l.b16 %v2183
        %v2703 = vunpack.c.l.b16 %v2184
        %v2704 = vunpack.c.l.b16 %v2185
        %v2705 = vunpack.c.l.b16 %v2186
        %v2706 = vunpack.c.l.b16 %v2187
        %v2707 = vunpack.c.l.b16 %v2188
        %v2708 = vunpack.c.l.b16 %v2189
        %v2709 = vunpack.c.l.b16 %v2190
        %v2710 = vunpack.c.l.b16 %v2191
        %v2711 = vunpack.c.l.b16 %v2192
        %v2712 = vunpack.c.l.b16 %v2193
        %v2713 = vunpack.c.l.b16 %v2194
        %v2714 = vunpack.c.l.b16 %v2195
        %v2715 = vunpack.c.l.b16 %v2196
        %v2716 = vunpack.c.l.b16 %v2197
        %v2717 = vunpack.c.l.b16 %v2198
        %v2718 = vunpack.c.l.b16 %v2199
        %v2719 = vunpack.c.l.b16 %v2200
        %v2720 = vunpack.c.l.b16 %v2201
        %v2721 = vunpack.c.l.b16 %v2202
        %v2722 = vunpack.c.l.b16 %v2203
        %v2723 = vunpack.c.l.b16 %v2204
        %v2724 = vunpack.c.l.b16 %v2205
        %v2725 = vunpack.c.l.b16 %v2206
        %v2726 = vunpack.c.l.b16 %v2207
        %v2727 = vunpack.c.l.b16 %v2208
        %v2728 = vunpack.c.l.b16 %v2209
        %v2729 = vunpack.c.l.b16 %v2210
        %v2730 = vunpack.c.l.b16 %v2211
        %v2731 = vunpack.c.l.b16 %v2212
        %v2732 = vunpack.c.l.b16 %v2213
        %v2733 = vunpack.c.l.b16 %v2214
        %v2734 = vunpack.c.l.b16 %v2215
        %v2735 = vunpack.c.l.b16 %v2216
        %v2736 = vunpack.c.l.b16 %v2217
        %v2737 = vunpack.c.l.b16 %v2218
        %v2738 = vunpack.c.l.b16 %v2219
        %v2739 = vunpack.c.l.b16 %v2220
        %v2740 = vunpack.c.l.b16 %v2221
        %v2741 = vunpack.c.l.b16 %v2222
        %v2742 = vunpack.c.l.b16 %v2223
        %v2743 = vunpack.c.l.b16 %v2224
        %v2744 = vunpack.c.l.b16 %v2225
        %v2745 = vunpack.c.l.b16 %v2226
        %v2746 = vunpack.c.l.b16 %v2227
        %v2747 = vunpack.c.l.b16 %v2228
        %v2748 = vunpack.c.l.b16 %v2229
        %v2749 = vunpack.c.l.b16 %v2230
        %v2750 = vunpack.c.l.b16 %v2231
        %v2751 = vunpack.c.l.b16 %v2232
        %v2752 = vunpack.c.l.b16 %v2233
        %v2753 = vunpack.c.l.b16 %v2234
        %v2754 = vunpack.c.l.b16 %v2235
        %v2755 = vunpack.c.l.b16 %v2236
        %v2756 = vunpack.c.l.b16 %v2237
        %v2757 = vunpack.c.l.b16 %v2238
        %v2758 = vunpack.c.l.b16 %v2239
        %v2759 = vunpack.c.l.b16 %v2240
        %v2760 = vunpack.c.l.b16 %v2241
        %v2761 = vunpack.c.l.b16 %v2242
        %v2762 = vunpack.c.l.b16 %v2243
        %v2763 = vunpack.c.l.b16 %v2244
        %v2764 = vunpack.c.l.b16 %v2245
        %v2765 = vunpack.c.l.b16 %v2246
        %v2766 = vunpack.c.l.b16 %v2247
        %v2767 = vunpack.c.l.b16 %v2248
        %v2768 = vunpack.c.l.b16 %v2249
        %v2769 = vunpack.c.l.b16 %v2250
        %v2770 = vunpack.c.l.b16 %v2251
        %v2771 = vunpack.c.l.b16 %v2252
        %v2772 = vunpack.c.l.b16 %v2253
        %v2773 = vunpack.c.l.b16 %v2254
        %v2774 = vunpack.c.l.b16 %v2255
        %v2775 = vunpack.c.l.b16 %v2256
        %v2776 = vunpack.c.l.b16 %v2257
        %v2777 = vunpack.c.l.b16 %v2258
        %v2778 = vunpack.c.l.b16 %v2259
        %v2779 = vunpack.c.l.b16 %v2260
        %v2780 = vunpack.c.l.b16 %v2261
        %v2781 = vunpack.c.l.b16 %v2262
        %v2782 = vunpack.c.l.b16 %v2263
        %v2783 = vunpack.c.l.b16 %v2264
        %v2784 = vunpack.c.l.b16 %v2265
        %v2785 = vunpack.c.l.b16 %v2266
        %v2786 = vunpack.c.l.b16 %v2267
        %v2787 = vunpack.c.l.b16 %v2268
        %v2788 = vunpack.c.l.b16 %v2269
        %v2789 = vunpack.c.l.b16 %v2270
        %v2790 = vunpack.c.l.b16 %v2271
        %v2791 = vunpack.c.l.b16 %v2272
        %v2792 = vunpack.c.l.b16 %v2273
        %v2793 = vunpack.c.l.b16 %v2274
        %v2794 = vunpack.c.l.b16 %v2275
        %v2795 = vunpack.c.l.b16 %v2276
        %v2796 = vunpack.c.l.b16 %v2277
        %v2797 = vunpack.c.l.b16 %v2278
        %v2798 = vunpack.c.l.b16 %v2279
        %v2799 = vunpack.c.l.b16 %v2280
        %v2800 = vunpack.c.l.b16 %v2281
        %v2801 = vunpack.c.l.b16 %v2282
        %v2802 = vunpack.c.l.b16 %v2283
        %v2803 = vunpack.c.l.b16 %v2284
        %v2804 = vunpack.c.l.b16 %v2285
        %v2805 = vunpack.c.l.b16 %v2286
        %v2806 = vunpack.c.l.b16 %v2287
        %v2807 = vunpack.c.l.b16 %v2288
        %v2808 = vunpack.c.l.b16 %v2289
        %v2809 = vunpack.c.l.b16 %v2290
        %v2810 = vunpack.c.l.b16 %v2291
        %v2811 = vunpack.c.l.b16 %v2292
        %v2812 = vunpack.c.l.b16 %v2293
        %v2813 = vunpack.c.l.b16 %v2294
        %v2814 = vunpack.c.l.b16 %v2295
        %v2815 = vunpack.c.l.b16 %v2296
        %v2816 = vunpack.c.l.b16 %v2297
        %v2817 = vunpack.c.l.b16 %v2298
        %v2818 = vunpack.c.l.b16 %v2299
        %v2819 = vunpack.c.l.b16 %v2300
        %v2820 = vunpack.c.l.b16 %v2301
        %v2821 = vunpack.c.l.b16 %v2302
        %v2822 = vunpack.c.l.b16 %v2303
        %v2823 = vunpack.c.l.b16 %v2304
        %v2824 = vunpack.c.l.b16 %v2305
        %v2825 = vunpack.c.l.b16 %v2306
        %v2826 = vunpack.c.l.b16 %v2307
        %v2827 = vunpack.c.l.b16 %v2308
        %v2828 = vunpack.c.l.b16 %v2309
        %v2829 = vunpack.c.l.b16 %v2310
        %v2830 = vunpack.c.l.b16 %v2311
        %v2831 = vunpack.c.l.b16 %v2312
        %v2832 = vunpack.c.l.b16 %v2313
        %v2833 = vunpack.c.l.b16 %v2314
        %v2834 = vunpack.c.l.b16 %v2315
        %v2835 = vunpack.c.l.b16 %v2316
        %v2836 = vunpack.c.l.b16 %v2317
        %v2837 = vunpack.c.l.b16 %v2318
        %v2838 = vunpack.c.l.b16 %v2319
        %v2839 = vunpack.c.l.b16 %v2320
        %v2840 = vunpack.c.l.b16 %v2321
        %v2841 = vunpack.c.l.b16 %v2322
        %v2842 = vunpack.c.l.b16 %v2323
        %v2843 = vunpack.c.l.b16 %v2324
        %v2844 = vunpack.c.l.b16 %v2325
        %v2845 = vunpack.c.l.b16 %v2326
        %v2846 = vunpack.c.l.b16 %v2327
        %v2847 = vunpack.c.l.b16 %v2328
        %v2848 = vunpack.c.l.b16 %v2329
        %v2849 = vunpack.c.l.b16 %v2330
        %v2850 = vunpack.c.l.b16 %v2331
        %v2851 = vunpack.c.l.b16 %v2332
        %v2852 = vunpack.c.l.b16 %v2333
        %v2853 = vunpack.c.l.b16 %v2334
        %v2854 = vunpack.c.l.b16 %v2335
        %v2855 = vunpack.c.l.b16 %v2336
        %v2856 = vunpack.c.l.b16 %v2337
        %v2857 = vunpack.c.l.b16 %v2338
        %v2858 = vunpack.c.l.b16 %v2339
        %v2859 = vunpack.c.l.b16 %v2340
        %v2860 = vunpack.c.l.b16 %v2341
        %v2861 = vunpack.c.l.b16 %v2342
        %v2862 = vunpack.c.l.b16 %v2343
        %v2863 = vunpack.c.l.b16 %v2344
        %v2864 = vunpack.c.l.b16 %v2345
        %v2865 = vunpack.c.l.b16 %v2346
        %v2866 = vunpack.c.l.b16 %v2347
        %v2867 = vunpack.c.l.b16 %v2348
        %v2868 = vunpack.c.l.b16 %v2349
        %v2869 = vunpack.c.l.b16 %v2350
        %v2870 = vunpack.c.l.b16 %v2351
        %v2871 = vunpack.c.l.b16 %v2352
        %v2872 = vunpack.c.l.b16 %v2353
        %v2873 = vunpack.c.l.b16 %v2354
        %v2874 = vunpack.c.l.b16 %v2355
        %v2875 = vunpack.c.l.b16 %v2356
        %v2876 = vunpack.c.l.b16 %v2357
        %v2877 = vunpack.c.l.b16 %v2358
        %v2878 = vunpack.c.l.b16 %v2359
        %v2879 = vunpack.c.l.b16 %v2360
        %v2880 = vunpack.c.l.b16 %v2361
        %v2881 = vunpack.c.l.b16 %v2362
        %v2882 = vunpack.c.l.b16 %v2363
        %v2883 = vunpack.c.l.b16 %v2364
        %v2884 = vunpack.c.l.b16 %v2365
        %v2885 = vunpack.c.l.b16 %v2366
        %v2886 = vunpack.c.l.b16 %v2367
        %v2887 = vunpack.c.l.b16 %v2368
        %v2888 = vunpack.c.l.b16 %v2369
        %v2889 = vunpack.c.l.b16 %v2370
        %v2890 = vunpack.c.l.b16 %v2371
        %v2891 = vunpack.c.l.b16 %v2372
        %v2892 = vunpack.c.l.b16 %v2373
        %v2893 = vunpack.c.l.b16 %v2374
        %v2894 = vunpack.c.l.b16 %v2375
        %v2895 = vunpack.c.l.b16 %v2376
        %v2896 = vunpack.c.l.b16 %v2377
        %v2897 = vunpack.c.l.b16 %v2378
        %v2898 = vunpack.c.l.b16 %v2379
        %v2899 = vunpack.c.l.b16 %v2380
        %v2900 = vunpack.c.l.b16 %v2381
        %v2901 = vunpack.c.l.b16 %v2382
        %v2902 = vunpack.c.l.b16 %v2383
        %v2903 = vpack.c.b16 %v2648, %v2647
        %v2904 = vpack.c.b16 %v2650, %v2649
        %v2905 = vpack.c.b16 %v2652, %v2651
        %v2906 = vpack.c.b16 %v2654, %v2653
        %v2907 = vpack.c.b16 %v2656, %v2655
        %v2908 = vpack.c.b16 %v2658, %v2657
        %v2909 = vpack.c.b16 %v2660, %v2659
        %v2910 = vpack.c.b16 %v2662, %v2661
        %v2911 = vpack.c.b16 %v2664, %v2663
        %v2912 = vpack.c.b16 %v2666, %v2665
        %v2913 = vpack.c.b16 %v2668, %v2667
        %v2914 = vpack.c.b16 %v2670, %v2669
        %v2915 = vpack.c.b16 %v2672, %v2671
        %v2916 = vpack.c.b16 %v2674, %v2673
        %v2917 = vpack.c.b16 %v2676, %v2675
        %v2918 = vpack.c.b16 %v2678, %v2677
        %v2919 = vpack.c.b16 %v2680, %v2679
        %v2920 = vpack.c.b16 %v2682, %v2681
        %v2921 = vpack.c.b16 %v2684, %v2683
        %v2922 = vpack.c.b16 %v2686, %v2685
        %v2923 = vpack.c.b16 %v2688, %v2687
        %v2924 = vpack.c.b16 %v2690, %v2689
        %v2925 = vpack.c.b16 %v2692, %v2691
        %v2926 = vpack.c.b16 %v2694, %v2693
        %v2927 = vpack.c.b16 %v2696, %v2695
        %v2928 = vpack.c.b16 %v2698, %v2697
        %v2929 = vpack.c.b16 %v2700, %v2699
        %v2930 = vpack.c.b16 %v2702, %v2701
        %v2931 = vpack.c.b16 %v2704, %v2703
        %v2932 = vpack.c.b16 %v2706, %v2705
        %v2933 = vpack.c.b16 %v2708, %v2707
        %v2934 = vpack.c.b16 %v2710, %v2709
        %v2935 = vpack.c.b16 %v2712, %v2711
        %v2936 = vpack.c.b16 %v2714, %v2713
        %v2937 = vpack.c.b16 %v2716, %v2715
        %v2938 = vpack.c.b16 %v2718, %v2717
        %v2939 = vpack.c.b16 %v2720, %v2719
        %v2940 = vpack.c.b16 %v2722, %v2721
        %v2941 = vpack.c.b16 %v2724, %v2723
        %v2942 = vpack.c.b16 %v2726, %v2725
        %v2943 = vpack.c.b16 %v2728, %v2727
        %v2944 = vpack.c.b16 %v2730, %v2729
        %v2945 = vpack.c.b16 %v2732, %v2731
        %v2946 = vpack.c.b16 %v2734, %v2733
        %v2947 = vpack.c.b16 %v2736, %v2735
        %v2948 = vpack.c.b16 %v2738, %v2737
        %v2949 = vpack.c.b16 %v2740, %v2739
        %v2950 = vpack.c.b16 %v2742, %v2741
        %v2951 = vpack.c.b16 %v2744, %v2743
        %v2952 = vpack.c.b16 %v2746, %v2745
        %v2953 = vpack.c.b16 %v2748, %v2747
        %v2954 = vpack.c.b16 %v2750, %v2749
        %v2955 = vpack.c.b16 %v2752, %v2751
        %v2956 = vpack.c.b16 %v2754, %v2753
        %v2957 = vpack.c.b16 %v2756, %v2755
        %v2958 = vpack.c.b16 %v2758, %v2757
        %v2959 = vpack.c.b16 %v2760, %v2759
        %v2960 = vpack.c.b16 %v2762, %v2761
        %v2961 = vpack.c.b16 %v2764, %v2763
        %v2962 = vpack.c.b16 %v2766, %v2765
        %v2963 = vpack.c.b16 %v2768, %v2767
        %v2964 = vpack.c.b16 %v2770, %v2769
        %v2965 = vpack.c.b16 %v2772, %v2771
        %v2966 = vpack.c.b16 %v2774, %v2773
        %v2967 = vpack.c.b16 %v2776, %v2775
        %v2968 = vpack.c.b16 %v2778, %v2777
        %v2969 = vpack.c.b16 %v2780, %v2779
        %v2970 = vpack.c.b16 %v2782, %v2781
        %v2971 = vpack.c.b16 %v2784, %v2783
        %v2972 = vpack.c.b16 %v2786, %v2785
        %v2973 = vpack.c.b16 %v2788, %v2787
        %v2974 = vpack.c.b16 %v2790, %v2789
        %v2975 = vpack.c.b16 %v2792, %v2791
        %v2976 = vpack.c.b16 %v2794, %v2793
        %v2977 = vpack.c.b16 %v2796, %v2795
        %v2978 = vpack.c.b16 %v2798, %v2797
        %v2979 = vpack.c.b16 %v2800, %v2799
        %v2980 = vpack.c.b16 %v2802, %v2801
        %v2981 = vpack.c.b16 %v2804, %v2803
        %v2982 = vpack.c.b16 %v2806, %v2805
        %v2983 = vpack.c.b16 %v2808, %v2807
        %v2984 = vpack.c.b16 %v2810, %v2809
        %v2985 = vpack.c.b16 %v2812, %v2811
        %v2986 = vpack.c.b16 %v2814, %v2813
        %v2987 = vpack.c.b16 %v2816, %v2815
        %v2988 = vpack.c.b16 %v2818, %v2817
        %v2989 = vpack.c.b16 %v2820, %v2819
        %v2990 = vpack.c.b16 %v2822, %v2821
        %v2991 = vpack.c.b16 %v2824, %v2823
        %v2992 = vpack.c.b16 %v2826, %v2825
        %v2993 = vpack.c.b16 %v2828, %v2827
        %v2994 = vpack.c.b16 %v2830, %v2829
        %v2995 = vpack.c.b16 %v2832, %v2831
        %v2996 = vpack.c.b16 %v2834, %v2833
        %v2997 = vpack.c.b16 %v2836, %v2835
        %v2998 = vpack.c.b16 %v2838, %v2837
        %v2999 = vpack.c.b16 %v2840, %v2839
        %v3000 = vpack.c.b16 %v2842, %v2841
        %v3001 = vpack.c.b16 %v2844, %v2843
        %v3002 = vpack.c.b16 %v2846, %v2845
        %v3003 = vpack.c.b16 %v2848, %v2847
        %v3004 = vpack.c.b16 %v2850, %v2849
        %v3005 = vpack.c.b16 %v2852, %v2851
        %v3006 = vpack.c.b16 %v2854, %v2853
        %v3007 = vpack.c.b16 %v2856, %v2855
        %v3008 = vpack.c.b16 %v2858, %v2857
        %v3009 = vpack.c.b16 %v2860, %v2859
        %v3010 = vpack.c.b16 %v2862, %v2861
        %v3011 = vpack.c.b16 %v2864, %v2863
        %v3012 = vpack.c.b16 %v2866, %v2865
        %v3013 = vpack.c.b16 %v2868, %v2867
        %v3014 = vpack.c.b16 %v2870, %v2869
        %v3015 = vpack.c.b16 %v2872, %v2871
        %v3016 = vpack.c.b16 %v2874, %v2873
        %v3017 = vpack.c.b16 %v2876, %v2875
        %v3018 = vpack.c.b16 %v2878, %v2877
        %v3019 = vpack.c.b16 %v2880, %v2879
        %v3020 = vpack.c.b16 %v2882, %v2881
        %v3021 = vpack.c.b16 %v2884, %v2883
        %v3022 = vpack.c.b16 %v2886, %v2885
        %v3023 = vpack.c.b16 %v2888, %v2887
        %v3024 = vpack.c.b16 %v2890, %v2889
        %v3025 = vpack.c.b16 %v2892, %v2891
        %v3026 = vpack.c.b16 %v2894, %v2893
        %v3027 = vpack.c.b16 %v2896, %v2895
        %v3028 = vpack.c.b16 %v2898, %v2897
        %v3029 = vpack.c.b16 %v2900, %v2899
        %v3030 = vpack.c.b16 %v2902, %v2901
        %3159 = vmatprep.subr.bf16.mxu0 0
        %3160 = vmatpush1.bf16.msra.mxu0 %v2910
        %3161 = vmatprep.subr.bf16.mxu0 0
        %3162 = vmatpush1.bf16.msra.mxu0 %v2909
        %3163 = vmatprep.subr.bf16.mxu0 0
        %3164 = vmatpush1.bf16.msra.mxu0 %v2908
        %3165 = vmatprep.subr.bf16.mxu0 0
        %3166 = vmatpush1.bf16.msra.mxu0 %v2907
        %3167 = vmatprep.subr.bf16.mxu0 0
        %3168 = vmatpush1.bf16.msra.mxu0 %v2906
        %3169 = vmatprep.subr.bf16.mxu0 0
        %3170 = vmatpush1.bf16.msra.mxu0 %v2905
        %3171 = vmatprep.subr.bf16.mxu0 0
        %3172 = vmatpush1.bf16.msra.mxu0 %v2904
        %3173 = vmatprep.subr.bf16.mxu0 0
        %3174 = vmatpush1.bf16.msra.mxu0 %v2903
        %3175 = vmatprep.subr.bf16.mxu0 0
        %3176 = vmatpush2.bf16.msra.mxu0 %v2918
        %3177 = vmatprep.subr.bf16.mxu0 0
        %3178 = vmatpush2.bf16.msra.mxu0 %v2917
        %3179 = vmatprep.subr.bf16.mxu0 0
        %3180 = vmatpush2.bf16.msra.mxu0 %v2916
        %3181 = vmatprep.subr.bf16.mxu0 0
        %3182 = vmatpush2.bf16.msra.mxu0 %v2915
        %3183 = vmatprep.subr.bf16.mxu0 0
        %3184 = vmatpush2.bf16.msra.mxu0 %v2914
        %3185 = vmatprep.subr.bf16.mxu0 0
        %3186 = vmatpush2.bf16.msra.mxu0 %v2913
        %3187 = vmatprep.subr.bf16.mxu0 0
        %3188 = vmatpush2.bf16.msra.mxu0 %v2912
        %3189 = vmatprep.subr.bf16.mxu0 0
        %3190 = vmatpush2.bf16.msra.mxu0 %v2911
        %3191 = vmatprep.mubr.bf16.mxu0 %v2113
        %3192 = vmatmul.mubr.bf16.gmra.mxu0 %v2112
        %v3193 = vpop.f32.mrf.mxu0
        %v3194 = vadd.f32 %v2389, %v3193
        %v3195 = vpop.f32.mrf.mxu0
        %v3196 = vpop.f32.mrf.mxu0
        %v3197 = vpop.f32.mrf.mxu0
        %3198 = vdwg.mxu0
        %3199 = vmatprep.subr.bf16.mxu0 0
        %3200 = vmatpush1.bf16.msra.mxu0 %v2926
        %3201 = vmatprep.subr.bf16.mxu0 0
        %3202 = vmatpush1.bf16.msra.mxu0 %v2925
        %3203 = vmatprep.subr.bf16.mxu0 0
        %3204 = vmatpush1.bf16.msra.mxu0 %v2924
        %3205 = vmatprep.subr.bf16.mxu0 0
        %3206 = vmatpush1.bf16.msra.mxu0 %v2923
        %3207 = vmatprep.subr.bf16.mxu0 0
        %3208 = vmatpush1.bf16.msra.mxu0 %v2922
        %3209 = vmatprep.subr.bf16.mxu0 0
        %3210 = vmatpush1.bf16.msra.mxu0 %v2921
        %3211 = vmatprep.subr.bf16.mxu0 0
        %3212 = vmatpush1.bf16.msra.mxu0 %v2920
        %3213 = vmatprep.subr.bf16.mxu0 0
        %3214 = vmatpush1.bf16.msra.mxu0 %v2919
        %3215 = vmatprep.subr.bf16.mxu0 0
        %3216 = vmatpush2.bf16.msra.mxu0 %v2934
        %3217 = vmatprep.subr.bf16.mxu0 0
        %3218 = vmatpush2.bf16.msra.mxu0 %v2933
        %3219 = vmatprep.subr.bf16.mxu0 0
        %3220 = vmatpush2.bf16.msra.mxu0 %v2932
        %3221 = vmatprep.subr.bf16.mxu0 0
        %3222 = vmatpush2.bf16.msra.mxu0 %v2931
        %3223 = vmatprep.subr.bf16.mxu0 0
        %3224 = vmatpush2.bf16.msra.mxu0 %v2930
        %3225 = vmatprep.subr.bf16.mxu0 0
        %3226 = vmatpush2.bf16.msra.mxu0 %v2929
        %3227 = vmatprep.subr.bf16.mxu0 0
        %3228 = vmatpush2.bf16.msra.mxu0 %v2928
        %3229 = vmatprep.subr.bf16.mxu0 0
        %3230 = vmatpush2.bf16.msra.mxu0 %v2927
        %3231 = vmatprep.mubr.bf16.mxu0 %v2115
        %3232 = vmatmul.mubr.bf16.gmra.mxu0 %v2114
        %v3233 = vpop.f32.mrf.mxu0
        %v3234 = vadd.f32 %v3194, %v3233
        %v3235 = vpop.f32.mrf.mxu0
        %v3236 = vpop.f32.mrf.mxu0
        %v3237 = vpop.f32.mrf.mxu0
        %3238 = vdwg.mxu0
        %3239 = vmatprep.subr.bf16.mxu0 0
        %3240 = vmatpush1.bf16.msra.mxu0 %v2942
        %3241 = vmatprep.subr.bf16.mxu0 0
        %3242 = vmatpush1.bf16.msra.mxu0 %v2941
        %3243 = vmatprep.subr.bf16.mxu0 0
        %3244 = vmatpush1.bf16.msra.mxu0 %v2940
        %3245 = vmatprep.subr.bf16.mxu0 0
        %3246 = vmatpush1.bf16.msra.mxu0 %v2939
        %3247 = vmatprep.subr.bf16.mxu0 0
        %3248 = vmatpush1.bf16.msra.mxu0 %v2938
        %3249 = vmatprep.subr.bf16.mxu0 0
        %3250 = vmatpush1.bf16.msra.mxu0 %v2937
        %3251 = vmatprep.subr.bf16.mxu0 0
        %3252 = vmatpush1.bf16.msra.mxu0 %v2936
        %3253 = vmatprep.subr.bf16.mxu0 0
        %3254 = vmatpush1.bf16.msra.mxu0 %v2935
        %3255 = vmatprep.subr.bf16.mxu0 0
        %3256 = vmatpush2.bf16.msra.mxu0 %v2950
        %3257 = vmatprep.subr.bf16.mxu0 0
        %3258 = vmatpush2.bf16.msra.mxu0 %v2949
        %3259 = vmatprep.subr.bf16.mxu0 0
        %3260 = vmatpush2.bf16.msra.mxu0 %v2948
        %3261 = vmatprep.subr.bf16.mxu0 0
        %3262 = vmatpush2.bf16.msra.mxu0 %v2947
        %3263 = vmatprep.subr.bf16.mxu0 0
        %3264 = vmatpush2.bf16.msra.mxu0 %v2946
        %3265 = vmatprep.subr.bf16.mxu0 0
        %3266 = vmatpush2.bf16.msra.mxu0 %v2945
        %3267 = vmatprep.subr.bf16.mxu0 0
        %3268 = vmatpush2.bf16.msra.mxu0 %v2944
        %3269 = vmatprep.subr.bf16.mxu0 0
        %3270 = vmatpush2.bf16.msra.mxu0 %v2943
        %3271 = vmatprep.mubr.bf16.mxu0 %v2117
        %3272 = vmatmul.mubr.bf16.gmra.mxu0 %v2116
        %v3273 = vpop.f32.mrf.mxu0
        %v3274 = vadd.f32 %v3234, %v3273
        %v3275 = vpop.f32.mrf.mxu0
        %v3276 = vpop.f32.mrf.mxu0
        %v3277 = vpop.f32.mrf.mxu0
        %3278 = vdwg.mxu0
        %3279 = vmatprep.subr.bf16.mxu0 0
        %3280 = vmatpush1.bf16.msra.mxu0 %v2958
        %3281 = vmatprep.subr.bf16.mxu0 0
        %3282 = vmatpush1.bf16.msra.mxu0 %v2957
        %3283 = vmatprep.subr.bf16.mxu0 0
        %3284 = vmatpush1.bf16.msra.mxu0 %v2956
        %3285 = vmatprep.subr.bf16.mxu0 0
        %3286 = vmatpush1.bf16.msra.mxu0 %v2955
        %3287 = vmatprep.subr.bf16.mxu0 0
        %3288 = vmatpush1.bf16.msra.mxu0 %v2954
        %3289 = vmatprep.subr.bf16.mxu0 0
        %3290 = vmatpush1.bf16.msra.mxu0 %v2953
        %3291 = vmatprep.subr.bf16.mxu0 0
        %3292 = vmatpush1.bf16.msra.mxu0 %v2952
        %3293 = vmatprep.subr.bf16.mxu0 0
        %3294 = vmatpush1.bf16.msra.mxu0 %v2951
        %3295 = vmatprep.subr.bf16.mxu0 0
        %3296 = vmatpush2.bf16.msra.mxu0 %v2966
        %3297 = vmatprep.subr.bf16.mxu0 0
        %3298 = vmatpush2.bf16.msra.mxu0 %v2965
        %3299 = vmatprep.subr.bf16.mxu0 0
        %3300 = vmatpush2.bf16.msra.mxu0 %v2964
        %3301 = vmatprep.subr.bf16.mxu0 0
        %3302 = vmatpush2.bf16.msra.mxu0 %v2963
        %3303 = vmatprep.subr.bf16.mxu0 0
        %3304 = vmatpush2.bf16.msra.mxu0 %v2962
        %3305 = vmatprep.subr.bf16.mxu0 0
        %3306 = vmatpush2.bf16.msra.mxu0 %v2961
        %3307 = vmatprep.subr.bf16.mxu0 0
        %3308 = vmatpush2.bf16.msra.mxu0 %v2960
        %3309 = vmatprep.subr.bf16.mxu0 0
        %3310 = vmatpush2.bf16.msra.mxu0 %v2959
        %3311 = vmatprep.mubr.bf16.mxu0 %v2119
        %3312 = vmatmul.mubr.bf16.gmra.mxu0 %v2118
        %v3313 = vpop.f32.mrf.mxu0
        %v3314 = vadd.f32 %v3274, %v3313
        %v3315 = vpop.f32.mrf.mxu0
        %v3316 = vpop.f32.mrf.mxu0
        %v3317 = vpop.f32.mrf.mxu0
        %3318 = vdwg.mxu0
        %3319 = vmatprep.subr.bf16.mxu0 0
        %3320 = vmatpush1.bf16.msra.mxu0 %v2974
        %3321 = vmatprep.subr.bf16.mxu0 0
        %3322 = vmatpush1.bf16.msra.mxu0 %v2973
        %3323 = vmatprep.subr.bf16.mxu0 0
        %3324 = vmatpush1.bf16.msra.mxu0 %v2972
        %3325 = vmatprep.subr.bf16.mxu0 0
        %3326 = vmatpush1.bf16.msra.mxu0 %v2971
        %3327 = vmatprep.subr.bf16.mxu0 0
        %3328 = vmatpush1.bf16.msra.mxu0 %v2970
        %3329 = vmatprep.subr.bf16.mxu0 0
        %3330 = vmatpush1.bf16.msra.mxu0 %v2969
        %3331 = vmatprep.subr.bf16.mxu0 0
        %3332 = vmatpush1.bf16.msra.mxu0 %v2968
        %3333 = vmatprep.subr.bf16.mxu0 0
        %3334 = vmatpush1.bf16.msra.mxu0 %v2967
        %3335 = vmatprep.subr.bf16.mxu0 0
        %3336 = vmatpush2.bf16.msra.mxu0 %v2982
        %3337 = vmatprep.subr.bf16.mxu0 0
        %3338 = vmatpush2.bf16.msra.mxu0 %v2981
        %3339 = vmatprep.subr.bf16.mxu0 0
        %3340 = vmatpush2.bf16.msra.mxu0 %v2980
        %3341 = vmatprep.subr.bf16.mxu0 0
        %3342 = vmatpush2.bf16.msra.mxu0 %v2979
        %3343 = vmatprep.subr.bf16.mxu0 0
        %3344 = vmatpush2.bf16.msra.mxu0 %v2978
        %3345 = vmatprep.subr.bf16.mxu0 0
        %3346 = vmatpush2.bf16.msra.mxu0 %v2977
        %3347 = vmatprep.subr.bf16.mxu0 0
        %3348 = vmatpush2.bf16.msra.mxu0 %v2976
        %3349 = vmatprep.subr.bf16.mxu0 0
        %3350 = vmatpush2.bf16.msra.mxu0 %v2975
        %3351 = vmatprep.mubr.bf16.mxu0 %v2121
        %3352 = vmatmul.mubr.bf16.gmra.mxu0 %v2120
        %v3353 = vpop.f32.mrf.mxu0
        %v3354 = vadd.f32 %v3314, %v3353
        %v3355 = vpop.f32.mrf.mxu0
        %v3356 = vpop.f32.mrf.mxu0
        %v3357 = vpop.f32.mrf.mxu0
        %3358 = vdwg.mxu0
        %3359 = vmatprep.subr.bf16.mxu0 0
        %3360 = vmatpush1.bf16.msra.mxu0 %v2990
        %3361 = vmatprep.subr.bf16.mxu0 0
        %3362 = vmatpush1.bf16.msra.mxu0 %v2989
        %3363 = vmatprep.subr.bf16.mxu0 0
        %3364 = vmatpush1.bf16.msra.mxu0 %v2988
        %3365 = vmatprep.subr.bf16.mxu0 0
        %3366 = vmatpush1.bf16.msra.mxu0 %v2987
        %3367 = vmatprep.subr.bf16.mxu0 0
        %3368 = vmatpush1.bf16.msra.mxu0 %v2986
        %3369 = vmatprep.subr.bf16.mxu0 0
        %3370 = vmatpush1.bf16.msra.mxu0 %v2985
        %3371 = vmatprep.subr.bf16.mxu0 0
        %3372 = vmatpush1.bf16.msra.mxu0 %v2984
        %3373 = vmatprep.subr.bf16.mxu0 0
        %3374 = vmatpush1.bf16.msra.mxu0 %v2983
        %3375 = vmatprep.subr.bf16.mxu0 0
        %3376 = vmatpush2.bf16.msra.mxu0 %v2998
        %3377 = vmatprep.subr.bf16.mxu0 0
        %3378 = vmatpush2.bf16.msra.mxu0 %v2997
        %3379 = vmatprep.subr.bf16.mxu0 0
        %3380 = vmatpush2.bf16.msra.mxu0 %v2996
        %3381 = vmatprep.subr.bf16.mxu0 0
        %3382 = vmatpush2.bf16.msra.mxu0 %v2995
        %3383 = vmatprep.subr.bf16.mxu0 0
        %3384 = vmatpush2.bf16.msra.mxu0 %v2994
        %3385 = vmatprep.subr.bf16.mxu0 0
        %3386 = vmatpush2.bf16.msra.mxu0 %v2993
        %3387 = vmatprep.subr.bf16.mxu0 0
        %3388 = vmatpush2.bf16.msra.mxu0 %v2992
        %3389 = vmatprep.subr.bf16.mxu0 0
        %3390 = vmatpush2.bf16.msra.mxu0 %v2991
        %3391 = vmatprep.mubr.bf16.mxu0 %v2123
        %3392 = vmatmul.mubr.bf16.gmra.mxu0 %v2122
        %v3393 = vpop.f32.mrf.mxu0
        %v3394 = vadd.f32 %v3354, %v3393
        %v3395 = vpop.f32.mrf.mxu0
        %v3396 = vpop.f32.mrf.mxu0
        %v3397 = vpop.f32.mrf.mxu0
        %3398 = vdwg.mxu0
        %3399 = vmatprep.subr.bf16.mxu0 0
        %3400 = vmatpush1.bf16.msra.mxu0 %v3006
        %3401 = vmatprep.subr.bf16.mxu0 0
        %3402 = vmatpush1.bf16.msra.mxu0 %v3005
        %3403 = vmatprep.subr.bf16.mxu0 0
        %3404 = vmatpush1.bf16.msra.mxu0 %v3004
        %3405 = vmatprep.subr.bf16.mxu0 0
        %3406 = vmatpush1.bf16.msra.mxu0 %v3003
        %3407 = vmatprep.subr.bf16.mxu0 0
        %3408 = vmatpush1.bf16.msra.mxu0 %v3002
        %3409 = vmatprep.subr.bf16.mxu0 0
        %3410 = vmatpush1.bf16.msra.mxu0 %v3001
        %3411 = vmatprep.subr.bf16.mxu0 0
        %3412 = vmatpush1.bf16.msra.mxu0 %v3000
        %3413 = vmatprep.subr.bf16.mxu0 0
        %3414 = vmatpush1.bf16.msra.mxu0 %v2999
        %3415 = vmatprep.subr.bf16.mxu0 0
        %3416 = vmatpush2.bf16.msra.mxu0 %v3014
        %3417 = vmatprep.subr.bf16.mxu0 0
        %3418 = vmatpush2.bf16.msra.mxu0 %v3013
        %3419 = vmatprep.subr.bf16.mxu0 0
        %3420 = vmatpush2.bf16.msra.mxu0 %v3012
        %3421 = vmatprep.subr.bf16.mxu0 0
        %3422 = vmatpush2.bf16.msra.mxu0 %v3011
        %3423 = vmatprep.subr.bf16.mxu0 0
        %3424 = vmatpush2.bf16.msra.mxu0 %v3010
        %3425 = vmatprep.subr.bf16.mxu0 0
        %3426 = vmatpush2.bf16.msra.mxu0 %v3009
        %3427 = vmatprep.subr.bf16.mxu0 0
        %3428 = vmatpush2.bf16.msra.mxu0 %v3008
        %3429 = vmatprep.subr.bf16.mxu0 0
        %3430 = vmatpush2.bf16.msra.mxu0 %v3007
        %3431 = vmatprep.mubr.bf16.mxu0 %v2125
        %3432 = vmatmul.mubr.bf16.gmra.mxu0 %v2124
        %v3433 = vpop.f32.mrf.mxu0
        %v3434 = vadd.f32 %v3394, %v3433
        %v3435 = vpop.f32.mrf.mxu0
        %v3436 = vpop.f32.mrf.mxu0
        %v3437 = vpop.f32.mrf.mxu0
        %3438 = vdwg.mxu0
        %3439 = vmatprep.subr.bf16.mxu0 0
        %3440 = vmatpush1.bf16.msra.mxu0 %v3022
        %3441 = vmatprep.subr.bf16.mxu0 0
        %3442 = vmatpush1.bf16.msra.mxu0 %v3021
        %3443 = vmatprep.subr.bf16.mxu0 0
        %3444 = vmatpush1.bf16.msra.mxu0 %v3020
        %3445 = vmatprep.subr.bf16.mxu0 0
        %3446 = vmatpush1.bf16.msra.mxu0 %v3019
        %3447 = vmatprep.subr.bf16.mxu0 0
        %3448 = vmatpush1.bf16.msra.mxu0 %v3018
        %3449 = vmatprep.subr.bf16.mxu0 0
        %3450 = vmatpush1.bf16.msra.mxu0 %v3017
        %3451 = vmatprep.subr.bf16.mxu0 0
        %3452 = vmatpush1.bf16.msra.mxu0 %v3016
        %3453 = vmatprep.subr.bf16.mxu0 0
        %3454 = vmatpush1.bf16.msra.mxu0 %v3015
        %3455 = vmatprep.subr.bf16.mxu0 0
        %3456 = vmatpush2.bf16.msra.mxu0 %v3030
        %3457 = vmatprep.subr.bf16.mxu0 0
        %3458 = vmatpush2.bf16.msra.mxu0 %v3029
        %3459 = vmatprep.subr.bf16.mxu0 0
        %3460 = vmatpush2.bf16.msra.mxu0 %v3028
        %3461 = vmatprep.subr.bf16.mxu0 0
        %3462 = vmatpush2.bf16.msra.mxu0 %v3027
        %3463 = vmatprep.subr.bf16.mxu0 0
        %3464 = vmatpush2.bf16.msra.mxu0 %v3026
        %3465 = vmatprep.subr.bf16.mxu0 0
        %3466 = vmatpush2.bf16.msra.mxu0 %v3025
        %3467 = vmatprep.subr.bf16.mxu0 0
        %3468 = vmatpush2.bf16.msra.mxu0 %v3024
        %3469 = vmatprep.subr.bf16.mxu0 0
        %3470 = vmatpush2.bf16.msra.mxu0 %v3023
        %3471 = vmatprep.mubr.bf16.mxu0 %v2127
        %3472 = vmatmul.mubr.bf16.gmra.mxu0 %v2126
        %v3473 = vpop.f32.mrf.mxu0
        %v3474 = vadd.f32 %v3434, %v3473
        %v3475 = vpop.f32.mrf.mxu0
        %v3476 = vpop.f32.mrf.mxu0
        %v3477 = vpop.f32.mrf.mxu0
        %3478 = vdwg.mxu0
        %v3479 = vadd.f32 %v1451, %v3474
        %3480 = vst.msk [vmem:[%s601] sm:$0xff] %vm797, %v3479
        %s3481 = sand.u32 %s444, 1
        %s3482 = scalar_lea.sflag [#allocation6], %s3481
        %s3483 = sand.u32 %s444, 1
        %s3484 = smul.addr %s3483, 8
        %s3485 = scalar_lea.vmem [#allocation5], %s3484
        // Predicated region
        $region97: #{tpu_custom_call.1} parent=91 // pred_check
          %p3486 = pneg %p454
        $region98: #{tpu_custom_call.1} parent=91 // pred_check_branch
          %3488 = sbr.rel (%p3486) target = $region100
        $region99: #{tpu_custom_call.1} parent=91 // pred_region
          %s3490 = ssub.s32 128, 128
          %3491 = vsyncadd %s3482, %s3490
          %s3492 = sadd.s32 %s37, %s36
          %s3493 = smul.addr %s3492, 128
          %s3494 = scalar_lea.hbm %s18, %s3493
          %s3496 = sshll.u32 %s3485, 4
          %s3497 = int_to_ptr.vmem [resolvable:$true] %s3496
          %3499 = dma.vmem_to_hbm [thread:$0]  %s3497, 128, %s3494, %s3482
        $region100: #{tpu_custom_call.1} parent=91 // pred_fallthru
          _
      $region92: #{tpu_custom_call.1} parent=5 // pred_fallthru
        _
      %p3500 = scmp.le.s32.totalorder 2, %s27
      // Predicated region
      $region101: #{tpu_custom_call.1} parent=5 // pred_check
        %p3501 = pneg %p3500
      $region102: #{tpu_custom_call.1} parent=5 // pred_check_branch
        %3503 = sbr.rel (%p3501) target = $region104
      $region103: #{tpu_custom_call.1} parent=5 // pred_region
        %s3504 = ssub.s32 %s27, 2
        // Predicated region
        $region105: #{tpu_custom_call.1} parent=103 // pred_check
          %p3505 = pneg %p460
        $region106: #{tpu_custom_call.1} parent=103 // pred_check_branch
          %3507 = sbr.rel (%p3505) target = $region108
        $region107: #{tpu_custom_call.1} parent=103 // pred_region
          %s3508 = sand.u32 %s445, 1
          %s3509 = scalar_lea.sflag [#allocation6], %s3508
          %s3510 = sand.u32 %s445, 1
          %s3511 = smul.addr %s3510, 8
          %s3512 = scalar_lea.vmem [#allocation5], %s3511
          %3513 = dma.done %s3509, 128
        $region108: #{tpu_custom_call.1} parent=103 // pred_fallthru
          _
      $region104: #{tpu_custom_call.1} parent=5 // pred_fallthru
        _
    $region6: #{tpu_custom_call.1} parent=1 // loop_footer
      %s31 = sadd.s32 1, %s27
    $region7: #{tpu_custom_call.1} parent=1 // loop_footer_branch
      %26 = sbr.rel target = $region3
    $region8: #{tpu_custom_call.1} parent=1 // loop_exit
      _
    %3514 = vsyncpa [#allocation6], 1
    %s3515 = scalar_lea.sflag [#allocation6], 1
    %3516 = vsyncpa %s3515, 1

</llo_original>
